<compile_context>
chip_gen: v6e
topology: v6e:2x2x1
jax: 0.10.0
libtpu: 0.0.40
codegen_flags: <defaults>
</compile_context>

<pallas_src>
import jax
import jax.numpy as jnp
from jax import lax
from jax.experimental import pallas as pl
from jax.experimental.pallas import tpu as pltpu

LANE = 128


def _round_up(x, m):
    return (x + m - 1) // m * m


def _make_kernel(H, W, TH, Cp):
    """Build the fused kernel for static dims H, W (original), TH (row tile), Cp (padded channels)."""
    R1 = TH + 2   # conv1 output rows needed (tile rows + 1-row halo each side for conv2)
    W1 = W + 2    # conv1 output cols needed

    def kernel(x_hbm, w1_ref, w2_ref, s1_ref, b1_ref, s2_ref, b2_ref,
               s3_ref, b3_ref, alpha_ref, o_ref, xslab, xbn, h1buf, sem):
        n = pl.program_id(0)
        r = pl.program_id(1)

        # ---- manual DMA: (TH+4)-row halo slab of image n (contiguous region) ----
        row0 = pl.multiple_of(r * TH, TH)
        cp = pltpu.make_async_copy(x_hbm.at[n, pl.ds(row0, TH + 4)], xslab, sem)
        cp.start()
        cp.wait()

        # ---- bn1 (folded scale/bias) in f32; zero everything outside the real image
        #      (replaces conv1's implicit SAME zero padding) ----
        x = xslab[...].astype(jnp.float32)                       # (TH+4, W+4, Cp)
        rows = lax.broadcasted_iota(jnp.int32, (TH + 4, W + 4, 1), 0) + (r * TH - 2)
        cols = lax.broadcasted_iota(jnp.int32, (TH + 4, W + 4, 1), 1) - 2
        inside = (rows >= 0) & (rows < H) & (cols >= 0) & (cols < W)
        h = x * s1_ref[...] + b1_ref[...]
        xbn[...] = jnp.where(inside, h, 0.0).astype(jnp.bfloat16)

        # ---- conv1: one im2col matmul, K = 9*Cp, bf16 x bf16 -> f32 accumulate ----
        p1 = jnp.concatenate(
            [xbn[dy:dy + R1, dx:dx + W1, :] for dy in range(3) for dx in range(3)],
            axis=-1).reshape(R1 * W1, 9 * Cp)
        h1 = jnp.dot(p1, w1_ref[...], preferred_element_type=jnp.float32)

        # ---- bn2 + PReLU in f32; zero conv1 outputs lying outside the image
        #      (replaces conv2's implicit SAME zero padding of conv1's output) ----
        h1 = h1 * s2_ref[...] + b2_ref[...]
        h1 = jnp.where(h1 >= 0.0, h1, alpha_ref[...] * h1)
        h1 = h1.reshape(R1, W1, Cp)
        rows1 = lax.broadcasted_iota(jnp.int32, (R1, W1, 1), 0) + (r * TH - 1)
        cols1 = lax.broadcasted_iota(jnp.int32, (R1, W1, 1), 1) - 1
        inside1 = (rows1 >= 0) & (rows1 < H) & (cols1 >= 0) & (cols1 < W)
        h1buf[...] = jnp.where(inside1, h1, 0.0).astype(jnp.bfloat16)

        # ---- conv2 (stride 1): one im2col matmul, K = 9*Cp ----
        p2 = jnp.concatenate(
            [h1buf[dy:dy + TH, dx:dx + W, :] for dy in range(3) for dx in range(3)],
            axis=-1).reshape(TH * W, 9 * Cp)
        acc = jnp.dot(p2, w2_ref[...], preferred_element_type=jnp.float32)

        # ---- bn3 + residual (identity from the full-precision slab interior) ----
        out = acc * s3_ref[...] + b3_ref[...]
        ident = xslab[2:TH + 2, 2:W + 2, :].reshape(TH * W, Cp).astype(jnp.float32)
        out = out + ident
        o_ref[0] = out.reshape(TH, W, Cp).astype(o_ref.dtype)

    return kernel


def ibasic_block_forward(x_nchw, params, row_tile=8):
    """NCHW in / NCHW out. Fused bn1->conv3x3->bn2->prelu->conv3x3->bn3->(+x)."""
    N, C, H, W = x_nchw.shape
    P = params["w1_hwio"].shape[-1]
    assert C == P, "fused IBasicBlock kernel requires inplanes == planes"
    # TODO(synk): stride>1 / downsample branch and training-mode BatchNorm
    # (batch stats + running-stat updates) are not implemented in-kernel.

    Cp = _round_up(C, LANE)                     # lane-dense channel axis
    TH = row_tile if (H % row_tile == 0) else H  # row tile (full W kept per tile)

    # TODO(synk): keep activations NHWC end-to-end in production; this
    # NCHW<->NHWC transpose pair costs an extra HBM round-trip per block.
    x = jnp.transpose(x_nchw, (0, 2, 3, 1))
    # 2-pixel spatial halo (covers both stacked SAME 3x3 convs) + zero-padded channels.
    x_pad = jnp.pad(x, ((0, 0), (2, 2), (2, 2), (0, Cp - C)))

    def pvec(v):                                 # (C,) -> (1, Cp) f32, zero-padded
        return jnp.pad(v.astype(jnp.float32), (0, Cp - C)).reshape(1, Cp)

    def pw(w_hwio):                              # (3,3,C,P) -> (9*Cp, Cp) bf16, tap-major
        w = jnp.pad(w_hwio, ((0, 0), (0, 0), (0, Cp - C), (0, Cp - P)))
        return w.reshape(9 * Cp, Cp).astype(jnp.bfloat16)

    args = (x_pad, pw(params["w1_hwio"]), pw(params["w2_hwio"]),
            pvec(params["s1"]), pvec(params["b1"]),
            pvec(params["s2"]), pvec(params["b2"]),
            pvec(params["s3"]), pvec(params["b3"]), pvec(params["alpha"]))

    grid = (N, H // TH)
    vec_spec = pl.BlockSpec((1, Cp), lambda n, r: (0, 0))
    in_specs = [
        pl.BlockSpec(memory_space=pl.ANY),                  # x_pad stays in HBM (manual DMA)
        pl.BlockSpec((9 * Cp, Cp), lambda n, r: (0, 0)),     # w1 (resident in VMEM)
        pl.BlockSpec((9 * Cp, Cp), lambda n, r: (0, 0)),     # w2
        vec_spec, vec_spec, vec_spec, vec_spec, vec_spec, vec_spec, vec_spec,
    ]
    out_specs = pl.BlockSpec((1, TH, W, Cp), lambda n, r: (n, r, 0, 0))
    scratch_shapes = [
        pltpu.VMEM((TH + 4, W + 4, Cp), x_pad.dtype),    # raw slab (also f32 identity)
        pltpu.VMEM((TH + 4, W + 4, Cp), jnp.bfloat16),   # bn1 output (conv1 operand)
        pltpu.VMEM((TH + 2, W + 2, Cp), jnp.bfloat16),   # prelu output (conv2 operand)
        pltpu.SemaphoreType.DMA,
    ]

    flops = 2 * (2 * N * H * W * 9 * Cp * Cp)            # two 3x3 convs
    bytes_accessed = (x_pad.size * x_pad.dtype.itemsize
                      + N * H * W * Cp * x_nchw.dtype.itemsize
                      + 2 * 9 * Cp * Cp * 2)

    out = pl.pallas_call(
        _make_kernel(H, W, TH, Cp),
        out_shape=jax.ShapeDtypeStruct((N, H, W, Cp), x_nchw.dtype),
        grid=grid,
        in_specs=in_specs,
        out_specs=out_specs,
        scratch_shapes=scratch_shapes,
        compiler_params=pltpu.CompilerParams(
            dimension_semantics=("parallel", "parallel"),
            vmem_limit_bytes=32 * 1024 * 1024),
        cost_estimate=pl.CostEstimate(flops=flops, transcendentals=0,
                                      bytes_accessed=bytes_accessed),
    )(*args)

    return jnp.transpose(out[..., :C], (0, 3, 1, 2))     # drop channel pad, NHWC->NCHW


def make_params(key, inplanes, planes, eps=1e-5):
    """Deterministic synthetic parameters matching the PyTorch module shapes."""
    ks = jax.random.split(key, 15)

    def bn_fold(kg, kb, km, kv, c):
        gamma = 1.0 + 0.1 * jax.random.normal(kg, (c,), jnp.float32)
        beta = 0.1 * jax.random.normal(kb, (c,), jnp.float32)
        mean = 0.1 * jax.random.normal(km, (c,), jnp.float32)
        var = jnp.abs(jax.random.normal(kv, (c,), jnp.float32)) + 0.5
        scale = gamma / jnp.sqrt(var + eps)
        return scale, beta - mean * scale

    s1, b1 = bn_fold(ks[0], ks[1], ks[2], ks[3], inplanes)
    s2, b2 = bn_fold(ks[4], ks[5], ks[6], ks[7], planes)
    s3, b3 = bn_fold(ks[8], ks[9], ks[10], ks[11], planes)

    # PyTorch conv weight layout is (out, in, kh, kw); convert to HWIO.
    w1_oihw = 0.1 * jax.random.normal(ks[12], (planes, inplanes, 3, 3), jnp.float32)
    w2_oihw = 0.1 * jax.random.normal(ks[13], (planes, planes, 3, 3), jnp.float32)
    alpha = 0.25 + 0.05 * jax.random.normal(ks[14], (planes,), jnp.float32)

    return dict(s1=s1, b1=b1, s2=s2, b2=b2, s3=s3, b3=b3, alpha=alpha,
                w1_hwio=jnp.transpose(w1_oihw, (2, 3, 1, 0)),
                w2_hwio=jnp.transpose(w2_oihw, (2, 3, 1, 0)))


def ref_forward(x_nchw, p):
    """Pure-JAX reference (XLA convs), mirroring the kernel's bf16 matmul inputs."""
    x = jnp.transpose(x_nchw, (0, 2, 3, 1)).astype(jnp.float32)
    dn = ("NHWC", "HWIO", "NHWC")
    h = x * p["s1"] + p["b1"]
    h = lax.conv_general_dilated(h.astype(jnp.bfloat16),
                                 p["w1_hwio"].astype(jnp.bfloat16),
                                 (1, 1), "SAME", dimension_numbers=dn,
                                 preferred_element_type=jnp.float32)
    h = h * p["s2"] + p["b2"]
    h = jnp.where(h >= 0.0, h, p["alpha"] * h)
    h = lax.conv_general_dilated(h.astype(jnp.bfloat16),
                                 p["w2_hwio"].astype(jnp.bfloat16),
                                 (1, 1), "SAME", dimension_numbers=dn,
                                 preferred_element_type=jnp.float32)
    h = h * p["s3"] + p["b3"] + x
    return jnp.transpose(h, (0, 3, 1, 2))


if __name__ == "__main__":
    key = jax.random.PRNGKey(0)
    kx, kp = jax.random.split(key)

    # Small shapes consistent with the block: inplanes == planes, stride = 1.
    N, C, H, W = 2, 4, 16, 16
    inplanes = planes = C

    x = jax.random.normal(kx, (N, C, H, W), jnp.float32)
    params = make_params(kp, inplanes, planes)

    out = jax.block_until_ready(ibasic_block_forward(x, params, row_tile=8))
    ref = jax.block_until_ready(ref_forward(x, params))

    assert out.shape == (N, planes, H, W), out.shape
    max_err = float(jnp.max(jnp.abs(out - ref)))
    assert jnp.allclose(out, ref, atol=1e-2, rtol=1e-2), max_err

    print("KERNEL_OK")
</pallas_src>

<mosaic_0001>
module attributes {stable_mosaic.version = 11 : i64} {
  func.func @kernel(%arg0: i32, %arg1: i32, %arg2: memref<2x20x20x128xf32, #tpu.memory_space<any>>, %arg3: memref<1152x128xbf16, #tpu.memory_space<vmem>>, %arg4: memref<1152x128xbf16, #tpu.memory_space<vmem>>, %arg5: memref<1x128xf32, #tpu.memory_space<vmem>>, %arg6: memref<1x128xf32, #tpu.memory_space<vmem>>, %arg7: memref<1x128xf32, #tpu.memory_space<vmem>>, %arg8: memref<1x128xf32, #tpu.memory_space<vmem>>, %arg9: memref<1x128xf32, #tpu.memory_space<vmem>>, %arg10: memref<1x128xf32, #tpu.memory_space<vmem>>, %arg11: memref<1x128xf32, #tpu.memory_space<vmem>>, %arg12: memref<1x8x16x128xf32, #tpu.memory_space<vmem>>, %arg13: memref<12x20x128xf32, #tpu.memory_space<vmem>>, %arg14: memref<12x20x128xbf16, #tpu.memory_space<vmem>>, %arg15: memref<10x18x128xbf16, #tpu.memory_space<vmem>>, %arg16: memref<!tpu.dma_semaphore, #tpu.memory_space<semaphore_mem>>) attributes {dimension_semantics = [#tpu.dimension_semantics<parallel>, #tpu.dimension_semantics<parallel>], iteration_bounds = array<i64: 2, 2>, scalar_prefetch = 0 : i64, scratch_operands = 4 : i64, tpu.core_type = #tpu.core_type<tc>, window_params = [{}, {pipeline_mode = #tpu.pipeline_mode<synchronous>, transform_indices = @transform_1, window_bounds = array<i64: 1152, 128>}, {pipeline_mode = #tpu.pipeline_mode<synchronous>, transform_indices = @transform_2, window_bounds = array<i64: 1152, 128>}, {pipeline_mode = #tpu.pipeline_mode<synchronous>, transform_indices = @transform_3, window_bounds = array<i64: 1, 128>}, {pipeline_mode = #tpu.pipeline_mode<synchronous>, transform_indices = @transform_4, window_bounds = array<i64: 1, 128>}, {pipeline_mode = #tpu.pipeline_mode<synchronous>, transform_indices = @transform_5, window_bounds = array<i64: 1, 128>}, {pipeline_mode = #tpu.pipeline_mode<synchronous>, transform_indices = @transform_6, window_bounds = array<i64: 1, 128>}, {pipeline_mode = #tpu.pipeline_mode<synchronous>, transform_indices = @transform_7, window_bounds = array<i64: 1, 128>}, {pipeline_mode = #tpu.pipeline_mode<synchronous>, transform_indices = @transform_8, window_bounds = array<i64: 1, 128>}, {pipeline_mode = #tpu.pipeline_mode<synchronous>, transform_indices = @transform_9, window_bounds = array<i64: 1, 128>}, {transform_indices = @transform_10, window_bounds = array<i64: 1, 8, 16, 128>}]} {
    %c8_i32 = arith.constant 8 : i32
    %0 = arith.muli %arg1, %c8_i32 : i32
    %1 = tpu.assume_multiple %0, 8 : i32
    %c0_i32 = arith.constant 0 : i32
    %c0_i32_0 = arith.constant 0 : i32
    %2 = tpu.memref_slice %arg2[%arg0, %1, %c0_i32, %c0_i32_0] : memref<2x20x20x128xf32, #tpu.memory_space<any>> -> memref<1x12x20x128xf32, #tpu.memory_space<any>>
    %3 = tpu.memref_squeeze %2 : memref<1x12x20x128xf32, #tpu.memory_space<any>> -> memref<12x20x128xf32, #tpu.memory_space<any>>
    tpu.enqueue_dma source(%3 : memref<12x20x128xf32, #tpu.memory_space<any>>) target(%arg13 : memref<12x20x128xf32, #tpu.memory_space<vmem>>) target_semaphore(%arg16 : memref<!tpu.dma_semaphore, #tpu.memory_space<semaphore_mem>>)
    %c0_i32_1 = arith.constant 0 : i32
    %c0_i32_2 = arith.constant 0 : i32
    %4 = tpu.memref_slice %arg2[%arg0, %1, %c0_i32_1, %c0_i32_2] : memref<2x20x20x128xf32, #tpu.memory_space<any>> -> memref<1x12x20x128xf32, #tpu.memory_space<any>>
    %5 = tpu.memref_squeeze %4 : memref<1x12x20x128xf32, #tpu.memory_space<any>> -> memref<12x20x128xf32, #tpu.memory_space<any>>
    tpu.wait_dma2 semaphore(%arg16 : memref<!tpu.dma_semaphore, #tpu.memory_space<semaphore_mem>>) src(%5 : memref<12x20x128xf32, #tpu.memory_space<any>>) dst(%arg13 : memref<12x20x128xf32, #tpu.memory_space<vmem>>)
    %c0 = arith.constant 0 : index
    %c0_3 = arith.constant 0 : index
    %c0_4 = arith.constant 0 : index
    %6 = vector.load %arg13[%c0, %c0_3, %c0_4] : memref<12x20x128xf32, #tpu.memory_space<vmem>>, vector<12x20x128xf32>
    %7 = tpu.iota {dimensions = array<i32: 0>} : vector<12x20x1xi32>
    %c8_i32_5 = arith.constant 8 : i32
    %8 = arith.muli %arg1, %c8_i32_5 : i32
    %c2_i32 = arith.constant 2 : i32
    %9 = arith.subi %8, %c2_i32 : i32
    %10 = vector.broadcast %9 : i32 to vector<12x20x1xi32>
    %11 = arith.addi %7, %10 : vector<12x20x1xi32>
    %12 = tpu.iota {dimensions = array<i32: 1>} : vector<12x20x1xi32>
    %c2_i32_6 = arith.constant 2 : i32
    %13 = vector.broadcast %c2_i32_6 : i32 to vector<12x20x1xi32>
    %14 = arith.subi %12, %13 : vector<12x20x1xi32>
    %c0_i32_7 = arith.constant 0 : i32
    %15 = vector.broadcast %c0_i32_7 : i32 to vector<12x20x1xi32>
    %16 = arith.cmpi sge, %11, %15 : vector<12x20x1xi32>
    %c16_i32 = arith.constant 16 : i32
    %17 = vector.broadcast %c16_i32 : i32 to vector<12x20x1xi32>
    %18 = arith.cmpi slt, %11, %17 : vector<12x20x1xi32>
    %19 = arith.andi %16, %18 : vector<12x20x1xi1>
    %c0_i32_8 = arith.constant 0 : i32
    %20 = vector.broadcast %c0_i32_8 : i32 to vector<12x20x1xi32>
    %21 = arith.cmpi sge, %14, %20 : vector<12x20x1xi32>
    %22 = arith.andi %19, %21 : vector<12x20x1xi1>
    %c16_i32_9 = arith.constant 16 : i32
    %23 = vector.broadcast %c16_i32_9 : i32 to vector<12x20x1xi32>
    %24 = arith.cmpi slt, %14, %23 : vector<12x20x1xi32>
    %25 = arith.andi %22, %24 : vector<12x20x1xi1>
    %c0_10 = arith.constant 0 : index
    %c0_11 = arith.constant 0 : index
    %26 = vector.load %arg5[%c0_10, %c0_11] : memref<1x128xf32, #tpu.memory_space<vmem>>, vector<1x128xf32>
    %27 = vector.shape_cast %26 : vector<1x128xf32> to vector<1x1x128xf32>
    %28 = vector.broadcast %27 : vector<1x1x128xf32> to vector<12x20x128xf32>
    %29 = arith.mulf %6, %28 : vector<12x20x128xf32>
    %c0_12 = arith.constant 0 : index
    %c0_13 = arith.constant 0 : index
    %30 = vector.load %arg6[%c0_12, %c0_13] : memref<1x128xf32, #tpu.memory_space<vmem>>, vector<1x128xf32>
    %31 = vector.shape_cast %30 : vector<1x128xf32> to vector<1x1x128xf32>
    %32 = vector.broadcast %31 : vector<1x1x128xf32> to vector<12x20x128xf32>
    %33 = arith.addf %29, %32 : vector<12x20x128xf32>
    %cst = arith.constant 0.000000e+00 : f32
    %34 = vector.shape_cast %25 : vector<12x20x1xi1> to vector<12x20x1xi1>
    %35 = vector.broadcast %34 : vector<12x20x1xi1> to vector<12x20x128xi1>
    %36 = vector.broadcast %cst : f32 to vector<12x20x128xf32>
    %37 = arith.select %35, %33, %36 : vector<12x20x128xi1>, vector<12x20x128xf32>
    %38 = arith.truncf %37 : vector<12x20x128xf32> to vector<12x20x128xbf16>
    %c0_14 = arith.constant 0 : index
    %c0_15 = arith.constant 0 : index
    %c0_16 = arith.constant 0 : index
    %39 = vector.load %arg14[%c0_14, %c0_15, %c0_16] : memref<12x20x128xbf16, #tpu.memory_space<vmem>>, vector<12x20x128xbf16>
    tpu.vector_store %arg14[%c0_14, %c0_15, %c0_16], %38 {strides = array<i32>} : memref<12x20x128xbf16, #tpu.memory_space<vmem>>, vector<12x20x128xbf16>,
    %c0_17 = arith.constant 0 : index
    %c0_18 = arith.constant 0 : index
    %c0_19 = arith.constant 0 : index
    %40 = vector.load %arg14[%c0_17, %c0_18, %c0_19] : memref<12x20x128xbf16, #tpu.memory_space<vmem>>, vector<10x18x128xbf16>
    %c0_20 = arith.constant 0 : index
    %c1 = arith.constant 1 : index
    %c0_21 = arith.constant 0 : index
    %41 = vector.load %arg14[%c0_20, %c1, %c0_21] : memref<12x20x128xbf16, #tpu.memory_space<vmem>>, vector<10x18x128xbf16>
    %c0_22 = arith.constant 0 : index
    %c2 = arith.constant 2 : index
    %c0_23 = arith.constant 0 : index
    %42 = vector.load %arg14[%c0_22, %c2, %c0_23] : memref<12x20x128xbf16, #tpu.memory_space<vmem>>, vector<10x18x128xbf16>
    %c1_24 = arith.constant 1 : index
    %c0_25 = arith.constant 0 : index
    %c0_26 = arith.constant 0 : index
    %43 = vector.load %arg14[%c1_24, %c0_25, %c0_26] : memref<12x20x128xbf16, #tpu.memory_space<vmem>>, vector<10x18x128xbf16>
    %c1_27 = arith.constant 1 : index
    %c1_28 = arith.constant 1 : index
    %c0_29 = arith.constant 0 : index
    %44 = vector.load %arg14[%c1_27, %c1_28, %c0_29] : memref<12x20x128xbf16, #tpu.memory_space<vmem>>, vector<10x18x128xbf16>
    %c1_30 = arith.constant 1 : index
    %c2_31 = arith.constant 2 : index
    %c0_32 = arith.constant 0 : index
    %45 = vector.load %arg14[%c1_30, %c2_31, %c0_32] : memref<12x20x128xbf16, #tpu.memory_space<vmem>>, vector<10x18x128xbf16>
    %c2_33 = arith.constant 2 : index
    %c0_34 = arith.constant 0 : index
    %c0_35 = arith.constant 0 : index
    %46 = vector.load %arg14[%c2_33, %c0_34, %c0_35] : memref<12x20x128xbf16, #tpu.memory_space<vmem>>, vector<10x18x128xbf16>
    %c2_36 = arith.constant 2 : index
    %c1_37 = arith.constant 1 : index
    %c0_38 = arith.constant 0 : index
    %47 = vector.load %arg14[%c2_36, %c1_37, %c0_38] : memref<12x20x128xbf16, #tpu.memory_space<vmem>>, vector<10x18x128xbf16>
    %c2_39 = arith.constant 2 : index
    %c2_40 = arith.constant 2 : index
    %c0_41 = arith.constant 0 : index
    %48 = vector.load %arg14[%c2_39, %c2_40, %c0_41] : memref<12x20x128xbf16, #tpu.memory_space<vmem>>, vector<10x18x128xbf16>
    %49 = tpu.concatenate %40, %41, %42, %43, %44, %45, %46, %47, %48 in 2 : vector<10x18x128xbf16>, vector<10x18x128xbf16>, vector<10x18x128xbf16>, vector<10x18x128xbf16>, vector<10x18x128xbf16>, vector<10x18x128xbf16>, vector<10x18x128xbf16>, vector<10x18x128xbf16>, vector<10x18x128xbf16> -> vector<10x18x1152xbf16>
    %50 = vector.shape_cast %49 : vector<10x18x1152xbf16> to vector<180x1152xbf16>
    %c0_42 = arith.constant 0 : index
    %c0_43 = arith.constant 0 : index
    %51 = vector.load %arg3[%c0_42, %c0_43] : memref<1152x128xbf16, #tpu.memory_space<vmem>>, vector<1152x128xbf16>
    %cst_44 = arith.constant dense<0.000000e+00> : vector<180x128xf32>
    %52 = tpu.matmul %50, %51, %cst_44 {dimension_numbers = #tpu.dot_dimension_numbers<[1], [0], [0], [1], [0, 0, 1, 1], [], []>} : vector<180x1152xbf16>, vector<1152x128xbf16>, vector<180x128xf32> -> vector<180x128xf32>
    %c0_45 = arith.constant 0 : index
    %c0_46 = arith.constant 0 : index
    %53 = vector.load %arg7[%c0_45, %c0_46] : memref<1x128xf32, #tpu.memory_space<vmem>>, vector<1x128xf32>
    %54 = vector.broadcast %53 : vector<1x128xf32> to vector<180x128xf32>
    %55 = arith.mulf %52, %54 : vector<180x128xf32>
    %c0_47 = arith.constant 0 : index
    %c0_48 = arith.constant 0 : index
    %56 = vector.load %arg8[%c0_47, %c0_48] : memref<1x128xf32, #tpu.memory_space<vmem>>, vector<1x128xf32>
    %57 = vector.broadcast %56 : vector<1x128xf32> to vector<180x128xf32>
    %58 = arith.addf %55, %57 : vector<180x128xf32>
    %cst_49 = arith.constant 0.000000e+00 : f32
    %59 = vector.broadcast %cst_49 : f32 to vector<180x128xf32>
    %60 = arith.cmpf oge, %58, %59 : vector<180x128xf32>
    %c0_50 = arith.constant 0 : index
    %c0_51 = arith.constant 0 : index
    %61 = vector.load %arg11[%c0_50, %c0_51] : memref<1x128xf32, #tpu.memory_space<vmem>>, vector<1x128xf32>
    %62 = vector.broadcast %61 : vector<1x128xf32> to vector<180x128xf32>
    %63 = arith.mulf %62, %58 : vector<180x128xf32>
    %64 = arith.select %60, %58, %63 : vector<180x128xi1>, vector<180x128xf32>
    %65 = vector.shape_cast %64 : vector<180x128xf32> to vector<10x18x128xf32>
    %66 = tpu.iota {dimensions = array<i32: 0>} : vector<10x18x1xi32>
    %c8_i32_52 = arith.constant 8 : i32
    %67 = arith.muli %arg1, %c8_i32_52 : i32
    %c1_i32 = arith.constant 1 : i32
    %68 = arith.subi %67, %c1_i32 : i32
    %69 = vector.broadcast %68 : i32 to vector<10x18x1xi32>
    %70 = arith.addi %66, %69 : vector<10x18x1xi32>
    %71 = tpu.iota {dimensions = array<i32: 1>} : vector<10x18x1xi32>
    %c1_i32_53 = arith.constant 1 : i32
    %72 = vector.broadcast %c1_i32_53 : i32 to vector<10x18x1xi32>
    %73 = arith.subi %71, %72 : vector<10x18x1xi32>
    %c0_i32_54 = arith.constant 0 : i32
    %74 = vector.broadcast %c0_i32_54 : i32 to vector<10x18x1xi32>
    %75 = arith.cmpi sge, %70, %74 : vector<10x18x1xi32>
    %c16_i32_55 = arith.constant 16 : i32
    %76 = vector.broadcast %c16_i32_55 : i32 to vector<10x18x1xi32>
    %77 = arith.cmpi slt, %70, %76 : vector<10x18x1xi32>
    %78 = arith.andi %75, %77 : vector<10x18x1xi1>
    %c0_i32_56 = arith.constant 0 : i32
    %79 = vector.broadcast %c0_i32_56 : i32 to vector<10x18x1xi32>
    %80 = arith.cmpi sge, %73, %79 : vector<10x18x1xi32>
    %81 = arith.andi %78, %80 : vector<10x18x1xi1>
    %c16_i32_57 = arith.constant 16 : i32
    %82 = vector.broadcast %c16_i32_57 : i32 to vector<10x18x1xi32>
    %83 = arith.cmpi slt, %73, %82 : vector<10x18x1xi32>
    %84 = arith.andi %81, %83 : vector<10x18x1xi1>
    %cst_58 = arith.constant 0.000000e+00 : f32
    %85 = vector.shape_cast %84 : vector<10x18x1xi1> to vector<10x18x1xi1>
    %86 = vector.broadcast %85 : vector<10x18x1xi1> to vector<10x18x128xi1>
    %87 = vector.broadcast %cst_58 : f32 to vector<10x18x128xf32>
    %88 = arith.select %86, %65, %87 : vector<10x18x128xi1>, vector<10x18x128xf32>
    %89 = arith.truncf %88 : vector<10x18x128xf32> to vector<10x18x128xbf16>
    %c0_59 = arith.constant 0 : index
    %c0_60 = arith.constant 0 : index
    %c0_61 = arith.constant 0 : index
    %90 = vector.load %arg15[%c0_59, %c0_60, %c0_61] : memref<10x18x128xbf16, #tpu.memory_space<vmem>>, vector<10x18x128xbf16>
    tpu.vector_store %arg15[%c0_59, %c0_60, %c0_61], %89 {strides = array<i32>} : memref<10x18x128xbf16, #tpu.memory_space<vmem>>, vector<10x18x128xbf16>,
    %c0_62 = arith.constant 0 : index
    %c0_63 = arith.constant 0 : index
    %c0_64 = arith.constant 0 : index
    %91 = vector.load %arg15[%c0_62, %c0_63, %c0_64] : memref<10x18x128xbf16, #tpu.memory_space<vmem>>, vector<8x16x128xbf16>
    %c0_65 = arith.constant 0 : index
    %c1_66 = arith.constant 1 : index
    %c0_67 = arith.constant 0 : index
    %92 = vector.load %arg15[%c0_65, %c1_66, %c0_67] : memref<10x18x128xbf16, #tpu.memory_space<vmem>>, vector<8x16x128xbf16>
    %c0_68 = arith.constant 0 : index
    %c2_69 = arith.constant 2 : index
    %c0_70 = arith.constant 0 : index
    %93 = vector.load %arg15[%c0_68, %c2_69, %c0_70] : memref<10x18x128xbf16, #tpu.memory_space<vmem>>, vector<8x16x128xbf16>
    %c1_71 = arith.constant 1 : index
    %c0_72 = arith.constant 0 : index
    %c0_73 = arith.constant 0 : index
    %94 = vector.load %arg15[%c1_71, %c0_72, %c0_73] : memref<10x18x128xbf16, #tpu.memory_space<vmem>>, vector<8x16x128xbf16>
    %c1_74 = arith.constant 1 : index
    %c1_75 = arith.constant 1 : index
    %c0_76 = arith.constant 0 : index
    %95 = vector.load %arg15[%c1_74, %c1_75, %c0_76] : memref<10x18x128xbf16, #tpu.memory_space<vmem>>, vector<8x16x128xbf16>
    %c1_77 = arith.constant 1 : index
    %c2_78 = arith.constant 2 : index
    %c0_79 = arith.constant 0 : index
    %96 = vector.load %arg15[%c1_77, %c2_78, %c0_79] : memref<10x18x128xbf16, #tpu.memory_space<vmem>>, vector<8x16x128xbf16>
    %c2_80 = arith.constant 2 : index
    %c0_81 = arith.constant 0 : index
    %c0_82 = arith.constant 0 : index
    %97 = vector.load %arg15[%c2_80, %c0_81, %c0_82] : memref<10x18x128xbf16, #tpu.memory_space<vmem>>, vector<8x16x128xbf16>
    %c2_83 = arith.constant 2 : index
    %c1_84 = arith.constant 1 : index
    %c0_85 = arith.constant 0 : index
    %98 = vector.load %arg15[%c2_83, %c1_84, %c0_85] : memref<10x18x128xbf16, #tpu.memory_space<vmem>>, vector<8x16x128xbf16>
    %c2_86 = arith.constant 2 : index
    %c2_87 = arith.constant 2 : index
    %c0_88 = arith.constant 0 : index
    %99 = vector.load %arg15[%c2_86, %c2_87, %c0_88] : memref<10x18x128xbf16, #tpu.memory_space<vmem>>, vector<8x16x128xbf16>
    %100 = tpu.concatenate %91, %92, %93, %94, %95, %96, %97, %98, %99 in 2 : vector<8x16x128xbf16>, vector<8x16x128xbf16>, vector<8x16x128xbf16>, vector<8x16x128xbf16>, vector<8x16x128xbf16>, vector<8x16x128xbf16>, vector<8x16x128xbf16>, vector<8x16x128xbf16>, vector<8x16x128xbf16> -> vector<8x16x1152xbf16>
    %101 = vector.shape_cast %100 : vector<8x16x1152xbf16> to vector<128x1152xbf16>
    %c0_89 = arith.constant 0 : index
    %c0_90 = arith.constant 0 : index
    %102 = vector.load %arg4[%c0_89, %c0_90] : memref<1152x128xbf16, #tpu.memory_space<vmem>>, vector<1152x128xbf16>
    %cst_91 = arith.constant dense<0.000000e+00> : vector<128x128xf32>
    %103 = tpu.matmul %101, %102, %cst_91 {dimension_numbers = #tpu.dot_dimension_numbers<[1], [0], [0], [1], [0, 0, 1, 1], [], []>} : vector<128x1152xbf16>, vector<1152x128xbf16>, vector<128x128xf32> -> vector<128x128xf32>
    %c0_92 = arith.constant 0 : index
    %c0_93 = arith.constant 0 : index
    %104 = vector.load %arg9[%c0_92, %c0_93] : memref<1x128xf32, #tpu.memory_space<vmem>>, vector<1x128xf32>
    %105 = vector.broadcast %104 : vector<1x128xf32> to vector<128x128xf32>
    %106 = arith.mulf %103, %105 : vector<128x128xf32>
    %c0_94 = arith.constant 0 : index
    %c0_95 = arith.constant 0 : index
    %107 = vector.load %arg10[%c0_94, %c0_95] : memref<1x128xf32, #tpu.memory_space<vmem>>, vector<1x128xf32>
    %108 = vector.broadcast %107 : vector<1x128xf32> to vector<128x128xf32>
    %109 = arith.addf %106, %108 : vector<128x128xf32>
    %c2_96 = arith.constant 2 : index
    %c2_97 = arith.constant 2 : index
    %c0_98 = arith.constant 0 : index
    %110 = vector.load %arg13[%c2_96, %c2_97, %c0_98] : memref<12x20x128xf32, #tpu.memory_space<vmem>>, vector<8x16x128xf32>
    %111 = vector.shape_cast %110 : vector<8x16x128xf32> to vector<128x128xf32>
    %112 = arith.addf %109, %111 : vector<128x128xf32>
    %113 = vector.shape_cast %112 : vector<128x128xf32> to vector<8x16x128xf32>
    %c0_99 = arith.constant 0 : index
    %c0_100 = arith.constant 0 : index
    %c0_101 = arith.constant 0 : index
    %c0_102 = arith.constant 0 : index
    %114 = vector.load %arg12[%c0_99, %c0_100, %c0_101, %c0_102] : memref<1x8x16x128xf32, #tpu.memory_space<vmem>>, vector<1x8x16x128xf32>
    %115 = vector.shape_cast %114 : vector<1x8x16x128xf32> to vector<8x16x128xf32>
    %116 = vector.shape_cast %113 : vector<8x16x128xf32> to vector<1x8x16x128xf32>
    tpu.vector_store %arg12[%c0_99, %c0_100, %c0_101, %c0_102], %116 {strides = array<i32>} : memref<1x8x16x128xf32, #tpu.memory_space<vmem>>, vector<1x8x16x128xf32>,
    return
  }
  func.func @transform_1(%arg0: i32, %arg1: i32) -> (i32, i32) {
    %c0_i32 = arith.constant 0 : i32
    %c0_i32_0 = arith.constant 0 : i32
    %c0_i32_1 = arith.constant 0 : i32
    return %c0_i32, %c0_i32_0 : i32, i32
  }
  func.func @transform_2(%arg0: i32, %arg1: i32) -> (i32, i32) {
    %c0_i32 = arith.constant 0 : i32
    %c0_i32_0 = arith.constant 0 : i32
    %c0_i32_1 = arith.constant 0 : i32
    return %c0_i32, %c0_i32_0 : i32, i32
  }
  func.func @transform_3(%arg0: i32, %arg1: i32) -> (i32, i32) {
    %c0_i32 = arith.constant 0 : i32
    %c0_i32_0 = arith.constant 0 : i32
    %c0_i32_1 = arith.constant 0 : i32
    return %c0_i32, %c0_i32_0 : i32, i32
  }
  func.func @transform_4(%arg0: i32, %arg1: i32) -> (i32, i32) {
    %c0_i32 = arith.constant 0 : i32
    %c0_i32_0 = arith.constant 0 : i32
    %c0_i32_1 = arith.constant 0 : i32
    return %c0_i32, %c0_i32_0 : i32, i32
  }
  func.func @transform_5(%arg0: i32, %arg1: i32) -> (i32, i32) {
    %c0_i32 = arith.constant 0 : i32
    %c0_i32_0 = arith.constant 0 : i32
    %c0_i32_1 = arith.constant 0 : i32
    return %c0_i32, %c0_i32_0 : i32, i32
  }
  func.func @transform_6(%arg0: i32, %arg1: i32) -> (i32, i32) {
    %c0_i32 = arith.constant 0 : i32
    %c0_i32_0 = arith.constant 0 : i32
    %c0_i32_1 = arith.constant 0 : i32
    return %c0_i32, %c0_i32_0 : i32, i32
  }
  func.func @transform_7(%arg0: i32, %arg1: i32) -> (i32, i32) {
    %c0_i32 = arith.constant 0 : i32
    %c0_i32_0 = arith.constant 0 : i32
    %c0_i32_1 = arith.constant 0 : i32
    return %c0_i32, %c0_i32_0 : i32, i32
  }
  func.func @transform_8(%arg0: i32, %arg1: i32) -> (i32, i32) {
    %c0_i32 = arith.constant 0 : i32
    %c0_i32_0 = arith.constant 0 : i32
    %c0_i32_1 = arith.constant 0 : i32
    return %c0_i32, %c0_i32_0 : i32, i32
  }
  func.func @transform_9(%arg0: i32, %arg1: i32) -> (i32, i32) {
    %c0_i32 = arith.constant 0 : i32
    %c0_i32_0 = arith.constant 0 : i32
    %c0_i32_1 = arith.constant 0 : i32
    return %c0_i32, %c0_i32_0 : i32, i32
  }
  func.func @transform_10(%arg0: i32, %arg1: i32) -> (i32, i32, i32, i32) {
    %c0_i32 = arith.constant 0 : i32
    %c0_i32_0 = arith.constant 0 : i32
    %c0_i32_1 = arith.constant 0 : i32
    return %arg0, %arg1, %c0_i32, %c0_i32_0 : i32, i32, i32, i32
  }
}

</mosaic_0001>

<llo_original>
// kernel: tpu_custom_call.1
$region0: #{tpu_custom_call.1}
  #allocation0 [shape = 'u32[]', space=smem, size = 0x4, offset = 0x4, fixed_abs, tag = 'smem constant byte address 0x4 - core index']
  #allocation1 [shape = 'u32[144,128]{1,0:T(1,128)}', space=vmem, size = 0x12000, scoped, tag = 'internal scratch']
  #allocation2 [shape = 'f32[12,20,128]{2,1,0:T(8,128)}', space=vmem, size = 0x24000, scoped, tag = 'scratch operand']
  #allocation3 [shape = 'bf16[12,20,128]{2,1,0:T(8,128)(2,1)}', space=vmem, size = 0x12000, scoped, tag = 'scratch operand']
  #allocation4 [shape = 'bf16[10,18,128]{2,1,0:T(8,128)(2,1)}', space=vmem, size = 0xf000, scoped, tag = 'scratch operand']
  #allocation5 [shape = 's32[1]{0}', space=sflag, size = 0x4, scoped, tag = 'scratch operand']
  #allocation8 [shape = 's32[]', space=sflag, size = 0x4, offset = 0, fixed_abs, tag = 'sflag constant byte address 0x0 - dummy sync flag']
  %s0 = inlined_call_operand.vmem [shape: f32[2,20,20,128], index: 0, kind: input, shape index: {}]
  %s1 = inlined_call_operand.vmem [shape: bf16[1152,128], index: 1, kind: input, shape index: {}]
  %s2 = inlined_call_operand.vmem [shape: bf16[1152,128], index: 2, kind: input, shape index: {}]
  %s3 = inlined_call_operand.vmem [shape: f32[1,128], index: 3, kind: input, shape index: {}]
  %s4 = inlined_call_operand.vmem [shape: f32[1,128], index: 4, kind: input, shape index: {}]
  %s5 = inlined_call_operand.vmem [shape: f32[1,128], index: 5, kind: input, shape index: {}]
  %s6 = inlined_call_operand.vmem [shape: f32[1,128], index: 6, kind: input, shape index: {}]
  %s7 = inlined_call_operand.vmem [shape: f32[1,128], index: 7, kind: input, shape index: {}]
  %s8 = inlined_call_operand.vmem [shape: f32[1,128], index: 8, kind: input, shape index: {}]
  %s9 = inlined_call_operand.vmem [shape: f32[1,128], index: 9, kind: input, shape index: {}]
  %s10 = inlined_call_operand.hbm [shape: f32[2,16,16,128], index: 10, kind: output, shape index: {}]
  %s11 = sld [smem:[#allocation0]]
  $region106: #{tpu_custom_call.1} parent=0
    _
  %s13 = ssub.s32 1, %s11
  %s14 = scalar_select 0, %s13, %s11
  $region1: #{tpu_custom_call.1} parent=0
    #allocation6 [shape = 'u8[131072]{0}', space=vmem, size = 0x20000, scoped, tag = 'output window, operand 0']
    #allocation7 [shape = 's32[2]{0}', space=sflag, size = 0x8, scoped, tag = 'scoped memory for tpu_custom_call.1']
    %15 = vsyncpa [#allocation7], 0
    %s16 = scalar_lea.sflag [#allocation7], 1
    %17 = vsyncpa %s16, 0
    loop: start=0, step=1, limit=6
    $region2: #{tpu_custom_call.1} parent=1 // loop_pre_header
      _
    $region3: #{tpu_custom_call.1} parent=1 // loop_header
      %s19 = sphi 0, %s23
      %p20 = scmp.ge.s32.totalorder %s19, 6
      %s26 = sphi 0, %s38
      %s27 = sphi 0, %s34
      %s28 = sphi 0, %s26
      %s29 = sphi 0, %s27
      %s30 = sphi 0, %s28
      %s31 = sphi 0, %s29
      %s39 = sphi 0, %s39
      %s41 = sphi 0, %s39
      %s42 = sphi 0, %s41
      %s56 = sphi 0, %s42
      %s60 = sphi 0, %s60
      %s62 = sphi 0, %s60
      %s63 = sphi 0, %s62
      %s77 = sphi 0, %s63
      %s81 = sphi 0, %s81
      %s83 = sphi 0, %s81
      %s84 = sphi 0, %s83
      %s98 = sphi 0, %s84
      %s102 = sphi 0, %s102
      %s104 = sphi 0, %s102
      %s105 = sphi 0, %s104
      %s119 = sphi 0, %s105
      %s123 = sphi 0, %s123
      %s125 = sphi 0, %s123
      %s126 = sphi 0, %s125
      %s140 = sphi 0, %s126
      %s144 = sphi 0, %s144
      %s146 = sphi 0, %s144
      %s147 = sphi 0, %s146
      %s161 = sphi 0, %s147
      %s165 = sphi 0, %s165
      %s167 = sphi 0, %s165
      %s168 = sphi 0, %s167
      %s182 = sphi 0, %s168
      %s186 = sphi 0, %s186
      %s188 = sphi 0, %s186
      %s189 = sphi 0, %s188
      %s203 = sphi 0, %s189
      %s207 = sphi 0, %s207
      %s209 = sphi 0, %s207
      %s210 = sphi 0, %s209
      %s224 = sphi 0, %s210
      %s232 = sphi 0, %s234
      %s235 = sphi 0, %s232
      %s236 = sphi 0, %s235
      %s252 = sphi 0, %s236
    $region4: #{tpu_custom_call.1} parent=1 // loop_header_branch
      %22 = sbr.rel (%p20) target = $region8
    $region5: #{tpu_custom_call.1} parent=1 // loop_body
      %s24 = ssub.s32 %s19, 1
      %s25 = ssub.s32 %s19, 2
      %s32 = sadd.s32 1, %s27
      %p33 = scmp.ge.s32.totalorder %s32, 2
      %s34 = scalar_select %p33, 0, %s32
      %s35 = sadd.s32 1, %s26
      %s36 = scalar_select %p33, %s35, %s26
      %p37 = scmp.ge.s32.totalorder %s36, 2
      %s38 = scalar_select %p37, 0, %s36
      %s40 = sadd.s32 %s39, 1
      %p43 = scmp.eq.s32.totalorder %s19, 3
      %p44 = scmp.ne.s32.totalorder %s39, %s41
      %p45 = scmp.eq.s32.totalorder %s19, 0
      %p46 = por %p44, %p45
      %p47 = scmp.ne.s32.totalorder %s39, %s41
      %p48 = scmp.eq.s32.totalorder %s24, 3
      %p49 = por %p47, %p48
      %p50 = scmp.ne.s32.totalorder %s41, %s42
      %p51 = scmp.eq.s32.totalorder %s24, 0
      %p52 = por %p50, %p51
      %p53 = scmp.ne.s32.totalorder %s41, %s42
      %p54 = scmp.eq.s32.totalorder %s25, 3
      %p55 = por %p53, %p54
      %p57 = scmp.ne.s32.totalorder %s42, %s56
      %p58 = scmp.eq.s32.totalorder %s25, 0
      %p59 = por %p57, %p58
      %s61 = sadd.s32 %s60, 1
      %p64 = scmp.eq.s32.totalorder %s19, 3
      %p65 = scmp.ne.s32.totalorder %s60, %s62
      %p66 = scmp.eq.s32.totalorder %s19, 0
      %p67 = por %p65, %p66
      %p68 = scmp.ne.s32.totalorder %s60, %s62
      %p69 = scmp.eq.s32.totalorder %s24, 3
      %p70 = por %p68, %p69
      %p71 = scmp.ne.s32.totalorder %s62, %s63
      %p72 = scmp.eq.s32.totalorder %s24, 0
      %p73 = por %p71, %p72
      %p74 = scmp.ne.s32.totalorder %s62, %s63
      %p75 = scmp.eq.s32.totalorder %s25, 3
      %p76 = por %p74, %p75
      %p78 = scmp.ne.s32.totalorder %s63, %s77
      %p79 = scmp.eq.s32.totalorder %s25, 0
      %p80 = por %p78, %p79
      %s82 = sadd.s32 %s81, 1
      %p85 = scmp.eq.s32.totalorder %s19, 3
      %p86 = scmp.ne.s32.totalorder %s81, %s83
      %p87 = scmp.eq.s32.totalorder %s19, 0
      %p88 = por %p86, %p87
      %p89 = scmp.ne.s32.totalorder %s81, %s83
      %p90 = scmp.eq.s32.totalorder %s24, 3
      %p91 = por %p89, %p90
      %p92 = scmp.ne.s32.totalorder %s83, %s84
      %p93 = scmp.eq.s32.totalorder %s24, 0
      %p94 = por %p92, %p93
      %p95 = scmp.ne.s32.totalorder %s83, %s84
      %p96 = scmp.eq.s32.totalorder %s25, 3
      %p97 = por %p95, %p96
      %p99 = scmp.ne.s32.totalorder %s84, %s98
      %p100 = scmp.eq.s32.totalorder %s25, 0
      %p101 = por %p99, %p100
      %s103 = sadd.s32 %s102, 1
      %p106 = scmp.eq.s32.totalorder %s19, 3
      %p107 = scmp.ne.s32.totalorder %s102, %s104
      %p108 = scmp.eq.s32.totalorder %s19, 0
      %p109 = por %p107, %p108
      %p110 = scmp.ne.s32.totalorder %s102, %s104
      %p111 = scmp.eq.s32.totalorder %s24, 3
      %p112 = por %p110, %p111
      %p113 = scmp.ne.s32.totalorder %s104, %s105
      %p114 = scmp.eq.s32.totalorder %s24, 0
      %p115 = por %p113, %p114
      %p116 = scmp.ne.s32.totalorder %s104, %s105
      %p117 = scmp.eq.s32.totalorder %s25, 3
      %p118 = por %p116, %p117
      %p120 = scmp.ne.s32.totalorder %s105, %s119
      %p121 = scmp.eq.s32.totalorder %s25, 0
      %p122 = por %p120, %p121
      %s124 = sadd.s32 %s123, 1
      %p127 = scmp.eq.s32.totalorder %s19, 3
      %p128 = scmp.ne.s32.totalorder %s123, %s125
      %p129 = scmp.eq.s32.totalorder %s19, 0
      %p130 = por %p128, %p129
      %p131 = scmp.ne.s32.totalorder %s123, %s125
      %p132 = scmp.eq.s32.totalorder %s24, 3
      %p133 = por %p131, %p132
      %p134 = scmp.ne.s32.totalorder %s125, %s126
      %p135 = scmp.eq.s32.totalorder %s24, 0
      %p136 = por %p134, %p135
      %p137 = scmp.ne.s32.totalorder %s125, %s126
      %p138 = scmp.eq.s32.totalorder %s25, 3
      %p139 = por %p137, %p138
      %p141 = scmp.ne.s32.totalorder %s126, %s140
      %p142 = scmp.eq.s32.totalorder %s25, 0
      %p143 = por %p141, %p142
      %s145 = sadd.s32 %s144, 1
      %p148 = scmp.eq.s32.totalorder %s19, 3
      %p149 = scmp.ne.s32.totalorder %s144, %s146
      %p150 = scmp.eq.s32.totalorder %s19, 0
      %p151 = por %p149, %p150
      %p152 = scmp.ne.s32.totalorder %s144, %s146
      %p153 = scmp.eq.s32.totalorder %s24, 3
      %p154 = por %p152, %p153
      %p155 = scmp.ne.s32.totalorder %s146, %s147
      %p156 = scmp.eq.s32.totalorder %s24, 0
      %p157 = por %p155, %p156
      %p158 = scmp.ne.s32.totalorder %s146, %s147
      %p159 = scmp.eq.s32.totalorder %s25, 3
      %p160 = por %p158, %p159
      %p162 = scmp.ne.s32.totalorder %s147, %s161
      %p163 = scmp.eq.s32.totalorder %s25, 0
      %p164 = por %p162, %p163
      %s166 = sadd.s32 %s165, 1
      %p169 = scmp.eq.s32.totalorder %s19, 3
      %p170 = scmp.ne.s32.totalorder %s165, %s167
      %p171 = scmp.eq.s32.totalorder %s19, 0
      %p172 = por %p170, %p171
      %p173 = scmp.ne.s32.totalorder %s165, %s167
      %p174 = scmp.eq.s32.totalorder %s24, 3
      %p175 = por %p173, %p174
      %p176 = scmp.ne.s32.totalorder %s167, %s168
      %p177 = scmp.eq.s32.totalorder %s24, 0
      %p178 = por %p176, %p177
      %p179 = scmp.ne.s32.totalorder %s167, %s168
      %p180 = scmp.eq.s32.totalorder %s25, 3
      %p181 = por %p179, %p180
      %p183 = scmp.ne.s32.totalorder %s168, %s182
      %p184 = scmp.eq.s32.totalorder %s25, 0
      %p185 = por %p183, %p184
      %s187 = sadd.s32 %s186, 1
      %p190 = scmp.eq.s32.totalorder %s19, 3
      %p191 = scmp.ne.s32.totalorder %s186, %s188
      %p192 = scmp.eq.s32.totalorder %s19, 0
      %p193 = por %p191, %p192
      %p194 = scmp.ne.s32.totalorder %s186, %s188
      %p195 = scmp.eq.s32.totalorder %s24, 3
      %p196 = por %p194, %p195
      %p197 = scmp.ne.s32.totalorder %s188, %s189
      %p198 = scmp.eq.s32.totalorder %s24, 0
      %p199 = por %p197, %p198
      %p200 = scmp.ne.s32.totalorder %s188, %s189
      %p201 = scmp.eq.s32.totalorder %s25, 3
      %p202 = por %p200, %p201
      %p204 = scmp.ne.s32.totalorder %s189, %s203
      %p205 = scmp.eq.s32.totalorder %s25, 0
      %p206 = por %p204, %p205
      %s208 = sadd.s32 %s207, 1
      %p211 = scmp.eq.s32.totalorder %s19, 3
      %p212 = scmp.ne.s32.totalorder %s207, %s209
      %p213 = scmp.eq.s32.totalorder %s19, 0
      %p214 = por %p212, %p213
      %p215 = scmp.ne.s32.totalorder %s207, %s209
      %p216 = scmp.eq.s32.totalorder %s24, 3
      %p217 = por %p215, %p216
      %p218 = scmp.ne.s32.totalorder %s209, %s210
      %p219 = scmp.eq.s32.totalorder %s24, 0
      %p220 = por %p218, %p219
      %p221 = scmp.ne.s32.totalorder %s209, %s210
      %p222 = scmp.eq.s32.totalorder %s25, 3
      %p223 = por %p221, %p222
      %p225 = scmp.ne.s32.totalorder %s210, %s224
      %p226 = scmp.eq.s32.totalorder %s25, 0
      %p227 = por %p225, %p226
      %s228 = ssub.s32 %s26, %s38
      %s229 = ssub.s32 %s27, %s34
      %s230 = sor.u32 %s228, %s229
      %p231 = scmp.eq.s32.totalorder %s230, 0
      %s233 = sadd.s32 %s232, 1
      %s234 = scalar_select %p231, %s232, %s233
      %p237 = pneg %p231
      %p238 = scmp.eq.s32.totalorder %s19, 3
      %p239 = por %p237, %p238
      %p240 = scmp.ne.s32.totalorder %s232, %s235
      %p241 = scmp.eq.s32.totalorder %s19, 0
      %p242 = por %p240, %p241
      %p243 = scmp.ne.s32.totalorder %s232, %s235
      %p244 = scmp.eq.s32.totalorder %s24, 3
      %p245 = por %p243, %p244
      %p246 = scmp.ne.s32.totalorder %s235, %s236
      %p247 = scmp.eq.s32.totalorder %s24, 0
      %p248 = por %p246, %p247
      %p249 = scmp.ne.s32.totalorder %s235, %s236
      %p250 = scmp.eq.s32.totalorder %s25, 3
      %p251 = por %p249, %p250
      %p253 = scmp.ne.s32.totalorder %s236, %s252
      %p254 = scmp.eq.s32.totalorder %s25, 0
      %p255 = por %p253, %p254
      %p256 = scmp.le.s32.totalorder 1, %s19
      %p257 = scmp.lt.s32.totalorder %s19, 5
      %p258 = pnand %p256, %p257
      %p259 = pneg %p258
      // Predicated region
      $region9: #{tpu_custom_call.1} parent=5 // pred_check
        _
      $region10: #{tpu_custom_call.1} parent=5 // pred_check_branch
        %261 = sbr.rel (%p258) target = $region12
      $region11: #{tpu_custom_call.1} parent=5 // pred_region
        %s262 = ssub.s32 %s19, 1
        // Predicated region
        $region13: #{tpu_custom_call.1} parent=11 // pred_check
          %p263 = pneg %p52
        $region14: #{tpu_custom_call.1} parent=11 // pred_check_branch
          %265 = sbr.rel (%p263) target = $region16
        $region15: #{tpu_custom_call.1} parent=11 // pred_region
          _
        $region16: #{tpu_custom_call.1} parent=11 // pred_fallthru
          _
        // Predicated region
        $region17: #{tpu_custom_call.1} parent=11 // pred_check
          %p266 = pneg %p73
        $region18: #{tpu_custom_call.1} parent=11 // pred_check_branch
          %268 = sbr.rel (%p266) target = $region20
        $region19: #{tpu_custom_call.1} parent=11 // pred_region
          _
        $region20: #{tpu_custom_call.1} parent=11 // pred_fallthru
          _
        // Predicated region
        $region21: #{tpu_custom_call.1} parent=11 // pred_check
          %p269 = pneg %p94
        $region22: #{tpu_custom_call.1} parent=11 // pred_check_branch
          %271 = sbr.rel (%p269) target = $region24
        $region23: #{tpu_custom_call.1} parent=11 // pred_region
          _
        $region24: #{tpu_custom_call.1} parent=11 // pred_fallthru
          _
        // Predicated region
        $region25: #{tpu_custom_call.1} parent=11 // pred_check
          %p272 = pneg %p115
        $region26: #{tpu_custom_call.1} parent=11 // pred_check_branch
          %274 = sbr.rel (%p272) target = $region28
        $region27: #{tpu_custom_call.1} parent=11 // pred_region
          _
        $region28: #{tpu_custom_call.1} parent=11 // pred_fallthru
          _
        // Predicated region
        $region29: #{tpu_custom_call.1} parent=11 // pred_check
          %p275 = pneg %p136
        $region30: #{tpu_custom_call.1} parent=11 // pred_check_branch
          %277 = sbr.rel (%p275) target = $region32
        $region31: #{tpu_custom_call.1} parent=11 // pred_region
          _
        $region32: #{tpu_custom_call.1} parent=11 // pred_fallthru
          _
        // Predicated region
        $region33: #{tpu_custom_call.1} parent=11 // pred_check
          %p278 = pneg %p157
        $region34: #{tpu_custom_call.1} parent=11 // pred_check_branch
          %280 = sbr.rel (%p278) target = $region36
        $region35: #{tpu_custom_call.1} parent=11 // pred_region
          _
        $region36: #{tpu_custom_call.1} parent=11 // pred_fallthru
          _
        // Predicated region
        $region37: #{tpu_custom_call.1} parent=11 // pred_check
          %p281 = pneg %p178
        $region38: #{tpu_custom_call.1} parent=11 // pred_check_branch
          %283 = sbr.rel (%p281) target = $region40
        $region39: #{tpu_custom_call.1} parent=11 // pred_region
          _
        $region40: #{tpu_custom_call.1} parent=11 // pred_fallthru
          _
        // Predicated region
        $region41: #{tpu_custom_call.1} parent=11 // pred_check
          %p284 = pneg %p199
        $region42: #{tpu_custom_call.1} parent=11 // pred_check_branch
          %286 = sbr.rel (%p284) target = $region44
        $region43: #{tpu_custom_call.1} parent=11 // pred_region
          _
        $region44: #{tpu_custom_call.1} parent=11 // pred_fallthru
          _
        // Predicated region
        $region45: #{tpu_custom_call.1} parent=11 // pred_check
          %p287 = pneg %p220
        $region46: #{tpu_custom_call.1} parent=11 // pred_check_branch
          %289 = sbr.rel (%p287) target = $region48
        $region47: #{tpu_custom_call.1} parent=11 // pred_region
          _
        $region48: #{tpu_custom_call.1} parent=11 // pred_fallthru
          _
      $region12: #{tpu_custom_call.1} parent=5 // pred_fallthru
        _
      %p290 = scmp.lt.s32.totalorder %s19, 4
      // Predicated region
      $region49: #{tpu_custom_call.1} parent=5 // pred_check
        %p291 = pneg %p290
      $region50: #{tpu_custom_call.1} parent=5 // pred_check_branch
        %293 = sbr.rel (%p291) target = $region52
      $region51: #{tpu_custom_call.1} parent=5 // pred_region
        _
      $region52: #{tpu_custom_call.1} parent=5 // pred_fallthru
        _
      %p294 = scmp.le.s32.totalorder 1, %s19
      %p295 = scmp.lt.s32.totalorder %s19, 5
      %p296 = pnand %p294, %p295
      %p297 = pneg %p296
      // Predicated region
      $region53: #{tpu_custom_call.1} parent=5 // pred_check
        _
      $region54: #{tpu_custom_call.1} parent=5 // pred_check_branch
        %299 = sbr.rel (%p296) target = $region56
      $region55: #{tpu_custom_call.1} parent=5 // pred_region
        %s300 = ssub.s32 %s19, 1
        %p301 = pneg %p52
        %p302 = pneg %p49
        %p303 = pneg %p73
        %p304 = pneg %p70
        %p305 = pneg %p94
        %p306 = pneg %p91
        %p307 = pneg %p115
        %p308 = pneg %p112
        %p309 = pneg %p136
        %p310 = pneg %p133
        %p311 = pneg %p157
        %p312 = pneg %p154
        %p313 = pneg %p178
        %p314 = pneg %p175
        %p315 = pneg %p199
        %p316 = pneg %p196
        %p317 = pneg %p220
        %p318 = pneg %p217
        %p319 = pneg %p248
        %p320 = pneg %p245
        %s321 = sand.u32 %s235, 1
        %s322 = scalar_lea.sflag [#allocation7], %s321
        %s323 = sand.u32 %s235, 1
        %s324 = smul.addr %s323, 128
        %s325 = scalar_lea.vmem [#allocation6], %s324
        %s326 = smul.u32 8, %s29
        %s328 = smul.u32 %s29, 8
        %s329 = smul.u32 %s328, 24
        %s330 = smul.u32 %s28, 480
        %s331 = sadd.s32 %s329, %s330
        %s332 = scalar_lea.vmem %s0, %s331
        %p334 = scmp.lt.u32.totalorder 20, 8
        %p335 = pneg %p334
        // Predicated region
        $region57: #{tpu_custom_call.1} parent=55 // pred_check
          _
        $region58: #{tpu_custom_call.1} parent=55 // pred_check_branch
          %337 = sbr.rel (%p334) target = $region60
        $region59: #{tpu_custom_call.1} parent=55 // pred_region
          %s375 = sand.u32 20, 7
          %p376 = scmp.eq.s32.totalorder %s375, 0
          %p377 = pneg %p376
          // Predicated region
          $region72: #{tpu_custom_call.1} parent=59 // pred_check
            _
          $region73: #{tpu_custom_call.1} parent=59 // pred_check_branch
            %379 = sbr.rel (%p376) target = $region75
          $region74: #{tpu_custom_call.1} parent=59 // pred_region
            %s380 = sand.u32 20, 7
            %s381 = ssub.s32 20, %s380
            %s382 = scalar_lea.vmem %s332, %s381
            %s383 = ssub.s32 20, %s380
            %s384 = scalar_lea.vmem [#allocation2], %s383
            loop: start=0, step=1, limit=1
            $region76: #{tpu_custom_call.1} parent=74 // loop_pre_header
              _
            $region77: #{tpu_custom_call.1} parent=74 // loop_header
              %s386 = sphi 0, %s390
              %p387 = scmp.ge.s32.totalorder %s386, 1
              %s391 = sphi %s332, %s332
              %s392 = sphi [#allocation2], [#allocation2]
            $region78: #{tpu_custom_call.1} parent=74 // loop_header_branch
              %389 = sbr.rel (%p387) target = $region82
            $region79: #{tpu_custom_call.1} parent=74 // loop_body
              %v393 = vld [vmem:[%s391] sm:$0xff]
              %394 = vst [vmem:[%s392] sm:$0xff] %v393
              %v395 = vld [vmem:[%s391 + $0x8] sm:$0xff]
              %396 = vst [vmem:[%s392 + $0x8] sm:$0xff] %v395
              %v397 = vld [vmem:[%s391 + $0x18] sm:$0xff]
              %398 = vst [vmem:[%s392 + $0x18] sm:$0xff] %v397
              %v399 = vld [vmem:[%s391 + $0x20] sm:$0xff]
              %400 = vst [vmem:[%s392 + $0x20] sm:$0xff] %v399
              %v401 = vld [vmem:[%s391 + $0x30] sm:$0xff]
              %402 = vst [vmem:[%s392 + $0x30] sm:$0xff] %v401
              %v403 = vld [vmem:[%s391 + $0x38] sm:$0xff]
              %404 = vst [vmem:[%s392 + $0x38] sm:$0xff] %v403
              %v405 = vld [vmem:[%s391 + $0x48] sm:$0xff]
              %406 = vst [vmem:[%s392 + $0x48] sm:$0xff] %v405
              %v407 = vld [vmem:[%s391 + $0x50] sm:$0xff]
              %408 = vst [vmem:[%s392 + $0x50] sm:$0xff] %v407
              %v409 = vld [vmem:[%s391 + $0x60] sm:$0xff]
              %410 = vst [vmem:[%s392 + $0x60] sm:$0xff] %v409
              %v411 = vld [vmem:[%s391 + $0x68] sm:$0xff]
              %412 = vst [vmem:[%s392 + $0x68] sm:$0xff] %v411
              %v413 = vld [vmem:[%s391 + $0x78] sm:$0xff]
              %414 = vst [vmem:[%s392 + $0x78] sm:$0xff] %v413
              %v415 = vld [vmem:[%s391 + $0x80] sm:$0xff]
              %416 = vst [vmem:[%s392 + $0x80] sm:$0xff] %v415
              %v417 = vld [vmem:[%s391 + $0x90] sm:$0xff]
              %418 = vst [vmem:[%s392 + $0x90] sm:$0xff] %v417
              %v419 = vld [vmem:[%s391 + $0x98] sm:$0xff]
              %420 = vst [vmem:[%s392 + $0x98] sm:$0xff] %v419
              %v421 = vld [vmem:[%s391 + $0xa8] sm:$0xff]
              %422 = vst [vmem:[%s392 + $0xa8] sm:$0xff] %v421
              %v423 = vld [vmem:[%s391 + $0xb0] sm:$0xff]
              %424 = vst [vmem:[%s392 + $0xb0] sm:$0xff] %v423
              %v425 = vld [vmem:[%s391 + $0xc0] sm:$0xff]
              %426 = vst [vmem:[%s392 + $0xc0] sm:$0xff] %v425
              %v427 = vld [vmem:[%s391 + $0xc8] sm:$0xff]
              %428 = vst [vmem:[%s392 + $0xc8] sm:$0xff] %v427
              %v429 = vld [vmem:[%s391 + $0xd8] sm:$0xff]
              %430 = vst [vmem:[%s392 + $0xd8] sm:$0xff] %v429
              %v431 = vld [vmem:[%s391 + $0xe0] sm:$0xff]
              %432 = vst [vmem:[%s392 + $0xe0] sm:$0xff] %v431
              %v433 = vld [vmem:[%s391 + $0xf0] sm:$0xff]
              %434 = vst [vmem:[%s392 + $0xf0] sm:$0xff] %v433
              %v435 = vld [vmem:[%s391 + $0xf8] sm:$0xff]
              %436 = vst [vmem:[%s392 + $0xf8] sm:$0xff] %v435
              %v437 = vld [vmem:[%s391 + $0x108] sm:$0xff]
              %438 = vst [vmem:[%s392 + $0x108] sm:$0xff] %v437
              %v439 = vld [vmem:[%s391 + $0x110] sm:$0xff]
              %440 = vst [vmem:[%s392 + $0x110] sm:$0xff] %v439
            $region80: #{tpu_custom_call.1} parent=74 // loop_footer
              %s390 = sadd.s32 1, %s386
            $region81: #{tpu_custom_call.1} parent=74 // loop_footer_branch
              %385 = sbr.rel target = $region77
            $region82: #{tpu_custom_call.1} parent=74 // loop_exit
              _
            %s441 = sshll.u32 1, %s380
            %s442 = ssub.s32 %s441, 1
            loop: start=0, step=1, limit=1
            $region83: #{tpu_custom_call.1} parent=74 // loop_pre_header
              _
            $region84: #{tpu_custom_call.1} parent=74 // loop_header
              %s444 = sphi 0, %s448
              %p445 = scmp.ge.s32.totalorder %s444, 1
              %s449 = sphi %s382, %s382
              %s450 = sphi %s384, %s384
            $region85: #{tpu_custom_call.1} parent=74 // loop_header_branch
              %447 = sbr.rel (%p445) target = $region89
            $region86: #{tpu_custom_call.1} parent=74 // loop_body
              %v451 = vld [vmem:[%s449] sm:%s442]
              %452 = vst [vmem:[%s450] sm:%s442] %v451
              %v453 = vld [vmem:[%s449 + $0x18] sm:%s442]
              %454 = vst [vmem:[%s450 + $0x18] sm:%s442] %v453
              %v455 = vld [vmem:[%s449 + $0x30] sm:%s442]
              %456 = vst [vmem:[%s450 + $0x30] sm:%s442] %v455
              %v457 = vld [vmem:[%s449 + $0x48] sm:%s442]
              %458 = vst [vmem:[%s450 + $0x48] sm:%s442] %v457
              %v459 = vld [vmem:[%s449 + $0x60] sm:%s442]
              %460 = vst [vmem:[%s450 + $0x60] sm:%s442] %v459
              %v461 = vld [vmem:[%s449 + $0x78] sm:%s442]
              %462 = vst [vmem:[%s450 + $0x78] sm:%s442] %v461
              %v463 = vld [vmem:[%s449 + $0x90] sm:%s442]
              %464 = vst [vmem:[%s450 + $0x90] sm:%s442] %v463
              %v465 = vld [vmem:[%s449 + $0xa8] sm:%s442]
              %466 = vst [vmem:[%s450 + $0xa8] sm:%s442] %v465
              %v467 = vld [vmem:[%s449 + $0xc0] sm:%s442]
              %468 = vst [vmem:[%s450 + $0xc0] sm:%s442] %v467
              %v469 = vld [vmem:[%s449 + $0xd8] sm:%s442]
              %470 = vst [vmem:[%s450 + $0xd8] sm:%s442] %v469
              %v471 = vld [vmem:[%s449 + $0xf0] sm:%s442]
              %472 = vst [vmem:[%s450 + $0xf0] sm:%s442] %v471
              %v473 = vld [vmem:[%s449 + $0x108] sm:%s442]
              %474 = vst [vmem:[%s450 + $0x108] sm:%s442] %v473
            $region87: #{tpu_custom_call.1} parent=74 // loop_footer
              %s448 = sadd.s32 1, %s444
            $region88: #{tpu_custom_call.1} parent=74 // loop_footer_branch
              %443 = sbr.rel target = $region84
            $region89: #{tpu_custom_call.1} parent=74 // loop_exit
              _
          $region75: #{tpu_custom_call.1} parent=59 // pred_fallthru
            _
        $region60: #{tpu_custom_call.1} parent=55 // pred_fallthru
          _
        // Predicated region
        $region61: #{tpu_custom_call.1} parent=55 // pred_check
          %p338 = pneg %p334
        $region62: #{tpu_custom_call.1} parent=55 // pred_check_branch
          %340 = sbr.rel (%p338) target = $region64
        $region63: #{tpu_custom_call.1} parent=55 // pred_region
          %s341 = sshll.u32 1, 20
          %s342 = ssub.s32 %s341, 1
          loop: start=0, step=1, limit=1
          $region65: #{tpu_custom_call.1} parent=63 // loop_pre_header
            _
          $region66: #{tpu_custom_call.1} parent=63 // loop_header
            %s344 = sphi 0, %s348
            %p345 = scmp.ge.s32.totalorder %s344, 1
            %s349 = sphi %s332, %s332
            %s350 = sphi [#allocation2], [#allocation2]
          $region67: #{tpu_custom_call.1} parent=63 // loop_header_branch
            %347 = sbr.rel (%p345) target = $region71
          $region68: #{tpu_custom_call.1} parent=63 // loop_body
            %v351 = vld [vmem:[%s349] sm:%s342]
            %352 = vst [vmem:[%s350] sm:%s342] %v351
            %v353 = vld [vmem:[%s349 + $0x18] sm:%s342]
            %354 = vst [vmem:[%s350 + $0x18] sm:%s342] %v353
            %v355 = vld [vmem:[%s349 + $0x30] sm:%s342]
            %356 = vst [vmem:[%s350 + $0x30] sm:%s342] %v355
            %v357 = vld [vmem:[%s349 + $0x48] sm:%s342]
            %358 = vst [vmem:[%s350 + $0x48] sm:%s342] %v357
            %v359 = vld [vmem:[%s349 + $0x60] sm:%s342]
            %360 = vst [vmem:[%s350 + $0x60] sm:%s342] %v359
            %v361 = vld [vmem:[%s349 + $0x78] sm:%s342]
            %362 = vst [vmem:[%s350 + $0x78] sm:%s342] %v361
            %v363 = vld [vmem:[%s349 + $0x90] sm:%s342]
            %364 = vst [vmem:[%s350 + $0x90] sm:%s342] %v363
            %v365 = vld [vmem:[%s349 + $0xa8] sm:%s342]
            %366 = vst [vmem:[%s350 + $0xa8] sm:%s342] %v365
            %v367 = vld [vmem:[%s349 + $0xc0] sm:%s342]
            %368 = vst [vmem:[%s350 + $0xc0] sm:%s342] %v367
            %v369 = vld [vmem:[%s349 + $0xd8] sm:%s342]
            %370 = vst [vmem:[%s350 + $0xd8] sm:%s342] %v369
            %v371 = vld [vmem:[%s349 + $0xf0] sm:%s342]
            %372 = vst [vmem:[%s350 + $0xf0] sm:%s342] %v371
            %v373 = vld [vmem:[%s349 + $0x108] sm:%s342]
            %374 = vst [vmem:[%s350 + $0x108] sm:%s342] %v373
          $region69: #{tpu_custom_call.1} parent=63 // loop_footer
            %s348 = sadd.s32 1, %s344
          $region70: #{tpu_custom_call.1} parent=63 // loop_footer_branch
            %343 = sbr.rel target = $region66
          $region71: #{tpu_custom_call.1} parent=63 // loop_exit
            _
        $region64: #{tpu_custom_call.1} parent=55 // pred_fallthru
          _
        // Predicated region
        $region90: #{tpu_custom_call.1} parent=55 // pred_check
          _
        $region91: #{tpu_custom_call.1} parent=55 // pred_check_branch
          %477 = sbr.rel (0) target = $region93
        $region92: #{tpu_custom_call.1} parent=55 // pred_region
          %478 = vsyncadd [#allocation5], 3840
        $region93: #{tpu_custom_call.1} parent=55 // pred_fallthru
          _
        %s479 = smul.u32 12, 20
        %s480 = smul.u32 %s479, 1
        %s481 = sshll.u32 %s480, 4
        %482 = dma.done [#allocation5], %s481
        %v483 = vld [vmem:[#allocation2] sm:$0xff]
        %v484 = vld [vmem:[#allocation2 + $0x8] sm:$0xff]
        %v485 = vld [vmem:[#allocation2 + $0x10] sm:$0xf]
        %v486 = vld [vmem:[#allocation2 + $0x18] sm:$0xff]
        %v487 = vld [vmem:[#allocation2 + $0x20] sm:$0xff]
        %v488 = vld [vmem:[#allocation2 + $0x28] sm:$0xf]
        %v489 = vld [vmem:[#allocation2 + $0x30] sm:$0xff]
        %v490 = vld [vmem:[#allocation2 + $0x38] sm:$0xff]
        %v491 = vld [vmem:[#allocation2 + $0x40] sm:$0xf]
        %v492 = vld [vmem:[#allocation2 + $0x48] sm:$0xff]
        %v493 = vld [vmem:[#allocation2 + $0x50] sm:$0xff]
        %v494 = vld [vmem:[#allocation2 + $0x58] sm:$0xf]
        %v495 = vld [vmem:[#allocation2 + $0x60] sm:$0xff]
        %v496 = vld [vmem:[#allocation2 + $0x68] sm:$0xff]
        %v497 = vld [vmem:[#allocation2 + $0x70] sm:$0xf]
        %v498 = vld [vmem:[#allocation2 + $0x78] sm:$0xff]
        %v499 = vld [vmem:[#allocation2 + $0x80] sm:$0xff]
        %v500 = vld [vmem:[#allocation2 + $0x88] sm:$0xf]
        %v501 = vld [vmem:[#allocation2 + $0x90] sm:$0xff]
        %v502 = vld [vmem:[#allocation2 + $0x98] sm:$0xff]
        %v503 = vld [vmem:[#allocation2 + $0xa0] sm:$0xf]
        %v504 = vld [vmem:[#allocation2 + $0xa8] sm:$0xff]
        %v505 = vld [vmem:[#allocation2 + $0xb0] sm:$0xff]
        %v506 = vld [vmem:[#allocation2 + $0xb8] sm:$0xf]
        %v507 = vld [vmem:[#allocation2 + $0xc0] sm:$0xff]
        %v508 = vld [vmem:[#allocation2 + $0xc8] sm:$0xff]
        %v509 = vld [vmem:[#allocation2 + $0xd0] sm:$0xf]
        %v510 = vld [vmem:[#allocation2 + $0xd8] sm:$0xff]
        %v511 = vld [vmem:[#allocation2 + $0xe0] sm:$0xff]
        %v512 = vld [vmem:[#allocation2 + $0xe8] sm:$0xf]
        %v513 = vld [vmem:[#allocation2 + $0xf0] sm:$0xff]
        %v514 = vld [vmem:[#allocation2 + $0xf8] sm:$0xff]
        %v515 = vld [vmem:[#allocation2 + $0x100] sm:$0xf]
        %v516 = vld [vmem:[#allocation2 + $0x108] sm:$0xff]
        %v517 = vld [vmem:[#allocation2 + $0x110] sm:$0xff]
        %v518 = vld [vmem:[#allocation2 + $0x118] sm:$0xf]
        %s519 = ssub.s32 %s328, 2
        %v520 = vstv %s519
        %v521 = vadd.s32 %v520, 1
        %v522 = vadd.s32 %v520, 2
        %v523 = vadd.s32 %v520, 3
        %v524 = vadd.s32 %v520, 4
        %v525 = vadd.s32 %v520, 5
        %v526 = vadd.s32 %v520, 6
        %v527 = vadd.s32 %v520, 7
        %v528 = vadd.s32 %v520, 8
        %v529 = vadd.s32 %v520, 9
        %v530 = vadd.s32 %v520, 10
        %v531 = vadd.s32 %v520, 11
        %v532 = vlaneseq
        %v533 = vshrl.u32 %v532, 7
        %v534 = vadd.s32 %v533, 8
        %v535 = vadd.s32 %v533, 16
        %v536 = vsub.s32 %v533, 2
        %v537 = vsub.s32 %v534, 2
        %v538 = vsub.s32 %v535, 2
        %vm539 = vcmp.ge.s32.totalorder %v520, 0
        %vm540 = vcmp.ge.s32.totalorder %v521, 0
        %vm541 = vcmp.ge.s32.totalorder %v522, 0
        %vm542 = vcmp.ge.s32.totalorder %v523, 0
        %vm543 = vcmp.ge.s32.totalorder %v524, 0
        %vm544 = vcmp.ge.s32.totalorder %v525, 0
        %vm545 = vcmp.ge.s32.totalorder %v526, 0
        %vm546 = vcmp.ge.s32.totalorder %v527, 0
        %vm547 = vcmp.ge.s32.totalorder %v528, 0
        %vm548 = vcmp.ge.s32.totalorder %v529, 0
        %vm549 = vcmp.ge.s32.totalorder %v530, 0
        %vm550 = vcmp.ge.s32.totalorder %v531, 0
        %vm551 = vcmp.lt.s32.totalorder %v520, 16
        %vm552 = vcmp.lt.s32.totalorder %v521, 16
        %vm553 = vcmp.lt.s32.totalorder %v522, 16
        %vm554 = vcmp.lt.s32.totalorder %v523, 16
        %vm555 = vcmp.lt.s32.totalorder %v524, 16
        %vm556 = vcmp.lt.s32.totalorder %v525, 16
        %vm557 = vcmp.lt.s32.totalorder %v526, 16
        %vm558 = vcmp.lt.s32.totalorder %v527, 16
        %vm559 = vcmp.lt.s32.totalorder %v528, 16
        %vm560 = vcmp.lt.s32.totalorder %v529, 16
        %vm561 = vcmp.lt.s32.totalorder %v530, 16
        %vm562 = vcmp.lt.s32.totalorder %v531, 16
        %vm563 = vmand %vm539, %vm551
        %vm564 = vmand %vm540, %vm552
        %vm565 = vmand %vm541, %vm553
        %vm566 = vmand %vm542, %vm554
        %vm567 = vmand %vm543, %vm555
        %vm568 = vmand %vm544, %vm556
        %vm569 = vmand %vm545, %vm557
        %vm570 = vmand %vm546, %vm558
        %vm571 = vmand %vm547, %vm559
        %vm572 = vmand %vm548, %vm560
        %vm573 = vmand %vm549, %vm561
        %vm574 = vmand %vm550, %vm562
        %vm575 = vcmp.ge.s32.totalorder %v536, 0
        %vm576 = vcmp.ge.s32.totalorder %v537, 0
        %vm577 = vcmp.ge.s32.totalorder %v538, 0
        %vm578 = vmand %vm563, %vm575
        %vm579 = vmand %vm563, %vm576
        %vm580 = vmand %vm563, %vm577
        %vm581 = vmand %vm564, %vm575
        %vm582 = vmand %vm564, %vm576
        %vm583 = vmand %vm564, %vm577
        %vm584 = vmand %vm565, %vm575
        %vm585 = vmand %vm565, %vm576
        %vm586 = vmand %vm565, %vm577
        %vm587 = vmand %vm566, %vm575
        %vm588 = vmand %vm566, %vm576
        %vm589 = vmand %vm566, %vm577
        %vm590 = vmand %vm567, %vm575
        %vm591 = vmand %vm567, %vm576
        %vm592 = vmand %vm567, %vm577
        %vm593 = vmand %vm568, %vm575
        %vm594 = vmand %vm568, %vm576
        %vm595 = vmand %vm568, %vm577
        %vm596 = vmand %vm569, %vm575
        %vm597 = vmand %vm569, %vm576
        %vm598 = vmand %vm569, %vm577
        %vm599 = vmand %vm570, %vm575
        %vm600 = vmand %vm570, %vm576
        %vm601 = vmand %vm570, %vm577
        %vm602 = vmand %vm571, %vm575
        %vm603 = vmand %vm571, %vm576
        %vm604 = vmand %vm571, %vm577
        %vm605 = vmand %vm572, %vm575
        %vm606 = vmand %vm572, %vm576
        %vm607 = vmand %vm572, %vm577
        %vm608 = vmand %vm573, %vm575
        %vm609 = vmand %vm573, %vm576
        %vm610 = vmand %vm573, %vm577
        %vm611 = vmand %vm574, %vm575
        %vm612 = vmand %vm574, %vm576
        %vm613 = vmand %vm574, %vm577
        %vm614 = vcmp.lt.s32.totalorder %v536, 16
        %vm615 = vcmp.lt.s32.totalorder %v537, 16
        %vm616 = vcmp.lt.s32.totalorder %v538, 16
        %vm617 = vmand %vm578, %vm614
        %vm618 = vmand %vm579, %vm615
        %vm619 = vmand %vm580, %vm616
        %vm620 = vmand %vm581, %vm614
        %vm621 = vmand %vm582, %vm615
        %vm622 = vmand %vm583, %vm616
        %vm623 = vmand %vm584, %vm614
        %vm624 = vmand %vm585, %vm615
        %vm625 = vmand %vm586, %vm616
        %vm626 = vmand %vm587, %vm614
        %vm627 = vmand %vm588, %vm615
        %vm628 = vmand %vm589, %vm616
        %vm629 = vmand %vm590, %vm614
        %vm630 = vmand %vm591, %vm615
        %vm631 = vmand %vm592, %vm616
        %vm632 = vmand %vm593, %vm614
        %vm633 = vmand %vm594, %vm615
        %vm634 = vmand %vm595, %vm616
        %vm635 = vmand %vm596, %vm614
        %vm636 = vmand %vm597, %vm615
        %vm637 = vmand %vm598, %vm616
        %vm638 = vmand %vm599, %vm614
        %vm639 = vmand %vm600, %vm615
        %vm640 = vmand %vm601, %vm616
        %vm641 = vmand %vm602, %vm614
        %vm642 = vmand %vm603, %vm615
        %vm643 = vmand %vm604, %vm616
        %vm644 = vmand %vm605, %vm614
        %vm645 = vmand %vm606, %vm615
        %vm646 = vmand %vm607, %vm616
        %vm647 = vmand %vm608, %vm614
        %vm648 = vmand %vm609, %vm615
        %vm649 = vmand %vm610, %vm616
        %vm650 = vmand %vm611, %vm614
        %vm651 = vmand %vm612, %vm615
        %vm652 = vmand %vm613, %vm616
        %v653 = vld [vmem:[%s3] sm:$0x1]
        %v655 = vlaneseq
        %v656 = vshrl.u32 %v655, 7
        %v657 = vsub.s32 0, %v656
        %v658 = vrot.slane %v653, %v657
        %v660 = vmul.f32 %v483, %v658
        %v661 = vmul.f32 %v484, %v658
        %v662 = vmul.f32 %v485, %v658
        %v663 = vmul.f32 %v486, %v658
        %v664 = vmul.f32 %v487, %v658
        %v665 = vmul.f32 %v488, %v658
        %v666 = vmul.f32 %v489, %v658
        %v667 = vmul.f32 %v490, %v658
        %v668 = vmul.f32 %v491, %v658
        %v669 = vmul.f32 %v492, %v658
        %v670 = vmul.f32 %v493, %v658
        %v671 = vmul.f32 %v494, %v658
        %v672 = vmul.f32 %v495, %v658
        %v673 = vmul.f32 %v496, %v658
        %v674 = vmul.f32 %v497, %v658
        %v675 = vmul.f32 %v498, %v658
        %v676 = vmul.f32 %v499, %v658
        %v677 = vmul.f32 %v500, %v658
        %v678 = vmul.f32 %v501, %v658
        %v679 = vmul.f32 %v502, %v658
        %v680 = vmul.f32 %v503, %v658
        %v681 = vmul.f32 %v504, %v658
        %v682 = vmul.f32 %v505, %v658
        %v683 = vmul.f32 %v506, %v658
        %v684 = vmul.f32 %v507, %v658
        %v685 = vmul.f32 %v508, %v658
        %v686 = vmul.f32 %v509, %v658
        %v687 = vmul.f32 %v510, %v658
        %v688 = vmul.f32 %v511, %v658
        %v689 = vmul.f32 %v512, %v658
        %v690 = vmul.f32 %v513, %v658
        %v691 = vmul.f32 %v514, %v658
        %v692 = vmul.f32 %v515, %v658
        %v693 = vmul.f32 %v516, %v658
        %v694 = vmul.f32 %v517, %v658
        %v695 = vmul.f32 %v518, %v658
        %v696 = vld [vmem:[%s4] sm:$0x1]
        %v698 = vlaneseq
        %v699 = vshrl.u32 %v698, 7
        %v700 = vsub.s32 0, %v699
        %v701 = vrot.slane %v696, %v700
        %v703 = vadd.f32 %v660, %v701
        %v704 = vadd.f32 %v661, %v701
        %v705 = vadd.f32 %v662, %v701
        %v706 = vadd.f32 %v663, %v701
        %v707 = vadd.f32 %v664, %v701
        %v708 = vadd.f32 %v665, %v701
        %v709 = vadd.f32 %v666, %v701
        %v710 = vadd.f32 %v667, %v701
        %v711 = vadd.f32 %v668, %v701
        %v712 = vadd.f32 %v669, %v701
        %v713 = vadd.f32 %v670, %v701
        %v714 = vadd.f32 %v671, %v701
        %v715 = vadd.f32 %v672, %v701
        %v716 = vadd.f32 %v673, %v701
        %v717 = vadd.f32 %v674, %v701
        %v718 = vadd.f32 %v675, %v701
        %v719 = vadd.f32 %v676, %v701
        %v720 = vadd.f32 %v677, %v701
        %v721 = vadd.f32 %v678, %v701
        %v722 = vadd.f32 %v679, %v701
        %v723 = vadd.f32 %v680, %v701
        %v724 = vadd.f32 %v681, %v701
        %v725 = vadd.f32 %v682, %v701
        %v726 = vadd.f32 %v683, %v701
        %v727 = vadd.f32 %v684, %v701
        %v728 = vadd.f32 %v685, %v701
        %v729 = vadd.f32 %v686, %v701
        %v730 = vadd.f32 %v687, %v701
        %v731 = vadd.f32 %v688, %v701
        %v732 = vadd.f32 %v689, %v701
        %v733 = vadd.f32 %v690, %v701
        %v734 = vadd.f32 %v691, %v701
        %v735 = vadd.f32 %v692, %v701
        %v736 = vadd.f32 %v693, %v701
        %v737 = vadd.f32 %v694, %v701
        %v738 = vadd.f32 %v695, %v701
        %v739 = vsel %vm617, 1, 0
        %v740 = vsel %vm618, 1, 0
        %v741 = vsel %vm619, 1, 0
        %v742 = vsel %vm620, 1, 0
        %v743 = vsel %vm621, 1, 0
        %v744 = vsel %vm622, 1, 0
        %v745 = vsel %vm623, 1, 0
        %v746 = vsel %vm624, 1, 0
        %v747 = vsel %vm625, 1, 0
        %v748 = vsel %vm626, 1, 0
        %v749 = vsel %vm627, 1, 0
        %v750 = vsel %vm628, 1, 0
        %v751 = vsel %vm629, 1, 0
        %v752 = vsel %vm630, 1, 0
        %v753 = vsel %vm631, 1, 0
        %v754 = vsel %vm632, 1, 0
        %v755 = vsel %vm633, 1, 0
        %v756 = vsel %vm634, 1, 0
        %v757 = vsel %vm635, 1, 0
        %v758 = vsel %vm636, 1, 0
        %v759 = vsel %vm637, 1, 0
        %v760 = vsel %vm638, 1, 0
        %v761 = vsel %vm639, 1, 0
        %v762 = vsel %vm640, 1, 0
        %v763 = vsel %vm641, 1, 0
        %v764 = vsel %vm642, 1, 0
        %v765 = vsel %vm643, 1, 0
        %v766 = vsel %vm644, 1, 0
        %v767 = vsel %vm645, 1, 0
        %v768 = vsel %vm646, 1, 0
        %v769 = vsel %vm647, 1, 0
        %v770 = vsel %vm648, 1, 0
        %v771 = vsel %vm649, 1, 0
        %v772 = vsel %vm650, 1, 0
        %v773 = vsel %vm651, 1, 0
        %v774 = vsel %vm652, 1, 0
        %vm775 = vcmp.eq.s32.totalorder %v739, 1
        %vm776 = vcmp.eq.s32.totalorder %v740, 1
        %vm777 = vcmp.eq.s32.totalorder %v741, 1
        %vm778 = vcmp.eq.s32.totalorder %v742, 1
        %vm779 = vcmp.eq.s32.totalorder %v743, 1
        %vm780 = vcmp.eq.s32.totalorder %v744, 1
        %vm781 = vcmp.eq.s32.totalorder %v745, 1
        %vm782 = vcmp.eq.s32.totalorder %v746, 1
        %vm783 = vcmp.eq.s32.totalorder %v747, 1
        %vm784 = vcmp.eq.s32.totalorder %v748, 1
        %vm785 = vcmp.eq.s32.totalorder %v749, 1
        %vm786 = vcmp.eq.s32.totalorder %v750, 1
        %vm787 = vcmp.eq.s32.totalorder %v751, 1
        %vm788 = vcmp.eq.s32.totalorder %v752, 1
        %vm789 = vcmp.eq.s32.totalorder %v753, 1
        %vm790 = vcmp.eq.s32.totalorder %v754, 1
        %vm791 = vcmp.eq.s32.totalorder %v755, 1
        %vm792 = vcmp.eq.s32.totalorder %v756, 1
        %vm793 = vcmp.eq.s32.totalorder %v757, 1
        %vm794 = vcmp.eq.s32.totalorder %v758, 1
        %vm795 = vcmp.eq.s32.totalorder %v759, 1
        %vm796 = vcmp.eq.s32.totalorder %v760, 1
        %vm797 = vcmp.eq.s32.totalorder %v761, 1
        %vm798 = vcmp.eq.s32.totalorder %v762, 1
        %vm799 = vcmp.eq.s32.totalorder %v763, 1
        %vm800 = vcmp.eq.s32.totalorder %v764, 1
        %vm801 = vcmp.eq.s32.totalorder %v765, 1
        %vm802 = vcmp.eq.s32.totalorder %v766, 1
        %vm803 = vcmp.eq.s32.totalorder %v767, 1
        %vm804 = vcmp.eq.s32.totalorder %v768, 1
        %vm805 = vcmp.eq.s32.totalorder %v769, 1
        %vm806 = vcmp.eq.s32.totalorder %v770, 1
        %vm807 = vcmp.eq.s32.totalorder %v771, 1
        %vm808 = vcmp.eq.s32.totalorder %v772, 1
        %vm809 = vcmp.eq.s32.totalorder %v773, 1
        %vm810 = vcmp.eq.s32.totalorder %v774, 1
        %v811 = vsel %vm775, %v703, 0.0
        %v812 = vsel %vm776, %v704, 0.0
        %v813 = vsel %vm777, %v705, 0.0
        %v814 = vsel %vm778, %v706, 0.0
        %v815 = vsel %vm779, %v707, 0.0
        %v816 = vsel %vm780, %v708, 0.0
        %v817 = vsel %vm781, %v709, 0.0
        %v818 = vsel %vm782, %v710, 0.0
        %v819 = vsel %vm783, %v711, 0.0
        %v820 = vsel %vm784, %v712, 0.0
        %v821 = vsel %vm785, %v713, 0.0
        %v822 = vsel %vm786, %v714, 0.0
        %v823 = vsel %vm787, %v715, 0.0
        %v824 = vsel %vm788, %v716, 0.0
        %v825 = vsel %vm789, %v717, 0.0
        %v826 = vsel %vm790, %v718, 0.0
        %v827 = vsel %vm791, %v719, 0.0
        %v828 = vsel %vm792, %v720, 0.0
        %v829 = vsel %vm793, %v721, 0.0
        %v830 = vsel %vm794, %v722, 0.0
        %v831 = vsel %vm795, %v723, 0.0
        %v832 = vsel %vm796, %v724, 0.0
        %v833 = vsel %vm797, %v725, 0.0
        %v834 = vsel %vm798, %v726, 0.0
        %v835 = vsel %vm799, %v727, 0.0
        %v836 = vsel %vm800, %v728, 0.0
        %v837 = vsel %vm801, %v729, 0.0
        %v838 = vsel %vm802, %v730, 0.0
        %v839 = vsel %vm803, %v731, 0.0
        %v840 = vsel %vm804, %v732, 0.0
        %v841 = vsel %vm805, %v733, 0.0
        %v842 = vsel %vm806, %v734, 0.0
        %v843 = vsel %vm807, %v735, 0.0
        %v844 = vsel %vm808, %v736, 0.0
        %v845 = vsel %vm809, %v737, 0.0
        %v846 = vsel %vm810, %v738, 0.0
        %v847 = vpack.c.bf16 %v812, %v811
        %v848 = vpack.c.bf16 %v813, %v813
        %v849 = vpack.c.bf16 %v815, %v814
        %v850 = vpack.c.bf16 %v816, %v816
        %v851 = vpack.c.bf16 %v818, %v817
        %v852 = vpack.c.bf16 %v819, %v819
        %v853 = vpack.c.bf16 %v821, %v820
        %v854 = vpack.c.bf16 %v822, %v822
        %v855 = vpack.c.bf16 %v824, %v823
        %v856 = vpack.c.bf16 %v825, %v825
        %v857 = vpack.c.bf16 %v827, %v826
        %v858 = vpack.c.bf16 %v828, %v828
        %v859 = vpack.c.bf16 %v830, %v829
        %v860 = vpack.c.bf16 %v831, %v831
        %v861 = vpack.c.bf16 %v833, %v832
        %v862 = vpack.c.bf16 %v834, %v834
        %v863 = vpack.c.bf16 %v836, %v835
        %v864 = vpack.c.bf16 %v837, %v837
        %v865 = vpack.c.bf16 %v839, %v838
        %v866 = vpack.c.bf16 %v840, %v840
        %v867 = vpack.c.bf16 %v842, %v841
        %v868 = vpack.c.bf16 %v843, %v843
        %v869 = vpack.c.bf16 %v845, %v844
        %v870 = vpack.c.bf16 %v846, %v846
        %v895 = vunpack.c.l.b16 %v847
        %v896 = vunpack.c.h.b16 %v847
        %v897 = vunpack.c.l.b16 %v848
        %v898 = vunpack.c.l.b16 %v849
        %v899 = vunpack.c.h.b16 %v849
        %v900 = vunpack.c.l.b16 %v850
        %v901 = vunpack.c.l.b16 %v851
        %v902 = vunpack.c.h.b16 %v851
        %v903 = vunpack.c.l.b16 %v852
        %v904 = vunpack.c.l.b16 %v853
        %v905 = vunpack.c.h.b16 %v853
        %v906 = vunpack.c.l.b16 %v854
        %v907 = vunpack.c.l.b16 %v855
        %v908 = vunpack.c.h.b16 %v855
        %v909 = vunpack.c.l.b16 %v856
        %v910 = vunpack.c.l.b16 %v857
        %v911 = vunpack.c.h.b16 %v857
        %v912 = vunpack.c.l.b16 %v858
        %v913 = vunpack.c.l.b16 %v859
        %v914 = vunpack.c.h.b16 %v859
        %v915 = vunpack.c.l.b16 %v860
        %v916 = vunpack.c.l.b16 %v861
        %v917 = vunpack.c.h.b16 %v861
        %v918 = vunpack.c.l.b16 %v862
        %v919 = vunpack.c.l.b16 %v863
        %v920 = vunpack.c.h.b16 %v863
        %v921 = vunpack.c.l.b16 %v864
        %v922 = vunpack.c.l.b16 %v865
        %v923 = vunpack.c.h.b16 %v865
        %v924 = vunpack.c.l.b16 %v866
        %v925 = vunpack.c.l.b16 %v867
        %v926 = vunpack.c.h.b16 %v867
        %v927 = vunpack.c.l.b16 %v868
        %v928 = vunpack.c.l.b16 %v869
        %v929 = vunpack.c.h.b16 %v869
        %v930 = vunpack.c.l.b16 %v870
        %v931 = vpack.c.b16 %v895, %v895
        %v932 = vpack.c.b16 %v896, %v896
        %v933 = vpack.c.b16 %v897, %v897
        %v934 = vpack.c.b16 %v898, %v898
        %v935 = vpack.c.b16 %v899, %v899
        %v936 = vpack.c.b16 %v900, %v900
        %v937 = vpack.c.b16 %v901, %v901
        %v938 = vpack.c.b16 %v902, %v902
        %v939 = vpack.c.b16 %v903, %v903
        %v940 = vpack.c.b16 %v904, %v904
        %v941 = vpack.c.b16 %v905, %v905
        %v942 = vpack.c.b16 %v906, %v906
        %v943 = vpack.c.b16 %v907, %v907
        %v944 = vpack.c.b16 %v908, %v908
        %v945 = vpack.c.b16 %v909, %v909
        %v946 = vpack.c.b16 %v910, %v910
        %v947 = vpack.c.b16 %v911, %v911
        %v948 = vpack.c.b16 %v912, %v912
        %v949 = vpack.c.b16 %v913, %v913
        %v950 = vpack.c.b16 %v914, %v914
        %v951 = vpack.c.b16 %v915, %v915
        %v952 = vpack.c.b16 %v916, %v916
        %v953 = vpack.c.b16 %v917, %v917
        %v954 = vpack.c.b16 %v918, %v918
        %v955 = vpack.c.b16 %v919, %v919
        %v956 = vpack.c.b16 %v920, %v920
        %v957 = vpack.c.b16 %v921, %v921
        %v958 = vpack.c.b16 %v922, %v922
        %v959 = vpack.c.b16 %v923, %v923
        %v960 = vpack.c.b16 %v924, %v924
        %v961 = vpack.c.b16 %v925, %v925
        %v962 = vpack.c.b16 %v926, %v926
        %v963 = vpack.c.b16 %v927, %v927
        %v964 = vpack.c.b16 %v928, %v928
        %v965 = vpack.c.b16 %v929, %v929
        %v966 = vpack.c.b16 %v930, %v930
        %1003 = vst [vmem:[#allocation3] sm:$0xf] %v931
        %1004 = vst [vmem:[#allocation3 + $0x4] sm:$0xf] %v932
        %1005 = vst [vmem:[#allocation3 + $0x8] sm:$0x3] %v933
        %1006 = vst [vmem:[#allocation3 + $0xc] sm:$0xf] %v934
        %1007 = vst [vmem:[#allocation3 + $0x10] sm:$0xf] %v935
        %1008 = vst [vmem:[#allocation3 + $0x14] sm:$0x3] %v936
        %1009 = vst [vmem:[#allocation3 + $0x18] sm:$0xf] %v937
        %1010 = vst [vmem:[#allocation3 + $0x1c] sm:$0xf] %v938
        %1011 = vst [vmem:[#allocation3 + $0x20] sm:$0x3] %v939
        %1012 = vst [vmem:[#allocation3 + $0x24] sm:$0xf] %v940
        %1013 = vst [vmem:[#allocation3 + $0x28] sm:$0xf] %v941
        %1014 = vst [vmem:[#allocation3 + $0x2c] sm:$0x3] %v942
        %1015 = vst [vmem:[#allocation3 + $0x30] sm:$0xf] %v943
        %1016 = vst [vmem:[#allocation3 + $0x34] sm:$0xf] %v944
        %1017 = vst [vmem:[#allocation3 + $0x38] sm:$0x3] %v945
        %1018 = vst [vmem:[#allocation3 + $0x3c] sm:$0xf] %v946
        %1019 = vst [vmem:[#allocation3 + $0x40] sm:$0xf] %v947
        %1020 = vst [vmem:[#allocation3 + $0x44] sm:$0x3] %v948
        %1021 = vst [vmem:[#allocation3 + $0x48] sm:$0xf] %v949
        %1022 = vst [vmem:[#allocation3 + $0x4c] sm:$0xf] %v950
        %1023 = vst [vmem:[#allocation3 + $0x50] sm:$0x3] %v951
        %1024 = vst [vmem:[#allocation3 + $0x54] sm:$0xf] %v952
        %1025 = vst [vmem:[#allocation3 + $0x58] sm:$0xf] %v953
        %1026 = vst [vmem:[#allocation3 + $0x5c] sm:$0x3] %v954
        %1027 = vst [vmem:[#allocation3 + $0x60] sm:$0xf] %v955
        %1028 = vst [vmem:[#allocation3 + $0x64] sm:$0xf] %v956
        %1029 = vst [vmem:[#allocation3 + $0x68] sm:$0x3] %v957
        %1030 = vst [vmem:[#allocation3 + $0x6c] sm:$0xf] %v958
        %1031 = vst [vmem:[#allocation3 + $0x70] sm:$0xf] %v959
        %1032 = vst [vmem:[#allocation3 + $0x74] sm:$0x3] %v960
        %1033 = vst [vmem:[#allocation3 + $0x78] sm:$0xf] %v961
        %1034 = vst [vmem:[#allocation3 + $0x7c] sm:$0xf] %v962
        %1035 = vst [vmem:[#allocation3 + $0x80] sm:$0x3] %v963
        %1036 = vst [vmem:[#allocation3 + $0x84] sm:$0xf] %v964
        %1037 = vst [vmem:[#allocation3 + $0x88] sm:$0xf] %v965
        %1038 = vst [vmem:[#allocation3 + $0x8c] sm:$0x3] %v966
        %v1039 = vld [vmem:[#allocation3] sm:$0xf]
        %v1040 = vld [vmem:[#allocation3 + $0x4] sm:$0xf]
        %v1041 = vld [vmem:[#allocation3 + $0x8] sm:$0x1]
        %v1042 = vld [vmem:[#allocation3 + $0xc] sm:$0xf]
        %v1043 = vld [vmem:[#allocation3 + $0x10] sm:$0xf]
        %v1044 = vld [vmem:[#allocation3 + $0x14] sm:$0x1]
        %v1045 = vld [vmem:[#allocation3 + $0x18] sm:$0xf]
        %v1046 = vld [vmem:[#allocation3 + $0x1c] sm:$0xf]
        %v1047 = vld [vmem:[#allocation3 + $0x20] sm:$0x1]
        %v1048 = vld [vmem:[#allocation3 + $0x24] sm:$0xf]
        %v1049 = vld [vmem:[#allocation3 + $0x28] sm:$0xf]
        %v1050 = vld [vmem:[#allocation3 + $0x2c] sm:$0x1]
        %v1051 = vld [vmem:[#allocation3 + $0x30] sm:$0xf]
        %v1052 = vld [vmem:[#allocation3 + $0x34] sm:$0xf]
        %v1053 = vld [vmem:[#allocation3 + $0x38] sm:$0x1]
        %v1054 = vld [vmem:[#allocation3 + $0x3c] sm:$0xf]
        %v1055 = vld [vmem:[#allocation3 + $0x40] sm:$0xf]
        %v1056 = vld [vmem:[#allocation3 + $0x44] sm:$0x1]
        %v1057 = vld [vmem:[#allocation3 + $0x48] sm:$0xf]
        %v1058 = vld [vmem:[#allocation3 + $0x4c] sm:$0xf]
        %v1059 = vld [vmem:[#allocation3 + $0x50] sm:$0x1]
        %v1060 = vld [vmem:[#allocation3 + $0x54] sm:$0xf]
        %v1061 = vld [vmem:[#allocation3 + $0x58] sm:$0xf]
        %v1062 = vld [vmem:[#allocation3 + $0x5c] sm:$0x1]
        %v1063 = vld [vmem:[#allocation3 + $0x60] sm:$0xf]
        %v1064 = vld [vmem:[#allocation3 + $0x64] sm:$0xf]
        %v1065 = vld [vmem:[#allocation3 + $0x68] sm:$0x1]
        %v1066 = vld [vmem:[#allocation3 + $0x6c] sm:$0xf]
        %v1067 = vld [vmem:[#allocation3 + $0x70] sm:$0xf]
        %v1068 = vld [vmem:[#allocation3 + $0x74] sm:$0x1]
        %v1069 = vld [vmem:[#allocation3 + $0x8] sm:$0x3]
        %v1070 = vld [vmem:[#allocation3 + $0x14] sm:$0x3]
        %v1071 = vld [vmem:[#allocation3 + $0x20] sm:$0x3]
        %v1072 = vld [vmem:[#allocation3 + $0x2c] sm:$0x3]
        %v1073 = vld [vmem:[#allocation3 + $0x38] sm:$0x3]
        %v1074 = vld [vmem:[#allocation3 + $0x44] sm:$0x3]
        %v1075 = vld [vmem:[#allocation3 + $0x50] sm:$0x3]
        %v1076 = vld [vmem:[#allocation3 + $0x5c] sm:$0x3]
        %v1077 = vld [vmem:[#allocation3 + $0x68] sm:$0x3]
        %v1078 = vld [vmem:[#allocation3 + $0x74] sm:$0x3]
        %v1079 = vld [vmem:[#allocation3] sm:$0xe]
        %v1080 = vld [vmem:[#allocation3 + $0xc] sm:$0xe]
        %v1081 = vld [vmem:[#allocation3 + $0x18] sm:$0xe]
        %v1082 = vld [vmem:[#allocation3 + $0x24] sm:$0xe]
        %v1083 = vld [vmem:[#allocation3 + $0x30] sm:$0xe]
        %v1084 = vld [vmem:[#allocation3 + $0x3c] sm:$0xe]
        %v1085 = vld [vmem:[#allocation3 + $0x48] sm:$0xe]
        %v1086 = vld [vmem:[#allocation3 + $0x54] sm:$0xe]
        %v1087 = vld [vmem:[#allocation3 + $0x60] sm:$0xe]
        %v1088 = vld [vmem:[#allocation3 + $0x6c] sm:$0xe]
        %s1089 = scalar_lea.vmem [#allocation3], 12
        %v1090 = vld [vmem:[%s1089] sm:$0xf]
        %v1091 = vld [vmem:[%s1089 + $0x4] sm:$0xf]
        %v1092 = vld [vmem:[%s1089 + $0x8] sm:$0x1]
        %v1093 = vld [vmem:[%s1089 + $0xc] sm:$0xf]
        %v1094 = vld [vmem:[%s1089 + $0x10] sm:$0xf]
        %v1095 = vld [vmem:[%s1089 + $0x14] sm:$0x1]
        %v1096 = vld [vmem:[%s1089 + $0x18] sm:$0xf]
        %v1097 = vld [vmem:[%s1089 + $0x1c] sm:$0xf]
        %v1098 = vld [vmem:[%s1089 + $0x20] sm:$0x1]
        %v1099 = vld [vmem:[%s1089 + $0x24] sm:$0xf]
        %v1100 = vld [vmem:[%s1089 + $0x28] sm:$0xf]
        %v1101 = vld [vmem:[%s1089 + $0x2c] sm:$0x1]
        %v1102 = vld [vmem:[%s1089 + $0x30] sm:$0xf]
        %v1103 = vld [vmem:[%s1089 + $0x34] sm:$0xf]
        %v1104 = vld [vmem:[%s1089 + $0x38] sm:$0x1]
        %v1105 = vld [vmem:[%s1089 + $0x3c] sm:$0xf]
        %v1106 = vld [vmem:[%s1089 + $0x40] sm:$0xf]
        %v1107 = vld [vmem:[%s1089 + $0x44] sm:$0x1]
        %v1108 = vld [vmem:[%s1089 + $0x48] sm:$0xf]
        %v1109 = vld [vmem:[%s1089 + $0x4c] sm:$0xf]
        %v1110 = vld [vmem:[%s1089 + $0x50] sm:$0x1]
        %v1111 = vld [vmem:[%s1089 + $0x54] sm:$0xf]
        %v1112 = vld [vmem:[%s1089 + $0x58] sm:$0xf]
        %v1113 = vld [vmem:[%s1089 + $0x5c] sm:$0x1]
        %v1114 = vld [vmem:[%s1089 + $0x60] sm:$0xf]
        %v1115 = vld [vmem:[%s1089 + $0x64] sm:$0xf]
        %v1116 = vld [vmem:[%s1089 + $0x68] sm:$0x1]
        %v1117 = vld [vmem:[%s1089 + $0x6c] sm:$0xf]
        %v1118 = vld [vmem:[%s1089 + $0x70] sm:$0xf]
        %v1119 = vld [vmem:[%s1089 + $0x74] sm:$0x1]
        %v1120 = vld [vmem:[%s1089 + $0x8] sm:$0x3]
        %v1121 = vld [vmem:[%s1089 + $0x14] sm:$0x3]
        %v1122 = vld [vmem:[%s1089 + $0x20] sm:$0x3]
        %v1123 = vld [vmem:[%s1089 + $0x2c] sm:$0x3]
        %v1124 = vld [vmem:[%s1089 + $0x38] sm:$0x3]
        %v1125 = vld [vmem:[%s1089 + $0x44] sm:$0x3]
        %v1126 = vld [vmem:[%s1089 + $0x50] sm:$0x3]
        %v1127 = vld [vmem:[%s1089 + $0x5c] sm:$0x3]
        %v1128 = vld [vmem:[%s1089 + $0x68] sm:$0x3]
        %v1129 = vld [vmem:[%s1089 + $0x74] sm:$0x3]
        %v1130 = vld [vmem:[%s1089] sm:$0xe]
        %v1131 = vld [vmem:[%s1089 + $0xc] sm:$0xe]
        %v1132 = vld [vmem:[%s1089 + $0x18] sm:$0xe]
        %v1133 = vld [vmem:[%s1089 + $0x24] sm:$0xe]
        %v1134 = vld [vmem:[%s1089 + $0x30] sm:$0xe]
        %v1135 = vld [vmem:[%s1089 + $0x3c] sm:$0xe]
        %v1136 = vld [vmem:[%s1089 + $0x48] sm:$0xe]
        %v1137 = vld [vmem:[%s1089 + $0x54] sm:$0xe]
        %v1138 = vld [vmem:[%s1089 + $0x60] sm:$0xe]
        %v1139 = vld [vmem:[%s1089 + $0x6c] sm:$0xe]
        %s1140 = scalar_lea.vmem [#allocation3], 24
        %v1141 = vld [vmem:[%s1140] sm:$0xf]
        %v1142 = vld [vmem:[%s1140 + $0x4] sm:$0xf]
        %v1143 = vld [vmem:[%s1140 + $0x8] sm:$0x1]
        %v1144 = vld [vmem:[%s1140 + $0xc] sm:$0xf]
        %v1145 = vld [vmem:[%s1140 + $0x10] sm:$0xf]
        %v1146 = vld [vmem:[%s1140 + $0x14] sm:$0x1]
        %v1147 = vld [vmem:[%s1140 + $0x18] sm:$0xf]
        %v1148 = vld [vmem:[%s1140 + $0x1c] sm:$0xf]
        %v1149 = vld [vmem:[%s1140 + $0x20] sm:$0x1]
        %v1150 = vld [vmem:[%s1140 + $0x24] sm:$0xf]
        %v1151 = vld [vmem:[%s1140 + $0x28] sm:$0xf]
        %v1152 = vld [vmem:[%s1140 + $0x2c] sm:$0x1]
        %v1153 = vld [vmem:[%s1140 + $0x30] sm:$0xf]
        %v1154 = vld [vmem:[%s1140 + $0x34] sm:$0xf]
        %v1155 = vld [vmem:[%s1140 + $0x38] sm:$0x1]
        %v1156 = vld [vmem:[%s1140 + $0x3c] sm:$0xf]
        %v1157 = vld [vmem:[%s1140 + $0x40] sm:$0xf]
        %v1158 = vld [vmem:[%s1140 + $0x44] sm:$0x1]
        %v1159 = vld [vmem:[%s1140 + $0x48] sm:$0xf]
        %v1160 = vld [vmem:[%s1140 + $0x4c] sm:$0xf]
        %v1161 = vld [vmem:[%s1140 + $0x50] sm:$0x1]
        %v1162 = vld [vmem:[%s1140 + $0x54] sm:$0xf]
        %v1163 = vld [vmem:[%s1140 + $0x58] sm:$0xf]
        %v1164 = vld [vmem:[%s1140 + $0x5c] sm:$0x1]
        %v1165 = vld [vmem:[%s1140 + $0x60] sm:$0xf]
        %v1166 = vld [vmem:[%s1140 + $0x64] sm:$0xf]
        %v1167 = vld [vmem:[%s1140 + $0x68] sm:$0x1]
        %v1168 = vld [vmem:[%s1140 + $0x6c] sm:$0xf]
        %v1169 = vld [vmem:[%s1140 + $0x70] sm:$0xf]
        %v1170 = vld [vmem:[%s1140 + $0x74] sm:$0x1]
        %v1171 = vld [vmem:[%s1140 + $0x8] sm:$0x3]
        %v1172 = vld [vmem:[%s1140 + $0x14] sm:$0x3]
        %v1173 = vld [vmem:[%s1140 + $0x20] sm:$0x3]
        %v1174 = vld [vmem:[%s1140 + $0x2c] sm:$0x3]
        %v1175 = vld [vmem:[%s1140 + $0x38] sm:$0x3]
        %v1176 = vld [vmem:[%s1140 + $0x44] sm:$0x3]
        %v1177 = vld [vmem:[%s1140 + $0x50] sm:$0x3]
        %v1178 = vld [vmem:[%s1140 + $0x5c] sm:$0x3]
        %v1179 = vld [vmem:[%s1140 + $0x68] sm:$0x3]
        %v1180 = vld [vmem:[%s1140 + $0x74] sm:$0x3]
        %v1181 = vld [vmem:[%s1140] sm:$0xe]
        %v1182 = vld [vmem:[%s1140 + $0xc] sm:$0xe]
        %v1183 = vld [vmem:[%s1140 + $0x18] sm:$0xe]
        %v1184 = vld [vmem:[%s1140 + $0x24] sm:$0xe]
        %v1185 = vld [vmem:[%s1140 + $0x30] sm:$0xe]
        %v1186 = vld [vmem:[%s1140 + $0x3c] sm:$0xe]
        %v1187 = vld [vmem:[%s1140 + $0x48] sm:$0xe]
        %v1188 = vld [vmem:[%s1140 + $0x54] sm:$0xe]
        %v1189 = vld [vmem:[%s1140 + $0x60] sm:$0xe]
        %v1190 = vld [vmem:[%s1140 + $0x6c] sm:$0xe]
        %v1221 = vunpack.c.l.b16 %v1039
        %v1222 = vunpack.c.l.b16 %v1040
        %v1223 = vunpack.c.l.b16 %v1041
        %v1224 = vunpack.c.l.b16 %v1042
        %v1225 = vunpack.c.l.b16 %v1043
        %v1226 = vunpack.c.l.b16 %v1044
        %v1227 = vunpack.c.l.b16 %v1045
        %v1228 = vunpack.c.l.b16 %v1046
        %v1229 = vunpack.c.l.b16 %v1047
        %v1230 = vunpack.c.l.b16 %v1048
        %v1231 = vunpack.c.l.b16 %v1049
        %v1232 = vunpack.c.l.b16 %v1050
        %v1233 = vunpack.c.l.b16 %v1051
        %v1234 = vunpack.c.l.b16 %v1052
        %v1235 = vunpack.c.l.b16 %v1053
        %v1236 = vunpack.c.l.b16 %v1054
        %v1237 = vunpack.c.l.b16 %v1055
        %v1238 = vunpack.c.l.b16 %v1056
        %v1239 = vunpack.c.l.b16 %v1057
        %v1240 = vunpack.c.l.b16 %v1058
        %v1241 = vunpack.c.l.b16 %v1059
        %v1242 = vunpack.c.l.b16 %v1060
        %v1243 = vunpack.c.l.b16 %v1061
        %v1244 = vunpack.c.l.b16 %v1062
        %v1245 = vunpack.c.l.b16 %v1063
        %v1246 = vunpack.c.l.b16 %v1064
        %v1247 = vunpack.c.l.b16 %v1065
        %v1248 = vunpack.c.l.b16 %v1066
        %v1249 = vunpack.c.l.b16 %v1067
        %v1250 = vunpack.c.l.b16 %v1068
        %v1251 = vpack.c.b16 %v1222, %v1221
        %v1252 = vpack.c.b16 %v1223, %v1223
        %v1253 = vpack.c.b16 %v1225, %v1224
        %v1254 = vpack.c.b16 %v1226, %v1226
        %v1255 = vpack.c.b16 %v1228, %v1227
        %v1256 = vpack.c.b16 %v1229, %v1229
        %v1257 = vpack.c.b16 %v1231, %v1230
        %v1258 = vpack.c.b16 %v1232, %v1232
        %v1259 = vpack.c.b16 %v1234, %v1233
        %v1260 = vpack.c.b16 %v1235, %v1235
        %v1261 = vpack.c.b16 %v1237, %v1236
        %v1262 = vpack.c.b16 %v1238, %v1238
        %v1263 = vpack.c.b16 %v1240, %v1239
        %v1264 = vpack.c.b16 %v1241, %v1241
        %v1265 = vpack.c.b16 %v1243, %v1242
        %v1266 = vpack.c.b16 %v1244, %v1244
        %v1267 = vpack.c.b16 %v1246, %v1245
        %v1268 = vpack.c.b16 %v1247, %v1247
        %v1269 = vpack.c.b16 %v1249, %v1248
        %v1270 = vpack.c.b16 %v1250, %v1250
        %v1281 = vunpack.c.l.b16 %v1069
        %v1282 = vunpack.c.l.b16 %v1070
        %v1283 = vunpack.c.l.b16 %v1071
        %v1284 = vunpack.c.l.b16 %v1072
        %v1285 = vunpack.c.l.b16 %v1073
        %v1286 = vunpack.c.l.b16 %v1074
        %v1287 = vunpack.c.l.b16 %v1075
        %v1288 = vunpack.c.l.b16 %v1076
        %v1289 = vunpack.c.l.b16 %v1077
        %v1290 = vunpack.c.l.b16 %v1078
        %v1291 = vpack.c.b16 %v1281, %v1281
        %v1292 = vpack.c.b16 %v1282, %v1282
        %v1293 = vpack.c.b16 %v1283, %v1283
        %v1294 = vpack.c.b16 %v1284, %v1284
        %v1295 = vpack.c.b16 %v1285, %v1285
        %v1296 = vpack.c.b16 %v1286, %v1286
        %v1297 = vpack.c.b16 %v1287, %v1287
        %v1298 = vpack.c.b16 %v1288, %v1288
        %v1299 = vpack.c.b16 %v1289, %v1289
        %v1300 = vpack.c.b16 %v1290, %v1290
        %vm1301 = vsmask.f32 7424
        %v1303 = vshrl.u32 %v1251, 16
        %v1305 = vshll.u32 %v1251, 16
        %v1307 = vrot.slane %v1305, 1
        %v1308 = vor.u32 %v1303, %v1307
        %v1310 = vshll.u32 %v1291, 16
        %v1312 = vrot.slane %v1310, 1
        %v1313 = vsel %vm1301, %v1308, %v1312
        %v1314 = vshrl.u32 %v1291, 16
        %v1316 = vor.u32 %v1314, %v1312
        %v1318 = vshrl.u32 %v1253, 16
        %v1320 = vshll.u32 %v1253, 16
        %v1322 = vrot.slane %v1320, 1
        %v1323 = vor.u32 %v1318, %v1322
        %v1325 = vshll.u32 %v1292, 16
        %v1327 = vrot.slane %v1325, 1
        %v1328 = vsel %vm1301, %v1323, %v1327
        %v1329 = vshrl.u32 %v1292, 16
        %v1331 = vor.u32 %v1329, %v1327
        %v1333 = vshrl.u32 %v1255, 16
        %v1335 = vshll.u32 %v1255, 16
        %v1337 = vrot.slane %v1335, 1
        %v1338 = vor.u32 %v1333, %v1337
        %v1340 = vshll.u32 %v1293, 16
        %v1342 = vrot.slane %v1340, 1
        %v1343 = vsel %vm1301, %v1338, %v1342
        %v1344 = vshrl.u32 %v1293, 16
        %v1346 = vor.u32 %v1344, %v1342
        %v1348 = vshrl.u32 %v1257, 16
        %v1350 = vshll.u32 %v1257, 16
        %v1352 = vrot.slane %v1350, 1
        %v1353 = vor.u32 %v1348, %v1352
        %v1355 = vshll.u32 %v1294, 16
        %v1357 = vrot.slane %v1355, 1
        %v1358 = vsel %vm1301, %v1353, %v1357
        %v1359 = vshrl.u32 %v1294, 16
        %v1361 = vor.u32 %v1359, %v1357
        %v1363 = vshrl.u32 %v1259, 16
        %v1365 = vshll.u32 %v1259, 16
        %v1367 = vrot.slane %v1365, 1
        %v1368 = vor.u32 %v1363, %v1367
        %v1370 = vshll.u32 %v1295, 16
        %v1372 = vrot.slane %v1370, 1
        %v1373 = vsel %vm1301, %v1368, %v1372
        %v1374 = vshrl.u32 %v1295, 16
        %v1376 = vor.u32 %v1374, %v1372
        %v1378 = vshrl.u32 %v1261, 16
        %v1380 = vshll.u32 %v1261, 16
        %v1382 = vrot.slane %v1380, 1
        %v1383 = vor.u32 %v1378, %v1382
        %v1385 = vshll.u32 %v1296, 16
        %v1387 = vrot.slane %v1385, 1
        %v1388 = vsel %vm1301, %v1383, %v1387
        %v1389 = vshrl.u32 %v1296, 16
        %v1391 = vor.u32 %v1389, %v1387
        %v1393 = vshrl.u32 %v1263, 16
        %v1395 = vshll.u32 %v1263, 16
        %v1397 = vrot.slane %v1395, 1
        %v1398 = vor.u32 %v1393, %v1397
        %v1400 = vshll.u32 %v1297, 16
        %v1402 = vrot.slane %v1400, 1
        %v1403 = vsel %vm1301, %v1398, %v1402
        %v1404 = vshrl.u32 %v1297, 16
        %v1406 = vor.u32 %v1404, %v1402
        %v1408 = vshrl.u32 %v1265, 16
        %v1410 = vshll.u32 %v1265, 16
        %v1412 = vrot.slane %v1410, 1
        %v1413 = vor.u32 %v1408, %v1412
        %v1415 = vshll.u32 %v1298, 16
        %v1417 = vrot.slane %v1415, 1
        %v1418 = vsel %vm1301, %v1413, %v1417
        %v1419 = vshrl.u32 %v1298, 16
        %v1421 = vor.u32 %v1419, %v1417
        %v1423 = vshrl.u32 %v1267, 16
        %v1425 = vshll.u32 %v1267, 16
        %v1427 = vrot.slane %v1425, 1
        %v1428 = vor.u32 %v1423, %v1427
        %v1430 = vshll.u32 %v1299, 16
        %v1432 = vrot.slane %v1430, 1
        %v1433 = vsel %vm1301, %v1428, %v1432
        %v1434 = vshrl.u32 %v1299, 16
        %v1436 = vor.u32 %v1434, %v1432
        %v1438 = vshrl.u32 %v1269, 16
        %v1440 = vshll.u32 %v1269, 16
        %v1442 = vrot.slane %v1440, 1
        %v1443 = vor.u32 %v1438, %v1442
        %v1445 = vshll.u32 %v1300, 16
        %v1447 = vrot.slane %v1445, 1
        %v1448 = vsel %vm1301, %v1443, %v1447
        %v1449 = vshrl.u32 %v1300, 16
        %v1451 = vor.u32 %v1449, %v1447
        %v1462 = vunpack.c.l.b16 %v1079
        %v1463 = vunpack.c.l.b16 %v1080
        %v1464 = vunpack.c.l.b16 %v1081
        %v1465 = vunpack.c.l.b16 %v1082
        %v1466 = vunpack.c.l.b16 %v1083
        %v1467 = vunpack.c.l.b16 %v1084
        %v1468 = vunpack.c.l.b16 %v1085
        %v1469 = vunpack.c.l.b16 %v1086
        %v1470 = vunpack.c.l.b16 %v1087
        %v1471 = vunpack.c.l.b16 %v1088
        %v1472 = vpack.c.b16 %v1222, %v1462
        %v1473 = vpack.c.b16 %v1225, %v1463
        %v1474 = vpack.c.b16 %v1228, %v1464
        %v1475 = vpack.c.b16 %v1231, %v1465
        %v1476 = vpack.c.b16 %v1234, %v1466
        %v1477 = vpack.c.b16 %v1237, %v1467
        %v1478 = vpack.c.b16 %v1240, %v1468
        %v1479 = vpack.c.b16 %v1243, %v1469
        %v1480 = vpack.c.b16 %v1246, %v1470
        %v1481 = vpack.c.b16 %v1249, %v1471
        %vm1482 = vcmask 1046528
        %v1483 = vrot.slane %v1472, 1
        %v1484 = vrot.slane %v1291, 1
        %v1485 = vsel %vm1482, %v1483, %v1484
        %v1486 = vrot.slane %v1473, 1
        %v1487 = vrot.slane %v1292, 1
        %v1488 = vsel %vm1482, %v1486, %v1487
        %v1489 = vrot.slane %v1474, 1
        %v1490 = vrot.slane %v1293, 1
        %v1491 = vsel %vm1482, %v1489, %v1490
        %v1492 = vrot.slane %v1475, 1
        %v1493 = vrot.slane %v1294, 1
        %v1494 = vsel %vm1482, %v1492, %v1493
        %v1495 = vrot.slane %v1476, 1
        %v1496 = vrot.slane %v1295, 1
        %v1497 = vsel %vm1482, %v1495, %v1496
        %v1498 = vrot.slane %v1477, 1
        %v1499 = vrot.slane %v1296, 1
        %v1500 = vsel %vm1482, %v1498, %v1499
        %v1501 = vrot.slane %v1478, 1
        %v1502 = vrot.slane %v1297, 1
        %v1503 = vsel %vm1482, %v1501, %v1502
        %v1504 = vrot.slane %v1479, 1
        %v1505 = vrot.slane %v1298, 1
        %v1506 = vsel %vm1482, %v1504, %v1505
        %v1507 = vrot.slane %v1480, 1
        %v1508 = vrot.slane %v1299, 1
        %v1509 = vsel %vm1482, %v1507, %v1508
        %v1510 = vrot.slane %v1481, 1
        %v1511 = vrot.slane %v1300, 1
        %v1512 = vsel %vm1482, %v1510, %v1511
        %v1543 = vunpack.c.l.b16 %v1090
        %v1544 = vunpack.c.l.b16 %v1091
        %v1545 = vunpack.c.l.b16 %v1092
        %v1546 = vunpack.c.l.b16 %v1093
        %v1547 = vunpack.c.l.b16 %v1094
        %v1548 = vunpack.c.l.b16 %v1095
        %v1549 = vunpack.c.l.b16 %v1096
        %v1550 = vunpack.c.l.b16 %v1097
        %v1551 = vunpack.c.l.b16 %v1098
        %v1552 = vunpack.c.l.b16 %v1099
        %v1553 = vunpack.c.l.b16 %v1100
        %v1554 = vunpack.c.l.b16 %v1101
        %v1555 = vunpack.c.l.b16 %v1102
        %v1556 = vunpack.c.l.b16 %v1103
        %v1557 = vunpack.c.l.b16 %v1104
        %v1558 = vunpack.c.l.b16 %v1105
        %v1559 = vunpack.c.l.b16 %v1106
        %v1560 = vunpack.c.l.b16 %v1107
        %v1561 = vunpack.c.l.b16 %v1108
        %v1562 = vunpack.c.l.b16 %v1109
        %v1563 = vunpack.c.l.b16 %v1110
        %v1564 = vunpack.c.l.b16 %v1111
        %v1565 = vunpack.c.l.b16 %v1112
        %v1566 = vunpack.c.l.b16 %v1113
        %v1567 = vunpack.c.l.b16 %v1114
        %v1568 = vunpack.c.l.b16 %v1115
        %v1569 = vunpack.c.l.b16 %v1116
        %v1570 = vunpack.c.l.b16 %v1117
        %v1571 = vunpack.c.l.b16 %v1118
        %v1572 = vunpack.c.l.b16 %v1119
        %v1573 = vpack.c.b16 %v1544, %v1543
        %v1574 = vpack.c.b16 %v1545, %v1545
        %v1575 = vpack.c.b16 %v1547, %v1546
        %v1576 = vpack.c.b16 %v1548, %v1548
        %v1577 = vpack.c.b16 %v1550, %v1549
        %v1578 = vpack.c.b16 %v1551, %v1551
        %v1579 = vpack.c.b16 %v1553, %v1552
        %v1580 = vpack.c.b16 %v1554, %v1554
        %v1581 = vpack.c.b16 %v1556, %v1555
        %v1582 = vpack.c.b16 %v1557, %v1557
        %v1583 = vpack.c.b16 %v1559, %v1558
        %v1584 = vpack.c.b16 %v1560, %v1560
        %v1585 = vpack.c.b16 %v1562, %v1561
        %v1586 = vpack.c.b16 %v1563, %v1563
        %v1587 = vpack.c.b16 %v1565, %v1564
        %v1588 = vpack.c.b16 %v1566, %v1566
        %v1589 = vpack.c.b16 %v1568, %v1567
        %v1590 = vpack.c.b16 %v1569, %v1569
        %v1591 = vpack.c.b16 %v1571, %v1570
        %v1592 = vpack.c.b16 %v1572, %v1572
        %v1603 = vunpack.c.l.b16 %v1120
        %v1604 = vunpack.c.l.b16 %v1121
        %v1605 = vunpack.c.l.b16 %v1122
        %v1606 = vunpack.c.l.b16 %v1123
        %v1607 = vunpack.c.l.b16 %v1124
        %v1608 = vunpack.c.l.b16 %v1125
        %v1609 = vunpack.c.l.b16 %v1126
        %v1610 = vunpack.c.l.b16 %v1127
        %v1611 = vunpack.c.l.b16 %v1128
        %v1612 = vunpack.c.l.b16 %v1129
        %v1613 = vpack.c.b16 %v1603, %v1603
        %v1614 = vpack.c.b16 %v1604, %v1604
        %v1615 = vpack.c.b16 %v1605, %v1605
        %v1616 = vpack.c.b16 %v1606, %v1606
        %v1617 = vpack.c.b16 %v1607, %v1607
        %v1618 = vpack.c.b16 %v1608, %v1608
        %v1619 = vpack.c.b16 %v1609, %v1609
        %v1620 = vpack.c.b16 %v1610, %v1610
        %v1621 = vpack.c.b16 %v1611, %v1611
        %v1622 = vpack.c.b16 %v1612, %v1612
        %v1624 = vshrl.u32 %v1573, 16
        %v1626 = vshll.u32 %v1573, 16
        %v1628 = vrot.slane %v1626, 1
        %v1629 = vor.u32 %v1624, %v1628
        %v1631 = vshll.u32 %v1613, 16
        %v1633 = vrot.slane %v1631, 1
        %v1634 = vsel %vm1301, %v1629, %v1633
        %v1635 = vshrl.u32 %v1613, 16
        %v1637 = vor.u32 %v1635, %v1633
        %v1639 = vshrl.u32 %v1575, 16
        %v1641 = vshll.u32 %v1575, 16
        %v1643 = vrot.slane %v1641, 1
        %v1644 = vor.u32 %v1639, %v1643
        %v1646 = vshll.u32 %v1614, 16
        %v1648 = vrot.slane %v1646, 1
        %v1649 = vsel %vm1301, %v1644, %v1648
        %v1650 = vshrl.u32 %v1614, 16
        %v1652 = vor.u32 %v1650, %v1648
        %v1654 = vshrl.u32 %v1577, 16
        %v1656 = vshll.u32 %v1577, 16
        %v1658 = vrot.slane %v1656, 1
        %v1659 = vor.u32 %v1654, %v1658
        %v1661 = vshll.u32 %v1615, 16
        %v1663 = vrot.slane %v1661, 1
        %v1664 = vsel %vm1301, %v1659, %v1663
        %v1665 = vshrl.u32 %v1615, 16
        %v1667 = vor.u32 %v1665, %v1663
        %v1669 = vshrl.u32 %v1579, 16
        %v1671 = vshll.u32 %v1579, 16
        %v1673 = vrot.slane %v1671, 1
        %v1674 = vor.u32 %v1669, %v1673
        %v1676 = vshll.u32 %v1616, 16
        %v1678 = vrot.slane %v1676, 1
        %v1679 = vsel %vm1301, %v1674, %v1678
        %v1680 = vshrl.u32 %v1616, 16
        %v1682 = vor.u32 %v1680, %v1678
        %v1684 = vshrl.u32 %v1581, 16
        %v1686 = vshll.u32 %v1581, 16
        %v1688 = vrot.slane %v1686, 1
        %v1689 = vor.u32 %v1684, %v1688
        %v1691 = vshll.u32 %v1617, 16
        %v1693 = vrot.slane %v1691, 1
        %v1694 = vsel %vm1301, %v1689, %v1693
        %v1695 = vshrl.u32 %v1617, 16
        %v1697 = vor.u32 %v1695, %v1693
        %v1699 = vshrl.u32 %v1583, 16
        %v1701 = vshll.u32 %v1583, 16
        %v1703 = vrot.slane %v1701, 1
        %v1704 = vor.u32 %v1699, %v1703
        %v1706 = vshll.u32 %v1618, 16
        %v1708 = vrot.slane %v1706, 1
        %v1709 = vsel %vm1301, %v1704, %v1708
        %v1710 = vshrl.u32 %v1618, 16
        %v1712 = vor.u32 %v1710, %v1708
        %v1714 = vshrl.u32 %v1585, 16
        %v1716 = vshll.u32 %v1585, 16
        %v1718 = vrot.slane %v1716, 1
        %v1719 = vor.u32 %v1714, %v1718
        %v1721 = vshll.u32 %v1619, 16
        %v1723 = vrot.slane %v1721, 1
        %v1724 = vsel %vm1301, %v1719, %v1723
        %v1725 = vshrl.u32 %v1619, 16
        %v1727 = vor.u32 %v1725, %v1723
        %v1729 = vshrl.u32 %v1587, 16
        %v1731 = vshll.u32 %v1587, 16
        %v1733 = vrot.slane %v1731, 1
        %v1734 = vor.u32 %v1729, %v1733
        %v1736 = vshll.u32 %v1620, 16
        %v1738 = vrot.slane %v1736, 1
        %v1739 = vsel %vm1301, %v1734, %v1738
        %v1740 = vshrl.u32 %v1620, 16
        %v1742 = vor.u32 %v1740, %v1738
        %v1744 = vshrl.u32 %v1589, 16
        %v1746 = vshll.u32 %v1589, 16
        %v1748 = vrot.slane %v1746, 1
        %v1749 = vor.u32 %v1744, %v1748
        %v1751 = vshll.u32 %v1621, 16
        %v1753 = vrot.slane %v1751, 1
        %v1754 = vsel %vm1301, %v1749, %v1753
        %v1755 = vshrl.u32 %v1621, 16
        %v1757 = vor.u32 %v1755, %v1753
        %v1759 = vshrl.u32 %v1591, 16
        %v1761 = vshll.u32 %v1591, 16
        %v1763 = vrot.slane %v1761, 1
        %v1764 = vor.u32 %v1759, %v1763
        %v1766 = vshll.u32 %v1622, 16
        %v1768 = vrot.slane %v1766, 1
        %v1769 = vsel %vm1301, %v1764, %v1768
        %v1770 = vshrl.u32 %v1622, 16
        %v1772 = vor.u32 %v1770, %v1768
        %v1783 = vunpack.c.l.b16 %v1130
        %v1784 = vunpack.c.l.b16 %v1131
        %v1785 = vunpack.c.l.b16 %v1132
        %v1786 = vunpack.c.l.b16 %v1133
        %v1787 = vunpack.c.l.b16 %v1134
        %v1788 = vunpack.c.l.b16 %v1135
        %v1789 = vunpack.c.l.b16 %v1136
        %v1790 = vunpack.c.l.b16 %v1137
        %v1791 = vunpack.c.l.b16 %v1138
        %v1792 = vunpack.c.l.b16 %v1139
        %v1793 = vpack.c.b16 %v1544, %v1783
        %v1794 = vpack.c.b16 %v1547, %v1784
        %v1795 = vpack.c.b16 %v1550, %v1785
        %v1796 = vpack.c.b16 %v1553, %v1786
        %v1797 = vpack.c.b16 %v1556, %v1787
        %v1798 = vpack.c.b16 %v1559, %v1788
        %v1799 = vpack.c.b16 %v1562, %v1789
        %v1800 = vpack.c.b16 %v1565, %v1790
        %v1801 = vpack.c.b16 %v1568, %v1791
        %v1802 = vpack.c.b16 %v1571, %v1792
        %v1803 = vrot.slane %v1793, 1
        %v1804 = vrot.slane %v1613, 1
        %v1805 = vsel %vm1482, %v1803, %v1804
        %v1806 = vrot.slane %v1794, 1
        %v1807 = vrot.slane %v1614, 1
        %v1808 = vsel %vm1482, %v1806, %v1807
        %v1809 = vrot.slane %v1795, 1
        %v1810 = vrot.slane %v1615, 1
        %v1811 = vsel %vm1482, %v1809, %v1810
        %v1812 = vrot.slane %v1796, 1
        %v1813 = vrot.slane %v1616, 1
        %v1814 = vsel %vm1482, %v1812, %v1813
        %v1815 = vrot.slane %v1797, 1
        %v1816 = vrot.slane %v1617, 1
        %v1817 = vsel %vm1482, %v1815, %v1816
        %v1818 = vrot.slane %v1798, 1
        %v1819 = vrot.slane %v1618, 1
        %v1820 = vsel %vm1482, %v1818, %v1819
        %v1821 = vrot.slane %v1799, 1
        %v1822 = vrot.slane %v1619, 1
        %v1823 = vsel %vm1482, %v1821, %v1822
        %v1824 = vrot.slane %v1800, 1
        %v1825 = vrot.slane %v1620, 1
        %v1826 = vsel %vm1482, %v1824, %v1825
        %v1827 = vrot.slane %v1801, 1
        %v1828 = vrot.slane %v1621, 1
        %v1829 = vsel %vm1482, %v1827, %v1828
        %v1830 = vrot.slane %v1802, 1
        %v1831 = vrot.slane %v1622, 1
        %v1832 = vsel %vm1482, %v1830, %v1831
        %v1863 = vunpack.c.l.b16 %v1141
        %v1864 = vunpack.c.l.b16 %v1142
        %v1865 = vunpack.c.l.b16 %v1143
        %v1866 = vunpack.c.l.b16 %v1144
        %v1867 = vunpack.c.l.b16 %v1145
        %v1868 = vunpack.c.l.b16 %v1146
        %v1869 = vunpack.c.l.b16 %v1147
        %v1870 = vunpack.c.l.b16 %v1148
        %v1871 = vunpack.c.l.b16 %v1149
        %v1872 = vunpack.c.l.b16 %v1150
        %v1873 = vunpack.c.l.b16 %v1151
        %v1874 = vunpack.c.l.b16 %v1152
        %v1875 = vunpack.c.l.b16 %v1153
        %v1876 = vunpack.c.l.b16 %v1154
        %v1877 = vunpack.c.l.b16 %v1155
        %v1878 = vunpack.c.l.b16 %v1156
        %v1879 = vunpack.c.l.b16 %v1157
        %v1880 = vunpack.c.l.b16 %v1158
        %v1881 = vunpack.c.l.b16 %v1159
        %v1882 = vunpack.c.l.b16 %v1160
        %v1883 = vunpack.c.l.b16 %v1161
        %v1884 = vunpack.c.l.b16 %v1162
        %v1885 = vunpack.c.l.b16 %v1163
        %v1886 = vunpack.c.l.b16 %v1164
        %v1887 = vunpack.c.l.b16 %v1165
        %v1888 = vunpack.c.l.b16 %v1166
        %v1889 = vunpack.c.l.b16 %v1167
        %v1890 = vunpack.c.l.b16 %v1168
        %v1891 = vunpack.c.l.b16 %v1169
        %v1892 = vunpack.c.l.b16 %v1170
        %v1893 = vpack.c.b16 %v1864, %v1863
        %v1894 = vpack.c.b16 %v1865, %v1865
        %v1895 = vpack.c.b16 %v1867, %v1866
        %v1896 = vpack.c.b16 %v1868, %v1868
        %v1897 = vpack.c.b16 %v1870, %v1869
        %v1898 = vpack.c.b16 %v1871, %v1871
        %v1899 = vpack.c.b16 %v1873, %v1872
        %v1900 = vpack.c.b16 %v1874, %v1874
        %v1901 = vpack.c.b16 %v1876, %v1875
        %v1902 = vpack.c.b16 %v1877, %v1877
        %v1903 = vpack.c.b16 %v1879, %v1878
        %v1904 = vpack.c.b16 %v1880, %v1880
        %v1905 = vpack.c.b16 %v1882, %v1881
        %v1906 = vpack.c.b16 %v1883, %v1883
        %v1907 = vpack.c.b16 %v1885, %v1884
        %v1908 = vpack.c.b16 %v1886, %v1886
        %v1909 = vpack.c.b16 %v1888, %v1887
        %v1910 = vpack.c.b16 %v1889, %v1889
        %v1911 = vpack.c.b16 %v1891, %v1890
        %v1912 = vpack.c.b16 %v1892, %v1892
        %v1923 = vunpack.c.l.b16 %v1171
        %v1924 = vunpack.c.l.b16 %v1172
        %v1925 = vunpack.c.l.b16 %v1173
        %v1926 = vunpack.c.l.b16 %v1174
        %v1927 = vunpack.c.l.b16 %v1175
        %v1928 = vunpack.c.l.b16 %v1176
        %v1929 = vunpack.c.l.b16 %v1177
        %v1930 = vunpack.c.l.b16 %v1178
        %v1931 = vunpack.c.l.b16 %v1179
        %v1932 = vunpack.c.l.b16 %v1180
        %v1933 = vpack.c.b16 %v1923, %v1923
        %v1934 = vpack.c.b16 %v1924, %v1924
        %v1935 = vpack.c.b16 %v1925, %v1925
        %v1936 = vpack.c.b16 %v1926, %v1926
        %v1937 = vpack.c.b16 %v1927, %v1927
        %v1938 = vpack.c.b16 %v1928, %v1928
        %v1939 = vpack.c.b16 %v1929, %v1929
        %v1940 = vpack.c.b16 %v1930, %v1930
        %v1941 = vpack.c.b16 %v1931, %v1931
        %v1942 = vpack.c.b16 %v1932, %v1932
        %v1944 = vshrl.u32 %v1893, 16
        %v1946 = vshll.u32 %v1893, 16
        %v1948 = vrot.slane %v1946, 1
        %v1949 = vor.u32 %v1944, %v1948
        %v1951 = vshll.u32 %v1933, 16
        %v1953 = vrot.slane %v1951, 1
        %v1954 = vsel %vm1301, %v1949, %v1953
        %v1955 = vshrl.u32 %v1933, 16
        %v1957 = vor.u32 %v1955, %v1953
        %v1959 = vshrl.u32 %v1895, 16
        %v1961 = vshll.u32 %v1895, 16
        %v1963 = vrot.slane %v1961, 1
        %v1964 = vor.u32 %v1959, %v1963
        %v1966 = vshll.u32 %v1934, 16
        %v1968 = vrot.slane %v1966, 1
        %v1969 = vsel %vm1301, %v1964, %v1968
        %v1970 = vshrl.u32 %v1934, 16
        %v1972 = vor.u32 %v1970, %v1968
        %v1974 = vshrl.u32 %v1897, 16
        %v1976 = vshll.u32 %v1897, 16
        %v1978 = vrot.slane %v1976, 1
        %v1979 = vor.u32 %v1974, %v1978
        %v1981 = vshll.u32 %v1935, 16
        %v1983 = vrot.slane %v1981, 1
        %v1984 = vsel %vm1301, %v1979, %v1983
        %v1985 = vshrl.u32 %v1935, 16
        %v1987 = vor.u32 %v1985, %v1983
        %v1989 = vshrl.u32 %v1899, 16
        %v1991 = vshll.u32 %v1899, 16
        %v1993 = vrot.slane %v1991, 1
        %v1994 = vor.u32 %v1989, %v1993
        %v1996 = vshll.u32 %v1936, 16
        %v1998 = vrot.slane %v1996, 1
        %v1999 = vsel %vm1301, %v1994, %v1998
        %v2000 = vshrl.u32 %v1936, 16
        %v2002 = vor.u32 %v2000, %v1998
        %v2004 = vshrl.u32 %v1901, 16
        %v2006 = vshll.u32 %v1901, 16
        %v2008 = vrot.slane %v2006, 1
        %v2009 = vor.u32 %v2004, %v2008
        %v2011 = vshll.u32 %v1937, 16
        %v2013 = vrot.slane %v2011, 1
        %v2014 = vsel %vm1301, %v2009, %v2013
        %v2015 = vshrl.u32 %v1937, 16
        %v2017 = vor.u32 %v2015, %v2013
        %v2019 = vshrl.u32 %v1903, 16
        %v2021 = vshll.u32 %v1903, 16
        %v2023 = vrot.slane %v2021, 1
        %v2024 = vor.u32 %v2019, %v2023
        %v2026 = vshll.u32 %v1938, 16
        %v2028 = vrot.slane %v2026, 1
        %v2029 = vsel %vm1301, %v2024, %v2028
        %v2030 = vshrl.u32 %v1938, 16
        %v2032 = vor.u32 %v2030, %v2028
        %v2034 = vshrl.u32 %v1905, 16
        %v2036 = vshll.u32 %v1905, 16
        %v2038 = vrot.slane %v2036, 1
        %v2039 = vor.u32 %v2034, %v2038
        %v2041 = vshll.u32 %v1939, 16
        %v2043 = vrot.slane %v2041, 1
        %v2044 = vsel %vm1301, %v2039, %v2043
        %v2045 = vshrl.u32 %v1939, 16
        %v2047 = vor.u32 %v2045, %v2043
        %v2049 = vshrl.u32 %v1907, 16
        %v2051 = vshll.u32 %v1907, 16
        %v2053 = vrot.slane %v2051, 1
        %v2054 = vor.u32 %v2049, %v2053
        %v2056 = vshll.u32 %v1940, 16
        %v2058 = vrot.slane %v2056, 1
        %v2059 = vsel %vm1301, %v2054, %v2058
        %v2060 = vshrl.u32 %v1940, 16
        %v2062 = vor.u32 %v2060, %v2058
        %v2064 = vshrl.u32 %v1909, 16
        %v2066 = vshll.u32 %v1909, 16
        %v2068 = vrot.slane %v2066, 1
        %v2069 = vor.u32 %v2064, %v2068
        %v2071 = vshll.u32 %v1941, 16
        %v2073 = vrot.slane %v2071, 1
        %v2074 = vsel %vm1301, %v2069, %v2073
        %v2075 = vshrl.u32 %v1941, 16
        %v2077 = vor.u32 %v2075, %v2073
        %v2079 = vshrl.u32 %v1911, 16
        %v2081 = vshll.u32 %v1911, 16
        %v2083 = vrot.slane %v2081, 1
        %v2084 = vor.u32 %v2079, %v2083
        %v2086 = vshll.u32 %v1942, 16
        %v2088 = vrot.slane %v2086, 1
        %v2089 = vsel %vm1301, %v2084, %v2088
        %v2090 = vshrl.u32 %v1942, 16
        %v2092 = vor.u32 %v2090, %v2088
        %v2103 = vunpack.c.l.b16 %v1181
        %v2104 = vunpack.c.l.b16 %v1182
        %v2105 = vunpack.c.l.b16 %v1183
        %v2106 = vunpack.c.l.b16 %v1184
        %v2107 = vunpack.c.l.b16 %v1185
        %v2108 = vunpack.c.l.b16 %v1186
        %v2109 = vunpack.c.l.b16 %v1187
        %v2110 = vunpack.c.l.b16 %v1188
        %v2111 = vunpack.c.l.b16 %v1189
        %v2112 = vunpack.c.l.b16 %v1190
        %v2113 = vpack.c.b16 %v1864, %v2103
        %v2114 = vpack.c.b16 %v1867, %v2104
        %v2115 = vpack.c.b16 %v1870, %v2105
        %v2116 = vpack.c.b16 %v1873, %v2106
        %v2117 = vpack.c.b16 %v1876, %v2107
        %v2118 = vpack.c.b16 %v1879, %v2108
        %v2119 = vpack.c.b16 %v1882, %v2109
        %v2120 = vpack.c.b16 %v1885, %v2110
        %v2121 = vpack.c.b16 %v1888, %v2111
        %v2122 = vpack.c.b16 %v1891, %v2112
        %v2123 = vrot.slane %v2113, 1
        %v2124 = vrot.slane %v1933, 1
        %v2125 = vsel %vm1482, %v2123, %v2124
        %v2126 = vrot.slane %v2114, 1
        %v2127 = vrot.slane %v1934, 1
        %v2128 = vsel %vm1482, %v2126, %v2127
        %v2129 = vrot.slane %v2115, 1
        %v2130 = vrot.slane %v1935, 1
        %v2131 = vsel %vm1482, %v2129, %v2130
        %v2132 = vrot.slane %v2116, 1
        %v2133 = vrot.slane %v1936, 1
        %v2134 = vsel %vm1482, %v2132, %v2133
        %v2135 = vrot.slane %v2117, 1
        %v2136 = vrot.slane %v1937, 1
        %v2137 = vsel %vm1482, %v2135, %v2136
        %v2138 = vrot.slane %v2118, 1
        %v2139 = vrot.slane %v1938, 1
        %v2140 = vsel %vm1482, %v2138, %v2139
        %v2141 = vrot.slane %v2119, 1
        %v2142 = vrot.slane %v1939, 1
        %v2143 = vsel %vm1482, %v2141, %v2142
        %v2144 = vrot.slane %v2120, 1
        %v2145 = vrot.slane %v1940, 1
        %v2146 = vsel %vm1482, %v2144, %v2145
        %v2147 = vrot.slane %v2121, 1
        %v2148 = vrot.slane %v1941, 1
        %v2149 = vsel %vm1482, %v2147, %v2148
        %v2150 = vrot.slane %v2122, 1
        %v2151 = vrot.slane %v1942, 1
        %v2152 = vsel %vm1482, %v2150, %v2151
        %v2153 = vcombine.low %v1251, %v1313
        %v2154 = vcombine.high %v1251, %v1313
        %v2155 = vcombine.low %v1485, %v1573
        %v2156 = vcombine.high %v1485, %v1573
        %v2157 = vcombine.low %v1634, %v1805
        %v2158 = vcombine.high %v1634, %v1805
        %v2159 = vcombine.low %v1893, %v1954
        %v2160 = vcombine.high %v1893, %v1954
        %v2162 = vunpack.c.l.s4 1966171168
        %v2163 = vunpack.c.0.s8 %v2162
        %v2164 = vlaneseq
        %v2165 = vshrl.u32 %v2164, 7
        %v2166 = vsub.s32 %v2163, %v2165
        %v2167 = vrot.slane %v2153, %v2166
        %v2169 = vunpack.c.l.s4 1966171168
        %v2170 = vunpack.c.0.s8 %v2169
        %v2171 = vlaneseq
        %v2172 = vshrl.u32 %v2171, 7
        %v2173 = vsub.s32 %v2170, %v2172
        %v2174 = vrot.slane %v2154, %v2173
        %v2176 = vunpack.c.l.s4 1966171168
        %v2177 = vunpack.c.0.s8 %v2176
        %v2178 = vlaneseq
        %v2179 = vshrl.u32 %v2178, 7
        %v2180 = vsub.s32 %v2177, %v2179
        %v2181 = vrot.slane %v2155, %v2180
        %v2183 = vunpack.c.l.s4 1966171168
        %v2184 = vunpack.c.0.s8 %v2183
        %v2185 = vlaneseq
        %v2186 = vshrl.u32 %v2185, 7
        %v2187 = vsub.s32 %v2184, %v2186
        %v2188 = vrot.slane %v2156, %v2187
        %v2190 = vunpack.c.l.s4 1966171168
        %v2191 = vunpack.c.0.s8 %v2190
        %v2192 = vlaneseq
        %v2193 = vshrl.u32 %v2192, 7
        %v2194 = vsub.s32 %v2191, %v2193
        %v2195 = vrot.slane %v2157, %v2194
        %v2197 = vunpack.c.l.s4 1966171168
        %v2198 = vunpack.c.0.s8 %v2197
        %v2199 = vlaneseq
        %v2200 = vshrl.u32 %v2199, 7
        %v2201 = vsub.s32 %v2198, %v2200
        %v2202 = vrot.slane %v2158, %v2201
        %v2204 = vunpack.c.l.s4 1966171168
        %v2205 = vunpack.c.0.s8 %v2204
        %v2206 = vlaneseq
        %v2207 = vshrl.u32 %v2206, 7
        %v2208 = vsub.s32 %v2205, %v2207
        %v2209 = vrot.slane %v2159, %v2208
        %v2211 = vunpack.c.l.s4 1966171168
        %v2212 = vunpack.c.0.s8 %v2211
        %v2213 = vlaneseq
        %v2214 = vshrl.u32 %v2213, 7
        %v2215 = vsub.s32 %v2212, %v2214
        %v2216 = vrot.slane %v2160, %v2215
        %v2217 = vcombine.low %v2167, %v2181
        %v2218 = vcombine.high %v2167, %v2181
        %v2219 = vcombine.low %v2174, %v2188
        %v2220 = vcombine.high %v2174, %v2188
        %v2221 = vcombine.low %v2195, %v2209
        %v2222 = vcombine.high %v2195, %v2209
        %v2223 = vcombine.low %v2202, %v2216
        %v2224 = vcombine.high %v2202, %v2216
        %v2226 = vunpack.c.l.s4 1966171168
        %v2227 = vunpack.c.0.s8 %v2226
        %v2228 = vlaneseq
        %v2229 = vshrl.u32 %v2228, 7
        %v2230 = vsub.s32 %v2227, %v2229
        %v2231 = vrot.slane %v2217, %v2230
        %v2233 = vunpack.c.l.s4 1966171168
        %v2234 = vunpack.c.0.s8 %v2233
        %v2235 = vlaneseq
        %v2236 = vshrl.u32 %v2235, 7
        %v2237 = vsub.s32 %v2234, %v2236
        %v2238 = vrot.slane %v2219, %v2237
        %v2240 = vunpack.c.l.s4 1966171168
        %v2241 = vunpack.c.0.s8 %v2240
        %v2242 = vlaneseq
        %v2243 = vshrl.u32 %v2242, 7
        %v2244 = vsub.s32 %v2241, %v2243
        %v2245 = vrot.slane %v2218, %v2244
        %v2247 = vunpack.c.l.s4 1966171168
        %v2248 = vunpack.c.0.s8 %v2247
        %v2249 = vlaneseq
        %v2250 = vshrl.u32 %v2249, 7
        %v2251 = vsub.s32 %v2248, %v2250
        %v2252 = vrot.slane %v2220, %v2251
        %v2254 = vunpack.c.l.s4 1966171168
        %v2255 = vunpack.c.0.s8 %v2254
        %v2256 = vlaneseq
        %v2257 = vshrl.u32 %v2256, 7
        %v2258 = vsub.s32 %v2255, %v2257
        %v2259 = vrot.slane %v2221, %v2258
        %v2261 = vunpack.c.l.s4 1966171168
        %v2262 = vunpack.c.0.s8 %v2261
        %v2263 = vlaneseq
        %v2264 = vshrl.u32 %v2263, 7
        %v2265 = vsub.s32 %v2262, %v2264
        %v2266 = vrot.slane %v2223, %v2265
        %v2268 = vunpack.c.l.s4 1966171168
        %v2269 = vunpack.c.0.s8 %v2268
        %v2270 = vlaneseq
        %v2271 = vshrl.u32 %v2270, 7
        %v2272 = vsub.s32 %v2269, %v2271
        %v2273 = vrot.slane %v2222, %v2272
        %v2275 = vunpack.c.l.s4 1966171168
        %v2276 = vunpack.c.0.s8 %v2275
        %v2277 = vlaneseq
        %v2278 = vshrl.u32 %v2277, 7
        %v2279 = vsub.s32 %v2276, %v2278
        %v2280 = vrot.slane %v2224, %v2279
        %v2281 = vcombine.low %v2231, %v2259
        %v2282 = vcombine.high %v2231, %v2259
        %v2283 = vcombine.low %v2238, %v2266
        %v2284 = vcombine.high %v2238, %v2266
        %v2285 = vcombine.low %v2245, %v2273
        %v2286 = vcombine.high %v2245, %v2273
        %v2287 = vcombine.low %v2252, %v2280
        %v2288 = vcombine.high %v2252, %v2280
        %v2289 = vcombine.high %v2125, %v2125
        %v2291 = vunpack.c.l.s4 1966171168
        %v2292 = vunpack.c.0.s8 %v2291
        %v2293 = vlaneseq
        %v2294 = vshrl.u32 %v2293, 7
        %v2295 = vsub.s32 %v2292, %v2294
        %v2296 = vrot.slane %v2125, %v2295
        %v2298 = vunpack.c.l.s4 1966171168
        %v2299 = vunpack.c.0.s8 %v2298
        %v2300 = vlaneseq
        %v2301 = vshrl.u32 %v2300, 7
        %v2302 = vsub.s32 %v2299, %v2301
        %v2303 = vrot.slane %v2289, %v2302
        %v2304 = vcombine.high %v2296, %v2296
        %v2305 = vcombine.high %v2303, %v2303
        %v2307 = vunpack.c.l.s4 1966171168
        %v2308 = vunpack.c.0.s8 %v2307
        %v2309 = vlaneseq
        %v2310 = vshrl.u32 %v2309, 7
        %v2311 = vsub.s32 %v2308, %v2310
        %v2312 = vrot.slane %v2296, %v2311
        %v2314 = vunpack.c.l.s4 1966171168
        %v2315 = vunpack.c.0.s8 %v2314
        %v2316 = vlaneseq
        %v2317 = vshrl.u32 %v2316, 7
        %v2318 = vsub.s32 %v2315, %v2317
        %v2319 = vrot.slane %v2303, %v2318
        %v2321 = vunpack.c.l.s4 1966171168
        %v2322 = vunpack.c.0.s8 %v2321
        %v2323 = vlaneseq
        %v2324 = vshrl.u32 %v2323, 7
        %v2325 = vsub.s32 %v2322, %v2324
        %v2326 = vrot.slane %v2304, %v2325
        %v2328 = vunpack.c.l.s4 1966171168
        %v2329 = vunpack.c.0.s8 %v2328
        %v2330 = vlaneseq
        %v2331 = vshrl.u32 %v2330, 7
        %v2332 = vsub.s32 %v2329, %v2331
        %v2333 = vrot.slane %v2305, %v2332
        %v2334 = vcombine.high %v2312, %v2312
        %v2335 = vcombine.high %v2319, %v2319
        %v2336 = vcombine.high %v2326, %v2326
        %v2337 = vcombine.high %v2333, %v2333
        %v2338 = vcombine.low %v1252, %v1316
        %v2339 = vcombine.low %v1484, %v1574
        %v2340 = vcombine.low %v1637, %v1804
        %v2341 = vcombine.low %v1894, %v1957
        %v2343 = vunpack.c.l.s4 1966171168
        %v2344 = vunpack.c.0.s8 %v2343
        %v2345 = vlaneseq
        %v2346 = vshrl.u32 %v2345, 7
        %v2347 = vsub.s32 %v2344, %v2346
        %v2348 = vrot.slane %v2338, %v2347
        %v2350 = vunpack.c.l.s4 1966171168
        %v2351 = vunpack.c.0.s8 %v2350
        %v2352 = vlaneseq
        %v2353 = vshrl.u32 %v2352, 7
        %v2354 = vsub.s32 %v2351, %v2353
        %v2355 = vrot.slane %v2339, %v2354
        %v2357 = vunpack.c.l.s4 1966171168
        %v2358 = vunpack.c.0.s8 %v2357
        %v2359 = vlaneseq
        %v2360 = vshrl.u32 %v2359, 7
        %v2361 = vsub.s32 %v2358, %v2360
        %v2362 = vrot.slane %v2340, %v2361
        %v2364 = vunpack.c.l.s4 1966171168
        %v2365 = vunpack.c.0.s8 %v2364
        %v2366 = vlaneseq
        %v2367 = vshrl.u32 %v2366, 7
        %v2368 = vsub.s32 %v2365, %v2367
        %v2369 = vrot.slane %v2341, %v2368
        %v2370 = vcombine.low %v2348, %v2355
        %v2371 = vcombine.low %v2362, %v2369
        %v2373 = vunpack.c.l.s4 1966171168
        %v2374 = vunpack.c.0.s8 %v2373
        %v2375 = vlaneseq
        %v2376 = vshrl.u32 %v2375, 7
        %v2377 = vsub.s32 %v2374, %v2376
        %v2378 = vrot.slane %v2370, %v2377
        %v2380 = vunpack.c.l.s4 1966171168
        %v2381 = vunpack.c.0.s8 %v2380
        %v2382 = vlaneseq
        %v2383 = vshrl.u32 %v2382, 7
        %v2384 = vsub.s32 %v2381, %v2383
        %v2385 = vrot.slane %v2371, %v2384
        %v2386 = vcombine.low %v2378, %v2385
        %v2388 = vunpack.c.l.s4 1966171168
        %v2389 = vunpack.c.0.s8 %v2388
        %v2390 = vlaneseq
        %v2391 = vshrl.u32 %v2390, 7
        %v2392 = vsub.s32 %v2389, %v2391
        %v2393 = vrot.slane %v2124, %v2392
        %v2395 = vunpack.c.l.s4 1966171168
        %v2396 = vunpack.c.0.s8 %v2395
        %v2397 = vlaneseq
        %v2398 = vshrl.u32 %v2397, 7
        %v2399 = vsub.s32 %v2396, %v2398
        %v2400 = vrot.slane %v2393, %v2399
        %v2401 = vcombine.low %v1253, %v1328
        %v2402 = vcombine.high %v1253, %v1328
        %v2403 = vcombine.low %v1488, %v1575
        %v2404 = vcombine.high %v1488, %v1575
        %v2405 = vcombine.low %v1649, %v1808
        %v2406 = vcombine.high %v1649, %v1808
        %v2407 = vcombine.low %v1895, %v1969
        %v2408 = vcombine.high %v1895, %v1969
        %v2410 = vunpack.c.l.s4 1966171168
        %v2411 = vunpack.c.0.s8 %v2410
        %v2412 = vlaneseq
        %v2413 = vshrl.u32 %v2412, 7
        %v2414 = vsub.s32 %v2411, %v2413
        %v2415 = vrot.slane %v2401, %v2414
        %v2417 = vunpack.c.l.s4 1966171168
        %v2418 = vunpack.c.0.s8 %v2417
        %v2419 = vlaneseq
        %v2420 = vshrl.u32 %v2419, 7
        %v2421 = vsub.s32 %v2418, %v2420
        %v2422 = vrot.slane %v2402, %v2421
        %v2424 = vunpack.c.l.s4 1966171168
        %v2425 = vunpack.c.0.s8 %v2424
        %v2426 = vlaneseq
        %v2427 = vshrl.u32 %v2426, 7
        %v2428 = vsub.s32 %v2425, %v2427
        %v2429 = vrot.slane %v2403, %v2428
        %v2431 = vunpack.c.l.s4 1966171168
        %v2432 = vunpack.c.0.s8 %v2431
        %v2433 = vlaneseq
        %v2434 = vshrl.u32 %v2433, 7
        %v2435 = vsub.s32 %v2432, %v2434
        %v2436 = vrot.slane %v2404, %v2435
        %v2438 = vunpack.c.l.s4 1966171168
        %v2439 = vunpack.c.0.s8 %v2438
        %v2440 = vlaneseq
        %v2441 = vshrl.u32 %v2440, 7
        %v2442 = vsub.s32 %v2439, %v2441
        %v2443 = vrot.slane %v2405, %v2442
        %v2445 = vunpack.c.l.s4 1966171168
        %v2446 = vunpack.c.0.s8 %v2445
        %v2447 = vlaneseq
        %v2448 = vshrl.u32 %v2447, 7
        %v2449 = vsub.s32 %v2446, %v2448
        %v2450 = vrot.slane %v2406, %v2449
        %v2452 = vunpack.c.l.s4 1966171168
        %v2453 = vunpack.c.0.s8 %v2452
        %v2454 = vlaneseq
        %v2455 = vshrl.u32 %v2454, 7
        %v2456 = vsub.s32 %v2453, %v2455
        %v2457 = vrot.slane %v2407, %v2456
        %v2459 = vunpack.c.l.s4 1966171168
        %v2460 = vunpack.c.0.s8 %v2459
        %v2461 = vlaneseq
        %v2462 = vshrl.u32 %v2461, 7
        %v2463 = vsub.s32 %v2460, %v2462
        %v2464 = vrot.slane %v2408, %v2463
        %v2465 = vcombine.low %v2415, %v2429
        %v2466 = vcombine.high %v2415, %v2429
        %v2467 = vcombine.low %v2422, %v2436
        %v2468 = vcombine.high %v2422, %v2436
        %v2469 = vcombine.low %v2443, %v2457
        %v2470 = vcombine.high %v2443, %v2457
        %v2471 = vcombine.low %v2450, %v2464
        %v2472 = vcombine.high %v2450, %v2464
        %v2474 = vunpack.c.l.s4 1966171168
        %v2475 = vunpack.c.0.s8 %v2474
        %v2476 = vlaneseq
        %v2477 = vshrl.u32 %v2476, 7
        %v2478 = vsub.s32 %v2475, %v2477
        %v2479 = vrot.slane %v2465, %v2478
        %v2481 = vunpack.c.l.s4 1966171168
        %v2482 = vunpack.c.0.s8 %v2481
        %v2483 = vlaneseq
        %v2484 = vshrl.u32 %v2483, 7
        %v2485 = vsub.s32 %v2482, %v2484
        %v2486 = vrot.slane %v2467, %v2485
        %v2488 = vunpack.c.l.s4 1966171168
        %v2489 = vunpack.c.0.s8 %v2488
        %v2490 = vlaneseq
        %v2491 = vshrl.u32 %v2490, 7
        %v2492 = vsub.s32 %v2489, %v2491
        %v2493 = vrot.slane %v2466, %v2492
        %v2495 = vunpack.c.l.s4 1966171168
        %v2496 = vunpack.c.0.s8 %v2495
        %v2497 = vlaneseq
        %v2498 = vshrl.u32 %v2497, 7
        %v2499 = vsub.s32 %v2496, %v2498
        %v2500 = vrot.slane %v2468, %v2499
        %v2502 = vunpack.c.l.s4 1966171168
        %v2503 = vunpack.c.0.s8 %v2502
        %v2504 = vlaneseq
        %v2505 = vshrl.u32 %v2504, 7
        %v2506 = vsub.s32 %v2503, %v2505
        %v2507 = vrot.slane %v2469, %v2506
        %v2509 = vunpack.c.l.s4 1966171168
        %v2510 = vunpack.c.0.s8 %v2509
        %v2511 = vlaneseq
        %v2512 = vshrl.u32 %v2511, 7
        %v2513 = vsub.s32 %v2510, %v2512
        %v2514 = vrot.slane %v2471, %v2513
        %v2516 = vunpack.c.l.s4 1966171168
        %v2517 = vunpack.c.0.s8 %v2516
        %v2518 = vlaneseq
        %v2519 = vshrl.u32 %v2518, 7
        %v2520 = vsub.s32 %v2517, %v2519
        %v2521 = vrot.slane %v2470, %v2520
        %v2523 = vunpack.c.l.s4 1966171168
        %v2524 = vunpack.c.0.s8 %v2523
        %v2525 = vlaneseq
        %v2526 = vshrl.u32 %v2525, 7
        %v2527 = vsub.s32 %v2524, %v2526
        %v2528 = vrot.slane %v2472, %v2527
        %v2529 = vcombine.low %v2479, %v2507
        %v2530 = vcombine.high %v2479, %v2507
        %v2531 = vcombine.low %v2486, %v2514
        %v2532 = vcombine.high %v2486, %v2514
        %v2533 = vcombine.low %v2493, %v2521
        %v2534 = vcombine.high %v2493, %v2521
        %v2535 = vcombine.low %v2500, %v2528
        %v2536 = vcombine.high %v2500, %v2528
        %v2537 = vcombine.high %v2128, %v2128
        %v2539 = vunpack.c.l.s4 1966171168
        %v2540 = vunpack.c.0.s8 %v2539
        %v2541 = vlaneseq
        %v2542 = vshrl.u32 %v2541, 7
        %v2543 = vsub.s32 %v2540, %v2542
        %v2544 = vrot.slane %v2128, %v2543
        %v2546 = vunpack.c.l.s4 1966171168
        %v2547 = vunpack.c.0.s8 %v2546
        %v2548 = vlaneseq
        %v2549 = vshrl.u32 %v2548, 7
        %v2550 = vsub.s32 %v2547, %v2549
        %v2551 = vrot.slane %v2537, %v2550
        %v2552 = vcombine.high %v2544, %v2544
        %v2553 = vcombine.high %v2551, %v2551
        %v2555 = vunpack.c.l.s4 1966171168
        %v2556 = vunpack.c.0.s8 %v2555
        %v2557 = vlaneseq
        %v2558 = vshrl.u32 %v2557, 7
        %v2559 = vsub.s32 %v2556, %v2558
        %v2560 = vrot.slane %v2544, %v2559
        %v2562 = vunpack.c.l.s4 1966171168
        %v2563 = vunpack.c.0.s8 %v2562
        %v2564 = vlaneseq
        %v2565 = vshrl.u32 %v2564, 7
        %v2566 = vsub.s32 %v2563, %v2565
        %v2567 = vrot.slane %v2551, %v2566
        %v2569 = vunpack.c.l.s4 1966171168
        %v2570 = vunpack.c.0.s8 %v2569
        %v2571 = vlaneseq
        %v2572 = vshrl.u32 %v2571, 7
        %v2573 = vsub.s32 %v2570, %v2572
        %v2574 = vrot.slane %v2552, %v2573
        %v2576 = vunpack.c.l.s4 1966171168
        %v2577 = vunpack.c.0.s8 %v2576
        %v2578 = vlaneseq
        %v2579 = vshrl.u32 %v2578, 7
        %v2580 = vsub.s32 %v2577, %v2579
        %v2581 = vrot.slane %v2553, %v2580
        %v2582 = vcombine.high %v2560, %v2560
        %v2583 = vcombine.high %v2567, %v2567
        %v2584 = vcombine.high %v2574, %v2574
        %v2585 = vcombine.high %v2581, %v2581
        %v2586 = vcombine.low %v1254, %v1331
        %v2587 = vcombine.low %v1487, %v1576
        %v2588 = vcombine.low %v1652, %v1807
        %v2589 = vcombine.low %v1896, %v1972
        %v2591 = vunpack.c.l.s4 1966171168
        %v2592 = vunpack.c.0.s8 %v2591
        %v2593 = vlaneseq
        %v2594 = vshrl.u32 %v2593, 7
        %v2595 = vsub.s32 %v2592, %v2594
        %v2596 = vrot.slane %v2586, %v2595
        %v2598 = vunpack.c.l.s4 1966171168
        %v2599 = vunpack.c.0.s8 %v2598
        %v2600 = vlaneseq
        %v2601 = vshrl.u32 %v2600, 7
        %v2602 = vsub.s32 %v2599, %v2601
        %v2603 = vrot.slane %v2587, %v2602
        %v2605 = vunpack.c.l.s4 1966171168
        %v2606 = vunpack.c.0.s8 %v2605
        %v2607 = vlaneseq
        %v2608 = vshrl.u32 %v2607, 7
        %v2609 = vsub.s32 %v2606, %v2608
        %v2610 = vrot.slane %v2588, %v2609
        %v2612 = vunpack.c.l.s4 1966171168
        %v2613 = vunpack.c.0.s8 %v2612
        %v2614 = vlaneseq
        %v2615 = vshrl.u32 %v2614, 7
        %v2616 = vsub.s32 %v2613, %v2615
        %v2617 = vrot.slane %v2589, %v2616
        %v2618 = vcombine.low %v2596, %v2603
        %v2619 = vcombine.low %v2610, %v2617
        %v2621 = vunpack.c.l.s4 1966171168
        %v2622 = vunpack.c.0.s8 %v2621
        %v2623 = vlaneseq
        %v2624 = vshrl.u32 %v2623, 7
        %v2625 = vsub.s32 %v2622, %v2624
        %v2626 = vrot.slane %v2618, %v2625
        %v2628 = vunpack.c.l.s4 1966171168
        %v2629 = vunpack.c.0.s8 %v2628
        %v2630 = vlaneseq
        %v2631 = vshrl.u32 %v2630, 7
        %v2632 = vsub.s32 %v2629, %v2631
        %v2633 = vrot.slane %v2619, %v2632
        %v2634 = vcombine.low %v2626, %v2633
        %v2636 = vunpack.c.l.s4 1966171168
        %v2637 = vunpack.c.0.s8 %v2636
        %v2638 = vlaneseq
        %v2639 = vshrl.u32 %v2638, 7
        %v2640 = vsub.s32 %v2637, %v2639
        %v2641 = vrot.slane %v2127, %v2640
        %v2643 = vunpack.c.l.s4 1966171168
        %v2644 = vunpack.c.0.s8 %v2643
        %v2645 = vlaneseq
        %v2646 = vshrl.u32 %v2645, 7
        %v2647 = vsub.s32 %v2644, %v2646
        %v2648 = vrot.slane %v2641, %v2647
        %v2649 = vcombine.low %v1255, %v1343
        %v2650 = vcombine.high %v1255, %v1343
        %v2651 = vcombine.low %v1491, %v1577
        %v2652 = vcombine.high %v1491, %v1577
        %v2653 = vcombine.low %v1664, %v1811
        %v2654 = vcombine.high %v1664, %v1811
        %v2655 = vcombine.low %v1897, %v1984
        %v2656 = vcombine.high %v1897, %v1984
        %v2658 = vunpack.c.l.s4 1966171168
        %v2659 = vunpack.c.0.s8 %v2658
        %v2660 = vlaneseq
        %v2661 = vshrl.u32 %v2660, 7
        %v2662 = vsub.s32 %v2659, %v2661
        %v2663 = vrot.slane %v2649, %v2662
        %v2665 = vunpack.c.l.s4 1966171168
        %v2666 = vunpack.c.0.s8 %v2665
        %v2667 = vlaneseq
        %v2668 = vshrl.u32 %v2667, 7
        %v2669 = vsub.s32 %v2666, %v2668
        %v2670 = vrot.slane %v2650, %v2669
        %v2672 = vunpack.c.l.s4 1966171168
        %v2673 = vunpack.c.0.s8 %v2672
        %v2674 = vlaneseq
        %v2675 = vshrl.u32 %v2674, 7
        %v2676 = vsub.s32 %v2673, %v2675
        %v2677 = vrot.slane %v2651, %v2676
        %v2679 = vunpack.c.l.s4 1966171168
        %v2680 = vunpack.c.0.s8 %v2679
        %v2681 = vlaneseq
        %v2682 = vshrl.u32 %v2681, 7
        %v2683 = vsub.s32 %v2680, %v2682
        %v2684 = vrot.slane %v2652, %v2683
        %v2686 = vunpack.c.l.s4 1966171168
        %v2687 = vunpack.c.0.s8 %v2686
        %v2688 = vlaneseq
        %v2689 = vshrl.u32 %v2688, 7
        %v2690 = vsub.s32 %v2687, %v2689
        %v2691 = vrot.slane %v2653, %v2690
        %v2693 = vunpack.c.l.s4 1966171168
        %v2694 = vunpack.c.0.s8 %v2693
        %v2695 = vlaneseq
        %v2696 = vshrl.u32 %v2695, 7
        %v2697 = vsub.s32 %v2694, %v2696
        %v2698 = vrot.slane %v2654, %v2697
        %v2700 = vunpack.c.l.s4 1966171168
        %v2701 = vunpack.c.0.s8 %v2700
        %v2702 = vlaneseq
        %v2703 = vshrl.u32 %v2702, 7
        %v2704 = vsub.s32 %v2701, %v2703
        %v2705 = vrot.slane %v2655, %v2704
        %v2707 = vunpack.c.l.s4 1966171168
        %v2708 = vunpack.c.0.s8 %v2707
        %v2709 = vlaneseq
        %v2710 = vshrl.u32 %v2709, 7
        %v2711 = vsub.s32 %v2708, %v2710
        %v2712 = vrot.slane %v2656, %v2711
        %v2713 = vcombine.low %v2663, %v2677
        %v2714 = vcombine.high %v2663, %v2677
        %v2715 = vcombine.low %v2670, %v2684
        %v2716 = vcombine.high %v2670, %v2684
        %v2717 = vcombine.low %v2691, %v2705
        %v2718 = vcombine.high %v2691, %v2705
        %v2719 = vcombine.low %v2698, %v2712
        %v2720 = vcombine.high %v2698, %v2712
        %v2722 = vunpack.c.l.s4 1966171168
        %v2723 = vunpack.c.0.s8 %v2722
        %v2724 = vlaneseq
        %v2725 = vshrl.u32 %v2724, 7
        %v2726 = vsub.s32 %v2723, %v2725
        %v2727 = vrot.slane %v2713, %v2726
        %v2729 = vunpack.c.l.s4 1966171168
        %v2730 = vunpack.c.0.s8 %v2729
        %v2731 = vlaneseq
        %v2732 = vshrl.u32 %v2731, 7
        %v2733 = vsub.s32 %v2730, %v2732
        %v2734 = vrot.slane %v2715, %v2733
        %v2736 = vunpack.c.l.s4 1966171168
        %v2737 = vunpack.c.0.s8 %v2736
        %v2738 = vlaneseq
        %v2739 = vshrl.u32 %v2738, 7
        %v2740 = vsub.s32 %v2737, %v2739
        %v2741 = vrot.slane %v2714, %v2740
        %v2743 = vunpack.c.l.s4 1966171168
        %v2744 = vunpack.c.0.s8 %v2743
        %v2745 = vlaneseq
        %v2746 = vshrl.u32 %v2745, 7
        %v2747 = vsub.s32 %v2744, %v2746
        %v2748 = vrot.slane %v2716, %v2747
        %v2750 = vunpack.c.l.s4 1966171168
        %v2751 = vunpack.c.0.s8 %v2750
        %v2752 = vlaneseq
        %v2753 = vshrl.u32 %v2752, 7
        %v2754 = vsub.s32 %v2751, %v2753
        %v2755 = vrot.slane %v2717, %v2754
        %v2757 = vunpack.c.l.s4 1966171168
        %v2758 = vunpack.c.0.s8 %v2757
        %v2759 = vlaneseq
        %v2760 = vshrl.u32 %v2759, 7
        %v2761 = vsub.s32 %v2758, %v2760
        %v2762 = vrot.slane %v2719, %v2761
        %v2764 = vunpack.c.l.s4 1966171168
        %v2765 = vunpack.c.0.s8 %v2764
        %v2766 = vlaneseq
        %v2767 = vshrl.u32 %v2766, 7
        %v2768 = vsub.s32 %v2765, %v2767
        %v2769 = vrot.slane %v2718, %v2768
        %v2771 = vunpack.c.l.s4 1966171168
        %v2772 = vunpack.c.0.s8 %v2771
        %v2773 = vlaneseq
        %v2774 = vshrl.u32 %v2773, 7
        %v2775 = vsub.s32 %v2772, %v2774
        %v2776 = vrot.slane %v2720, %v2775
        %v2777 = vcombine.low %v2727, %v2755
        %v2778 = vcombine.high %v2727, %v2755
        %v2779 = vcombine.low %v2734, %v2762
        %v2780 = vcombine.high %v2734, %v2762
        %v2781 = vcombine.low %v2741, %v2769
        %v2782 = vcombine.high %v2741, %v2769
        %v2783 = vcombine.low %v2748, %v2776
        %v2784 = vcombine.high %v2748, %v2776
        %v2785 = vcombine.high %v2131, %v2131
        %v2787 = vunpack.c.l.s4 1966171168
        %v2788 = vunpack.c.0.s8 %v2787
        %v2789 = vlaneseq
        %v2790 = vshrl.u32 %v2789, 7
        %v2791 = vsub.s32 %v2788, %v2790
        %v2792 = vrot.slane %v2131, %v2791
        %v2794 = vunpack.c.l.s4 1966171168
        %v2795 = vunpack.c.0.s8 %v2794
        %v2796 = vlaneseq
        %v2797 = vshrl.u32 %v2796, 7
        %v2798 = vsub.s32 %v2795, %v2797
        %v2799 = vrot.slane %v2785, %v2798
        %v2800 = vcombine.high %v2792, %v2792
        %v2801 = vcombine.high %v2799, %v2799
        %v2803 = vunpack.c.l.s4 1966171168
        %v2804 = vunpack.c.0.s8 %v2803
        %v2805 = vlaneseq
        %v2806 = vshrl.u32 %v2805, 7
        %v2807 = vsub.s32 %v2804, %v2806
        %v2808 = vrot.slane %v2792, %v2807
        %v2810 = vunpack.c.l.s4 1966171168
        %v2811 = vunpack.c.0.s8 %v2810
        %v2812 = vlaneseq
        %v2813 = vshrl.u32 %v2812, 7
        %v2814 = vsub.s32 %v2811, %v2813
        %v2815 = vrot.slane %v2799, %v2814
        %v2817 = vunpack.c.l.s4 1966171168
        %v2818 = vunpack.c.0.s8 %v2817
        %v2819 = vlaneseq
        %v2820 = vshrl.u32 %v2819, 7
        %v2821 = vsub.s32 %v2818, %v2820
        %v2822 = vrot.slane %v2800, %v2821
        %v2824 = vunpack.c.l.s4 1966171168
        %v2825 = vunpack.c.0.s8 %v2824
        %v2826 = vlaneseq
        %v2827 = vshrl.u32 %v2826, 7
        %v2828 = vsub.s32 %v2825, %v2827
        %v2829 = vrot.slane %v2801, %v2828
        %v2830 = vcombine.high %v2808, %v2808
        %v2831 = vcombine.high %v2815, %v2815
        %v2832 = vcombine.high %v2822, %v2822
        %v2833 = vcombine.high %v2829, %v2829
        %v2834 = vcombine.low %v1256, %v1346
        %v2835 = vcombine.low %v1490, %v1578
        %v2836 = vcombine.low %v1667, %v1810
        %v2837 = vcombine.low %v1898, %v1987
        %v2839 = vunpack.c.l.s4 1966171168
        %v2840 = vunpack.c.0.s8 %v2839
        %v2841 = vlaneseq
        %v2842 = vshrl.u32 %v2841, 7
        %v2843 = vsub.s32 %v2840, %v2842
        %v2844 = vrot.slane %v2834, %v2843
        %v2846 = vunpack.c.l.s4 1966171168
        %v2847 = vunpack.c.0.s8 %v2846
        %v2848 = vlaneseq
        %v2849 = vshrl.u32 %v2848, 7
        %v2850 = vsub.s32 %v2847, %v2849
        %v2851 = vrot.slane %v2835, %v2850
        %v2853 = vunpack.c.l.s4 1966171168
        %v2854 = vunpack.c.0.s8 %v2853
        %v2855 = vlaneseq
        %v2856 = vshrl.u32 %v2855, 7
        %v2857 = vsub.s32 %v2854, %v2856
        %v2858 = vrot.slane %v2836, %v2857
        %v2860 = vunpack.c.l.s4 1966171168
        %v2861 = vunpack.c.0.s8 %v2860
        %v2862 = vlaneseq
        %v2863 = vshrl.u32 %v2862, 7
        %v2864 = vsub.s32 %v2861, %v2863
        %v2865 = vrot.slane %v2837, %v2864
        %v2866 = vcombine.low %v2844, %v2851
        %v2867 = vcombine.low %v2858, %v2865
        %v2869 = vunpack.c.l.s4 1966171168
        %v2870 = vunpack.c.0.s8 %v2869
        %v2871 = vlaneseq
        %v2872 = vshrl.u32 %v2871, 7
        %v2873 = vsub.s32 %v2870, %v2872
        %v2874 = vrot.slane %v2866, %v2873
        %v2876 = vunpack.c.l.s4 1966171168
        %v2877 = vunpack.c.0.s8 %v2876
        %v2878 = vlaneseq
        %v2879 = vshrl.u32 %v2878, 7
        %v2880 = vsub.s32 %v2877, %v2879
        %v2881 = vrot.slane %v2867, %v2880
        %v2882 = vcombine.low %v2874, %v2881
        %v2884 = vunpack.c.l.s4 1966171168
        %v2885 = vunpack.c.0.s8 %v2884
        %v2886 = vlaneseq
        %v2887 = vshrl.u32 %v2886, 7
        %v2888 = vsub.s32 %v2885, %v2887
        %v2889 = vrot.slane %v2130, %v2888
        %v2891 = vunpack.c.l.s4 1966171168
        %v2892 = vunpack.c.0.s8 %v2891
        %v2893 = vlaneseq
        %v2894 = vshrl.u32 %v2893, 7
        %v2895 = vsub.s32 %v2892, %v2894
        %v2896 = vrot.slane %v2889, %v2895
        %v2897 = vcombine.low %v1257, %v1358
        %v2898 = vcombine.high %v1257, %v1358
        %v2899 = vcombine.low %v1494, %v1579
        %v2900 = vcombine.high %v1494, %v1579
        %v2901 = vcombine.low %v1679, %v1814
        %v2902 = vcombine.high %v1679, %v1814
        %v2903 = vcombine.low %v1899, %v1999
        %v2904 = vcombine.high %v1899, %v1999
        %v2906 = vunpack.c.l.s4 1966171168
        %v2907 = vunpack.c.0.s8 %v2906
        %v2908 = vlaneseq
        %v2909 = vshrl.u32 %v2908, 7
        %v2910 = vsub.s32 %v2907, %v2909
        %v2911 = vrot.slane %v2897, %v2910
        %v2913 = vunpack.c.l.s4 1966171168
        %v2914 = vunpack.c.0.s8 %v2913
        %v2915 = vlaneseq
        %v2916 = vshrl.u32 %v2915, 7
        %v2917 = vsub.s32 %v2914, %v2916
        %v2918 = vrot.slane %v2898, %v2917
        %v2920 = vunpack.c.l.s4 1966171168
        %v2921 = vunpack.c.0.s8 %v2920
        %v2922 = vlaneseq
        %v2923 = vshrl.u32 %v2922, 7
        %v2924 = vsub.s32 %v2921, %v2923
        %v2925 = vrot.slane %v2899, %v2924
        %v2927 = vunpack.c.l.s4 1966171168
        %v2928 = vunpack.c.0.s8 %v2927
        %v2929 = vlaneseq
        %v2930 = vshrl.u32 %v2929, 7
        %v2931 = vsub.s32 %v2928, %v2930
        %v2932 = vrot.slane %v2900, %v2931
        %v2934 = vunpack.c.l.s4 1966171168
        %v2935 = vunpack.c.0.s8 %v2934
        %v2936 = vlaneseq
        %v2937 = vshrl.u32 %v2936, 7
        %v2938 = vsub.s32 %v2935, %v2937
        %v2939 = vrot.slane %v2901, %v2938
        %v2941 = vunpack.c.l.s4 1966171168
        %v2942 = vunpack.c.0.s8 %v2941
        %v2943 = vlaneseq
        %v2944 = vshrl.u32 %v2943, 7
        %v2945 = vsub.s32 %v2942, %v2944
        %v2946 = vrot.slane %v2902, %v2945
        %v2948 = vunpack.c.l.s4 1966171168
        %v2949 = vunpack.c.0.s8 %v2948
        %v2950 = vlaneseq
        %v2951 = vshrl.u32 %v2950, 7
        %v2952 = vsub.s32 %v2949, %v2951
        %v2953 = vrot.slane %v2903, %v2952
        %v2955 = vunpack.c.l.s4 1966171168
        %v2956 = vunpack.c.0.s8 %v2955
        %v2957 = vlaneseq
        %v2958 = vshrl.u32 %v2957, 7
        %v2959 = vsub.s32 %v2956, %v2958
        %v2960 = vrot.slane %v2904, %v2959
        %v2961 = vcombine.low %v2911, %v2925
        %v2962 = vcombine.high %v2911, %v2925
        %v2963 = vcombine.low %v2918, %v2932
        %v2964 = vcombine.high %v2918, %v2932
        %v2965 = vcombine.low %v2939, %v2953
        %v2966 = vcombine.high %v2939, %v2953
        %v2967 = vcombine.low %v2946, %v2960
        %v2968 = vcombine.high %v2946, %v2960
        %v2970 = vunpack.c.l.s4 1966171168
        %v2971 = vunpack.c.0.s8 %v2970
        %v2972 = vlaneseq
        %v2973 = vshrl.u32 %v2972, 7
        %v2974 = vsub.s32 %v2971, %v2973
        %v2975 = vrot.slane %v2961, %v2974
        %v2977 = vunpack.c.l.s4 1966171168
        %v2978 = vunpack.c.0.s8 %v2977
        %v2979 = vlaneseq
        %v2980 = vshrl.u32 %v2979, 7
        %v2981 = vsub.s32 %v2978, %v2980
        %v2982 = vrot.slane %v2963, %v2981
        %v2984 = vunpack.c.l.s4 1966171168
        %v2985 = vunpack.c.0.s8 %v2984
        %v2986 = vlaneseq
        %v2987 = vshrl.u32 %v2986, 7
        %v2988 = vsub.s32 %v2985, %v2987
        %v2989 = vrot.slane %v2962, %v2988
        %v2991 = vunpack.c.l.s4 1966171168
        %v2992 = vunpack.c.0.s8 %v2991
        %v2993 = vlaneseq
        %v2994 = vshrl.u32 %v2993, 7
        %v2995 = vsub.s32 %v2992, %v2994
        %v2996 = vrot.slane %v2964, %v2995
        %v2998 = vunpack.c.l.s4 1966171168
        %v2999 = vunpack.c.0.s8 %v2998
        %v3000 = vlaneseq
        %v3001 = vshrl.u32 %v3000, 7
        %v3002 = vsub.s32 %v2999, %v3001
        %v3003 = vrot.slane %v2965, %v3002
        %v3005 = vunpack.c.l.s4 1966171168
        %v3006 = vunpack.c.0.s8 %v3005
        %v3007 = vlaneseq
        %v3008 = vshrl.u32 %v3007, 7
        %v3009 = vsub.s32 %v3006, %v3008
        %v3010 = vrot.slane %v2967, %v3009
        %v3012 = vunpack.c.l.s4 1966171168
        %v3013 = vunpack.c.0.s8 %v3012
        %v3014 = vlaneseq
        %v3015 = vshrl.u32 %v3014, 7
        %v3016 = vsub.s32 %v3013, %v3015
        %v3017 = vrot.slane %v2966, %v3016
        %v3019 = vunpack.c.l.s4 1966171168
        %v3020 = vunpack.c.0.s8 %v3019
        %v3021 = vlaneseq
        %v3022 = vshrl.u32 %v3021, 7
        %v3023 = vsub.s32 %v3020, %v3022
        %v3024 = vrot.slane %v2968, %v3023
        %v3025 = vcombine.low %v2975, %v3003
        %v3026 = vcombine.high %v2975, %v3003
        %v3027 = vcombine.low %v2982, %v3010
        %v3028 = vcombine.high %v2982, %v3010
        %v3029 = vcombine.low %v2989, %v3017
        %v3030 = vcombine.high %v2989, %v3017
        %v3031 = vcombine.low %v2996, %v3024
        %v3032 = vcombine.high %v2996, %v3024
        %v3033 = vcombine.high %v2134, %v2134
        %v3035 = vunpack.c.l.s4 1966171168
        %v3036 = vunpack.c.0.s8 %v3035
        %v3037 = vlaneseq
        %v3038 = vshrl.u32 %v3037, 7
        %v3039 = vsub.s32 %v3036, %v3038
        %v3040 = vrot.slane %v2134, %v3039
        %v3042 = vunpack.c.l.s4 1966171168
        %v3043 = vunpack.c.0.s8 %v3042
        %v3044 = vlaneseq
        %v3045 = vshrl.u32 %v3044, 7
        %v3046 = vsub.s32 %v3043, %v3045
        %v3047 = vrot.slane %v3033, %v3046
        %v3048 = vcombine.high %v3040, %v3040
        %v3049 = vcombine.high %v3047, %v3047
        %v3051 = vunpack.c.l.s4 1966171168
        %v3052 = vunpack.c.0.s8 %v3051
        %v3053 = vlaneseq
        %v3054 = vshrl.u32 %v3053, 7
        %v3055 = vsub.s32 %v3052, %v3054
        %v3056 = vrot.slane %v3040, %v3055
        %v3058 = vunpack.c.l.s4 1966171168
        %v3059 = vunpack.c.0.s8 %v3058
        %v3060 = vlaneseq
        %v3061 = vshrl.u32 %v3060, 7
        %v3062 = vsub.s32 %v3059, %v3061
        %v3063 = vrot.slane %v3047, %v3062
        %v3065 = vunpack.c.l.s4 1966171168
        %v3066 = vunpack.c.0.s8 %v3065
        %v3067 = vlaneseq
        %v3068 = vshrl.u32 %v3067, 7
        %v3069 = vsub.s32 %v3066, %v3068
        %v3070 = vrot.slane %v3048, %v3069
        %v3072 = vunpack.c.l.s4 1966171168
        %v3073 = vunpack.c.0.s8 %v3072
        %v3074 = vlaneseq
        %v3075 = vshrl.u32 %v3074, 7
        %v3076 = vsub.s32 %v3073, %v3075
        %v3077 = vrot.slane %v3049, %v3076
        %v3078 = vcombine.high %v3056, %v3056
        %v3079 = vcombine.high %v3063, %v3063
        %v3080 = vcombine.high %v3070, %v3070
        %v3081 = vcombine.high %v3077, %v3077
        %v3082 = vcombine.low %v1258, %v1361
        %v3083 = vcombine.low %v1493, %v1580
        %v3084 = vcombine.low %v1682, %v1813
        %v3085 = vcombine.low %v1900, %v2002
        %v3087 = vunpack.c.l.s4 1966171168
        %v3088 = vunpack.c.0.s8 %v3087
        %v3089 = vlaneseq
        %v3090 = vshrl.u32 %v3089, 7
        %v3091 = vsub.s32 %v3088, %v3090
        %v3092 = vrot.slane %v3082, %v3091
        %v3094 = vunpack.c.l.s4 1966171168
        %v3095 = vunpack.c.0.s8 %v3094
        %v3096 = vlaneseq
        %v3097 = vshrl.u32 %v3096, 7
        %v3098 = vsub.s32 %v3095, %v3097
        %v3099 = vrot.slane %v3083, %v3098
        %v3101 = vunpack.c.l.s4 1966171168
        %v3102 = vunpack.c.0.s8 %v3101
        %v3103 = vlaneseq
        %v3104 = vshrl.u32 %v3103, 7
        %v3105 = vsub.s32 %v3102, %v3104
        %v3106 = vrot.slane %v3084, %v3105
        %v3108 = vunpack.c.l.s4 1966171168
        %v3109 = vunpack.c.0.s8 %v3108
        %v3110 = vlaneseq
        %v3111 = vshrl.u32 %v3110, 7
        %v3112 = vsub.s32 %v3109, %v3111
        %v3113 = vrot.slane %v3085, %v3112
        %v3114 = vcombine.low %v3092, %v3099
        %v3115 = vcombine.low %v3106, %v3113
        %v3117 = vunpack.c.l.s4 1966171168
        %v3118 = vunpack.c.0.s8 %v3117
        %v3119 = vlaneseq
        %v3120 = vshrl.u32 %v3119, 7
        %v3121 = vsub.s32 %v3118, %v3120
        %v3122 = vrot.slane %v3114, %v3121
        %v3124 = vunpack.c.l.s4 1966171168
        %v3125 = vunpack.c.0.s8 %v3124
        %v3126 = vlaneseq
        %v3127 = vshrl.u32 %v3126, 7
        %v3128 = vsub.s32 %v3125, %v3127
        %v3129 = vrot.slane %v3115, %v3128
        %v3130 = vcombine.low %v3122, %v3129
        %v3132 = vunpack.c.l.s4 1966171168
        %v3133 = vunpack.c.0.s8 %v3132
        %v3134 = vlaneseq
        %v3135 = vshrl.u32 %v3134, 7
        %v3136 = vsub.s32 %v3133, %v3135
        %v3137 = vrot.slane %v2133, %v3136
        %v3139 = vunpack.c.l.s4 1966171168
        %v3140 = vunpack.c.0.s8 %v3139
        %v3141 = vlaneseq
        %v3142 = vshrl.u32 %v3141, 7
        %v3143 = vsub.s32 %v3140, %v3142
        %v3144 = vrot.slane %v3137, %v3143
        %v3145 = vcombine.low %v1259, %v1373
        %v3146 = vcombine.high %v1259, %v1373
        %v3147 = vcombine.low %v1497, %v1581
        %v3148 = vcombine.high %v1497, %v1581
        %v3149 = vcombine.low %v1694, %v1817
        %v3150 = vcombine.high %v1694, %v1817
        %v3151 = vcombine.low %v1901, %v2014
        %v3152 = vcombine.high %v1901, %v2014
        %v3154 = vunpack.c.l.s4 1966171168
        %v3155 = vunpack.c.0.s8 %v3154
        %v3156 = vlaneseq
        %v3157 = vshrl.u32 %v3156, 7
        %v3158 = vsub.s32 %v3155, %v3157
        %v3159 = vrot.slane %v3145, %v3158
        %v3161 = vunpack.c.l.s4 1966171168
        %v3162 = vunpack.c.0.s8 %v3161
        %v3163 = vlaneseq
        %v3164 = vshrl.u32 %v3163, 7
        %v3165 = vsub.s32 %v3162, %v3164
        %v3166 = vrot.slane %v3146, %v3165
        %v3168 = vunpack.c.l.s4 1966171168
        %v3169 = vunpack.c.0.s8 %v3168
        %v3170 = vlaneseq
        %v3171 = vshrl.u32 %v3170, 7
        %v3172 = vsub.s32 %v3169, %v3171
        %v3173 = vrot.slane %v3147, %v3172
        %v3175 = vunpack.c.l.s4 1966171168
        %v3176 = vunpack.c.0.s8 %v3175
        %v3177 = vlaneseq
        %v3178 = vshrl.u32 %v3177, 7
        %v3179 = vsub.s32 %v3176, %v3178
        %v3180 = vrot.slane %v3148, %v3179
        %v3182 = vunpack.c.l.s4 1966171168
        %v3183 = vunpack.c.0.s8 %v3182
        %v3184 = vlaneseq
        %v3185 = vshrl.u32 %v3184, 7
        %v3186 = vsub.s32 %v3183, %v3185
        %v3187 = vrot.slane %v3149, %v3186
        %v3189 = vunpack.c.l.s4 1966171168
        %v3190 = vunpack.c.0.s8 %v3189
        %v3191 = vlaneseq
        %v3192 = vshrl.u32 %v3191, 7
        %v3193 = vsub.s32 %v3190, %v3192
        %v3194 = vrot.slane %v3150, %v3193
        %v3196 = vunpack.c.l.s4 1966171168
        %v3197 = vunpack.c.0.s8 %v3196
        %v3198 = vlaneseq
        %v3199 = vshrl.u32 %v3198, 7
        %v3200 = vsub.s32 %v3197, %v3199
        %v3201 = vrot.slane %v3151, %v3200
        %v3203 = vunpack.c.l.s4 1966171168
        %v3204 = vunpack.c.0.s8 %v3203
        %v3205 = vlaneseq
        %v3206 = vshrl.u32 %v3205, 7
        %v3207 = vsub.s32 %v3204, %v3206
        %v3208 = vrot.slane %v3152, %v3207
        %v3209 = vcombine.low %v3159, %v3173
        %v3210 = vcombine.high %v3159, %v3173
        %v3211 = vcombine.low %v3166, %v3180
        %v3212 = vcombine.high %v3166, %v3180
        %v3213 = vcombine.low %v3187, %v3201
        %v3214 = vcombine.high %v3187, %v3201
        %v3215 = vcombine.low %v3194, %v3208
        %v3216 = vcombine.high %v3194, %v3208
        %v3218 = vunpack.c.l.s4 1966171168
        %v3219 = vunpack.c.0.s8 %v3218
        %v3220 = vlaneseq
        %v3221 = vshrl.u32 %v3220, 7
        %v3222 = vsub.s32 %v3219, %v3221
        %v3223 = vrot.slane %v3209, %v3222
        %v3225 = vunpack.c.l.s4 1966171168
        %v3226 = vunpack.c.0.s8 %v3225
        %v3227 = vlaneseq
        %v3228 = vshrl.u32 %v3227, 7
        %v3229 = vsub.s32 %v3226, %v3228
        %v3230 = vrot.slane %v3211, %v3229
        %v3232 = vunpack.c.l.s4 1966171168
        %v3233 = vunpack.c.0.s8 %v3232
        %v3234 = vlaneseq
        %v3235 = vshrl.u32 %v3234, 7
        %v3236 = vsub.s32 %v3233, %v3235
        %v3237 = vrot.slane %v3210, %v3236
        %v3239 = vunpack.c.l.s4 1966171168
        %v3240 = vunpack.c.0.s8 %v3239
        %v3241 = vlaneseq
        %v3242 = vshrl.u32 %v3241, 7
        %v3243 = vsub.s32 %v3240, %v3242
        %v3244 = vrot.slane %v3212, %v3243
        %v3246 = vunpack.c.l.s4 1966171168
        %v3247 = vunpack.c.0.s8 %v3246
        %v3248 = vlaneseq
        %v3249 = vshrl.u32 %v3248, 7
        %v3250 = vsub.s32 %v3247, %v3249
        %v3251 = vrot.slane %v3213, %v3250
        %v3253 = vunpack.c.l.s4 1966171168
        %v3254 = vunpack.c.0.s8 %v3253
        %v3255 = vlaneseq
        %v3256 = vshrl.u32 %v3255, 7
        %v3257 = vsub.s32 %v3254, %v3256
        %v3258 = vrot.slane %v3215, %v3257
        %v3260 = vunpack.c.l.s4 1966171168
        %v3261 = vunpack.c.0.s8 %v3260
        %v3262 = vlaneseq
        %v3263 = vshrl.u32 %v3262, 7
        %v3264 = vsub.s32 %v3261, %v3263
        %v3265 = vrot.slane %v3214, %v3264
        %v3267 = vunpack.c.l.s4 1966171168
        %v3268 = vunpack.c.0.s8 %v3267
        %v3269 = vlaneseq
        %v3270 = vshrl.u32 %v3269, 7
        %v3271 = vsub.s32 %v3268, %v3270
        %v3272 = vrot.slane %v3216, %v3271
        %v3273 = vcombine.low %v3223, %v3251
        %v3274 = vcombine.high %v3223, %v3251
        %v3275 = vcombine.low %v3230, %v3258
        %v3276 = vcombine.high %v3230, %v3258
        %v3277 = vcombine.low %v3237, %v3265
        %v3278 = vcombine.high %v3237, %v3265
        %v3279 = vcombine.low %v3244, %v3272
        %v3280 = vcombine.high %v3244, %v3272
        %v3281 = vcombine.high %v2137, %v2137
        %v3283 = vunpack.c.l.s4 1966171168
        %v3284 = vunpack.c.0.s8 %v3283
        %v3285 = vlaneseq
        %v3286 = vshrl.u32 %v3285, 7
        %v3287 = vsub.s32 %v3284, %v3286
        %v3288 = vrot.slane %v2137, %v3287
        %v3290 = vunpack.c.l.s4 1966171168
        %v3291 = vunpack.c.0.s8 %v3290
        %v3292 = vlaneseq
        %v3293 = vshrl.u32 %v3292, 7
        %v3294 = vsub.s32 %v3291, %v3293
        %v3295 = vrot.slane %v3281, %v3294
        %v3296 = vcombine.high %v3288, %v3288
        %v3297 = vcombine.high %v3295, %v3295
        %v3299 = vunpack.c.l.s4 1966171168
        %v3300 = vunpack.c.0.s8 %v3299
        %v3301 = vlaneseq
        %v3302 = vshrl.u32 %v3301, 7
        %v3303 = vsub.s32 %v3300, %v3302
        %v3304 = vrot.slane %v3288, %v3303
        %v3306 = vunpack.c.l.s4 1966171168
        %v3307 = vunpack.c.0.s8 %v3306
        %v3308 = vlaneseq
        %v3309 = vshrl.u32 %v3308, 7
        %v3310 = vsub.s32 %v3307, %v3309
        %v3311 = vrot.slane %v3295, %v3310
        %v3313 = vunpack.c.l.s4 1966171168
        %v3314 = vunpack.c.0.s8 %v3313
        %v3315 = vlaneseq
        %v3316 = vshrl.u32 %v3315, 7
        %v3317 = vsub.s32 %v3314, %v3316
        %v3318 = vrot.slane %v3296, %v3317
        %v3320 = vunpack.c.l.s4 1966171168
        %v3321 = vunpack.c.0.s8 %v3320
        %v3322 = vlaneseq
        %v3323 = vshrl.u32 %v3322, 7
        %v3324 = vsub.s32 %v3321, %v3323
        %v3325 = vrot.slane %v3297, %v3324
        %v3326 = vcombine.high %v3304, %v3304
        %v3327 = vcombine.high %v3311, %v3311
        %v3328 = vcombine.high %v3318, %v3318
        %v3329 = vcombine.high %v3325, %v3325
        %v3330 = vcombine.low %v1260, %v1376
        %v3331 = vcombine.low %v1496, %v1582
        %v3332 = vcombine.low %v1697, %v1816
        %v3333 = vcombine.low %v1902, %v2017
        %v3335 = vunpack.c.l.s4 1966171168
        %v3336 = vunpack.c.0.s8 %v3335
        %v3337 = vlaneseq
        %v3338 = vshrl.u32 %v3337, 7
        %v3339 = vsub.s32 %v3336, %v3338
        %v3340 = vrot.slane %v3330, %v3339
        %v3342 = vunpack.c.l.s4 1966171168
        %v3343 = vunpack.c.0.s8 %v3342
        %v3344 = vlaneseq
        %v3345 = vshrl.u32 %v3344, 7
        %v3346 = vsub.s32 %v3343, %v3345
        %v3347 = vrot.slane %v3331, %v3346
        %v3349 = vunpack.c.l.s4 1966171168
        %v3350 = vunpack.c.0.s8 %v3349
        %v3351 = vlaneseq
        %v3352 = vshrl.u32 %v3351, 7
        %v3353 = vsub.s32 %v3350, %v3352
        %v3354 = vrot.slane %v3332, %v3353
        %v3356 = vunpack.c.l.s4 1966171168
        %v3357 = vunpack.c.0.s8 %v3356
        %v3358 = vlaneseq
        %v3359 = vshrl.u32 %v3358, 7
        %v3360 = vsub.s32 %v3357, %v3359
        %v3361 = vrot.slane %v3333, %v3360
        %v3362 = vcombine.low %v3340, %v3347
        %v3363 = vcombine.low %v3354, %v3361
        %v3365 = vunpack.c.l.s4 1966171168
        %v3366 = vunpack.c.0.s8 %v3365
        %v3367 = vlaneseq
        %v3368 = vshrl.u32 %v3367, 7
        %v3369 = vsub.s32 %v3366, %v3368
        %v3370 = vrot.slane %v3362, %v3369
        %v3372 = vunpack.c.l.s4 1966171168
        %v3373 = vunpack.c.0.s8 %v3372
        %v3374 = vlaneseq
        %v3375 = vshrl.u32 %v3374, 7
        %v3376 = vsub.s32 %v3373, %v3375
        %v3377 = vrot.slane %v3363, %v3376
        %v3378 = vcombine.low %v3370, %v3377
        %v3380 = vunpack.c.l.s4 1966171168
        %v3381 = vunpack.c.0.s8 %v3380
        %v3382 = vlaneseq
        %v3383 = vshrl.u32 %v3382, 7
        %v3384 = vsub.s32 %v3381, %v3383
        %v3385 = vrot.slane %v2136, %v3384
        %v3387 = vunpack.c.l.s4 1966171168
        %v3388 = vunpack.c.0.s8 %v3387
        %v3389 = vlaneseq
        %v3390 = vshrl.u32 %v3389, 7
        %v3391 = vsub.s32 %v3388, %v3390
        %v3392 = vrot.slane %v3385, %v3391
        %v3393 = vcombine.low %v1261, %v1388
        %v3394 = vcombine.high %v1261, %v1388
        %v3395 = vcombine.low %v1500, %v1583
        %v3396 = vcombine.high %v1500, %v1583
        %v3397 = vcombine.low %v1709, %v1820
        %v3398 = vcombine.high %v1709, %v1820
        %v3399 = vcombine.low %v1903, %v2029
        %v3400 = vcombine.high %v1903, %v2029
        %v3402 = vunpack.c.l.s4 1966171168
        %v3403 = vunpack.c.0.s8 %v3402
        %v3404 = vlaneseq
        %v3405 = vshrl.u32 %v3404, 7
        %v3406 = vsub.s32 %v3403, %v3405
        %v3407 = vrot.slane %v3393, %v3406
        %v3409 = vunpack.c.l.s4 1966171168
        %v3410 = vunpack.c.0.s8 %v3409
        %v3411 = vlaneseq
        %v3412 = vshrl.u32 %v3411, 7
        %v3413 = vsub.s32 %v3410, %v3412
        %v3414 = vrot.slane %v3394, %v3413
        %v3416 = vunpack.c.l.s4 1966171168
        %v3417 = vunpack.c.0.s8 %v3416
        %v3418 = vlaneseq
        %v3419 = vshrl.u32 %v3418, 7
        %v3420 = vsub.s32 %v3417, %v3419
        %v3421 = vrot.slane %v3395, %v3420
        %v3423 = vunpack.c.l.s4 1966171168
        %v3424 = vunpack.c.0.s8 %v3423
        %v3425 = vlaneseq
        %v3426 = vshrl.u32 %v3425, 7
        %v3427 = vsub.s32 %v3424, %v3426
        %v3428 = vrot.slane %v3396, %v3427
        %v3430 = vunpack.c.l.s4 1966171168
        %v3431 = vunpack.c.0.s8 %v3430
        %v3432 = vlaneseq
        %v3433 = vshrl.u32 %v3432, 7
        %v3434 = vsub.s32 %v3431, %v3433
        %v3435 = vrot.slane %v3397, %v3434
        %v3437 = vunpack.c.l.s4 1966171168
        %v3438 = vunpack.c.0.s8 %v3437
        %v3439 = vlaneseq
        %v3440 = vshrl.u32 %v3439, 7
        %v3441 = vsub.s32 %v3438, %v3440
        %v3442 = vrot.slane %v3398, %v3441
        %v3444 = vunpack.c.l.s4 1966171168
        %v3445 = vunpack.c.0.s8 %v3444
        %v3446 = vlaneseq
        %v3447 = vshrl.u32 %v3446, 7
        %v3448 = vsub.s32 %v3445, %v3447
        %v3449 = vrot.slane %v3399, %v3448
        %v3451 = vunpack.c.l.s4 1966171168
        %v3452 = vunpack.c.0.s8 %v3451
        %v3453 = vlaneseq
        %v3454 = vshrl.u32 %v3453, 7
        %v3455 = vsub.s32 %v3452, %v3454
        %v3456 = vrot.slane %v3400, %v3455
        %v3457 = vcombine.low %v3407, %v3421
        %v3458 = vcombine.high %v3407, %v3421
        %v3459 = vcombine.low %v3414, %v3428
        %v3460 = vcombine.high %v3414, %v3428
        %v3461 = vcombine.low %v3435, %v3449
        %v3462 = vcombine.high %v3435, %v3449
        %v3463 = vcombine.low %v3442, %v3456
        %v3464 = vcombine.high %v3442, %v3456
        %v3466 = vunpack.c.l.s4 1966171168
        %v3467 = vunpack.c.0.s8 %v3466
        %v3468 = vlaneseq
        %v3469 = vshrl.u32 %v3468, 7
        %v3470 = vsub.s32 %v3467, %v3469
        %v3471 = vrot.slane %v3457, %v3470
        %v3473 = vunpack.c.l.s4 1966171168
        %v3474 = vunpack.c.0.s8 %v3473
        %v3475 = vlaneseq
        %v3476 = vshrl.u32 %v3475, 7
        %v3477 = vsub.s32 %v3474, %v3476
        %v3478 = vrot.slane %v3459, %v3477
        %v3480 = vunpack.c.l.s4 1966171168
        %v3481 = vunpack.c.0.s8 %v3480
        %v3482 = vlaneseq
        %v3483 = vshrl.u32 %v3482, 7
        %v3484 = vsub.s32 %v3481, %v3483
        %v3485 = vrot.slane %v3458, %v3484
        %v3487 = vunpack.c.l.s4 1966171168
        %v3488 = vunpack.c.0.s8 %v3487
        %v3489 = vlaneseq
        %v3490 = vshrl.u32 %v3489, 7
        %v3491 = vsub.s32 %v3488, %v3490
        %v3492 = vrot.slane %v3460, %v3491
        %v3494 = vunpack.c.l.s4 1966171168
        %v3495 = vunpack.c.0.s8 %v3494
        %v3496 = vlaneseq
        %v3497 = vshrl.u32 %v3496, 7
        %v3498 = vsub.s32 %v3495, %v3497
        %v3499 = vrot.slane %v3461, %v3498
        %v3501 = vunpack.c.l.s4 1966171168
        %v3502 = vunpack.c.0.s8 %v3501
        %v3503 = vlaneseq
        %v3504 = vshrl.u32 %v3503, 7
        %v3505 = vsub.s32 %v3502, %v3504
        %v3506 = vrot.slane %v3463, %v3505
        %v3508 = vunpack.c.l.s4 1966171168
        %v3509 = vunpack.c.0.s8 %v3508
        %v3510 = vlaneseq
        %v3511 = vshrl.u32 %v3510, 7
        %v3512 = vsub.s32 %v3509, %v3511
        %v3513 = vrot.slane %v3462, %v3512
        %v3515 = vunpack.c.l.s4 1966171168
        %v3516 = vunpack.c.0.s8 %v3515
        %v3517 = vlaneseq
        %v3518 = vshrl.u32 %v3517, 7
        %v3519 = vsub.s32 %v3516, %v3518
        %v3520 = vrot.slane %v3464, %v3519
        %v3521 = vcombine.low %v3471, %v3499
        %v3522 = vcombine.high %v3471, %v3499
        %v3523 = vcombine.low %v3478, %v3506
        %v3524 = vcombine.high %v3478, %v3506
        %v3525 = vcombine.low %v3485, %v3513
        %v3526 = vcombine.high %v3485, %v3513
        %v3527 = vcombine.low %v3492, %v3520
        %v3528 = vcombine.high %v3492, %v3520
        %v3529 = vcombine.high %v2140, %v2140
        %v3531 = vunpack.c.l.s4 1966171168
        %v3532 = vunpack.c.0.s8 %v3531
        %v3533 = vlaneseq
        %v3534 = vshrl.u32 %v3533, 7
        %v3535 = vsub.s32 %v3532, %v3534
        %v3536 = vrot.slane %v2140, %v3535
        %v3538 = vunpack.c.l.s4 1966171168
        %v3539 = vunpack.c.0.s8 %v3538
        %v3540 = vlaneseq
        %v3541 = vshrl.u32 %v3540, 7
        %v3542 = vsub.s32 %v3539, %v3541
        %v3543 = vrot.slane %v3529, %v3542
        %v3544 = vcombine.high %v3536, %v3536
        %v3545 = vcombine.high %v3543, %v3543
        %v3547 = vunpack.c.l.s4 1966171168
        %v3548 = vunpack.c.0.s8 %v3547
        %v3549 = vlaneseq
        %v3550 = vshrl.u32 %v3549, 7
        %v3551 = vsub.s32 %v3548, %v3550
        %v3552 = vrot.slane %v3536, %v3551
        %v3554 = vunpack.c.l.s4 1966171168
        %v3555 = vunpack.c.0.s8 %v3554
        %v3556 = vlaneseq
        %v3557 = vshrl.u32 %v3556, 7
        %v3558 = vsub.s32 %v3555, %v3557
        %v3559 = vrot.slane %v3543, %v3558
        %v3561 = vunpack.c.l.s4 1966171168
        %v3562 = vunpack.c.0.s8 %v3561
        %v3563 = vlaneseq
        %v3564 = vshrl.u32 %v3563, 7
        %v3565 = vsub.s32 %v3562, %v3564
        %v3566 = vrot.slane %v3544, %v3565
        %v3568 = vunpack.c.l.s4 1966171168
        %v3569 = vunpack.c.0.s8 %v3568
        %v3570 = vlaneseq
        %v3571 = vshrl.u32 %v3570, 7
        %v3572 = vsub.s32 %v3569, %v3571
        %v3573 = vrot.slane %v3545, %v3572
        %v3574 = vcombine.high %v3552, %v3552
        %v3575 = vcombine.high %v3559, %v3559
        %v3576 = vcombine.high %v3566, %v3566
        %v3577 = vcombine.high %v3573, %v3573
        %v3578 = vcombine.low %v1262, %v1391
        %v3579 = vcombine.low %v1499, %v1584
        %v3580 = vcombine.low %v1712, %v1819
        %v3581 = vcombine.low %v1904, %v2032
        %v3583 = vunpack.c.l.s4 1966171168
        %v3584 = vunpack.c.0.s8 %v3583
        %v3585 = vlaneseq
        %v3586 = vshrl.u32 %v3585, 7
        %v3587 = vsub.s32 %v3584, %v3586
        %v3588 = vrot.slane %v3578, %v3587
        %v3590 = vunpack.c.l.s4 1966171168
        %v3591 = vunpack.c.0.s8 %v3590
        %v3592 = vlaneseq
        %v3593 = vshrl.u32 %v3592, 7
        %v3594 = vsub.s32 %v3591, %v3593
        %v3595 = vrot.slane %v3579, %v3594
        %v3597 = vunpack.c.l.s4 1966171168
        %v3598 = vunpack.c.0.s8 %v3597
        %v3599 = vlaneseq
        %v3600 = vshrl.u32 %v3599, 7
        %v3601 = vsub.s32 %v3598, %v3600
        %v3602 = vrot.slane %v3580, %v3601
        %v3604 = vunpack.c.l.s4 1966171168
        %v3605 = vunpack.c.0.s8 %v3604
        %v3606 = vlaneseq
        %v3607 = vshrl.u32 %v3606, 7
        %v3608 = vsub.s32 %v3605, %v3607
        %v3609 = vrot.slane %v3581, %v3608
        %v3610 = vcombine.low %v3588, %v3595
        %v3611 = vcombine.low %v3602, %v3609
        %v3613 = vunpack.c.l.s4 1966171168
        %v3614 = vunpack.c.0.s8 %v3613
        %v3615 = vlaneseq
        %v3616 = vshrl.u32 %v3615, 7
        %v3617 = vsub.s32 %v3614, %v3616
        %v3618 = vrot.slane %v3610, %v3617
        %v3620 = vunpack.c.l.s4 1966171168
        %v3621 = vunpack.c.0.s8 %v3620
        %v3622 = vlaneseq
        %v3623 = vshrl.u32 %v3622, 7
        %v3624 = vsub.s32 %v3621, %v3623
        %v3625 = vrot.slane %v3611, %v3624
        %v3626 = vcombine.low %v3618, %v3625
        %v3628 = vunpack.c.l.s4 1966171168
        %v3629 = vunpack.c.0.s8 %v3628
        %v3630 = vlaneseq
        %v3631 = vshrl.u32 %v3630, 7
        %v3632 = vsub.s32 %v3629, %v3631
        %v3633 = vrot.slane %v2139, %v3632
        %v3635 = vunpack.c.l.s4 1966171168
        %v3636 = vunpack.c.0.s8 %v3635
        %v3637 = vlaneseq
        %v3638 = vshrl.u32 %v3637, 7
        %v3639 = vsub.s32 %v3636, %v3638
        %v3640 = vrot.slane %v3633, %v3639
        %v3641 = vcombine.low %v1263, %v1403
        %v3642 = vcombine.high %v1263, %v1403
        %v3643 = vcombine.low %v1503, %v1585
        %v3644 = vcombine.high %v1503, %v1585
        %v3645 = vcombine.low %v1724, %v1823
        %v3646 = vcombine.high %v1724, %v1823
        %v3647 = vcombine.low %v1905, %v2044
        %v3648 = vcombine.high %v1905, %v2044
        %v3650 = vunpack.c.l.s4 1966171168
        %v3651 = vunpack.c.0.s8 %v3650
        %v3652 = vlaneseq
        %v3653 = vshrl.u32 %v3652, 7
        %v3654 = vsub.s32 %v3651, %v3653
        %v3655 = vrot.slane %v3641, %v3654
        %v3657 = vunpack.c.l.s4 1966171168
        %v3658 = vunpack.c.0.s8 %v3657
        %v3659 = vlaneseq
        %v3660 = vshrl.u32 %v3659, 7
        %v3661 = vsub.s32 %v3658, %v3660
        %v3662 = vrot.slane %v3642, %v3661
        %v3664 = vunpack.c.l.s4 1966171168
        %v3665 = vunpack.c.0.s8 %v3664
        %v3666 = vlaneseq
        %v3667 = vshrl.u32 %v3666, 7
        %v3668 = vsub.s32 %v3665, %v3667
        %v3669 = vrot.slane %v3643, %v3668
        %v3671 = vunpack.c.l.s4 1966171168
        %v3672 = vunpack.c.0.s8 %v3671
        %v3673 = vlaneseq
        %v3674 = vshrl.u32 %v3673, 7
        %v3675 = vsub.s32 %v3672, %v3674
        %v3676 = vrot.slane %v3644, %v3675
        %v3678 = vunpack.c.l.s4 1966171168
        %v3679 = vunpack.c.0.s8 %v3678
        %v3680 = vlaneseq
        %v3681 = vshrl.u32 %v3680, 7
        %v3682 = vsub.s32 %v3679, %v3681
        %v3683 = vrot.slane %v3645, %v3682
        %v3685 = vunpack.c.l.s4 1966171168
        %v3686 = vunpack.c.0.s8 %v3685
        %v3687 = vlaneseq
        %v3688 = vshrl.u32 %v3687, 7
        %v3689 = vsub.s32 %v3686, %v3688
        %v3690 = vrot.slane %v3646, %v3689
        %v3692 = vunpack.c.l.s4 1966171168
        %v3693 = vunpack.c.0.s8 %v3692
        %v3694 = vlaneseq
        %v3695 = vshrl.u32 %v3694, 7
        %v3696 = vsub.s32 %v3693, %v3695
        %v3697 = vrot.slane %v3647, %v3696
        %v3699 = vunpack.c.l.s4 1966171168
        %v3700 = vunpack.c.0.s8 %v3699
        %v3701 = vlaneseq
        %v3702 = vshrl.u32 %v3701, 7
        %v3703 = vsub.s32 %v3700, %v3702
        %v3704 = vrot.slane %v3648, %v3703
        %v3705 = vcombine.low %v3655, %v3669
        %v3706 = vcombine.high %v3655, %v3669
        %v3707 = vcombine.low %v3662, %v3676
        %v3708 = vcombine.high %v3662, %v3676
        %v3709 = vcombine.low %v3683, %v3697
        %v3710 = vcombine.high %v3683, %v3697
        %v3711 = vcombine.low %v3690, %v3704
        %v3712 = vcombine.high %v3690, %v3704
        %v3714 = vunpack.c.l.s4 1966171168
        %v3715 = vunpack.c.0.s8 %v3714
        %v3716 = vlaneseq
        %v3717 = vshrl.u32 %v3716, 7
        %v3718 = vsub.s32 %v3715, %v3717
        %v3719 = vrot.slane %v3705, %v3718
        %v3721 = vunpack.c.l.s4 1966171168
        %v3722 = vunpack.c.0.s8 %v3721
        %v3723 = vlaneseq
        %v3724 = vshrl.u32 %v3723, 7
        %v3725 = vsub.s32 %v3722, %v3724
        %v3726 = vrot.slane %v3707, %v3725
        %v3728 = vunpack.c.l.s4 1966171168
        %v3729 = vunpack.c.0.s8 %v3728
        %v3730 = vlaneseq
        %v3731 = vshrl.u32 %v3730, 7
        %v3732 = vsub.s32 %v3729, %v3731
        %v3733 = vrot.slane %v3706, %v3732
        %v3735 = vunpack.c.l.s4 1966171168
        %v3736 = vunpack.c.0.s8 %v3735
        %v3737 = vlaneseq
        %v3738 = vshrl.u32 %v3737, 7
        %v3739 = vsub.s32 %v3736, %v3738
        %v3740 = vrot.slane %v3708, %v3739
        %v3742 = vunpack.c.l.s4 1966171168
        %v3743 = vunpack.c.0.s8 %v3742
        %v3744 = vlaneseq
        %v3745 = vshrl.u32 %v3744, 7
        %v3746 = vsub.s32 %v3743, %v3745
        %v3747 = vrot.slane %v3709, %v3746
        %v3749 = vunpack.c.l.s4 1966171168
        %v3750 = vunpack.c.0.s8 %v3749
        %v3751 = vlaneseq
        %v3752 = vshrl.u32 %v3751, 7
        %v3753 = vsub.s32 %v3750, %v3752
        %v3754 = vrot.slane %v3711, %v3753
        %v3756 = vunpack.c.l.s4 1966171168
        %v3757 = vunpack.c.0.s8 %v3756
        %v3758 = vlaneseq
        %v3759 = vshrl.u32 %v3758, 7
        %v3760 = vsub.s32 %v3757, %v3759
        %v3761 = vrot.slane %v3710, %v3760
        %v3763 = vunpack.c.l.s4 1966171168
        %v3764 = vunpack.c.0.s8 %v3763
        %v3765 = vlaneseq
        %v3766 = vshrl.u32 %v3765, 7
        %v3767 = vsub.s32 %v3764, %v3766
        %v3768 = vrot.slane %v3712, %v3767
        %v3769 = vcombine.low %v3719, %v3747
        %v3770 = vcombine.high %v3719, %v3747
        %v3771 = vcombine.low %v3726, %v3754
        %v3772 = vcombine.high %v3726, %v3754
        %v3773 = vcombine.low %v3733, %v3761
        %v3774 = vcombine.high %v3733, %v3761
        %v3775 = vcombine.low %v3740, %v3768
        %v3776 = vcombine.high %v3740, %v3768
        %v3777 = vcombine.high %v2143, %v2143
        %v3779 = vunpack.c.l.s4 1966171168
        %v3780 = vunpack.c.0.s8 %v3779
        %v3781 = vlaneseq
        %v3782 = vshrl.u32 %v3781, 7
        %v3783 = vsub.s32 %v3780, %v3782
        %v3784 = vrot.slane %v2143, %v3783
        %v3786 = vunpack.c.l.s4 1966171168
        %v3787 = vunpack.c.0.s8 %v3786
        %v3788 = vlaneseq
        %v3789 = vshrl.u32 %v3788, 7
        %v3790 = vsub.s32 %v3787, %v3789
        %v3791 = vrot.slane %v3777, %v3790
        %v3792 = vcombine.high %v3784, %v3784
        %v3793 = vcombine.high %v3791, %v3791
        %v3795 = vunpack.c.l.s4 1966171168
        %v3796 = vunpack.c.0.s8 %v3795
        %v3797 = vlaneseq
        %v3798 = vshrl.u32 %v3797, 7
        %v3799 = vsub.s32 %v3796, %v3798
        %v3800 = vrot.slane %v3784, %v3799
        %v3802 = vunpack.c.l.s4 1966171168
        %v3803 = vunpack.c.0.s8 %v3802
        %v3804 = vlaneseq
        %v3805 = vshrl.u32 %v3804, 7
        %v3806 = vsub.s32 %v3803, %v3805
        %v3807 = vrot.slane %v3791, %v3806
        %v3809 = vunpack.c.l.s4 1966171168
        %v3810 = vunpack.c.0.s8 %v3809
        %v3811 = vlaneseq
        %v3812 = vshrl.u32 %v3811, 7
        %v3813 = vsub.s32 %v3810, %v3812
        %v3814 = vrot.slane %v3792, %v3813
        %v3816 = vunpack.c.l.s4 1966171168
        %v3817 = vunpack.c.0.s8 %v3816
        %v3818 = vlaneseq
        %v3819 = vshrl.u32 %v3818, 7
        %v3820 = vsub.s32 %v3817, %v3819
        %v3821 = vrot.slane %v3793, %v3820
        %v3822 = vcombine.high %v3800, %v3800
        %v3823 = vcombine.high %v3807, %v3807
        %v3824 = vcombine.high %v3814, %v3814
        %v3825 = vcombine.high %v3821, %v3821
        %v3826 = vcombine.low %v1264, %v1406
        %v3827 = vcombine.low %v1502, %v1586
        %v3828 = vcombine.low %v1727, %v1822
        %v3829 = vcombine.low %v1906, %v2047
        %v3831 = vunpack.c.l.s4 1966171168
        %v3832 = vunpack.c.0.s8 %v3831
        %v3833 = vlaneseq
        %v3834 = vshrl.u32 %v3833, 7
        %v3835 = vsub.s32 %v3832, %v3834
        %v3836 = vrot.slane %v3826, %v3835
        %v3838 = vunpack.c.l.s4 1966171168
        %v3839 = vunpack.c.0.s8 %v3838
        %v3840 = vlaneseq
        %v3841 = vshrl.u32 %v3840, 7
        %v3842 = vsub.s32 %v3839, %v3841
        %v3843 = vrot.slane %v3827, %v3842
        %v3845 = vunpack.c.l.s4 1966171168
        %v3846 = vunpack.c.0.s8 %v3845
        %v3847 = vlaneseq
        %v3848 = vshrl.u32 %v3847, 7
        %v3849 = vsub.s32 %v3846, %v3848
        %v3850 = vrot.slane %v3828, %v3849
        %v3852 = vunpack.c.l.s4 1966171168
        %v3853 = vunpack.c.0.s8 %v3852
        %v3854 = vlaneseq
        %v3855 = vshrl.u32 %v3854, 7
        %v3856 = vsub.s32 %v3853, %v3855
        %v3857 = vrot.slane %v3829, %v3856
        %v3858 = vcombine.low %v3836, %v3843
        %v3859 = vcombine.low %v3850, %v3857
        %v3861 = vunpack.c.l.s4 1966171168
        %v3862 = vunpack.c.0.s8 %v3861
        %v3863 = vlaneseq
        %v3864 = vshrl.u32 %v3863, 7
        %v3865 = vsub.s32 %v3862, %v3864
        %v3866 = vrot.slane %v3858, %v3865
        %v3868 = vunpack.c.l.s4 1966171168
        %v3869 = vunpack.c.0.s8 %v3868
        %v3870 = vlaneseq
        %v3871 = vshrl.u32 %v3870, 7
        %v3872 = vsub.s32 %v3869, %v3871
        %v3873 = vrot.slane %v3859, %v3872
        %v3874 = vcombine.low %v3866, %v3873
        %v3876 = vunpack.c.l.s4 1966171168
        %v3877 = vunpack.c.0.s8 %v3876
        %v3878 = vlaneseq
        %v3879 = vshrl.u32 %v3878, 7
        %v3880 = vsub.s32 %v3877, %v3879
        %v3881 = vrot.slane %v2142, %v3880
        %v3883 = vunpack.c.l.s4 1966171168
        %v3884 = vunpack.c.0.s8 %v3883
        %v3885 = vlaneseq
        %v3886 = vshrl.u32 %v3885, 7
        %v3887 = vsub.s32 %v3884, %v3886
        %v3888 = vrot.slane %v3881, %v3887
        %v3889 = vcombine.low %v1265, %v1418
        %v3890 = vcombine.high %v1265, %v1418
        %v3891 = vcombine.low %v1506, %v1587
        %v3892 = vcombine.high %v1506, %v1587
        %v3893 = vcombine.low %v1739, %v1826
        %v3894 = vcombine.high %v1739, %v1826
        %v3895 = vcombine.low %v1907, %v2059
        %v3896 = vcombine.high %v1907, %v2059
        %v3898 = vunpack.c.l.s4 1966171168
        %v3899 = vunpack.c.0.s8 %v3898
        %v3900 = vlaneseq
        %v3901 = vshrl.u32 %v3900, 7
        %v3902 = vsub.s32 %v3899, %v3901
        %v3903 = vrot.slane %v3889, %v3902
        %v3905 = vunpack.c.l.s4 1966171168
        %v3906 = vunpack.c.0.s8 %v3905
        %v3907 = vlaneseq
        %v3908 = vshrl.u32 %v3907, 7
        %v3909 = vsub.s32 %v3906, %v3908
        %v3910 = vrot.slane %v3890, %v3909
        %v3912 = vunpack.c.l.s4 1966171168
        %v3913 = vunpack.c.0.s8 %v3912
        %v3914 = vlaneseq
        %v3915 = vshrl.u32 %v3914, 7
        %v3916 = vsub.s32 %v3913, %v3915
        %v3917 = vrot.slane %v3891, %v3916
        %v3919 = vunpack.c.l.s4 1966171168
        %v3920 = vunpack.c.0.s8 %v3919
        %v3921 = vlaneseq
        %v3922 = vshrl.u32 %v3921, 7
        %v3923 = vsub.s32 %v3920, %v3922
        %v3924 = vrot.slane %v3892, %v3923
        %v3926 = vunpack.c.l.s4 1966171168
        %v3927 = vunpack.c.0.s8 %v3926
        %v3928 = vlaneseq
        %v3929 = vshrl.u32 %v3928, 7
        %v3930 = vsub.s32 %v3927, %v3929
        %v3931 = vrot.slane %v3893, %v3930
        %v3933 = vunpack.c.l.s4 1966171168
        %v3934 = vunpack.c.0.s8 %v3933
        %v3935 = vlaneseq
        %v3936 = vshrl.u32 %v3935, 7
        %v3937 = vsub.s32 %v3934, %v3936
        %v3938 = vrot.slane %v3894, %v3937
        %v3940 = vunpack.c.l.s4 1966171168
        %v3941 = vunpack.c.0.s8 %v3940
        %v3942 = vlaneseq
        %v3943 = vshrl.u32 %v3942, 7
        %v3944 = vsub.s32 %v3941, %v3943
        %v3945 = vrot.slane %v3895, %v3944
        %v3947 = vunpack.c.l.s4 1966171168
        %v3948 = vunpack.c.0.s8 %v3947
        %v3949 = vlaneseq
        %v3950 = vshrl.u32 %v3949, 7
        %v3951 = vsub.s32 %v3948, %v3950
        %v3952 = vrot.slane %v3896, %v3951
        %v3953 = vcombine.low %v3903, %v3917
        %v3954 = vcombine.high %v3903, %v3917
        %v3955 = vcombine.low %v3910, %v3924
        %v3956 = vcombine.high %v3910, %v3924
        %v3957 = vcombine.low %v3931, %v3945
        %v3958 = vcombine.high %v3931, %v3945
        %v3959 = vcombine.low %v3938, %v3952
        %v3960 = vcombine.high %v3938, %v3952
        %v3962 = vunpack.c.l.s4 1966171168
        %v3963 = vunpack.c.0.s8 %v3962
        %v3964 = vlaneseq
        %v3965 = vshrl.u32 %v3964, 7
        %v3966 = vsub.s32 %v3963, %v3965
        %v3967 = vrot.slane %v3953, %v3966
        %v3969 = vunpack.c.l.s4 1966171168
        %v3970 = vunpack.c.0.s8 %v3969
        %v3971 = vlaneseq
        %v3972 = vshrl.u32 %v3971, 7
        %v3973 = vsub.s32 %v3970, %v3972
        %v3974 = vrot.slane %v3955, %v3973
        %v3976 = vunpack.c.l.s4 1966171168
        %v3977 = vunpack.c.0.s8 %v3976
        %v3978 = vlaneseq
        %v3979 = vshrl.u32 %v3978, 7
        %v3980 = vsub.s32 %v3977, %v3979
        %v3981 = vrot.slane %v3954, %v3980
        %v3983 = vunpack.c.l.s4 1966171168
        %v3984 = vunpack.c.0.s8 %v3983
        %v3985 = vlaneseq
        %v3986 = vshrl.u32 %v3985, 7
        %v3987 = vsub.s32 %v3984, %v3986
        %v3988 = vrot.slane %v3956, %v3987
        %v3990 = vunpack.c.l.s4 1966171168
        %v3991 = vunpack.c.0.s8 %v3990
        %v3992 = vlaneseq
        %v3993 = vshrl.u32 %v3992, 7
        %v3994 = vsub.s32 %v3991, %v3993
        %v3995 = vrot.slane %v3957, %v3994
        %v3997 = vunpack.c.l.s4 1966171168
        %v3998 = vunpack.c.0.s8 %v3997
        %v3999 = vlaneseq
        %v4000 = vshrl.u32 %v3999, 7
        %v4001 = vsub.s32 %v3998, %v4000
        %v4002 = vrot.slane %v3959, %v4001
        %v4004 = vunpack.c.l.s4 1966171168
        %v4005 = vunpack.c.0.s8 %v4004
        %v4006 = vlaneseq
        %v4007 = vshrl.u32 %v4006, 7
        %v4008 = vsub.s32 %v4005, %v4007
        %v4009 = vrot.slane %v3958, %v4008
        %v4011 = vunpack.c.l.s4 1966171168
        %v4012 = vunpack.c.0.s8 %v4011
        %v4013 = vlaneseq
        %v4014 = vshrl.u32 %v4013, 7
        %v4015 = vsub.s32 %v4012, %v4014
        %v4016 = vrot.slane %v3960, %v4015
        %v4017 = vcombine.low %v3967, %v3995
        %v4018 = vcombine.high %v3967, %v3995
        %v4019 = vcombine.low %v3974, %v4002
        %v4020 = vcombine.high %v3974, %v4002
        %v4021 = vcombine.low %v3981, %v4009
        %v4022 = vcombine.high %v3981, %v4009
        %v4023 = vcombine.low %v3988, %v4016
        %v4024 = vcombine.high %v3988, %v4016
        %v4025 = vcombine.high %v2146, %v2146
        %v4027 = vunpack.c.l.s4 1966171168
        %v4028 = vunpack.c.0.s8 %v4027
        %v4029 = vlaneseq
        %v4030 = vshrl.u32 %v4029, 7
        %v4031 = vsub.s32 %v4028, %v4030
        %v4032 = vrot.slane %v2146, %v4031
        %v4034 = vunpack.c.l.s4 1966171168
        %v4035 = vunpack.c.0.s8 %v4034
        %v4036 = vlaneseq
        %v4037 = vshrl.u32 %v4036, 7
        %v4038 = vsub.s32 %v4035, %v4037
        %v4039 = vrot.slane %v4025, %v4038
        %v4040 = vcombine.high %v4032, %v4032
        %v4041 = vcombine.high %v4039, %v4039
        %v4043 = vunpack.c.l.s4 1966171168
        %v4044 = vunpack.c.0.s8 %v4043
        %v4045 = vlaneseq
        %v4046 = vshrl.u32 %v4045, 7
        %v4047 = vsub.s32 %v4044, %v4046
        %v4048 = vrot.slane %v4032, %v4047
        %v4050 = vunpack.c.l.s4 1966171168
        %v4051 = vunpack.c.0.s8 %v4050
        %v4052 = vlaneseq
        %v4053 = vshrl.u32 %v4052, 7
        %v4054 = vsub.s32 %v4051, %v4053
        %v4055 = vrot.slane %v4039, %v4054
        %v4057 = vunpack.c.l.s4 1966171168
        %v4058 = vunpack.c.0.s8 %v4057
        %v4059 = vlaneseq
        %v4060 = vshrl.u32 %v4059, 7
        %v4061 = vsub.s32 %v4058, %v4060
        %v4062 = vrot.slane %v4040, %v4061
        %v4064 = vunpack.c.l.s4 1966171168
        %v4065 = vunpack.c.0.s8 %v4064
        %v4066 = vlaneseq
        %v4067 = vshrl.u32 %v4066, 7
        %v4068 = vsub.s32 %v4065, %v4067
        %v4069 = vrot.slane %v4041, %v4068
        %v4070 = vcombine.high %v4048, %v4048
        %v4071 = vcombine.high %v4055, %v4055
        %v4072 = vcombine.high %v4062, %v4062
        %v4073 = vcombine.high %v4069, %v4069
        %v4074 = vcombine.low %v1266, %v1421
        %v4075 = vcombine.low %v1505, %v1588
        %v4076 = vcombine.low %v1742, %v1825
        %v4077 = vcombine.low %v1908, %v2062
        %v4079 = vunpack.c.l.s4 1966171168
        %v4080 = vunpack.c.0.s8 %v4079
        %v4081 = vlaneseq
        %v4082 = vshrl.u32 %v4081, 7
        %v4083 = vsub.s32 %v4080, %v4082
        %v4084 = vrot.slane %v4074, %v4083
        %v4086 = vunpack.c.l.s4 1966171168
        %v4087 = vunpack.c.0.s8 %v4086
        %v4088 = vlaneseq
        %v4089 = vshrl.u32 %v4088, 7
        %v4090 = vsub.s32 %v4087, %v4089
        %v4091 = vrot.slane %v4075, %v4090
        %v4093 = vunpack.c.l.s4 1966171168
        %v4094 = vunpack.c.0.s8 %v4093
        %v4095 = vlaneseq
        %v4096 = vshrl.u32 %v4095, 7
        %v4097 = vsub.s32 %v4094, %v4096
        %v4098 = vrot.slane %v4076, %v4097
        %v4100 = vunpack.c.l.s4 1966171168
        %v4101 = vunpack.c.0.s8 %v4100
        %v4102 = vlaneseq
        %v4103 = vshrl.u32 %v4102, 7
        %v4104 = vsub.s32 %v4101, %v4103
        %v4105 = vrot.slane %v4077, %v4104
        %v4106 = vcombine.low %v4084, %v4091
        %v4107 = vcombine.low %v4098, %v4105
        %v4109 = vunpack.c.l.s4 1966171168
        %v4110 = vunpack.c.0.s8 %v4109
        %v4111 = vlaneseq
        %v4112 = vshrl.u32 %v4111, 7
        %v4113 = vsub.s32 %v4110, %v4112
        %v4114 = vrot.slane %v4106, %v4113
        %v4116 = vunpack.c.l.s4 1966171168
        %v4117 = vunpack.c.0.s8 %v4116
        %v4118 = vlaneseq
        %v4119 = vshrl.u32 %v4118, 7
        %v4120 = vsub.s32 %v4117, %v4119
        %v4121 = vrot.slane %v4107, %v4120
        %v4122 = vcombine.low %v4114, %v4121
        %v4124 = vunpack.c.l.s4 1966171168
        %v4125 = vunpack.c.0.s8 %v4124
        %v4126 = vlaneseq
        %v4127 = vshrl.u32 %v4126, 7
        %v4128 = vsub.s32 %v4125, %v4127
        %v4129 = vrot.slane %v2145, %v4128
        %v4131 = vunpack.c.l.s4 1966171168
        %v4132 = vunpack.c.0.s8 %v4131
        %v4133 = vlaneseq
        %v4134 = vshrl.u32 %v4133, 7
        %v4135 = vsub.s32 %v4132, %v4134
        %v4136 = vrot.slane %v4129, %v4135
        %v4137 = vcombine.low %v1267, %v1433
        %v4138 = vcombine.high %v1267, %v1433
        %v4139 = vcombine.low %v1509, %v1589
        %v4140 = vcombine.high %v1509, %v1589
        %v4141 = vcombine.low %v1754, %v1829
        %v4142 = vcombine.high %v1754, %v1829
        %v4143 = vcombine.low %v1909, %v2074
        %v4144 = vcombine.high %v1909, %v2074
        %v4146 = vunpack.c.l.s4 1966171168
        %v4147 = vunpack.c.0.s8 %v4146
        %v4148 = vlaneseq
        %v4149 = vshrl.u32 %v4148, 7
        %v4150 = vsub.s32 %v4147, %v4149
        %v4151 = vrot.slane %v4137, %v4150
        %v4153 = vunpack.c.l.s4 1966171168
        %v4154 = vunpack.c.0.s8 %v4153
        %v4155 = vlaneseq
        %v4156 = vshrl.u32 %v4155, 7
        %v4157 = vsub.s32 %v4154, %v4156
        %v4158 = vrot.slane %v4138, %v4157
        %v4160 = vunpack.c.l.s4 1966171168
        %v4161 = vunpack.c.0.s8 %v4160
        %v4162 = vlaneseq
        %v4163 = vshrl.u32 %v4162, 7
        %v4164 = vsub.s32 %v4161, %v4163
        %v4165 = vrot.slane %v4139, %v4164
        %v4167 = vunpack.c.l.s4 1966171168
        %v4168 = vunpack.c.0.s8 %v4167
        %v4169 = vlaneseq
        %v4170 = vshrl.u32 %v4169, 7
        %v4171 = vsub.s32 %v4168, %v4170
        %v4172 = vrot.slane %v4140, %v4171
        %v4174 = vunpack.c.l.s4 1966171168
        %v4175 = vunpack.c.0.s8 %v4174
        %v4176 = vlaneseq
        %v4177 = vshrl.u32 %v4176, 7
        %v4178 = vsub.s32 %v4175, %v4177
        %v4179 = vrot.slane %v4141, %v4178
        %v4181 = vunpack.c.l.s4 1966171168
        %v4182 = vunpack.c.0.s8 %v4181
        %v4183 = vlaneseq
        %v4184 = vshrl.u32 %v4183, 7
        %v4185 = vsub.s32 %v4182, %v4184
        %v4186 = vrot.slane %v4142, %v4185
        %v4188 = vunpack.c.l.s4 1966171168
        %v4189 = vunpack.c.0.s8 %v4188
        %v4190 = vlaneseq
        %v4191 = vshrl.u32 %v4190, 7
        %v4192 = vsub.s32 %v4189, %v4191
        %v4193 = vrot.slane %v4143, %v4192
        %v4195 = vunpack.c.l.s4 1966171168
        %v4196 = vunpack.c.0.s8 %v4195
        %v4197 = vlaneseq
        %v4198 = vshrl.u32 %v4197, 7
        %v4199 = vsub.s32 %v4196, %v4198
        %v4200 = vrot.slane %v4144, %v4199
        %v4201 = vcombine.low %v4151, %v4165
        %v4202 = vcombine.high %v4151, %v4165
        %v4203 = vcombine.low %v4158, %v4172
        %v4204 = vcombine.high %v4158, %v4172
        %v4205 = vcombine.low %v4179, %v4193
        %v4206 = vcombine.high %v4179, %v4193
        %v4207 = vcombine.low %v4186, %v4200
        %v4208 = vcombine.high %v4186, %v4200
        %v4210 = vunpack.c.l.s4 1966171168
        %v4211 = vunpack.c.0.s8 %v4210
        %v4212 = vlaneseq
        %v4213 = vshrl.u32 %v4212, 7
        %v4214 = vsub.s32 %v4211, %v4213
        %v4215 = vrot.slane %v4201, %v4214
        %v4217 = vunpack.c.l.s4 1966171168
        %v4218 = vunpack.c.0.s8 %v4217
        %v4219 = vlaneseq
        %v4220 = vshrl.u32 %v4219, 7
        %v4221 = vsub.s32 %v4218, %v4220
        %v4222 = vrot.slane %v4203, %v4221
        %v4224 = vunpack.c.l.s4 1966171168
        %v4225 = vunpack.c.0.s8 %v4224
        %v4226 = vlaneseq
        %v4227 = vshrl.u32 %v4226, 7
        %v4228 = vsub.s32 %v4225, %v4227
        %v4229 = vrot.slane %v4202, %v4228
        %v4231 = vunpack.c.l.s4 1966171168
        %v4232 = vunpack.c.0.s8 %v4231
        %v4233 = vlaneseq
        %v4234 = vshrl.u32 %v4233, 7
        %v4235 = vsub.s32 %v4232, %v4234
        %v4236 = vrot.slane %v4204, %v4235
        %v4238 = vunpack.c.l.s4 1966171168
        %v4239 = vunpack.c.0.s8 %v4238
        %v4240 = vlaneseq
        %v4241 = vshrl.u32 %v4240, 7
        %v4242 = vsub.s32 %v4239, %v4241
        %v4243 = vrot.slane %v4205, %v4242
        %v4245 = vunpack.c.l.s4 1966171168
        %v4246 = vunpack.c.0.s8 %v4245
        %v4247 = vlaneseq
        %v4248 = vshrl.u32 %v4247, 7
        %v4249 = vsub.s32 %v4246, %v4248
        %v4250 = vrot.slane %v4207, %v4249
        %v4252 = vunpack.c.l.s4 1966171168
        %v4253 = vunpack.c.0.s8 %v4252
        %v4254 = vlaneseq
        %v4255 = vshrl.u32 %v4254, 7
        %v4256 = vsub.s32 %v4253, %v4255
        %v4257 = vrot.slane %v4206, %v4256
        %v4259 = vunpack.c.l.s4 1966171168
        %v4260 = vunpack.c.0.s8 %v4259
        %v4261 = vlaneseq
        %v4262 = vshrl.u32 %v4261, 7
        %v4263 = vsub.s32 %v4260, %v4262
        %v4264 = vrot.slane %v4208, %v4263
        %v4265 = vcombine.low %v4215, %v4243
        %v4266 = vcombine.high %v4215, %v4243
        %v4267 = vcombine.low %v4222, %v4250
        %v4268 = vcombine.high %v4222, %v4250
        %v4269 = vcombine.low %v4229, %v4257
        %v4270 = vcombine.high %v4229, %v4257
        %v4271 = vcombine.low %v4236, %v4264
        %v4272 = vcombine.high %v4236, %v4264
        %v4273 = vcombine.high %v2149, %v2149
        %v4275 = vunpack.c.l.s4 1966171168
        %v4276 = vunpack.c.0.s8 %v4275
        %v4277 = vlaneseq
        %v4278 = vshrl.u32 %v4277, 7
        %v4279 = vsub.s32 %v4276, %v4278
        %v4280 = vrot.slane %v2149, %v4279
        %v4282 = vunpack.c.l.s4 1966171168
        %v4283 = vunpack.c.0.s8 %v4282
        %v4284 = vlaneseq
        %v4285 = vshrl.u32 %v4284, 7
        %v4286 = vsub.s32 %v4283, %v4285
        %v4287 = vrot.slane %v4273, %v4286
        %v4288 = vcombine.high %v4280, %v4280
        %v4289 = vcombine.high %v4287, %v4287
        %v4291 = vunpack.c.l.s4 1966171168
        %v4292 = vunpack.c.0.s8 %v4291
        %v4293 = vlaneseq
        %v4294 = vshrl.u32 %v4293, 7
        %v4295 = vsub.s32 %v4292, %v4294
        %v4296 = vrot.slane %v4280, %v4295
        %v4298 = vunpack.c.l.s4 1966171168
        %v4299 = vunpack.c.0.s8 %v4298
        %v4300 = vlaneseq
        %v4301 = vshrl.u32 %v4300, 7
        %v4302 = vsub.s32 %v4299, %v4301
        %v4303 = vrot.slane %v4287, %v4302
        %v4305 = vunpack.c.l.s4 1966171168
        %v4306 = vunpack.c.0.s8 %v4305
        %v4307 = vlaneseq
        %v4308 = vshrl.u32 %v4307, 7
        %v4309 = vsub.s32 %v4306, %v4308
        %v4310 = vrot.slane %v4288, %v4309
        %v4312 = vunpack.c.l.s4 1966171168
        %v4313 = vunpack.c.0.s8 %v4312
        %v4314 = vlaneseq
        %v4315 = vshrl.u32 %v4314, 7
        %v4316 = vsub.s32 %v4313, %v4315
        %v4317 = vrot.slane %v4289, %v4316
        %v4318 = vcombine.high %v4296, %v4296
        %v4319 = vcombine.high %v4303, %v4303
        %v4320 = vcombine.high %v4310, %v4310
        %v4321 = vcombine.high %v4317, %v4317
        %v4322 = vcombine.low %v1268, %v1436
        %v4323 = vcombine.low %v1508, %v1590
        %v4324 = vcombine.low %v1757, %v1828
        %v4325 = vcombine.low %v1910, %v2077
        %v4327 = vunpack.c.l.s4 1966171168
        %v4328 = vunpack.c.0.s8 %v4327
        %v4329 = vlaneseq
        %v4330 = vshrl.u32 %v4329, 7
        %v4331 = vsub.s32 %v4328, %v4330
        %v4332 = vrot.slane %v4322, %v4331
        %v4334 = vunpack.c.l.s4 1966171168
        %v4335 = vunpack.c.0.s8 %v4334
        %v4336 = vlaneseq
        %v4337 = vshrl.u32 %v4336, 7
        %v4338 = vsub.s32 %v4335, %v4337
        %v4339 = vrot.slane %v4323, %v4338
        %v4341 = vunpack.c.l.s4 1966171168
        %v4342 = vunpack.c.0.s8 %v4341
        %v4343 = vlaneseq
        %v4344 = vshrl.u32 %v4343, 7
        %v4345 = vsub.s32 %v4342, %v4344
        %v4346 = vrot.slane %v4324, %v4345
        %v4348 = vunpack.c.l.s4 1966171168
        %v4349 = vunpack.c.0.s8 %v4348
        %v4350 = vlaneseq
        %v4351 = vshrl.u32 %v4350, 7
        %v4352 = vsub.s32 %v4349, %v4351
        %v4353 = vrot.slane %v4325, %v4352
        %v4354 = vcombine.low %v4332, %v4339
        %v4355 = vcombine.low %v4346, %v4353
        %v4357 = vunpack.c.l.s4 1966171168
        %v4358 = vunpack.c.0.s8 %v4357
        %v4359 = vlaneseq
        %v4360 = vshrl.u32 %v4359, 7
        %v4361 = vsub.s32 %v4358, %v4360
        %v4362 = vrot.slane %v4354, %v4361
        %v4364 = vunpack.c.l.s4 1966171168
        %v4365 = vunpack.c.0.s8 %v4364
        %v4366 = vlaneseq
        %v4367 = vshrl.u32 %v4366, 7
        %v4368 = vsub.s32 %v4365, %v4367
        %v4369 = vrot.slane %v4355, %v4368
        %v4370 = vcombine.low %v4362, %v4369
        %v4372 = vunpack.c.l.s4 1966171168
        %v4373 = vunpack.c.0.s8 %v4372
        %v4374 = vlaneseq
        %v4375 = vshrl.u32 %v4374, 7
        %v4376 = vsub.s32 %v4373, %v4375
        %v4377 = vrot.slane %v2148, %v4376
        %v4379 = vunpack.c.l.s4 1966171168
        %v4380 = vunpack.c.0.s8 %v4379
        %v4381 = vlaneseq
        %v4382 = vshrl.u32 %v4381, 7
        %v4383 = vsub.s32 %v4380, %v4382
        %v4384 = vrot.slane %v4377, %v4383
        %v4385 = vcombine.low %v1269, %v1448
        %v4386 = vcombine.high %v1269, %v1448
        %v4387 = vcombine.low %v1512, %v1591
        %v4388 = vcombine.high %v1512, %v1591
        %v4389 = vcombine.low %v1769, %v1832
        %v4390 = vcombine.high %v1769, %v1832
        %v4391 = vcombine.low %v1911, %v2089
        %v4392 = vcombine.high %v1911, %v2089
        %v4394 = vunpack.c.l.s4 1966171168
        %v4395 = vunpack.c.0.s8 %v4394
        %v4396 = vlaneseq
        %v4397 = vshrl.u32 %v4396, 7
        %v4398 = vsub.s32 %v4395, %v4397
        %v4399 = vrot.slane %v4385, %v4398
        %v4401 = vunpack.c.l.s4 1966171168
        %v4402 = vunpack.c.0.s8 %v4401
        %v4403 = vlaneseq
        %v4404 = vshrl.u32 %v4403, 7
        %v4405 = vsub.s32 %v4402, %v4404
        %v4406 = vrot.slane %v4386, %v4405
        %v4408 = vunpack.c.l.s4 1966171168
        %v4409 = vunpack.c.0.s8 %v4408
        %v4410 = vlaneseq
        %v4411 = vshrl.u32 %v4410, 7
        %v4412 = vsub.s32 %v4409, %v4411
        %v4413 = vrot.slane %v4387, %v4412
        %v4415 = vunpack.c.l.s4 1966171168
        %v4416 = vunpack.c.0.s8 %v4415
        %v4417 = vlaneseq
        %v4418 = vshrl.u32 %v4417, 7
        %v4419 = vsub.s32 %v4416, %v4418
        %v4420 = vrot.slane %v4388, %v4419
        %v4422 = vunpack.c.l.s4 1966171168
        %v4423 = vunpack.c.0.s8 %v4422
        %v4424 = vlaneseq
        %v4425 = vshrl.u32 %v4424, 7
        %v4426 = vsub.s32 %v4423, %v4425
        %v4427 = vrot.slane %v4389, %v4426
        %v4429 = vunpack.c.l.s4 1966171168
        %v4430 = vunpack.c.0.s8 %v4429
        %v4431 = vlaneseq
        %v4432 = vshrl.u32 %v4431, 7
        %v4433 = vsub.s32 %v4430, %v4432
        %v4434 = vrot.slane %v4390, %v4433
        %v4436 = vunpack.c.l.s4 1966171168
        %v4437 = vunpack.c.0.s8 %v4436
        %v4438 = vlaneseq
        %v4439 = vshrl.u32 %v4438, 7
        %v4440 = vsub.s32 %v4437, %v4439
        %v4441 = vrot.slane %v4391, %v4440
        %v4443 = vunpack.c.l.s4 1966171168
        %v4444 = vunpack.c.0.s8 %v4443
        %v4445 = vlaneseq
        %v4446 = vshrl.u32 %v4445, 7
        %v4447 = vsub.s32 %v4444, %v4446
        %v4448 = vrot.slane %v4392, %v4447
        %v4449 = vcombine.low %v4399, %v4413
        %v4450 = vcombine.high %v4399, %v4413
        %v4451 = vcombine.low %v4406, %v4420
        %v4452 = vcombine.high %v4406, %v4420
        %v4453 = vcombine.low %v4427, %v4441
        %v4454 = vcombine.high %v4427, %v4441
        %v4455 = vcombine.low %v4434, %v4448
        %v4456 = vcombine.high %v4434, %v4448
        %v4458 = vunpack.c.l.s4 1966171168
        %v4459 = vunpack.c.0.s8 %v4458
        %v4460 = vlaneseq
        %v4461 = vshrl.u32 %v4460, 7
        %v4462 = vsub.s32 %v4459, %v4461
        %v4463 = vrot.slane %v4449, %v4462
        %v4465 = vunpack.c.l.s4 1966171168
        %v4466 = vunpack.c.0.s8 %v4465
        %v4467 = vlaneseq
        %v4468 = vshrl.u32 %v4467, 7
        %v4469 = vsub.s32 %v4466, %v4468
        %v4470 = vrot.slane %v4451, %v4469
        %v4472 = vunpack.c.l.s4 1966171168
        %v4473 = vunpack.c.0.s8 %v4472
        %v4474 = vlaneseq
        %v4475 = vshrl.u32 %v4474, 7
        %v4476 = vsub.s32 %v4473, %v4475
        %v4477 = vrot.slane %v4450, %v4476
        %v4479 = vunpack.c.l.s4 1966171168
        %v4480 = vunpack.c.0.s8 %v4479
        %v4481 = vlaneseq
        %v4482 = vshrl.u32 %v4481, 7
        %v4483 = vsub.s32 %v4480, %v4482
        %v4484 = vrot.slane %v4452, %v4483
        %v4486 = vunpack.c.l.s4 1966171168
        %v4487 = vunpack.c.0.s8 %v4486
        %v4488 = vlaneseq
        %v4489 = vshrl.u32 %v4488, 7
        %v4490 = vsub.s32 %v4487, %v4489
        %v4491 = vrot.slane %v4453, %v4490
        %v4493 = vunpack.c.l.s4 1966171168
        %v4494 = vunpack.c.0.s8 %v4493
        %v4495 = vlaneseq
        %v4496 = vshrl.u32 %v4495, 7
        %v4497 = vsub.s32 %v4494, %v4496
        %v4498 = vrot.slane %v4455, %v4497
        %v4500 = vunpack.c.l.s4 1966171168
        %v4501 = vunpack.c.0.s8 %v4500
        %v4502 = vlaneseq
        %v4503 = vshrl.u32 %v4502, 7
        %v4504 = vsub.s32 %v4501, %v4503
        %v4505 = vrot.slane %v4454, %v4504
        %v4507 = vunpack.c.l.s4 1966171168
        %v4508 = vunpack.c.0.s8 %v4507
        %v4509 = vlaneseq
        %v4510 = vshrl.u32 %v4509, 7
        %v4511 = vsub.s32 %v4508, %v4510
        %v4512 = vrot.slane %v4456, %v4511
        %v4513 = vcombine.low %v4463, %v4491
        %v4514 = vcombine.high %v4463, %v4491
        %v4515 = vcombine.low %v4470, %v4498
        %v4516 = vcombine.high %v4470, %v4498
        %v4517 = vcombine.low %v4477, %v4505
        %v4518 = vcombine.high %v4477, %v4505
        %v4519 = vcombine.low %v4484, %v4512
        %v4520 = vcombine.high %v4484, %v4512
        %v4521 = vcombine.high %v2152, %v2152
        %v4523 = vunpack.c.l.s4 1966171168
        %v4524 = vunpack.c.0.s8 %v4523
        %v4525 = vlaneseq
        %v4526 = vshrl.u32 %v4525, 7
        %v4527 = vsub.s32 %v4524, %v4526
        %v4528 = vrot.slane %v2152, %v4527
        %v4530 = vunpack.c.l.s4 1966171168
        %v4531 = vunpack.c.0.s8 %v4530
        %v4532 = vlaneseq
        %v4533 = vshrl.u32 %v4532, 7
        %v4534 = vsub.s32 %v4531, %v4533
        %v4535 = vrot.slane %v4521, %v4534
        %v4536 = vcombine.high %v4528, %v4528
        %v4537 = vcombine.high %v4535, %v4535
        %v4539 = vunpack.c.l.s4 1966171168
        %v4540 = vunpack.c.0.s8 %v4539
        %v4541 = vlaneseq
        %v4542 = vshrl.u32 %v4541, 7
        %v4543 = vsub.s32 %v4540, %v4542
        %v4544 = vrot.slane %v4528, %v4543
        %v4546 = vunpack.c.l.s4 1966171168
        %v4547 = vunpack.c.0.s8 %v4546
        %v4548 = vlaneseq
        %v4549 = vshrl.u32 %v4548, 7
        %v4550 = vsub.s32 %v4547, %v4549
        %v4551 = vrot.slane %v4535, %v4550
        %v4553 = vunpack.c.l.s4 1966171168
        %v4554 = vunpack.c.0.s8 %v4553
        %v4555 = vlaneseq
        %v4556 = vshrl.u32 %v4555, 7
        %v4557 = vsub.s32 %v4554, %v4556
        %v4558 = vrot.slane %v4536, %v4557
        %v4560 = vunpack.c.l.s4 1966171168
        %v4561 = vunpack.c.0.s8 %v4560
        %v4562 = vlaneseq
        %v4563 = vshrl.u32 %v4562, 7
        %v4564 = vsub.s32 %v4561, %v4563
        %v4565 = vrot.slane %v4537, %v4564
        %v4566 = vcombine.high %v4544, %v4544
        %v4567 = vcombine.high %v4551, %v4551
        %v4568 = vcombine.high %v4558, %v4558
        %v4569 = vcombine.high %v4565, %v4565
        %v4570 = vcombine.low %v1270, %v1451
        %v4571 = vcombine.low %v1511, %v1592
        %v4572 = vcombine.low %v1772, %v1831
        %v4573 = vcombine.low %v1912, %v2092
        %v4575 = vunpack.c.l.s4 1966171168
        %v4576 = vunpack.c.0.s8 %v4575
        %v4577 = vlaneseq
        %v4578 = vshrl.u32 %v4577, 7
        %v4579 = vsub.s32 %v4576, %v4578
        %v4580 = vrot.slane %v4570, %v4579
        %v4582 = vunpack.c.l.s4 1966171168
        %v4583 = vunpack.c.0.s8 %v4582
        %v4584 = vlaneseq
        %v4585 = vshrl.u32 %v4584, 7
        %v4586 = vsub.s32 %v4583, %v4585
        %v4587 = vrot.slane %v4571, %v4586
        %v4589 = vunpack.c.l.s4 1966171168
        %v4590 = vunpack.c.0.s8 %v4589
        %v4591 = vlaneseq
        %v4592 = vshrl.u32 %v4591, 7
        %v4593 = vsub.s32 %v4590, %v4592
        %v4594 = vrot.slane %v4572, %v4593
        %v4596 = vunpack.c.l.s4 1966171168
        %v4597 = vunpack.c.0.s8 %v4596
        %v4598 = vlaneseq
        %v4599 = vshrl.u32 %v4598, 7
        %v4600 = vsub.s32 %v4597, %v4599
        %v4601 = vrot.slane %v4573, %v4600
        %v4602 = vcombine.low %v4580, %v4587
        %v4603 = vcombine.low %v4594, %v4601
        %v4605 = vunpack.c.l.s4 1966171168
        %v4606 = vunpack.c.0.s8 %v4605
        %v4607 = vlaneseq
        %v4608 = vshrl.u32 %v4607, 7
        %v4609 = vsub.s32 %v4606, %v4608
        %v4610 = vrot.slane %v4602, %v4609
        %v4612 = vunpack.c.l.s4 1966171168
        %v4613 = vunpack.c.0.s8 %v4612
        %v4614 = vlaneseq
        %v4615 = vshrl.u32 %v4614, 7
        %v4616 = vsub.s32 %v4613, %v4615
        %v4617 = vrot.slane %v4603, %v4616
        %v4618 = vcombine.low %v4610, %v4617
        %v4620 = vunpack.c.l.s4 1966171168
        %v4621 = vunpack.c.0.s8 %v4620
        %v4622 = vlaneseq
        %v4623 = vshrl.u32 %v4622, 7
        %v4624 = vsub.s32 %v4621, %v4623
        %v4625 = vrot.slane %v2151, %v4624
        %v4627 = vunpack.c.l.s4 1966171168
        %v4628 = vunpack.c.0.s8 %v4627
        %v4629 = vlaneseq
        %v4630 = vshrl.u32 %v4629, 7
        %v4631 = vsub.s32 %v4628, %v4630
        %v4632 = vrot.slane %v4625, %v4631
        %v4633 = vld [vmem:[%s1] sm:$0xf]
        %v4634 = vld [vmem:[%s1 + $0x4] sm:$0xf]
        %v4635 = vld [vmem:[%s1 + $0x8] sm:$0xf]
        %v4636 = vld [vmem:[%s1 + $0xc] sm:$0xf]
        %v4637 = vld [vmem:[%s1 + $0x10] sm:$0xf]
        %v4638 = vld [vmem:[%s1 + $0x14] sm:$0xf]
        %v4639 = vld [vmem:[%s1 + $0x18] sm:$0xf]
        %v4640 = vld [vmem:[%s1 + $0x1c] sm:$0xf]
        %v4641 = vld [vmem:[%s1 + $0x20] sm:$0xf]
        %v4642 = vld [vmem:[%s1 + $0x24] sm:$0xf]
        %v4643 = vld [vmem:[%s1 + $0x28] sm:$0xf]
        %v4644 = vld [vmem:[%s1 + $0x2c] sm:$0xf]
        %v4645 = vld [vmem:[%s1 + $0x30] sm:$0xf]
        %v4646 = vld [vmem:[%s1 + $0x34] sm:$0xf]
        %v4647 = vld [vmem:[%s1 + $0x38] sm:$0xf]
        %v4648 = vld [vmem:[%s1 + $0x3c] sm:$0xf]
        %v4649 = vld [vmem:[%s1 + $0x40] sm:$0xf]
        %v4650 = vld [vmem:[%s1 + $0x44] sm:$0xf]
        %v4651 = vld [vmem:[%s1 + $0x48] sm:$0xf]
        %v4652 = vld [vmem:[%s1 + $0x4c] sm:$0xf]
        %v4653 = vld [vmem:[%s1 + $0x50] sm:$0xf]
        %v4654 = vld [vmem:[%s1 + $0x54] sm:$0xf]
        %v4655 = vld [vmem:[%s1 + $0x58] sm:$0xf]
        %v4656 = vld [vmem:[%s1 + $0x5c] sm:$0xf]
        %v4657 = vld [vmem:[%s1 + $0x60] sm:$0xf]
        %v4658 = vld [vmem:[%s1 + $0x64] sm:$0xf]
        %v4659 = vld [vmem:[%s1 + $0x68] sm:$0xf]
        %v4660 = vld [vmem:[%s1 + $0x6c] sm:$0xf]
        %v4661 = vld [vmem:[%s1 + $0x70] sm:$0xf]
        %v4662 = vld [vmem:[%s1 + $0x74] sm:$0xf]
        %v4663 = vld [vmem:[%s1 + $0x78] sm:$0xf]
        %v4664 = vld [vmem:[%s1 + $0x7c] sm:$0xf]
        %v4665 = vld [vmem:[%s1 + $0x80] sm:$0xf]
        %v4666 = vld [vmem:[%s1 + $0x84] sm:$0xf]
        %v4667 = vld [vmem:[%s1 + $0x88] sm:$0xf]
        %v4668 = vld [vmem:[%s1 + $0x8c] sm:$0xf]
        %v4669 = vld [vmem:[%s1 + $0x90] sm:$0xf]
        %v4670 = vld [vmem:[%s1 + $0x94] sm:$0xf]
        %v4671 = vld [vmem:[%s1 + $0x98] sm:$0xf]
        %v4672 = vld [vmem:[%s1 + $0x9c] sm:$0xf]
        %v4673 = vld [vmem:[%s1 + $0xa0] sm:$0xf]
        %v4674 = vld [vmem:[%s1 + $0xa4] sm:$0xf]
        %v4675 = vld [vmem:[%s1 + $0xa8] sm:$0xf]
        %v4676 = vld [vmem:[%s1 + $0xac] sm:$0xf]
        %v4677 = vld [vmem:[%s1 + $0xb0] sm:$0xf]
        %v4678 = vld [vmem:[%s1 + $0xb4] sm:$0xf]
        %v4679 = vld [vmem:[%s1 + $0xb8] sm:$0xf]
        %v4680 = vld [vmem:[%s1 + $0xbc] sm:$0xf]
        %v4681 = vld [vmem:[%s1 + $0xc0] sm:$0xf]
        %v4682 = vld [vmem:[%s1 + $0xc4] sm:$0xf]
        %v4683 = vld [vmem:[%s1 + $0xc8] sm:$0xf]
        %v4684 = vld [vmem:[%s1 + $0xcc] sm:$0xf]
        %v4685 = vld [vmem:[%s1 + $0xd0] sm:$0xf]
        %v4686 = vld [vmem:[%s1 + $0xd4] sm:$0xf]
        %v4687 = vld [vmem:[%s1 + $0xd8] sm:$0xf]
        %v4688 = vld [vmem:[%s1 + $0xdc] sm:$0xf]
        %v4689 = vld [vmem:[%s1 + $0xe0] sm:$0xf]
        %v4690 = vld [vmem:[%s1 + $0xe4] sm:$0xf]
        %v4691 = vld [vmem:[%s1 + $0xe8] sm:$0xf]
        %v4692 = vld [vmem:[%s1 + $0xec] sm:$0xf]
        %v4693 = vld [vmem:[%s1 + $0xf0] sm:$0xf]
        %v4694 = vld [vmem:[%s1 + $0xf4] sm:$0xf]
        %v4695 = vld [vmem:[%s1 + $0xf8] sm:$0xf]
        %v4696 = vld [vmem:[%s1 + $0xfc] sm:$0xf]
        %v4697 = vld [vmem:[%s1 + $0x100] sm:$0xf]
        %v4698 = vld [vmem:[%s1 + $0x104] sm:$0xf]
        %v4699 = vld [vmem:[%s1 + $0x108] sm:$0xf]
        %v4700 = vld [vmem:[%s1 + $0x10c] sm:$0xf]
        %v4701 = vld [vmem:[%s1 + $0x110] sm:$0xf]
        %v4702 = vld [vmem:[%s1 + $0x114] sm:$0xf]
        %v4703 = vld [vmem:[%s1 + $0x118] sm:$0xf]
        %v4704 = vld [vmem:[%s1 + $0x11c] sm:$0xf]
        %v4705 = vld [vmem:[%s1 + $0x120] sm:$0xf]
        %v4706 = vld [vmem:[%s1 + $0x124] sm:$0xf]
        %v4707 = vld [vmem:[%s1 + $0x128] sm:$0xf]
        %v4708 = vld [vmem:[%s1 + $0x12c] sm:$0xf]
        %v4709 = vld [vmem:[%s1 + $0x130] sm:$0xf]
        %v4710 = vld [vmem:[%s1 + $0x134] sm:$0xf]
        %v4711 = vld [vmem:[%s1 + $0x138] sm:$0xf]
        %v4712 = vld [vmem:[%s1 + $0x13c] sm:$0xf]
        %v4713 = vld [vmem:[%s1 + $0x140] sm:$0xf]
        %v4714 = vld [vmem:[%s1 + $0x144] sm:$0xf]
        %v4715 = vld [vmem:[%s1 + $0x148] sm:$0xf]
        %v4716 = vld [vmem:[%s1 + $0x14c] sm:$0xf]
        %v4717 = vld [vmem:[%s1 + $0x150] sm:$0xf]
        %v4718 = vld [vmem:[%s1 + $0x154] sm:$0xf]
        %v4719 = vld [vmem:[%s1 + $0x158] sm:$0xf]
        %v4720 = vld [vmem:[%s1 + $0x15c] sm:$0xf]
        %v4721 = vld [vmem:[%s1 + $0x160] sm:$0xf]
        %v4722 = vld [vmem:[%s1 + $0x164] sm:$0xf]
        %v4723 = vld [vmem:[%s1 + $0x168] sm:$0xf]
        %v4724 = vld [vmem:[%s1 + $0x16c] sm:$0xf]
        %v4725 = vld [vmem:[%s1 + $0x170] sm:$0xf]
        %v4726 = vld [vmem:[%s1 + $0x174] sm:$0xf]
        %v4727 = vld [vmem:[%s1 + $0x178] sm:$0xf]
        %v4728 = vld [vmem:[%s1 + $0x17c] sm:$0xf]
        %v4729 = vld [vmem:[%s1 + $0x180] sm:$0xf]
        %v4730 = vld [vmem:[%s1 + $0x184] sm:$0xf]
        %v4731 = vld [vmem:[%s1 + $0x188] sm:$0xf]
        %v4732 = vld [vmem:[%s1 + $0x18c] sm:$0xf]
        %v4733 = vld [vmem:[%s1 + $0x190] sm:$0xf]
        %v4734 = vld [vmem:[%s1 + $0x194] sm:$0xf]
        %v4735 = vld [vmem:[%s1 + $0x198] sm:$0xf]
        %v4736 = vld [vmem:[%s1 + $0x19c] sm:$0xf]
        %v4737 = vld [vmem:[%s1 + $0x1a0] sm:$0xf]
        %v4738 = vld [vmem:[%s1 + $0x1a4] sm:$0xf]
        %v4739 = vld [vmem:[%s1 + $0x1a8] sm:$0xf]
        %v4740 = vld [vmem:[%s1 + $0x1ac] sm:$0xf]
        %v4741 = vld [vmem:[%s1 + $0x1b0] sm:$0xf]
        %v4742 = vld [vmem:[%s1 + $0x1b4] sm:$0xf]
        %v4743 = vld [vmem:[%s1 + $0x1b8] sm:$0xf]
        %v4744 = vld [vmem:[%s1 + $0x1bc] sm:$0xf]
        %v4745 = vld [vmem:[%s1 + $0x1c0] sm:$0xf]
        %v4746 = vld [vmem:[%s1 + $0x1c4] sm:$0xf]
        %v4747 = vld [vmem:[%s1 + $0x1c8] sm:$0xf]
        %v4748 = vld [vmem:[%s1 + $0x1cc] sm:$0xf]
        %v4749 = vld [vmem:[%s1 + $0x1d0] sm:$0xf]
        %v4750 = vld [vmem:[%s1 + $0x1d4] sm:$0xf]
        %v4751 = vld [vmem:[%s1 + $0x1d8] sm:$0xf]
        %v4752 = vld [vmem:[%s1 + $0x1dc] sm:$0xf]
        %v4753 = vld [vmem:[%s1 + $0x1e0] sm:$0xf]
        %v4754 = vld [vmem:[%s1 + $0x1e4] sm:$0xf]
        %v4755 = vld [vmem:[%s1 + $0x1e8] sm:$0xf]
        %v4756 = vld [vmem:[%s1 + $0x1ec] sm:$0xf]
        %v4757 = vld [vmem:[%s1 + $0x1f0] sm:$0xf]
        %v4758 = vld [vmem:[%s1 + $0x1f4] sm:$0xf]
        %v4759 = vld [vmem:[%s1 + $0x1f8] sm:$0xf]
        %v4760 = vld [vmem:[%s1 + $0x1fc] sm:$0xf]
        %v4761 = vld [vmem:[%s1 + $0x200] sm:$0xf]
        %v4762 = vld [vmem:[%s1 + $0x204] sm:$0xf]
        %v4763 = vld [vmem:[%s1 + $0x208] sm:$0xf]
        %v4764 = vld [vmem:[%s1 + $0x20c] sm:$0xf]
        %v4765 = vld [vmem:[%s1 + $0x210] sm:$0xf]
        %v4766 = vld [vmem:[%s1 + $0x214] sm:$0xf]
        %v4767 = vld [vmem:[%s1 + $0x218] sm:$0xf]
        %v4768 = vld [vmem:[%s1 + $0x21c] sm:$0xf]
        %v4769 = vld [vmem:[%s1 + $0x220] sm:$0xf]
        %v4770 = vld [vmem:[%s1 + $0x224] sm:$0xf]
        %v4771 = vld [vmem:[%s1 + $0x228] sm:$0xf]
        %v4772 = vld [vmem:[%s1 + $0x22c] sm:$0xf]
        %v4773 = vld [vmem:[%s1 + $0x230] sm:$0xf]
        %v4774 = vld [vmem:[%s1 + $0x234] sm:$0xf]
        %v4775 = vld [vmem:[%s1 + $0x238] sm:$0xf]
        %v4776 = vld [vmem:[%s1 + $0x23c] sm:$0xf]
        %v4777 = vcombine.low %v2281, %v2285
        %v4778 = vcombine.high %v2281, %v2285
        %v4779 = vcombine.low %v2282, %v2286
        %v4780 = vcombine.high %v2282, %v2286
        %v4781 = vcombine.low %v2283, %v2287
        %v4782 = vcombine.high %v2283, %v2287
        %v4783 = vcombine.low %v2284, %v2288
        %v4784 = vcombine.high %v2284, %v2288
        %v4786 = vunpack.c.l.s4 1966171168
        %v4787 = vunpack.c.0.s8 %v4786
        %v4788 = vlaneseq
        %v4789 = vshrl.u32 %v4788, 7
        %v4790 = vsub.s32 %v4787, %v4789
        %v4791 = vrot.slane %v4777, %v4790
        %v4793 = vunpack.c.l.s4 1966171168
        %v4794 = vunpack.c.0.s8 %v4793
        %v4795 = vlaneseq
        %v4796 = vshrl.u32 %v4795, 7
        %v4797 = vsub.s32 %v4794, %v4796
        %v4798 = vrot.slane %v4778, %v4797
        %v4800 = vunpack.c.l.s4 1966171168
        %v4801 = vunpack.c.0.s8 %v4800
        %v4802 = vlaneseq
        %v4803 = vshrl.u32 %v4802, 7
        %v4804 = vsub.s32 %v4801, %v4803
        %v4805 = vrot.slane %v4779, %v4804
        %v4807 = vunpack.c.l.s4 1966171168
        %v4808 = vunpack.c.0.s8 %v4807
        %v4809 = vlaneseq
        %v4810 = vshrl.u32 %v4809, 7
        %v4811 = vsub.s32 %v4808, %v4810
        %v4812 = vrot.slane %v4780, %v4811
        %v4814 = vunpack.c.l.s4 1966171168
        %v4815 = vunpack.c.0.s8 %v4814
        %v4816 = vlaneseq
        %v4817 = vshrl.u32 %v4816, 7
        %v4818 = vsub.s32 %v4815, %v4817
        %v4819 = vrot.slane %v4781, %v4818
        %v4821 = vunpack.c.l.s4 1966171168
        %v4822 = vunpack.c.0.s8 %v4821
        %v4823 = vlaneseq
        %v4824 = vshrl.u32 %v4823, 7
        %v4825 = vsub.s32 %v4822, %v4824
        %v4826 = vrot.slane %v4782, %v4825
        %v4828 = vunpack.c.l.s4 1966171168
        %v4829 = vunpack.c.0.s8 %v4828
        %v4830 = vlaneseq
        %v4831 = vshrl.u32 %v4830, 7
        %v4832 = vsub.s32 %v4829, %v4831
        %v4833 = vrot.slane %v4783, %v4832
        %v4835 = vunpack.c.l.s4 1966171168
        %v4836 = vunpack.c.0.s8 %v4835
        %v4837 = vlaneseq
        %v4838 = vshrl.u32 %v4837, 7
        %v4839 = vsub.s32 %v4836, %v4838
        %v4840 = vrot.slane %v4784, %v4839
        %v4841 = vcombine.low %v4791, %v4805
        %v4842 = vcombine.high %v4791, %v4805
        %v4843 = vcombine.low %v4798, %v4812
        %v4844 = vcombine.high %v4798, %v4812
        %v4845 = vcombine.low %v4819, %v4833
        %v4846 = vcombine.high %v4819, %v4833
        %v4847 = vcombine.low %v4826, %v4840
        %v4848 = vcombine.high %v4826, %v4840
        %v4850 = vunpack.c.l.s4 1966171168
        %v4851 = vunpack.c.0.s8 %v4850
        %v4852 = vlaneseq
        %v4853 = vshrl.u32 %v4852, 7
        %v4854 = vsub.s32 %v4851, %v4853
        %v4855 = vrot.slane %v4841, %v4854
        %v4857 = vunpack.c.l.s4 1966171168
        %v4858 = vunpack.c.0.s8 %v4857
        %v4859 = vlaneseq
        %v4860 = vshrl.u32 %v4859, 7
        %v4861 = vsub.s32 %v4858, %v4860
        %v4862 = vrot.slane %v4843, %v4861
        %v4864 = vunpack.c.l.s4 1966171168
        %v4865 = vunpack.c.0.s8 %v4864
        %v4866 = vlaneseq
        %v4867 = vshrl.u32 %v4866, 7
        %v4868 = vsub.s32 %v4865, %v4867
        %v4869 = vrot.slane %v4842, %v4868
        %v4871 = vunpack.c.l.s4 1966171168
        %v4872 = vunpack.c.0.s8 %v4871
        %v4873 = vlaneseq
        %v4874 = vshrl.u32 %v4873, 7
        %v4875 = vsub.s32 %v4872, %v4874
        %v4876 = vrot.slane %v4844, %v4875
        %v4878 = vunpack.c.l.s4 1966171168
        %v4879 = vunpack.c.0.s8 %v4878
        %v4880 = vlaneseq
        %v4881 = vshrl.u32 %v4880, 7
        %v4882 = vsub.s32 %v4879, %v4881
        %v4883 = vrot.slane %v4845, %v4882
        %v4885 = vunpack.c.l.s4 1966171168
        %v4886 = vunpack.c.0.s8 %v4885
        %v4887 = vlaneseq
        %v4888 = vshrl.u32 %v4887, 7
        %v4889 = vsub.s32 %v4886, %v4888
        %v4890 = vrot.slane %v4847, %v4889
        %v4892 = vunpack.c.l.s4 1966171168
        %v4893 = vunpack.c.0.s8 %v4892
        %v4894 = vlaneseq
        %v4895 = vshrl.u32 %v4894, 7
        %v4896 = vsub.s32 %v4893, %v4895
        %v4897 = vrot.slane %v4846, %v4896
        %v4899 = vunpack.c.l.s4 1966171168
        %v4900 = vunpack.c.0.s8 %v4899
        %v4901 = vlaneseq
        %v4902 = vshrl.u32 %v4901, 7
        %v4903 = vsub.s32 %v4900, %v4902
        %v4904 = vrot.slane %v4848, %v4903
        %v4905 = vcombine.low %v4855, %v4883
        %v4906 = vcombine.high %v4855, %v4883
        %v4907 = vcombine.low %v4862, %v4890
        %v4908 = vcombine.high %v4862, %v4890
        %v4909 = vcombine.low %v4869, %v4897
        %v4910 = vcombine.high %v4869, %v4897
        %v4911 = vcombine.low %v4876, %v4904
        %v4912 = vcombine.high %v4876, %v4904
        %v4913 = vcombine.low %v2312, %v2326
        %v4914 = vcombine.low %v2334, %v2336
        %v4915 = vcombine.low %v2319, %v2333
        %v4916 = vcombine.low %v2335, %v2337
        %v4918 = vunpack.c.l.s4 1966171168
        %v4919 = vunpack.c.0.s8 %v4918
        %v4920 = vlaneseq
        %v4921 = vshrl.u32 %v4920, 7
        %v4922 = vsub.s32 %v4919, %v4921
        %v4923 = vrot.slane %v4913, %v4922
        %v4925 = vunpack.c.l.s4 1966171168
        %v4926 = vunpack.c.0.s8 %v4925
        %v4927 = vlaneseq
        %v4928 = vshrl.u32 %v4927, 7
        %v4929 = vsub.s32 %v4926, %v4928
        %v4930 = vrot.slane %v4914, %v4929
        %v4932 = vunpack.c.l.s4 1966171168
        %v4933 = vunpack.c.0.s8 %v4932
        %v4934 = vlaneseq
        %v4935 = vshrl.u32 %v4934, 7
        %v4936 = vsub.s32 %v4933, %v4935
        %v4937 = vrot.slane %v4915, %v4936
        %v4939 = vunpack.c.l.s4 1966171168
        %v4940 = vunpack.c.0.s8 %v4939
        %v4941 = vlaneseq
        %v4942 = vshrl.u32 %v4941, 7
        %v4943 = vsub.s32 %v4940, %v4942
        %v4944 = vrot.slane %v4916, %v4943
        %v4945 = vcombine.low %v4923, %v4930
        %v4946 = vcombine.low %v4937, %v4944
        %v4948 = vunpack.c.l.s4 1966171168
        %v4949 = vunpack.c.0.s8 %v4948
        %v4950 = vlaneseq
        %v4951 = vshrl.u32 %v4950, 7
        %v4952 = vsub.s32 %v4949, %v4951
        %v4953 = vrot.slane %v4945, %v4952
        %v4955 = vunpack.c.l.s4 1966171168
        %v4956 = vunpack.c.0.s8 %v4955
        %v4957 = vlaneseq
        %v4958 = vshrl.u32 %v4957, 7
        %v4959 = vsub.s32 %v4956, %v4958
        %v4960 = vrot.slane %v4946, %v4959
        %v4961 = vcombine.low %v4953, %v4960
        %v4962 = vcombine.low %v2386, %v2529
        %v4963 = vcombine.high %v2386, %v2529
        %v4964 = vcombine.low %v2533, %v2530
        %v4965 = vcombine.high %v2533, %v2530
        %v4966 = vcombine.low %v2534, %v2531
        %v4967 = vcombine.high %v2534, %v2531
        %v4968 = vcombine.low %v2535, %v2532
        %v4969 = vcombine.high %v2535, %v2532
        %v4971 = vunpack.c.l.s4 1966171168
        %v4972 = vunpack.c.0.s8 %v4971
        %v4973 = vlaneseq
        %v4974 = vshrl.u32 %v4973, 7
        %v4975 = vsub.s32 %v4972, %v4974
        %v4976 = vrot.slane %v4962, %v4975
        %v4978 = vunpack.c.l.s4 1966171168
        %v4979 = vunpack.c.0.s8 %v4978
        %v4980 = vlaneseq
        %v4981 = vshrl.u32 %v4980, 7
        %v4982 = vsub.s32 %v4979, %v4981
        %v4983 = vrot.slane %v4963, %v4982
        %v4985 = vunpack.c.l.s4 1966171168
        %v4986 = vunpack.c.0.s8 %v4985
        %v4987 = vlaneseq
        %v4988 = vshrl.u32 %v4987, 7
        %v4989 = vsub.s32 %v4986, %v4988
        %v4990 = vrot.slane %v4964, %v4989
        %v4992 = vunpack.c.l.s4 1966171168
        %v4993 = vunpack.c.0.s8 %v4992
        %v4994 = vlaneseq
        %v4995 = vshrl.u32 %v4994, 7
        %v4996 = vsub.s32 %v4993, %v4995
        %v4997 = vrot.slane %v4965, %v4996
        %v4999 = vunpack.c.l.s4 1966171168
        %v5000 = vunpack.c.0.s8 %v4999
        %v5001 = vlaneseq
        %v5002 = vshrl.u32 %v5001, 7
        %v5003 = vsub.s32 %v5000, %v5002
        %v5004 = vrot.slane %v4966, %v5003
        %v5006 = vunpack.c.l.s4 1966171168
        %v5007 = vunpack.c.0.s8 %v5006
        %v5008 = vlaneseq
        %v5009 = vshrl.u32 %v5008, 7
        %v5010 = vsub.s32 %v5007, %v5009
        %v5011 = vrot.slane %v4967, %v5010
        %v5013 = vunpack.c.l.s4 1966171168
        %v5014 = vunpack.c.0.s8 %v5013
        %v5015 = vlaneseq
        %v5016 = vshrl.u32 %v5015, 7
        %v5017 = vsub.s32 %v5014, %v5016
        %v5018 = vrot.slane %v4968, %v5017
        %v5020 = vunpack.c.l.s4 1966171168
        %v5021 = vunpack.c.0.s8 %v5020
        %v5022 = vlaneseq
        %v5023 = vshrl.u32 %v5022, 7
        %v5024 = vsub.s32 %v5021, %v5023
        %v5025 = vrot.slane %v4969, %v5024
        %v5026 = vcombine.low %v4976, %v4990
        %v5027 = vcombine.high %v4976, %v4990
        %v5028 = vcombine.low %v4983, %v4997
        %v5029 = vcombine.high %v4983, %v4997
        %v5030 = vcombine.low %v5004, %v5018
        %v5031 = vcombine.high %v5004, %v5018
        %v5032 = vcombine.low %v5011, %v5025
        %v5033 = vcombine.high %v5011, %v5025
        %v5035 = vunpack.c.l.s4 1966171168
        %v5036 = vunpack.c.0.s8 %v5035
        %v5037 = vlaneseq
        %v5038 = vshrl.u32 %v5037, 7
        %v5039 = vsub.s32 %v5036, %v5038
        %v5040 = vrot.slane %v5026, %v5039
        %v5042 = vunpack.c.l.s4 1966171168
        %v5043 = vunpack.c.0.s8 %v5042
        %v5044 = vlaneseq
        %v5045 = vshrl.u32 %v5044, 7
        %v5046 = vsub.s32 %v5043, %v5045
        %v5047 = vrot.slane %v5028, %v5046
        %v5049 = vunpack.c.l.s4 1966171168
        %v5050 = vunpack.c.0.s8 %v5049
        %v5051 = vlaneseq
        %v5052 = vshrl.u32 %v5051, 7
        %v5053 = vsub.s32 %v5050, %v5052
        %v5054 = vrot.slane %v5027, %v5053
        %v5056 = vunpack.c.l.s4 1966171168
        %v5057 = vunpack.c.0.s8 %v5056
        %v5058 = vlaneseq
        %v5059 = vshrl.u32 %v5058, 7
        %v5060 = vsub.s32 %v5057, %v5059
        %v5061 = vrot.slane %v5029, %v5060
        %v5063 = vunpack.c.l.s4 1966171168
        %v5064 = vunpack.c.0.s8 %v5063
        %v5065 = vlaneseq
        %v5066 = vshrl.u32 %v5065, 7
        %v5067 = vsub.s32 %v5064, %v5066
        %v5068 = vrot.slane %v5030, %v5067
        %v5070 = vunpack.c.l.s4 1966171168
        %v5071 = vunpack.c.0.s8 %v5070
        %v5072 = vlaneseq
        %v5073 = vshrl.u32 %v5072, 7
        %v5074 = vsub.s32 %v5071, %v5073
        %v5075 = vrot.slane %v5032, %v5074
        %v5077 = vunpack.c.l.s4 1966171168
        %v5078 = vunpack.c.0.s8 %v5077
        %v5079 = vlaneseq
        %v5080 = vshrl.u32 %v5079, 7
        %v5081 = vsub.s32 %v5078, %v5080
        %v5082 = vrot.slane %v5031, %v5081
        %v5084 = vunpack.c.l.s4 1966171168
        %v5085 = vunpack.c.0.s8 %v5084
        %v5086 = vlaneseq
        %v5087 = vshrl.u32 %v5086, 7
        %v5088 = vsub.s32 %v5085, %v5087
        %v5089 = vrot.slane %v5033, %v5088
        %v5090 = vcombine.low %v5040, %v5068
        %v5091 = vcombine.high %v5040, %v5068
        %v5092 = vcombine.low %v5047, %v5075
        %v5093 = vcombine.high %v5047, %v5075
        %v5094 = vcombine.low %v5054, %v5082
        %v5095 = vcombine.high %v5054, %v5082
        %v5096 = vcombine.low %v5061, %v5089
        %v5097 = vcombine.high %v5061, %v5089
        %v5098 = vcombine.low %v2400, %v2560
        %v5099 = vcombine.low %v2574, %v2582
        %v5100 = vcombine.low %v2584, %v2567
        %v5101 = vcombine.low %v2581, %v2583
        %v5103 = vunpack.c.l.s4 1966171168
        %v5104 = vunpack.c.0.s8 %v5103
        %v5105 = vlaneseq
        %v5106 = vshrl.u32 %v5105, 7
        %v5107 = vsub.s32 %v5104, %v5106
        %v5108 = vrot.slane %v5098, %v5107
        %v5110 = vunpack.c.l.s4 1966171168
        %v5111 = vunpack.c.0.s8 %v5110
        %v5112 = vlaneseq
        %v5113 = vshrl.u32 %v5112, 7
        %v5114 = vsub.s32 %v5111, %v5113
        %v5115 = vrot.slane %v5099, %v5114
        %v5117 = vunpack.c.l.s4 1966171168
        %v5118 = vunpack.c.0.s8 %v5117
        %v5119 = vlaneseq
        %v5120 = vshrl.u32 %v5119, 7
        %v5121 = vsub.s32 %v5118, %v5120
        %v5122 = vrot.slane %v5100, %v5121
        %v5124 = vunpack.c.l.s4 1966171168
        %v5125 = vunpack.c.0.s8 %v5124
        %v5126 = vlaneseq
        %v5127 = vshrl.u32 %v5126, 7
        %v5128 = vsub.s32 %v5125, %v5127
        %v5129 = vrot.slane %v5101, %v5128
        %v5130 = vcombine.low %v5108, %v5115
        %v5131 = vcombine.low %v5122, %v5129
        %v5133 = vunpack.c.l.s4 1966171168
        %v5134 = vunpack.c.0.s8 %v5133
        %v5135 = vlaneseq
        %v5136 = vshrl.u32 %v5135, 7
        %v5137 = vsub.s32 %v5134, %v5136
        %v5138 = vrot.slane %v5130, %v5137
        %v5140 = vunpack.c.l.s4 1966171168
        %v5141 = vunpack.c.0.s8 %v5140
        %v5142 = vlaneseq
        %v5143 = vshrl.u32 %v5142, 7
        %v5144 = vsub.s32 %v5141, %v5143
        %v5145 = vrot.slane %v5131, %v5144
        %v5146 = vcombine.low %v5138, %v5145
        %v5147 = vcombine.low %v2536, %v2634
        %v5148 = vcombine.high %v2536, %v2634
        %v5149 = vcombine.low %v2777, %v2781
        %v5150 = vcombine.high %v2777, %v2781
        %v5151 = vcombine.low %v2778, %v2782
        %v5152 = vcombine.high %v2778, %v2782
        %v5153 = vcombine.low %v2779, %v2783
        %v5154 = vcombine.high %v2779, %v2783
        %v5156 = vunpack.c.l.s4 1966171168
        %v5157 = vunpack.c.0.s8 %v5156
        %v5158 = vlaneseq
        %v5159 = vshrl.u32 %v5158, 7
        %v5160 = vsub.s32 %v5157, %v5159
        %v5161 = vrot.slane %v5147, %v5160
        %v5163 = vunpack.c.l.s4 1966171168
        %v5164 = vunpack.c.0.s8 %v5163
        %v5165 = vlaneseq
        %v5166 = vshrl.u32 %v5165, 7
        %v5167 = vsub.s32 %v5164, %v5166
        %v5168 = vrot.slane %v5148, %v5167
        %v5170 = vunpack.c.l.s4 1966171168
        %v5171 = vunpack.c.0.s8 %v5170
        %v5172 = vlaneseq
        %v5173 = vshrl.u32 %v5172, 7
        %v5174 = vsub.s32 %v5171, %v5173
        %v5175 = vrot.slane %v5149, %v5174
        %v5177 = vunpack.c.l.s4 1966171168
        %v5178 = vunpack.c.0.s8 %v5177
        %v5179 = vlaneseq
        %v5180 = vshrl.u32 %v5179, 7
        %v5181 = vsub.s32 %v5178, %v5180
        %v5182 = vrot.slane %v5150, %v5181
        %v5184 = vunpack.c.l.s4 1966171168
        %v5185 = vunpack.c.0.s8 %v5184
        %v5186 = vlaneseq
        %v5187 = vshrl.u32 %v5186, 7
        %v5188 = vsub.s32 %v5185, %v5187
        %v5189 = vrot.slane %v5151, %v5188
        %v5191 = vunpack.c.l.s4 1966171168
        %v5192 = vunpack.c.0.s8 %v5191
        %v5193 = vlaneseq
        %v5194 = vshrl.u32 %v5193, 7
        %v5195 = vsub.s32 %v5192, %v5194
        %v5196 = vrot.slane %v5152, %v5195
        %v5198 = vunpack.c.l.s4 1966171168
        %v5199 = vunpack.c.0.s8 %v5198
        %v5200 = vlaneseq
        %v5201 = vshrl.u32 %v5200, 7
        %v5202 = vsub.s32 %v5199, %v5201
        %v5203 = vrot.slane %v5153, %v5202
        %v5205 = vunpack.c.l.s4 1966171168
        %v5206 = vunpack.c.0.s8 %v5205
        %v5207 = vlaneseq
        %v5208 = vshrl.u32 %v5207, 7
        %v5209 = vsub.s32 %v5206, %v5208
        %v5210 = vrot.slane %v5154, %v5209
        %v5211 = vcombine.low %v5161, %v5175
        %v5212 = vcombine.high %v5161, %v5175
        %v5213 = vcombine.low %v5168, %v5182
        %v5214 = vcombine.high %v5168, %v5182
        %v5215 = vcombine.low %v5189, %v5203
        %v5216 = vcombine.high %v5189, %v5203
        %v5217 = vcombine.low %v5196, %v5210
        %v5218 = vcombine.high %v5196, %v5210
        %v5220 = vunpack.c.l.s4 1966171168
        %v5221 = vunpack.c.0.s8 %v5220
        %v5222 = vlaneseq
        %v5223 = vshrl.u32 %v5222, 7
        %v5224 = vsub.s32 %v5221, %v5223
        %v5225 = vrot.slane %v5211, %v5224
        %v5227 = vunpack.c.l.s4 1966171168
        %v5228 = vunpack.c.0.s8 %v5227
        %v5229 = vlaneseq
        %v5230 = vshrl.u32 %v5229, 7
        %v5231 = vsub.s32 %v5228, %v5230
        %v5232 = vrot.slane %v5213, %v5231
        %v5234 = vunpack.c.l.s4 1966171168
        %v5235 = vunpack.c.0.s8 %v5234
        %v5236 = vlaneseq
        %v5237 = vshrl.u32 %v5236, 7
        %v5238 = vsub.s32 %v5235, %v5237
        %v5239 = vrot.slane %v5212, %v5238
        %v5241 = vunpack.c.l.s4 1966171168
        %v5242 = vunpack.c.0.s8 %v5241
        %v5243 = vlaneseq
        %v5244 = vshrl.u32 %v5243, 7
        %v5245 = vsub.s32 %v5242, %v5244
        %v5246 = vrot.slane %v5214, %v5245
        %v5248 = vunpack.c.l.s4 1966171168
        %v5249 = vunpack.c.0.s8 %v5248
        %v5250 = vlaneseq
        %v5251 = vshrl.u32 %v5250, 7
        %v5252 = vsub.s32 %v5249, %v5251
        %v5253 = vrot.slane %v5215, %v5252
        %v5255 = vunpack.c.l.s4 1966171168
        %v5256 = vunpack.c.0.s8 %v5255
        %v5257 = vlaneseq
        %v5258 = vshrl.u32 %v5257, 7
        %v5259 = vsub.s32 %v5256, %v5258
        %v5260 = vrot.slane %v5217, %v5259
        %v5262 = vunpack.c.l.s4 1966171168
        %v5263 = vunpack.c.0.s8 %v5262
        %v5264 = vlaneseq
        %v5265 = vshrl.u32 %v5264, 7
        %v5266 = vsub.s32 %v5263, %v5265
        %v5267 = vrot.slane %v5216, %v5266
        %v5269 = vunpack.c.l.s4 1966171168
        %v5270 = vunpack.c.0.s8 %v5269
        %v5271 = vlaneseq
        %v5272 = vshrl.u32 %v5271, 7
        %v5273 = vsub.s32 %v5270, %v5272
        %v5274 = vrot.slane %v5218, %v5273
        %v5275 = vcombine.low %v5225, %v5253
        %v5276 = vcombine.high %v5225, %v5253
        %v5277 = vcombine.low %v5232, %v5260
        %v5278 = vcombine.high %v5232, %v5260
        %v5279 = vcombine.low %v5239, %v5267
        %v5280 = vcombine.high %v5239, %v5267
        %v5281 = vcombine.low %v5246, %v5274
        %v5282 = vcombine.high %v5246, %v5274
        %v5283 = vcombine.low %v2585, %v2648
        %v5284 = vcombine.low %v2808, %v2822
        %v5285 = vcombine.low %v2830, %v2832
        %v5286 = vcombine.low %v2815, %v2829
        %v5288 = vunpack.c.l.s4 1966171168
        %v5289 = vunpack.c.0.s8 %v5288
        %v5290 = vlaneseq
        %v5291 = vshrl.u32 %v5290, 7
        %v5292 = vsub.s32 %v5289, %v5291
        %v5293 = vrot.slane %v5283, %v5292
        %v5295 = vunpack.c.l.s4 1966171168
        %v5296 = vunpack.c.0.s8 %v5295
        %v5297 = vlaneseq
        %v5298 = vshrl.u32 %v5297, 7
        %v5299 = vsub.s32 %v5296, %v5298
        %v5300 = vrot.slane %v5284, %v5299
        %v5302 = vunpack.c.l.s4 1966171168
        %v5303 = vunpack.c.0.s8 %v5302
        %v5304 = vlaneseq
        %v5305 = vshrl.u32 %v5304, 7
        %v5306 = vsub.s32 %v5303, %v5305
        %v5307 = vrot.slane %v5285, %v5306
        %v5309 = vunpack.c.l.s4 1966171168
        %v5310 = vunpack.c.0.s8 %v5309
        %v5311 = vlaneseq
        %v5312 = vshrl.u32 %v5311, 7
        %v5313 = vsub.s32 %v5310, %v5312
        %v5314 = vrot.slane %v5286, %v5313
        %v5315 = vcombine.low %v5293, %v5300
        %v5316 = vcombine.low %v5307, %v5314
        %v5318 = vunpack.c.l.s4 1966171168
        %v5319 = vunpack.c.0.s8 %v5318
        %v5320 = vlaneseq
        %v5321 = vshrl.u32 %v5320, 7
        %v5322 = vsub.s32 %v5319, %v5321
        %v5323 = vrot.slane %v5315, %v5322
        %v5325 = vunpack.c.l.s4 1966171168
        %v5326 = vunpack.c.0.s8 %v5325
        %v5327 = vlaneseq
        %v5328 = vshrl.u32 %v5327, 7
        %v5329 = vsub.s32 %v5326, %v5328
        %v5330 = vrot.slane %v5316, %v5329
        %v5331 = vcombine.low %v5323, %v5330
        %v5332 = vcombine.low %v2780, %v2784
        %v5333 = vcombine.high %v2780, %v2784
        %v5334 = vcombine.low %v2882, %v3025
        %v5335 = vcombine.high %v2882, %v3025
        %v5336 = vcombine.low %v3029, %v3026
        %v5337 = vcombine.high %v3029, %v3026
        %v5338 = vcombine.low %v3030, %v3027
        %v5339 = vcombine.high %v3030, %v3027
        %v5341 = vunpack.c.l.s4 1966171168
        %v5342 = vunpack.c.0.s8 %v5341
        %v5343 = vlaneseq
        %v5344 = vshrl.u32 %v5343, 7
        %v5345 = vsub.s32 %v5342, %v5344
        %v5346 = vrot.slane %v5332, %v5345
        %v5348 = vunpack.c.l.s4 1966171168
        %v5349 = vunpack.c.0.s8 %v5348
        %v5350 = vlaneseq
        %v5351 = vshrl.u32 %v5350, 7
        %v5352 = vsub.s32 %v5349, %v5351
        %v5353 = vrot.slane %v5333, %v5352
        %v5355 = vunpack.c.l.s4 1966171168
        %v5356 = vunpack.c.0.s8 %v5355
        %v5357 = vlaneseq
        %v5358 = vshrl.u32 %v5357, 7
        %v5359 = vsub.s32 %v5356, %v5358
        %v5360 = vrot.slane %v5334, %v5359
        %v5362 = vunpack.c.l.s4 1966171168
        %v5363 = vunpack.c.0.s8 %v5362
        %v5364 = vlaneseq
        %v5365 = vshrl.u32 %v5364, 7
        %v5366 = vsub.s32 %v5363, %v5365
        %v5367 = vrot.slane %v5335, %v5366
        %v5369 = vunpack.c.l.s4 1966171168
        %v5370 = vunpack.c.0.s8 %v5369
        %v5371 = vlaneseq
        %v5372 = vshrl.u32 %v5371, 7
        %v5373 = vsub.s32 %v5370, %v5372
        %v5374 = vrot.slane %v5336, %v5373
        %v5376 = vunpack.c.l.s4 1966171168
        %v5377 = vunpack.c.0.s8 %v5376
        %v5378 = vlaneseq
        %v5379 = vshrl.u32 %v5378, 7
        %v5380 = vsub.s32 %v5377, %v5379
        %v5381 = vrot.slane %v5337, %v5380
        %v5383 = vunpack.c.l.s4 1966171168
        %v5384 = vunpack.c.0.s8 %v5383
        %v5385 = vlaneseq
        %v5386 = vshrl.u32 %v5385, 7
        %v5387 = vsub.s32 %v5384, %v5386
        %v5388 = vrot.slane %v5338, %v5387
        %v5390 = vunpack.c.l.s4 1966171168
        %v5391 = vunpack.c.0.s8 %v5390
        %v5392 = vlaneseq
        %v5393 = vshrl.u32 %v5392, 7
        %v5394 = vsub.s32 %v5391, %v5393
        %v5395 = vrot.slane %v5339, %v5394
        %v5396 = vcombine.low %v5346, %v5360
        %v5397 = vcombine.high %v5346, %v5360
        %v5398 = vcombine.low %v5353, %v5367
        %v5399 = vcombine.high %v5353, %v5367
        %v5400 = vcombine.low %v5374, %v5388
        %v5401 = vcombine.high %v5374, %v5388
        %v5402 = vcombine.low %v5381, %v5395
        %v5403 = vcombine.high %v5381, %v5395
        %v5405 = vunpack.c.l.s4 1966171168
        %v5406 = vunpack.c.0.s8 %v5405
        %v5407 = vlaneseq
        %v5408 = vshrl.u32 %v5407, 7
        %v5409 = vsub.s32 %v5406, %v5408
        %v5410 = vrot.slane %v5396, %v5409
        %v5412 = vunpack.c.l.s4 1966171168
        %v5413 = vunpack.c.0.s8 %v5412
        %v5414 = vlaneseq
        %v5415 = vshrl.u32 %v5414, 7
        %v5416 = vsub.s32 %v5413, %v5415
        %v5417 = vrot.slane %v5398, %v5416
        %v5419 = vunpack.c.l.s4 1966171168
        %v5420 = vunpack.c.0.s8 %v5419
        %v5421 = vlaneseq
        %v5422 = vshrl.u32 %v5421, 7
        %v5423 = vsub.s32 %v5420, %v5422
        %v5424 = vrot.slane %v5397, %v5423
        %v5426 = vunpack.c.l.s4 1966171168
        %v5427 = vunpack.c.0.s8 %v5426
        %v5428 = vlaneseq
        %v5429 = vshrl.u32 %v5428, 7
        %v5430 = vsub.s32 %v5427, %v5429
        %v5431 = vrot.slane %v5399, %v5430
        %v5433 = vunpack.c.l.s4 1966171168
        %v5434 = vunpack.c.0.s8 %v5433
        %v5435 = vlaneseq
        %v5436 = vshrl.u32 %v5435, 7
        %v5437 = vsub.s32 %v5434, %v5436
        %v5438 = vrot.slane %v5400, %v5437
        %v5440 = vunpack.c.l.s4 1966171168
        %v5441 = vunpack.c.0.s8 %v5440
        %v5442 = vlaneseq
        %v5443 = vshrl.u32 %v5442, 7
        %v5444 = vsub.s32 %v5441, %v5443
        %v5445 = vrot.slane %v5402, %v5444
        %v5447 = vunpack.c.l.s4 1966171168
        %v5448 = vunpack.c.0.s8 %v5447
        %v5449 = vlaneseq
        %v5450 = vshrl.u32 %v5449, 7
        %v5451 = vsub.s32 %v5448, %v5450
        %v5452 = vrot.slane %v5401, %v5451
        %v5454 = vunpack.c.l.s4 1966171168
        %v5455 = vunpack.c.0.s8 %v5454
        %v5456 = vlaneseq
        %v5457 = vshrl.u32 %v5456, 7
        %v5458 = vsub.s32 %v5455, %v5457
        %v5459 = vrot.slane %v5403, %v5458
        %v5460 = vcombine.low %v5410, %v5438
        %v5461 = vcombine.high %v5410, %v5438
        %v5462 = vcombine.low %v5417, %v5445
        %v5463 = vcombine.high %v5417, %v5445
        %v5464 = vcombine.low %v5424, %v5452
        %v5465 = vcombine.high %v5424, %v5452
        %v5466 = vcombine.low %v5431, %v5459
        %v5467 = vcombine.high %v5431, %v5459
        %v5468 = vcombine.low %v2831, %v2833
        %v5469 = vcombine.low %v2896, %v3056
        %v5470 = vcombine.low %v3070, %v3078
        %v5471 = vcombine.low %v3080, %v3063
        %v5473 = vunpack.c.l.s4 1966171168
        %v5474 = vunpack.c.0.s8 %v5473
        %v5475 = vlaneseq
        %v5476 = vshrl.u32 %v5475, 7
        %v5477 = vsub.s32 %v5474, %v5476
        %v5478 = vrot.slane %v5468, %v5477
        %v5480 = vunpack.c.l.s4 1966171168
        %v5481 = vunpack.c.0.s8 %v5480
        %v5482 = vlaneseq
        %v5483 = vshrl.u32 %v5482, 7
        %v5484 = vsub.s32 %v5481, %v5483
        %v5485 = vrot.slane %v5469, %v5484
        %v5487 = vunpack.c.l.s4 1966171168
        %v5488 = vunpack.c.0.s8 %v5487
        %v5489 = vlaneseq
        %v5490 = vshrl.u32 %v5489, 7
        %v5491 = vsub.s32 %v5488, %v5490
        %v5492 = vrot.slane %v5470, %v5491
        %v5494 = vunpack.c.l.s4 1966171168
        %v5495 = vunpack.c.0.s8 %v5494
        %v5496 = vlaneseq
        %v5497 = vshrl.u32 %v5496, 7
        %v5498 = vsub.s32 %v5495, %v5497
        %v5499 = vrot.slane %v5471, %v5498
        %v5500 = vcombine.low %v5478, %v5485
        %v5501 = vcombine.low %v5492, %v5499
        %v5503 = vunpack.c.l.s4 1966171168
        %v5504 = vunpack.c.0.s8 %v5503
        %v5505 = vlaneseq
        %v5506 = vshrl.u32 %v5505, 7
        %v5507 = vsub.s32 %v5504, %v5506
        %v5508 = vrot.slane %v5500, %v5507
        %v5510 = vunpack.c.l.s4 1966171168
        %v5511 = vunpack.c.0.s8 %v5510
        %v5512 = vlaneseq
        %v5513 = vshrl.u32 %v5512, 7
        %v5514 = vsub.s32 %v5511, %v5513
        %v5515 = vrot.slane %v5501, %v5514
        %v5516 = vcombine.low %v5508, %v5515
        %v5517 = vcombine.low %v3031, %v3028
        %v5518 = vcombine.high %v3031, %v3028
        %v5519 = vcombine.low %v3032, %v3130
        %v5520 = vcombine.high %v3032, %v3130
        %v5521 = vcombine.low %v3273, %v3277
        %v5522 = vcombine.high %v3273, %v3277
        %v5523 = vcombine.low %v3274, %v3278
        %v5524 = vcombine.high %v3274, %v3278
        %v5526 = vunpack.c.l.s4 1966171168
        %v5527 = vunpack.c.0.s8 %v5526
        %v5528 = vlaneseq
        %v5529 = vshrl.u32 %v5528, 7
        %v5530 = vsub.s32 %v5527, %v5529
        %v5531 = vrot.slane %v5517, %v5530
        %v5533 = vunpack.c.l.s4 1966171168
        %v5534 = vunpack.c.0.s8 %v5533
        %v5535 = vlaneseq
        %v5536 = vshrl.u32 %v5535, 7
        %v5537 = vsub.s32 %v5534, %v5536
        %v5538 = vrot.slane %v5518, %v5537
        %v5540 = vunpack.c.l.s4 1966171168
        %v5541 = vunpack.c.0.s8 %v5540
        %v5542 = vlaneseq
        %v5543 = vshrl.u32 %v5542, 7
        %v5544 = vsub.s32 %v5541, %v5543
        %v5545 = vrot.slane %v5519, %v5544
        %v5547 = vunpack.c.l.s4 1966171168
        %v5548 = vunpack.c.0.s8 %v5547
        %v5549 = vlaneseq
        %v5550 = vshrl.u32 %v5549, 7
        %v5551 = vsub.s32 %v5548, %v5550
        %v5552 = vrot.slane %v5520, %v5551
        %v5554 = vunpack.c.l.s4 1966171168
        %v5555 = vunpack.c.0.s8 %v5554
        %v5556 = vlaneseq
        %v5557 = vshrl.u32 %v5556, 7
        %v5558 = vsub.s32 %v5555, %v5557
        %v5559 = vrot.slane %v5521, %v5558
        %v5561 = vunpack.c.l.s4 1966171168
        %v5562 = vunpack.c.0.s8 %v5561
        %v5563 = vlaneseq
        %v5564 = vshrl.u32 %v5563, 7
        %v5565 = vsub.s32 %v5562, %v5564
        %v5566 = vrot.slane %v5522, %v5565
        %v5568 = vunpack.c.l.s4 1966171168
        %v5569 = vunpack.c.0.s8 %v5568
        %v5570 = vlaneseq
        %v5571 = vshrl.u32 %v5570, 7
        %v5572 = vsub.s32 %v5569, %v5571
        %v5573 = vrot.slane %v5523, %v5572
        %v5575 = vunpack.c.l.s4 1966171168
        %v5576 = vunpack.c.0.s8 %v5575
        %v5577 = vlaneseq
        %v5578 = vshrl.u32 %v5577, 7
        %v5579 = vsub.s32 %v5576, %v5578
        %v5580 = vrot.slane %v5524, %v5579
        %v5581 = vcombine.low %v5531, %v5545
        %v5582 = vcombine.high %v5531, %v5545
        %v5583 = vcombine.low %v5538, %v5552
        %v5584 = vcombine.high %v5538, %v5552
        %v5585 = vcombine.low %v5559, %v5573
        %v5586 = vcombine.high %v5559, %v5573
        %v5587 = vcombine.low %v5566, %v5580
        %v5588 = vcombine.high %v5566, %v5580
        %v5590 = vunpack.c.l.s4 1966171168
        %v5591 = vunpack.c.0.s8 %v5590
        %v5592 = vlaneseq
        %v5593 = vshrl.u32 %v5592, 7
        %v5594 = vsub.s32 %v5591, %v5593
        %v5595 = vrot.slane %v5581, %v5594
        %v5597 = vunpack.c.l.s4 1966171168
        %v5598 = vunpack.c.0.s8 %v5597
        %v5599 = vlaneseq
        %v5600 = vshrl.u32 %v5599, 7
        %v5601 = vsub.s32 %v5598, %v5600
        %v5602 = vrot.slane %v5583, %v5601
        %v5604 = vunpack.c.l.s4 1966171168
        %v5605 = vunpack.c.0.s8 %v5604
        %v5606 = vlaneseq
        %v5607 = vshrl.u32 %v5606, 7
        %v5608 = vsub.s32 %v5605, %v5607
        %v5609 = vrot.slane %v5582, %v5608
        %v5611 = vunpack.c.l.s4 1966171168
        %v5612 = vunpack.c.0.s8 %v5611
        %v5613 = vlaneseq
        %v5614 = vshrl.u32 %v5613, 7
        %v5615 = vsub.s32 %v5612, %v5614
        %v5616 = vrot.slane %v5584, %v5615
        %v5618 = vunpack.c.l.s4 1966171168
        %v5619 = vunpack.c.0.s8 %v5618
        %v5620 = vlaneseq
        %v5621 = vshrl.u32 %v5620, 7
        %v5622 = vsub.s32 %v5619, %v5621
        %v5623 = vrot.slane %v5585, %v5622
        %v5625 = vunpack.c.l.s4 1966171168
        %v5626 = vunpack.c.0.s8 %v5625
        %v5627 = vlaneseq
        %v5628 = vshrl.u32 %v5627, 7
        %v5629 = vsub.s32 %v5626, %v5628
        %v5630 = vrot.slane %v5587, %v5629
        %v5632 = vunpack.c.l.s4 1966171168
        %v5633 = vunpack.c.0.s8 %v5632
        %v5634 = vlaneseq
        %v5635 = vshrl.u32 %v5634, 7
        %v5636 = vsub.s32 %v5633, %v5635
        %v5637 = vrot.slane %v5586, %v5636
        %v5639 = vunpack.c.l.s4 1966171168
        %v5640 = vunpack.c.0.s8 %v5639
        %v5641 = vlaneseq
        %v5642 = vshrl.u32 %v5641, 7
        %v5643 = vsub.s32 %v5640, %v5642
        %v5644 = vrot.slane %v5588, %v5643
        %v5645 = vcombine.low %v5595, %v5623
        %v5646 = vcombine.high %v5595, %v5623
        %v5647 = vcombine.low %v5602, %v5630
        %v5648 = vcombine.high %v5602, %v5630
        %v5649 = vcombine.low %v5609, %v5637
        %v5650 = vcombine.high %v5609, %v5637
        %v5651 = vcombine.low %v5616, %v5644
        %v5652 = vcombine.high %v5616, %v5644
        %v5653 = vcombine.low %v3077, %v3079
        %v5654 = vcombine.low %v3081, %v3144
        %v5655 = vcombine.low %v3304, %v3318
        %v5656 = vcombine.low %v3326, %v3328
        %v5658 = vunpack.c.l.s4 1966171168
        %v5659 = vunpack.c.0.s8 %v5658
        %v5660 = vlaneseq
        %v5661 = vshrl.u32 %v5660, 7
        %v5662 = vsub.s32 %v5659, %v5661
        %v5663 = vrot.slane %v5653, %v5662
        %v5665 = vunpack.c.l.s4 1966171168
        %v5666 = vunpack.c.0.s8 %v5665
        %v5667 = vlaneseq
        %v5668 = vshrl.u32 %v5667, 7
        %v5669 = vsub.s32 %v5666, %v5668
        %v5670 = vrot.slane %v5654, %v5669
        %v5672 = vunpack.c.l.s4 1966171168
        %v5673 = vunpack.c.0.s8 %v5672
        %v5674 = vlaneseq
        %v5675 = vshrl.u32 %v5674, 7
        %v5676 = vsub.s32 %v5673, %v5675
        %v5677 = vrot.slane %v5655, %v5676
        %v5679 = vunpack.c.l.s4 1966171168
        %v5680 = vunpack.c.0.s8 %v5679
        %v5681 = vlaneseq
        %v5682 = vshrl.u32 %v5681, 7
        %v5683 = vsub.s32 %v5680, %v5682
        %v5684 = vrot.slane %v5656, %v5683
        %v5685 = vcombine.low %v5663, %v5670
        %v5686 = vcombine.low %v5677, %v5684
        %v5688 = vunpack.c.l.s4 1966171168
        %v5689 = vunpack.c.0.s8 %v5688
        %v5690 = vlaneseq
        %v5691 = vshrl.u32 %v5690, 7
        %v5692 = vsub.s32 %v5689, %v5691
        %v5693 = vrot.slane %v5685, %v5692
        %v5695 = vunpack.c.l.s4 1966171168
        %v5696 = vunpack.c.0.s8 %v5695
        %v5697 = vlaneseq
        %v5698 = vshrl.u32 %v5697, 7
        %v5699 = vsub.s32 %v5696, %v5698
        %v5700 = vrot.slane %v5686, %v5699
        %v5701 = vcombine.low %v5693, %v5700
        %v5702 = vcombine.low %v3275, %v3279
        %v5703 = vcombine.high %v3275, %v3279
        %v5704 = vcombine.low %v3276, %v3280
        %v5705 = vcombine.high %v3276, %v3280
        %v5706 = vcombine.low %v3378, %v3521
        %v5707 = vcombine.high %v3378, %v3521
        %v5708 = vcombine.low %v3525, %v3522
        %v5709 = vcombine.high %v3525, %v3522
        %v5711 = vunpack.c.l.s4 1966171168
        %v5712 = vunpack.c.0.s8 %v5711
        %v5713 = vlaneseq
        %v5714 = vshrl.u32 %v5713, 7
        %v5715 = vsub.s32 %v5712, %v5714
        %v5716 = vrot.slane %v5702, %v5715
        %v5718 = vunpack.c.l.s4 1966171168
        %v5719 = vunpack.c.0.s8 %v5718
        %v5720 = vlaneseq
        %v5721 = vshrl.u32 %v5720, 7
        %v5722 = vsub.s32 %v5719, %v5721
        %v5723 = vrot.slane %v5703, %v5722
        %v5725 = vunpack.c.l.s4 1966171168
        %v5726 = vunpack.c.0.s8 %v5725
        %v5727 = vlaneseq
        %v5728 = vshrl.u32 %v5727, 7
        %v5729 = vsub.s32 %v5726, %v5728
        %v5730 = vrot.slane %v5704, %v5729
        %v5732 = vunpack.c.l.s4 1966171168
        %v5733 = vunpack.c.0.s8 %v5732
        %v5734 = vlaneseq
        %v5735 = vshrl.u32 %v5734, 7
        %v5736 = vsub.s32 %v5733, %v5735
        %v5737 = vrot.slane %v5705, %v5736
        %v5739 = vunpack.c.l.s4 1966171168
        %v5740 = vunpack.c.0.s8 %v5739
        %v5741 = vlaneseq
        %v5742 = vshrl.u32 %v5741, 7
        %v5743 = vsub.s32 %v5740, %v5742
        %v5744 = vrot.slane %v5706, %v5743
        %v5746 = vunpack.c.l.s4 1966171168
        %v5747 = vunpack.c.0.s8 %v5746
        %v5748 = vlaneseq
        %v5749 = vshrl.u32 %v5748, 7
        %v5750 = vsub.s32 %v5747, %v5749
        %v5751 = vrot.slane %v5707, %v5750
        %v5753 = vunpack.c.l.s4 1966171168
        %v5754 = vunpack.c.0.s8 %v5753
        %v5755 = vlaneseq
        %v5756 = vshrl.u32 %v5755, 7
        %v5757 = vsub.s32 %v5754, %v5756
        %v5758 = vrot.slane %v5708, %v5757
        %v5760 = vunpack.c.l.s4 1966171168
        %v5761 = vunpack.c.0.s8 %v5760
        %v5762 = vlaneseq
        %v5763 = vshrl.u32 %v5762, 7
        %v5764 = vsub.s32 %v5761, %v5763
        %v5765 = vrot.slane %v5709, %v5764
        %v5766 = vcombine.low %v5716, %v5730
        %v5767 = vcombine.high %v5716, %v5730
        %v5768 = vcombine.low %v5723, %v5737
        %v5769 = vcombine.high %v5723, %v5737
        %v5770 = vcombine.low %v5744, %v5758
        %v5771 = vcombine.high %v5744, %v5758
        %v5772 = vcombine.low %v5751, %v5765
        %v5773 = vcombine.high %v5751, %v5765
        %v5775 = vunpack.c.l.s4 1966171168
        %v5776 = vunpack.c.0.s8 %v5775
        %v5777 = vlaneseq
        %v5778 = vshrl.u32 %v5777, 7
        %v5779 = vsub.s32 %v5776, %v5778
        %v5780 = vrot.slane %v5766, %v5779
        %v5782 = vunpack.c.l.s4 1966171168
        %v5783 = vunpack.c.0.s8 %v5782
        %v5784 = vlaneseq
        %v5785 = vshrl.u32 %v5784, 7
        %v5786 = vsub.s32 %v5783, %v5785
        %v5787 = vrot.slane %v5768, %v5786
        %v5789 = vunpack.c.l.s4 1966171168
        %v5790 = vunpack.c.0.s8 %v5789
        %v5791 = vlaneseq
        %v5792 = vshrl.u32 %v5791, 7
        %v5793 = vsub.s32 %v5790, %v5792
        %v5794 = vrot.slane %v5767, %v5793
        %v5796 = vunpack.c.l.s4 1966171168
        %v5797 = vunpack.c.0.s8 %v5796
        %v5798 = vlaneseq
        %v5799 = vshrl.u32 %v5798, 7
        %v5800 = vsub.s32 %v5797, %v5799
        %v5801 = vrot.slane %v5769, %v5800
        %v5803 = vunpack.c.l.s4 1966171168
        %v5804 = vunpack.c.0.s8 %v5803
        %v5805 = vlaneseq
        %v5806 = vshrl.u32 %v5805, 7
        %v5807 = vsub.s32 %v5804, %v5806
        %v5808 = vrot.slane %v5770, %v5807
        %v5810 = vunpack.c.l.s4 1966171168
        %v5811 = vunpack.c.0.s8 %v5810
        %v5812 = vlaneseq
        %v5813 = vshrl.u32 %v5812, 7
        %v5814 = vsub.s32 %v5811, %v5813
        %v5815 = vrot.slane %v5772, %v5814
        %v5817 = vunpack.c.l.s4 1966171168
        %v5818 = vunpack.c.0.s8 %v5817
        %v5819 = vlaneseq
        %v5820 = vshrl.u32 %v5819, 7
        %v5821 = vsub.s32 %v5818, %v5820
        %v5822 = vrot.slane %v5771, %v5821
        %v5824 = vunpack.c.l.s4 1966171168
        %v5825 = vunpack.c.0.s8 %v5824
        %v5826 = vlaneseq
        %v5827 = vshrl.u32 %v5826, 7
        %v5828 = vsub.s32 %v5825, %v5827
        %v5829 = vrot.slane %v5773, %v5828
        %v5830 = vcombine.low %v5780, %v5808
        %v5831 = vcombine.high %v5780, %v5808
        %v5832 = vcombine.low %v5787, %v5815
        %v5833 = vcombine.high %v5787, %v5815
        %v5834 = vcombine.low %v5794, %v5822
        %v5835 = vcombine.high %v5794, %v5822
        %v5836 = vcombine.low %v5801, %v5829
        %v5837 = vcombine.high %v5801, %v5829
        %v5838 = vcombine.low %v3311, %v3325
        %v5839 = vcombine.low %v3327, %v3329
        %v5840 = vcombine.low %v3392, %v3552
        %v5841 = vcombine.low %v3566, %v3574
        %v5843 = vunpack.c.l.s4 1966171168
        %v5844 = vunpack.c.0.s8 %v5843
        %v5845 = vlaneseq
        %v5846 = vshrl.u32 %v5845, 7
        %v5847 = vsub.s32 %v5844, %v5846
        %v5848 = vrot.slane %v5838, %v5847
        %v5850 = vunpack.c.l.s4 1966171168
        %v5851 = vunpack.c.0.s8 %v5850
        %v5852 = vlaneseq
        %v5853 = vshrl.u32 %v5852, 7
        %v5854 = vsub.s32 %v5851, %v5853
        %v5855 = vrot.slane %v5839, %v5854
        %v5857 = vunpack.c.l.s4 1966171168
        %v5858 = vunpack.c.0.s8 %v5857
        %v5859 = vlaneseq
        %v5860 = vshrl.u32 %v5859, 7
        %v5861 = vsub.s32 %v5858, %v5860
        %v5862 = vrot.slane %v5840, %v5861
        %v5864 = vunpack.c.l.s4 1966171168
        %v5865 = vunpack.c.0.s8 %v5864
        %v5866 = vlaneseq
        %v5867 = vshrl.u32 %v5866, 7
        %v5868 = vsub.s32 %v5865, %v5867
        %v5869 = vrot.slane %v5841, %v5868
        %v5870 = vcombine.low %v5848, %v5855
        %v5871 = vcombine.low %v5862, %v5869
        %v5873 = vunpack.c.l.s4 1966171168
        %v5874 = vunpack.c.0.s8 %v5873
        %v5875 = vlaneseq
        %v5876 = vshrl.u32 %v5875, 7
        %v5877 = vsub.s32 %v5874, %v5876
        %v5878 = vrot.slane %v5870, %v5877
        %v5880 = vunpack.c.l.s4 1966171168
        %v5881 = vunpack.c.0.s8 %v5880
        %v5882 = vlaneseq
        %v5883 = vshrl.u32 %v5882, 7
        %v5884 = vsub.s32 %v5881, %v5883
        %v5885 = vrot.slane %v5871, %v5884
        %v5886 = vcombine.low %v5878, %v5885
        %v5887 = vcombine.low %v3526, %v3523
        %v5888 = vcombine.high %v3526, %v3523
        %v5889 = vcombine.low %v3527, %v3524
        %v5890 = vcombine.high %v3527, %v3524
        %v5891 = vcombine.low %v3528, %v3626
        %v5892 = vcombine.high %v3528, %v3626
        %v5893 = vcombine.low %v3769, %v3773
        %v5894 = vcombine.high %v3769, %v3773
        %v5896 = vunpack.c.l.s4 1966171168
        %v5897 = vunpack.c.0.s8 %v5896
        %v5898 = vlaneseq
        %v5899 = vshrl.u32 %v5898, 7
        %v5900 = vsub.s32 %v5897, %v5899
        %v5901 = vrot.slane %v5887, %v5900
        %v5903 = vunpack.c.l.s4 1966171168
        %v5904 = vunpack.c.0.s8 %v5903
        %v5905 = vlaneseq
        %v5906 = vshrl.u32 %v5905, 7
        %v5907 = vsub.s32 %v5904, %v5906
        %v5908 = vrot.slane %v5888, %v5907
        %v5910 = vunpack.c.l.s4 1966171168
        %v5911 = vunpack.c.0.s8 %v5910
        %v5912 = vlaneseq
        %v5913 = vshrl.u32 %v5912, 7
        %v5914 = vsub.s32 %v5911, %v5913
        %v5915 = vrot.slane %v5889, %v5914
        %v5917 = vunpack.c.l.s4 1966171168
        %v5918 = vunpack.c.0.s8 %v5917
        %v5919 = vlaneseq
        %v5920 = vshrl.u32 %v5919, 7
        %v5921 = vsub.s32 %v5918, %v5920
        %v5922 = vrot.slane %v5890, %v5921
        %v5924 = vunpack.c.l.s4 1966171168
        %v5925 = vunpack.c.0.s8 %v5924
        %v5926 = vlaneseq
        %v5927 = vshrl.u32 %v5926, 7
        %v5928 = vsub.s32 %v5925, %v5927
        %v5929 = vrot.slane %v5891, %v5928
        %v5931 = vunpack.c.l.s4 1966171168
        %v5932 = vunpack.c.0.s8 %v5931
        %v5933 = vlaneseq
        %v5934 = vshrl.u32 %v5933, 7
        %v5935 = vsub.s32 %v5932, %v5934
        %v5936 = vrot.slane %v5892, %v5935
        %v5938 = vunpack.c.l.s4 1966171168
        %v5939 = vunpack.c.0.s8 %v5938
        %v5940 = vlaneseq
        %v5941 = vshrl.u32 %v5940, 7
        %v5942 = vsub.s32 %v5939, %v5941
        %v5943 = vrot.slane %v5893, %v5942
        %v5945 = vunpack.c.l.s4 1966171168
        %v5946 = vunpack.c.0.s8 %v5945
        %v5947 = vlaneseq
        %v5948 = vshrl.u32 %v5947, 7
        %v5949 = vsub.s32 %v5946, %v5948
        %v5950 = vrot.slane %v5894, %v5949
        %v5951 = vcombine.low %v5901, %v5915
        %v5952 = vcombine.high %v5901, %v5915
        %v5953 = vcombine.low %v5908, %v5922
        %v5954 = vcombine.high %v5908, %v5922
        %v5955 = vcombine.low %v5929, %v5943
        %v5956 = vcombine.high %v5929, %v5943
        %v5957 = vcombine.low %v5936, %v5950
        %v5958 = vcombine.high %v5936, %v5950
        %v5960 = vunpack.c.l.s4 1966171168
        %v5961 = vunpack.c.0.s8 %v5960
        %v5962 = vlaneseq
        %v5963 = vshrl.u32 %v5962, 7
        %v5964 = vsub.s32 %v5961, %v5963
        %v5965 = vrot.slane %v5951, %v5964
        %v5967 = vunpack.c.l.s4 1966171168
        %v5968 = vunpack.c.0.s8 %v5967
        %v5969 = vlaneseq
        %v5970 = vshrl.u32 %v5969, 7
        %v5971 = vsub.s32 %v5968, %v5970
        %v5972 = vrot.slane %v5953, %v5971
        %v5974 = vunpack.c.l.s4 1966171168
        %v5975 = vunpack.c.0.s8 %v5974
        %v5976 = vlaneseq
        %v5977 = vshrl.u32 %v5976, 7
        %v5978 = vsub.s32 %v5975, %v5977
        %v5979 = vrot.slane %v5952, %v5978
        %v5981 = vunpack.c.l.s4 1966171168
        %v5982 = vunpack.c.0.s8 %v5981
        %v5983 = vlaneseq
        %v5984 = vshrl.u32 %v5983, 7
        %v5985 = vsub.s32 %v5982, %v5984
        %v5986 = vrot.slane %v5954, %v5985
        %v5988 = vunpack.c.l.s4 1966171168
        %v5989 = vunpack.c.0.s8 %v5988
        %v5990 = vlaneseq
        %v5991 = vshrl.u32 %v5990, 7
        %v5992 = vsub.s32 %v5989, %v5991
        %v5993 = vrot.slane %v5955, %v5992
        %v5995 = vunpack.c.l.s4 1966171168
        %v5996 = vunpack.c.0.s8 %v5995
        %v5997 = vlaneseq
        %v5998 = vshrl.u32 %v5997, 7
        %v5999 = vsub.s32 %v5996, %v5998
        %v6000 = vrot.slane %v5957, %v5999
        %v6002 = vunpack.c.l.s4 1966171168
        %v6003 = vunpack.c.0.s8 %v6002
        %v6004 = vlaneseq
        %v6005 = vshrl.u32 %v6004, 7
        %v6006 = vsub.s32 %v6003, %v6005
        %v6007 = vrot.slane %v5956, %v6006
        %v6009 = vunpack.c.l.s4 1966171168
        %v6010 = vunpack.c.0.s8 %v6009
        %v6011 = vlaneseq
        %v6012 = vshrl.u32 %v6011, 7
        %v6013 = vsub.s32 %v6010, %v6012
        %v6014 = vrot.slane %v5958, %v6013
        %v6015 = vcombine.low %v5965, %v5993
        %v6016 = vcombine.high %v5965, %v5993
        %v6017 = vcombine.low %v5972, %v6000
        %v6018 = vcombine.high %v5972, %v6000
        %v6019 = vcombine.low %v5979, %v6007
        %v6020 = vcombine.high %v5979, %v6007
        %v6021 = vcombine.low %v5986, %v6014
        %v6022 = vcombine.high %v5986, %v6014
        %v6023 = vcombine.low %v3576, %v3559
        %v6024 = vcombine.low %v3573, %v3575
        %v6025 = vcombine.low %v3577, %v3640
        %v6026 = vcombine.low %v3800, %v3814
        %v6028 = vunpack.c.l.s4 1966171168
        %v6029 = vunpack.c.0.s8 %v6028
        %v6030 = vlaneseq
        %v6031 = vshrl.u32 %v6030, 7
        %v6032 = vsub.s32 %v6029, %v6031
        %v6033 = vrot.slane %v6023, %v6032
        %v6035 = vunpack.c.l.s4 1966171168
        %v6036 = vunpack.c.0.s8 %v6035
        %v6037 = vlaneseq
        %v6038 = vshrl.u32 %v6037, 7
        %v6039 = vsub.s32 %v6036, %v6038
        %v6040 = vrot.slane %v6024, %v6039
        %v6042 = vunpack.c.l.s4 1966171168
        %v6043 = vunpack.c.0.s8 %v6042
        %v6044 = vlaneseq
        %v6045 = vshrl.u32 %v6044, 7
        %v6046 = vsub.s32 %v6043, %v6045
        %v6047 = vrot.slane %v6025, %v6046
        %v6049 = vunpack.c.l.s4 1966171168
        %v6050 = vunpack.c.0.s8 %v6049
        %v6051 = vlaneseq
        %v6052 = vshrl.u32 %v6051, 7
        %v6053 = vsub.s32 %v6050, %v6052
        %v6054 = vrot.slane %v6026, %v6053
        %v6055 = vcombine.low %v6033, %v6040
        %v6056 = vcombine.low %v6047, %v6054
        %v6058 = vunpack.c.l.s4 1966171168
        %v6059 = vunpack.c.0.s8 %v6058
        %v6060 = vlaneseq
        %v6061 = vshrl.u32 %v6060, 7
        %v6062 = vsub.s32 %v6059, %v6061
        %v6063 = vrot.slane %v6055, %v6062
        %v6065 = vunpack.c.l.s4 1966171168
        %v6066 = vunpack.c.0.s8 %v6065
        %v6067 = vlaneseq
        %v6068 = vshrl.u32 %v6067, 7
        %v6069 = vsub.s32 %v6066, %v6068
        %v6070 = vrot.slane %v6056, %v6069
        %v6071 = vcombine.low %v6063, %v6070
        %v6072 = vcombine.low %v3770, %v3774
        %v6073 = vcombine.high %v3770, %v3774
        %v6074 = vcombine.low %v3771, %v3775
        %v6075 = vcombine.high %v3771, %v3775
        %v6076 = vcombine.low %v3772, %v3776
        %v6077 = vcombine.high %v3772, %v3776
        %v6078 = vcombine.low %v3874, %v4017
        %v6079 = vcombine.high %v3874, %v4017
        %v6081 = vunpack.c.l.s4 1966171168
        %v6082 = vunpack.c.0.s8 %v6081
        %v6083 = vlaneseq
        %v6084 = vshrl.u32 %v6083, 7
        %v6085 = vsub.s32 %v6082, %v6084
        %v6086 = vrot.slane %v6072, %v6085
        %v6088 = vunpack.c.l.s4 1966171168
        %v6089 = vunpack.c.0.s8 %v6088
        %v6090 = vlaneseq
        %v6091 = vshrl.u32 %v6090, 7
        %v6092 = vsub.s32 %v6089, %v6091
        %v6093 = vrot.slane %v6073, %v6092
        %v6095 = vunpack.c.l.s4 1966171168
        %v6096 = vunpack.c.0.s8 %v6095
        %v6097 = vlaneseq
        %v6098 = vshrl.u32 %v6097, 7
        %v6099 = vsub.s32 %v6096, %v6098
        %v6100 = vrot.slane %v6074, %v6099
        %v6102 = vunpack.c.l.s4 1966171168
        %v6103 = vunpack.c.0.s8 %v6102
        %v6104 = vlaneseq
        %v6105 = vshrl.u32 %v6104, 7
        %v6106 = vsub.s32 %v6103, %v6105
        %v6107 = vrot.slane %v6075, %v6106
        %v6109 = vunpack.c.l.s4 1966171168
        %v6110 = vunpack.c.0.s8 %v6109
        %v6111 = vlaneseq
        %v6112 = vshrl.u32 %v6111, 7
        %v6113 = vsub.s32 %v6110, %v6112
        %v6114 = vrot.slane %v6076, %v6113
        %v6116 = vunpack.c.l.s4 1966171168
        %v6117 = vunpack.c.0.s8 %v6116
        %v6118 = vlaneseq
        %v6119 = vshrl.u32 %v6118, 7
        %v6120 = vsub.s32 %v6117, %v6119
        %v6121 = vrot.slane %v6077, %v6120
        %v6123 = vunpack.c.l.s4 1966171168
        %v6124 = vunpack.c.0.s8 %v6123
        %v6125 = vlaneseq
        %v6126 = vshrl.u32 %v6125, 7
        %v6127 = vsub.s32 %v6124, %v6126
        %v6128 = vrot.slane %v6078, %v6127
        %v6130 = vunpack.c.l.s4 1966171168
        %v6131 = vunpack.c.0.s8 %v6130
        %v6132 = vlaneseq
        %v6133 = vshrl.u32 %v6132, 7
        %v6134 = vsub.s32 %v6131, %v6133
        %v6135 = vrot.slane %v6079, %v6134
        %v6136 = vcombine.low %v6086, %v6100
        %v6137 = vcombine.high %v6086, %v6100
        %v6138 = vcombine.low %v6093, %v6107
        %v6139 = vcombine.high %v6093, %v6107
        %v6140 = vcombine.low %v6114, %v6128
        %v6141 = vcombine.high %v6114, %v6128
        %v6142 = vcombine.low %v6121, %v6135
        %v6143 = vcombine.high %v6121, %v6135
        %v6145 = vunpack.c.l.s4 1966171168
        %v6146 = vunpack.c.0.s8 %v6145
        %v6147 = vlaneseq
        %v6148 = vshrl.u32 %v6147, 7
        %v6149 = vsub.s32 %v6146, %v6148
        %v6150 = vrot.slane %v6136, %v6149
        %v6152 = vunpack.c.l.s4 1966171168
        %v6153 = vunpack.c.0.s8 %v6152
        %v6154 = vlaneseq
        %v6155 = vshrl.u32 %v6154, 7
        %v6156 = vsub.s32 %v6153, %v6155
        %v6157 = vrot.slane %v6138, %v6156
        %v6159 = vunpack.c.l.s4 1966171168
        %v6160 = vunpack.c.0.s8 %v6159
        %v6161 = vlaneseq
        %v6162 = vshrl.u32 %v6161, 7
        %v6163 = vsub.s32 %v6160, %v6162
        %v6164 = vrot.slane %v6137, %v6163
        %v6166 = vunpack.c.l.s4 1966171168
        %v6167 = vunpack.c.0.s8 %v6166
        %v6168 = vlaneseq
        %v6169 = vshrl.u32 %v6168, 7
        %v6170 = vsub.s32 %v6167, %v6169
        %v6171 = vrot.slane %v6139, %v6170
        %v6173 = vunpack.c.l.s4 1966171168
        %v6174 = vunpack.c.0.s8 %v6173
        %v6175 = vlaneseq
        %v6176 = vshrl.u32 %v6175, 7
        %v6177 = vsub.s32 %v6174, %v6176
        %v6178 = vrot.slane %v6140, %v6177
        %v6180 = vunpack.c.l.s4 1966171168
        %v6181 = vunpack.c.0.s8 %v6180
        %v6182 = vlaneseq
        %v6183 = vshrl.u32 %v6182, 7
        %v6184 = vsub.s32 %v6181, %v6183
        %v6185 = vrot.slane %v6142, %v6184
        %v6187 = vunpack.c.l.s4 1966171168
        %v6188 = vunpack.c.0.s8 %v6187
        %v6189 = vlaneseq
        %v6190 = vshrl.u32 %v6189, 7
        %v6191 = vsub.s32 %v6188, %v6190
        %v6192 = vrot.slane %v6141, %v6191
        %v6194 = vunpack.c.l.s4 1966171168
        %v6195 = vunpack.c.0.s8 %v6194
        %v6196 = vlaneseq
        %v6197 = vshrl.u32 %v6196, 7
        %v6198 = vsub.s32 %v6195, %v6197
        %v6199 = vrot.slane %v6143, %v6198
        %v6200 = vcombine.low %v6150, %v6178
        %v6201 = vcombine.high %v6150, %v6178
        %v6202 = vcombine.low %v6157, %v6185
        %v6203 = vcombine.high %v6157, %v6185
        %v6204 = vcombine.low %v6164, %v6192
        %v6205 = vcombine.high %v6164, %v6192
        %v6206 = vcombine.low %v6171, %v6199
        %v6207 = vcombine.high %v6171, %v6199
        %v6208 = vcombine.low %v3822, %v3824
        %v6209 = vcombine.low %v3807, %v3821
        %v6210 = vcombine.low %v3823, %v3825
        %v6211 = vcombine.low %v3888, %v4048
        %v6213 = vunpack.c.l.s4 1966171168
        %v6214 = vunpack.c.0.s8 %v6213
        %v6215 = vlaneseq
        %v6216 = vshrl.u32 %v6215, 7
        %v6217 = vsub.s32 %v6214, %v6216
        %v6218 = vrot.slane %v6208, %v6217
        %v6220 = vunpack.c.l.s4 1966171168
        %v6221 = vunpack.c.0.s8 %v6220
        %v6222 = vlaneseq
        %v6223 = vshrl.u32 %v6222, 7
        %v6224 = vsub.s32 %v6221, %v6223
        %v6225 = vrot.slane %v6209, %v6224
        %v6227 = vunpack.c.l.s4 1966171168
        %v6228 = vunpack.c.0.s8 %v6227
        %v6229 = vlaneseq
        %v6230 = vshrl.u32 %v6229, 7
        %v6231 = vsub.s32 %v6228, %v6230
        %v6232 = vrot.slane %v6210, %v6231
        %v6234 = vunpack.c.l.s4 1966171168
        %v6235 = vunpack.c.0.s8 %v6234
        %v6236 = vlaneseq
        %v6237 = vshrl.u32 %v6236, 7
        %v6238 = vsub.s32 %v6235, %v6237
        %v6239 = vrot.slane %v6211, %v6238
        %v6240 = vcombine.low %v6218, %v6225
        %v6241 = vcombine.low %v6232, %v6239
        %v6243 = vunpack.c.l.s4 1966171168
        %v6244 = vunpack.c.0.s8 %v6243
        %v6245 = vlaneseq
        %v6246 = vshrl.u32 %v6245, 7
        %v6247 = vsub.s32 %v6244, %v6246
        %v6248 = vrot.slane %v6240, %v6247
        %v6250 = vunpack.c.l.s4 1966171168
        %v6251 = vunpack.c.0.s8 %v6250
        %v6252 = vlaneseq
        %v6253 = vshrl.u32 %v6252, 7
        %v6254 = vsub.s32 %v6251, %v6253
        %v6255 = vrot.slane %v6241, %v6254
        %v6256 = vcombine.low %v6248, %v6255
        %v6257 = vcombine.low %v4021, %v4018
        %v6258 = vcombine.high %v4021, %v4018
        %v6259 = vcombine.low %v4022, %v4019
        %v6260 = vcombine.high %v4022, %v4019
        %v6261 = vcombine.low %v4023, %v4020
        %v6262 = vcombine.high %v4023, %v4020
        %v6263 = vcombine.low %v4024, %v4122
        %v6264 = vcombine.high %v4024, %v4122
        %v6266 = vunpack.c.l.s4 1966171168
        %v6267 = vunpack.c.0.s8 %v6266
        %v6268 = vlaneseq
        %v6269 = vshrl.u32 %v6268, 7
        %v6270 = vsub.s32 %v6267, %v6269
        %v6271 = vrot.slane %v6257, %v6270
        %v6273 = vunpack.c.l.s4 1966171168
        %v6274 = vunpack.c.0.s8 %v6273
        %v6275 = vlaneseq
        %v6276 = vshrl.u32 %v6275, 7
        %v6277 = vsub.s32 %v6274, %v6276
        %v6278 = vrot.slane %v6258, %v6277
        %v6280 = vunpack.c.l.s4 1966171168
        %v6281 = vunpack.c.0.s8 %v6280
        %v6282 = vlaneseq
        %v6283 = vshrl.u32 %v6282, 7
        %v6284 = vsub.s32 %v6281, %v6283
        %v6285 = vrot.slane %v6259, %v6284
        %v6287 = vunpack.c.l.s4 1966171168
        %v6288 = vunpack.c.0.s8 %v6287
        %v6289 = vlaneseq
        %v6290 = vshrl.u32 %v6289, 7
        %v6291 = vsub.s32 %v6288, %v6290
        %v6292 = vrot.slane %v6260, %v6291
        %v6294 = vunpack.c.l.s4 1966171168
        %v6295 = vunpack.c.0.s8 %v6294
        %v6296 = vlaneseq
        %v6297 = vshrl.u32 %v6296, 7
        %v6298 = vsub.s32 %v6295, %v6297
        %v6299 = vrot.slane %v6261, %v6298
        %v6301 = vunpack.c.l.s4 1966171168
        %v6302 = vunpack.c.0.s8 %v6301
        %v6303 = vlaneseq
        %v6304 = vshrl.u32 %v6303, 7
        %v6305 = vsub.s32 %v6302, %v6304
        %v6306 = vrot.slane %v6262, %v6305
        %v6308 = vunpack.c.l.s4 1966171168
        %v6309 = vunpack.c.0.s8 %v6308
        %v6310 = vlaneseq
        %v6311 = vshrl.u32 %v6310, 7
        %v6312 = vsub.s32 %v6309, %v6311
        %v6313 = vrot.slane %v6263, %v6312
        %v6315 = vunpack.c.l.s4 1966171168
        %v6316 = vunpack.c.0.s8 %v6315
        %v6317 = vlaneseq
        %v6318 = vshrl.u32 %v6317, 7
        %v6319 = vsub.s32 %v6316, %v6318
        %v6320 = vrot.slane %v6264, %v6319
        %v6321 = vcombine.low %v6271, %v6285
        %v6322 = vcombine.high %v6271, %v6285
        %v6323 = vcombine.low %v6278, %v6292
        %v6324 = vcombine.high %v6278, %v6292
        %v6325 = vcombine.low %v6299, %v6313
        %v6326 = vcombine.high %v6299, %v6313
        %v6327 = vcombine.low %v6306, %v6320
        %v6328 = vcombine.high %v6306, %v6320
        %v6330 = vunpack.c.l.s4 1966171168
        %v6331 = vunpack.c.0.s8 %v6330
        %v6332 = vlaneseq
        %v6333 = vshrl.u32 %v6332, 7
        %v6334 = vsub.s32 %v6331, %v6333
        %v6335 = vrot.slane %v6321, %v6334
        %v6337 = vunpack.c.l.s4 1966171168
        %v6338 = vunpack.c.0.s8 %v6337
        %v6339 = vlaneseq
        %v6340 = vshrl.u32 %v6339, 7
        %v6341 = vsub.s32 %v6338, %v6340
        %v6342 = vrot.slane %v6323, %v6341
        %v6344 = vunpack.c.l.s4 1966171168
        %v6345 = vunpack.c.0.s8 %v6344
        %v6346 = vlaneseq
        %v6347 = vshrl.u32 %v6346, 7
        %v6348 = vsub.s32 %v6345, %v6347
        %v6349 = vrot.slane %v6322, %v6348
        %v6351 = vunpack.c.l.s4 1966171168
        %v6352 = vunpack.c.0.s8 %v6351
        %v6353 = vlaneseq
        %v6354 = vshrl.u32 %v6353, 7
        %v6355 = vsub.s32 %v6352, %v6354
        %v6356 = vrot.slane %v6324, %v6355
        %v6358 = vunpack.c.l.s4 1966171168
        %v6359 = vunpack.c.0.s8 %v6358
        %v6360 = vlaneseq
        %v6361 = vshrl.u32 %v6360, 7
        %v6362 = vsub.s32 %v6359, %v6361
        %v6363 = vrot.slane %v6325, %v6362
        %v6365 = vunpack.c.l.s4 1966171168
        %v6366 = vunpack.c.0.s8 %v6365
        %v6367 = vlaneseq
        %v6368 = vshrl.u32 %v6367, 7
        %v6369 = vsub.s32 %v6366, %v6368
        %v6370 = vrot.slane %v6327, %v6369
        %v6372 = vunpack.c.l.s4 1966171168
        %v6373 = vunpack.c.0.s8 %v6372
        %v6374 = vlaneseq
        %v6375 = vshrl.u32 %v6374, 7
        %v6376 = vsub.s32 %v6373, %v6375
        %v6377 = vrot.slane %v6326, %v6376
        %v6379 = vunpack.c.l.s4 1966171168
        %v6380 = vunpack.c.0.s8 %v6379
        %v6381 = vlaneseq
        %v6382 = vshrl.u32 %v6381, 7
        %v6383 = vsub.s32 %v6380, %v6382
        %v6384 = vrot.slane %v6328, %v6383
        %v6385 = vcombine.low %v6335, %v6363
        %v6386 = vcombine.high %v6335, %v6363
        %v6387 = vcombine.low %v6342, %v6370
        %v6388 = vcombine.high %v6342, %v6370
        %v6389 = vcombine.low %v6349, %v6377
        %v6390 = vcombine.high %v6349, %v6377
        %v6391 = vcombine.low %v6356, %v6384
        %v6392 = vcombine.high %v6356, %v6384
        %v6393 = vcombine.low %v4062, %v4070
        %v6394 = vcombine.low %v4072, %v4055
        %v6395 = vcombine.low %v4069, %v4071
        %v6396 = vcombine.low %v4073, %v4136
        %v6398 = vunpack.c.l.s4 1966171168
        %v6399 = vunpack.c.0.s8 %v6398
        %v6400 = vlaneseq
        %v6401 = vshrl.u32 %v6400, 7
        %v6402 = vsub.s32 %v6399, %v6401
        %v6403 = vrot.slane %v6393, %v6402
        %v6405 = vunpack.c.l.s4 1966171168
        %v6406 = vunpack.c.0.s8 %v6405
        %v6407 = vlaneseq
        %v6408 = vshrl.u32 %v6407, 7
        %v6409 = vsub.s32 %v6406, %v6408
        %v6410 = vrot.slane %v6394, %v6409
        %v6412 = vunpack.c.l.s4 1966171168
        %v6413 = vunpack.c.0.s8 %v6412
        %v6414 = vlaneseq
        %v6415 = vshrl.u32 %v6414, 7
        %v6416 = vsub.s32 %v6413, %v6415
        %v6417 = vrot.slane %v6395, %v6416
        %v6419 = vunpack.c.l.s4 1966171168
        %v6420 = vunpack.c.0.s8 %v6419
        %v6421 = vlaneseq
        %v6422 = vshrl.u32 %v6421, 7
        %v6423 = vsub.s32 %v6420, %v6422
        %v6424 = vrot.slane %v6396, %v6423
        %v6425 = vcombine.low %v6403, %v6410
        %v6426 = vcombine.low %v6417, %v6424
        %v6428 = vunpack.c.l.s4 1966171168
        %v6429 = vunpack.c.0.s8 %v6428
        %v6430 = vlaneseq
        %v6431 = vshrl.u32 %v6430, 7
        %v6432 = vsub.s32 %v6429, %v6431
        %v6433 = vrot.slane %v6425, %v6432
        %v6435 = vunpack.c.l.s4 1966171168
        %v6436 = vunpack.c.0.s8 %v6435
        %v6437 = vlaneseq
        %v6438 = vshrl.u32 %v6437, 7
        %v6439 = vsub.s32 %v6436, %v6438
        %v6440 = vrot.slane %v6426, %v6439
        %v6441 = vcombine.low %v6433, %v6440
        %v6442 = vcombine.low %v4265, %v4269
        %v6443 = vcombine.high %v4265, %v4269
        %v6444 = vcombine.low %v4266, %v4270
        %v6445 = vcombine.high %v4266, %v4270
        %v6446 = vcombine.low %v4267, %v4271
        %v6447 = vcombine.high %v4267, %v4271
        %v6448 = vcombine.low %v4268, %v4272
        %v6449 = vcombine.high %v4268, %v4272
        %v6451 = vunpack.c.l.s4 1966171168
        %v6452 = vunpack.c.0.s8 %v6451
        %v6453 = vlaneseq
        %v6454 = vshrl.u32 %v6453, 7
        %v6455 = vsub.s32 %v6452, %v6454
        %v6456 = vrot.slane %v6442, %v6455
        %v6458 = vunpack.c.l.s4 1966171168
        %v6459 = vunpack.c.0.s8 %v6458
        %v6460 = vlaneseq
        %v6461 = vshrl.u32 %v6460, 7
        %v6462 = vsub.s32 %v6459, %v6461
        %v6463 = vrot.slane %v6443, %v6462
        %v6465 = vunpack.c.l.s4 1966171168
        %v6466 = vunpack.c.0.s8 %v6465
        %v6467 = vlaneseq
        %v6468 = vshrl.u32 %v6467, 7
        %v6469 = vsub.s32 %v6466, %v6468
        %v6470 = vrot.slane %v6444, %v6469
        %v6472 = vunpack.c.l.s4 1966171168
        %v6473 = vunpack.c.0.s8 %v6472
        %v6474 = vlaneseq
        %v6475 = vshrl.u32 %v6474, 7
        %v6476 = vsub.s32 %v6473, %v6475
        %v6477 = vrot.slane %v6445, %v6476
        %v6479 = vunpack.c.l.s4 1966171168
        %v6480 = vunpack.c.0.s8 %v6479
        %v6481 = vlaneseq
        %v6482 = vshrl.u32 %v6481, 7
        %v6483 = vsub.s32 %v6480, %v6482
        %v6484 = vrot.slane %v6446, %v6483
        %v6486 = vunpack.c.l.s4 1966171168
        %v6487 = vunpack.c.0.s8 %v6486
        %v6488 = vlaneseq
        %v6489 = vshrl.u32 %v6488, 7
        %v6490 = vsub.s32 %v6487, %v6489
        %v6491 = vrot.slane %v6447, %v6490
        %v6493 = vunpack.c.l.s4 1966171168
        %v6494 = vunpack.c.0.s8 %v6493
        %v6495 = vlaneseq
        %v6496 = vshrl.u32 %v6495, 7
        %v6497 = vsub.s32 %v6494, %v6496
        %v6498 = vrot.slane %v6448, %v6497
        %v6500 = vunpack.c.l.s4 1966171168
        %v6501 = vunpack.c.0.s8 %v6500
        %v6502 = vlaneseq
        %v6503 = vshrl.u32 %v6502, 7
        %v6504 = vsub.s32 %v6501, %v6503
        %v6505 = vrot.slane %v6449, %v6504
        %v6506 = vcombine.low %v6456, %v6470
        %v6507 = vcombine.high %v6456, %v6470
        %v6508 = vcombine.low %v6463, %v6477
        %v6509 = vcombine.high %v6463, %v6477
        %v6510 = vcombine.low %v6484, %v6498
        %v6511 = vcombine.high %v6484, %v6498
        %v6512 = vcombine.low %v6491, %v6505
        %v6513 = vcombine.high %v6491, %v6505
        %v6515 = vunpack.c.l.s4 1966171168
        %v6516 = vunpack.c.0.s8 %v6515
        %v6517 = vlaneseq
        %v6518 = vshrl.u32 %v6517, 7
        %v6519 = vsub.s32 %v6516, %v6518
        %v6520 = vrot.slane %v6506, %v6519
        %v6522 = vunpack.c.l.s4 1966171168
        %v6523 = vunpack.c.0.s8 %v6522
        %v6524 = vlaneseq
        %v6525 = vshrl.u32 %v6524, 7
        %v6526 = vsub.s32 %v6523, %v6525
        %v6527 = vrot.slane %v6508, %v6526
        %v6529 = vunpack.c.l.s4 1966171168
        %v6530 = vunpack.c.0.s8 %v6529
        %v6531 = vlaneseq
        %v6532 = vshrl.u32 %v6531, 7
        %v6533 = vsub.s32 %v6530, %v6532
        %v6534 = vrot.slane %v6507, %v6533
        %v6536 = vunpack.c.l.s4 1966171168
        %v6537 = vunpack.c.0.s8 %v6536
        %v6538 = vlaneseq
        %v6539 = vshrl.u32 %v6538, 7
        %v6540 = vsub.s32 %v6537, %v6539
        %v6541 = vrot.slane %v6509, %v6540
        %v6543 = vunpack.c.l.s4 1966171168
        %v6544 = vunpack.c.0.s8 %v6543
        %v6545 = vlaneseq
        %v6546 = vshrl.u32 %v6545, 7
        %v6547 = vsub.s32 %v6544, %v6546
        %v6548 = vrot.slane %v6510, %v6547
        %v6550 = vunpack.c.l.s4 1966171168
        %v6551 = vunpack.c.0.s8 %v6550
        %v6552 = vlaneseq
        %v6553 = vshrl.u32 %v6552, 7
        %v6554 = vsub.s32 %v6551, %v6553
        %v6555 = vrot.slane %v6512, %v6554
        %v6557 = vunpack.c.l.s4 1966171168
        %v6558 = vunpack.c.0.s8 %v6557
        %v6559 = vlaneseq
        %v6560 = vshrl.u32 %v6559, 7
        %v6561 = vsub.s32 %v6558, %v6560
        %v6562 = vrot.slane %v6511, %v6561
        %v6564 = vunpack.c.l.s4 1966171168
        %v6565 = vunpack.c.0.s8 %v6564
        %v6566 = vlaneseq
        %v6567 = vshrl.u32 %v6566, 7
        %v6568 = vsub.s32 %v6565, %v6567
        %v6569 = vrot.slane %v6513, %v6568
        %v6570 = vcombine.low %v6520, %v6548
        %v6571 = vcombine.high %v6520, %v6548
        %v6572 = vcombine.low %v6527, %v6555
        %v6573 = vcombine.high %v6527, %v6555
        %v6574 = vcombine.low %v6534, %v6562
        %v6575 = vcombine.high %v6534, %v6562
        %v6576 = vcombine.low %v6541, %v6569
        %v6577 = vcombine.high %v6541, %v6569
        %v6578 = vcombine.low %v4296, %v4310
        %v6579 = vcombine.low %v4318, %v4320
        %v6580 = vcombine.low %v4303, %v4317
        %v6581 = vcombine.low %v4319, %v4321
        %v6583 = vunpack.c.l.s4 1966171168
        %v6584 = vunpack.c.0.s8 %v6583
        %v6585 = vlaneseq
        %v6586 = vshrl.u32 %v6585, 7
        %v6587 = vsub.s32 %v6584, %v6586
        %v6588 = vrot.slane %v6578, %v6587
        %v6590 = vunpack.c.l.s4 1966171168
        %v6591 = vunpack.c.0.s8 %v6590
        %v6592 = vlaneseq
        %v6593 = vshrl.u32 %v6592, 7
        %v6594 = vsub.s32 %v6591, %v6593
        %v6595 = vrot.slane %v6579, %v6594
        %v6597 = vunpack.c.l.s4 1966171168
        %v6598 = vunpack.c.0.s8 %v6597
        %v6599 = vlaneseq
        %v6600 = vshrl.u32 %v6599, 7
        %v6601 = vsub.s32 %v6598, %v6600
        %v6602 = vrot.slane %v6580, %v6601
        %v6604 = vunpack.c.l.s4 1966171168
        %v6605 = vunpack.c.0.s8 %v6604
        %v6606 = vlaneseq
        %v6607 = vshrl.u32 %v6606, 7
        %v6608 = vsub.s32 %v6605, %v6607
        %v6609 = vrot.slane %v6581, %v6608
        %v6610 = vcombine.low %v6588, %v6595
        %v6611 = vcombine.low %v6602, %v6609
        %v6613 = vunpack.c.l.s4 1966171168
        %v6614 = vunpack.c.0.s8 %v6613
        %v6615 = vlaneseq
        %v6616 = vshrl.u32 %v6615, 7
        %v6617 = vsub.s32 %v6614, %v6616
        %v6618 = vrot.slane %v6610, %v6617
        %v6620 = vunpack.c.l.s4 1966171168
        %v6621 = vunpack.c.0.s8 %v6620
        %v6622 = vlaneseq
        %v6623 = vshrl.u32 %v6622, 7
        %v6624 = vsub.s32 %v6621, %v6623
        %v6625 = vrot.slane %v6611, %v6624
        %v6626 = vcombine.low %v6618, %v6625
        %v6627 = vcombine.low %v4370, %v4513
        %v6628 = vcombine.high %v4370, %v4513
        %v6629 = vcombine.low %v4517, %v4514
        %v6630 = vcombine.high %v4517, %v4514
        %v6631 = vcombine.low %v4518, %v4515
        %v6632 = vcombine.high %v4518, %v4515
        %v6633 = vcombine.low %v4519, %v4516
        %v6634 = vcombine.high %v4519, %v4516
        %v6636 = vunpack.c.l.s4 1966171168
        %v6637 = vunpack.c.0.s8 %v6636
        %v6638 = vlaneseq
        %v6639 = vshrl.u32 %v6638, 7
        %v6640 = vsub.s32 %v6637, %v6639
        %v6641 = vrot.slane %v6627, %v6640
        %v6643 = vunpack.c.l.s4 1966171168
        %v6644 = vunpack.c.0.s8 %v6643
        %v6645 = vlaneseq
        %v6646 = vshrl.u32 %v6645, 7
        %v6647 = vsub.s32 %v6644, %v6646
        %v6648 = vrot.slane %v6628, %v6647
        %v6650 = vunpack.c.l.s4 1966171168
        %v6651 = vunpack.c.0.s8 %v6650
        %v6652 = vlaneseq
        %v6653 = vshrl.u32 %v6652, 7
        %v6654 = vsub.s32 %v6651, %v6653
        %v6655 = vrot.slane %v6629, %v6654
        %v6657 = vunpack.c.l.s4 1966171168
        %v6658 = vunpack.c.0.s8 %v6657
        %v6659 = vlaneseq
        %v6660 = vshrl.u32 %v6659, 7
        %v6661 = vsub.s32 %v6658, %v6660
        %v6662 = vrot.slane %v6630, %v6661
        %v6664 = vunpack.c.l.s4 1966171168
        %v6665 = vunpack.c.0.s8 %v6664
        %v6666 = vlaneseq
        %v6667 = vshrl.u32 %v6666, 7
        %v6668 = vsub.s32 %v6665, %v6667
        %v6669 = vrot.slane %v6631, %v6668
        %v6671 = vunpack.c.l.s4 1966171168
        %v6672 = vunpack.c.0.s8 %v6671
        %v6673 = vlaneseq
        %v6674 = vshrl.u32 %v6673, 7
        %v6675 = vsub.s32 %v6672, %v6674
        %v6676 = vrot.slane %v6632, %v6675
        %v6678 = vunpack.c.l.s4 1966171168
        %v6679 = vunpack.c.0.s8 %v6678
        %v6680 = vlaneseq
        %v6681 = vshrl.u32 %v6680, 7
        %v6682 = vsub.s32 %v6679, %v6681
        %v6683 = vrot.slane %v6633, %v6682
        %v6685 = vunpack.c.l.s4 1966171168
        %v6686 = vunpack.c.0.s8 %v6685
        %v6687 = vlaneseq
        %v6688 = vshrl.u32 %v6687, 7
        %v6689 = vsub.s32 %v6686, %v6688
        %v6690 = vrot.slane %v6634, %v6689
        %v6691 = vcombine.low %v6641, %v6655
        %v6692 = vcombine.high %v6641, %v6655
        %v6693 = vcombine.low %v6648, %v6662
        %v6694 = vcombine.high %v6648, %v6662
        %v6695 = vcombine.low %v6669, %v6683
        %v6696 = vcombine.high %v6669, %v6683
        %v6697 = vcombine.low %v6676, %v6690
        %v6698 = vcombine.high %v6676, %v6690
        %v6700 = vunpack.c.l.s4 1966171168
        %v6701 = vunpack.c.0.s8 %v6700
        %v6702 = vlaneseq
        %v6703 = vshrl.u32 %v6702, 7
        %v6704 = vsub.s32 %v6701, %v6703
        %v6705 = vrot.slane %v6691, %v6704
        %v6707 = vunpack.c.l.s4 1966171168
        %v6708 = vunpack.c.0.s8 %v6707
        %v6709 = vlaneseq
        %v6710 = vshrl.u32 %v6709, 7
        %v6711 = vsub.s32 %v6708, %v6710
        %v6712 = vrot.slane %v6693, %v6711
        %v6714 = vunpack.c.l.s4 1966171168
        %v6715 = vunpack.c.0.s8 %v6714
        %v6716 = vlaneseq
        %v6717 = vshrl.u32 %v6716, 7
        %v6718 = vsub.s32 %v6715, %v6717
        %v6719 = vrot.slane %v6692, %v6718
        %v6721 = vunpack.c.l.s4 1966171168
        %v6722 = vunpack.c.0.s8 %v6721
        %v6723 = vlaneseq
        %v6724 = vshrl.u32 %v6723, 7
        %v6725 = vsub.s32 %v6722, %v6724
        %v6726 = vrot.slane %v6694, %v6725
        %v6728 = vunpack.c.l.s4 1966171168
        %v6729 = vunpack.c.0.s8 %v6728
        %v6730 = vlaneseq
        %v6731 = vshrl.u32 %v6730, 7
        %v6732 = vsub.s32 %v6729, %v6731
        %v6733 = vrot.slane %v6695, %v6732
        %v6735 = vunpack.c.l.s4 1966171168
        %v6736 = vunpack.c.0.s8 %v6735
        %v6737 = vlaneseq
        %v6738 = vshrl.u32 %v6737, 7
        %v6739 = vsub.s32 %v6736, %v6738
        %v6740 = vrot.slane %v6697, %v6739
        %v6742 = vunpack.c.l.s4 1966171168
        %v6743 = vunpack.c.0.s8 %v6742
        %v6744 = vlaneseq
        %v6745 = vshrl.u32 %v6744, 7
        %v6746 = vsub.s32 %v6743, %v6745
        %v6747 = vrot.slane %v6696, %v6746
        %v6749 = vunpack.c.l.s4 1966171168
        %v6750 = vunpack.c.0.s8 %v6749
        %v6751 = vlaneseq
        %v6752 = vshrl.u32 %v6751, 7
        %v6753 = vsub.s32 %v6750, %v6752
        %v6754 = vrot.slane %v6698, %v6753
        %v6755 = vcombine.low %v6705, %v6733
        %v6756 = vcombine.high %v6705, %v6733
        %v6757 = vcombine.low %v6712, %v6740
        %v6758 = vcombine.high %v6712, %v6740
        %v6759 = vcombine.low %v6719, %v6747
        %v6760 = vcombine.high %v6719, %v6747
        %v6761 = vcombine.low %v6726, %v6754
        %v6762 = vcombine.high %v6726, %v6754
        %v6763 = vcombine.low %v4384, %v4544
        %v6764 = vcombine.low %v4558, %v4566
        %v6765 = vcombine.low %v4568, %v4551
        %v6766 = vcombine.low %v4565, %v4567
        %v6768 = vunpack.c.l.s4 1966171168
        %v6769 = vunpack.c.0.s8 %v6768
        %v6770 = vlaneseq
        %v6771 = vshrl.u32 %v6770, 7
        %v6772 = vsub.s32 %v6769, %v6771
        %v6773 = vrot.slane %v6763, %v6772
        %v6775 = vunpack.c.l.s4 1966171168
        %v6776 = vunpack.c.0.s8 %v6775
        %v6777 = vlaneseq
        %v6778 = vshrl.u32 %v6777, 7
        %v6779 = vsub.s32 %v6776, %v6778
        %v6780 = vrot.slane %v6764, %v6779
        %v6782 = vunpack.c.l.s4 1966171168
        %v6783 = vunpack.c.0.s8 %v6782
        %v6784 = vlaneseq
        %v6785 = vshrl.u32 %v6784, 7
        %v6786 = vsub.s32 %v6783, %v6785
        %v6787 = vrot.slane %v6765, %v6786
        %v6789 = vunpack.c.l.s4 1966171168
        %v6790 = vunpack.c.0.s8 %v6789
        %v6791 = vlaneseq
        %v6792 = vshrl.u32 %v6791, 7
        %v6793 = vsub.s32 %v6790, %v6792
        %v6794 = vrot.slane %v6766, %v6793
        %v6795 = vcombine.low %v6773, %v6780
        %v6796 = vcombine.low %v6787, %v6794
        %v6798 = vunpack.c.l.s4 1966171168
        %v6799 = vunpack.c.0.s8 %v6798
        %v6800 = vlaneseq
        %v6801 = vshrl.u32 %v6800, 7
        %v6802 = vsub.s32 %v6799, %v6801
        %v6803 = vrot.slane %v6795, %v6802
        %v6805 = vunpack.c.l.s4 1966171168
        %v6806 = vunpack.c.0.s8 %v6805
        %v6807 = vlaneseq
        %v6808 = vshrl.u32 %v6807, 7
        %v6809 = vsub.s32 %v6806, %v6808
        %v6810 = vrot.slane %v6796, %v6809
        %v6811 = vcombine.low %v6803, %v6810
        %v6812 = vcombine.low %v4520, %v4618
        %v6813 = vcombine.high %v4520, %v4618
        %v6815 = vunpack.c.l.s4 1966171168
        %v6816 = vunpack.c.0.s8 %v6815
        %v6817 = vlaneseq
        %v6818 = vshrl.u32 %v6817, 7
        %v6819 = vsub.s32 %v6816, %v6818
        %v6820 = vrot.slane %v6812, %v6819
        %v6822 = vunpack.c.l.s4 1966171168
        %v6823 = vunpack.c.0.s8 %v6822
        %v6824 = vlaneseq
        %v6825 = vshrl.u32 %v6824, 7
        %v6826 = vsub.s32 %v6823, %v6825
        %v6827 = vrot.slane %v6813, %v6826
        %v6828 = vcombine.high %v6820, %v6820
        %v6829 = vcombine.high %v6827, %v6827
        %v6831 = vunpack.c.l.s4 1966171168
        %v6832 = vunpack.c.0.s8 %v6831
        %v6833 = vlaneseq
        %v6834 = vshrl.u32 %v6833, 7
        %v6835 = vsub.s32 %v6832, %v6834
        %v6836 = vrot.slane %v6820, %v6835
        %v6838 = vunpack.c.l.s4 1966171168
        %v6839 = vunpack.c.0.s8 %v6838
        %v6840 = vlaneseq
        %v6841 = vshrl.u32 %v6840, 7
        %v6842 = vsub.s32 %v6839, %v6841
        %v6843 = vrot.slane %v6827, %v6842
        %v6845 = vunpack.c.l.s4 1966171168
        %v6846 = vunpack.c.0.s8 %v6845
        %v6847 = vlaneseq
        %v6848 = vshrl.u32 %v6847, 7
        %v6849 = vsub.s32 %v6846, %v6848
        %v6850 = vrot.slane %v6828, %v6849
        %v6852 = vunpack.c.l.s4 1966171168
        %v6853 = vunpack.c.0.s8 %v6852
        %v6854 = vlaneseq
        %v6855 = vshrl.u32 %v6854, 7
        %v6856 = vsub.s32 %v6853, %v6855
        %v6857 = vrot.slane %v6829, %v6856
        %v6858 = vcombine.high %v6836, %v6836
        %v6859 = vcombine.high %v6843, %v6843
        %v6860 = vcombine.high %v6850, %v6850
        %v6861 = vcombine.high %v6857, %v6857
        %v6862 = vcombine.low %v4569, %v4632
        %v6864 = vunpack.c.l.s4 1966171168
        %v6865 = vunpack.c.0.s8 %v6864
        %v6866 = vlaneseq
        %v6867 = vshrl.u32 %v6866, 7
        %v6868 = vsub.s32 %v6865, %v6867
        %v6869 = vrot.slane %v6862, %v6868
        %v6871 = vunpack.c.l.s4 1966171168
        %v6872 = vunpack.c.0.s8 %v6871
        %v6873 = vlaneseq
        %v6874 = vshrl.u32 %v6873, 7
        %v6875 = vsub.s32 %v6872, %v6874
        %v6876 = vrot.slane %v6869, %v6875
        %v7129 = vunpack.c.l.b16 %v4633
        %v7130 = vunpack.c.l.b16 %v4634
        %v7131 = vunpack.c.l.b16 %v4635
        %v7132 = vunpack.c.l.b16 %v4636
        %v7133 = vunpack.c.l.b16 %v4637
        %v7134 = vunpack.c.l.b16 %v4638
        %v7135 = vunpack.c.l.b16 %v4639
        %v7136 = vunpack.c.l.b16 %v4640
        %v7137 = vunpack.c.l.b16 %v4641
        %v7138 = vunpack.c.l.b16 %v4642
        %v7139 = vunpack.c.l.b16 %v4643
        %v7140 = vunpack.c.l.b16 %v4644
        %v7141 = vunpack.c.l.b16 %v4645
        %v7142 = vunpack.c.l.b16 %v4646
        %v7143 = vunpack.c.l.b16 %v4647
        %v7144 = vunpack.c.l.b16 %v4648
        %v7145 = vunpack.c.l.b16 %v4649
        %v7146 = vunpack.c.l.b16 %v4650
        %v7147 = vunpack.c.l.b16 %v4651
        %v7148 = vunpack.c.l.b16 %v4652
        %v7149 = vunpack.c.l.b16 %v4653
        %v7150 = vunpack.c.l.b16 %v4654
        %v7151 = vunpack.c.l.b16 %v4655
        %v7152 = vunpack.c.l.b16 %v4656
        %v7153 = vunpack.c.l.b16 %v4657
        %v7154 = vunpack.c.l.b16 %v4658
        %v7155 = vunpack.c.l.b16 %v4659
        %v7156 = vunpack.c.l.b16 %v4660
        %v7157 = vunpack.c.l.b16 %v4661
        %v7158 = vunpack.c.l.b16 %v4662
        %v7159 = vunpack.c.l.b16 %v4663
        %v7160 = vunpack.c.l.b16 %v4664
        %v7161 = vunpack.c.l.b16 %v4665
        %v7162 = vunpack.c.l.b16 %v4666
        %v7163 = vunpack.c.l.b16 %v4667
        %v7164 = vunpack.c.l.b16 %v4668
        %v7165 = vunpack.c.l.b16 %v4669
        %v7166 = vunpack.c.l.b16 %v4670
        %v7167 = vunpack.c.l.b16 %v4671
        %v7168 = vunpack.c.l.b16 %v4672
        %v7169 = vunpack.c.l.b16 %v4673
        %v7170 = vunpack.c.l.b16 %v4674
        %v7171 = vunpack.c.l.b16 %v4675
        %v7172 = vunpack.c.l.b16 %v4676
        %v7173 = vunpack.c.l.b16 %v4677
        %v7174 = vunpack.c.l.b16 %v4678
        %v7175 = vunpack.c.l.b16 %v4679
        %v7176 = vunpack.c.l.b16 %v4680
        %v7177 = vunpack.c.l.b16 %v4681
        %v7178 = vunpack.c.l.b16 %v4682
        %v7179 = vunpack.c.l.b16 %v4683
        %v7180 = vunpack.c.l.b16 %v4684
        %v7181 = vunpack.c.l.b16 %v4685
        %v7182 = vunpack.c.l.b16 %v4686
        %v7183 = vunpack.c.l.b16 %v4687
        %v7184 = vunpack.c.l.b16 %v4688
        %v7185 = vunpack.c.l.b16 %v4689
        %v7186 = vunpack.c.l.b16 %v4690
        %v7187 = vunpack.c.l.b16 %v4691
        %v7188 = vunpack.c.l.b16 %v4692
        %v7189 = vunpack.c.l.b16 %v4693
        %v7190 = vunpack.c.l.b16 %v4694
        %v7191 = vunpack.c.l.b16 %v4695
        %v7192 = vunpack.c.l.b16 %v4696
        %v7193 = vunpack.c.l.b16 %v4697
        %v7194 = vunpack.c.l.b16 %v4698
        %v7195 = vunpack.c.l.b16 %v4699
        %v7196 = vunpack.c.l.b16 %v4700
        %v7197 = vunpack.c.l.b16 %v4701
        %v7198 = vunpack.c.l.b16 %v4702
        %v7199 = vunpack.c.l.b16 %v4703
        %v7200 = vunpack.c.l.b16 %v4704
        %v7201 = vunpack.c.l.b16 %v4705
        %v7202 = vunpack.c.l.b16 %v4706
        %v7203 = vunpack.c.l.b16 %v4707
        %v7204 = vunpack.c.l.b16 %v4708
        %v7205 = vunpack.c.l.b16 %v4709
        %v7206 = vunpack.c.l.b16 %v4710
        %v7207 = vunpack.c.l.b16 %v4711
        %v7208 = vunpack.c.l.b16 %v4712
        %v7209 = vunpack.c.l.b16 %v4713
        %v7210 = vunpack.c.l.b16 %v4714
        %v7211 = vunpack.c.l.b16 %v4715
        %v7212 = vunpack.c.l.b16 %v4716
        %v7213 = vunpack.c.l.b16 %v4717
        %v7214 = vunpack.c.l.b16 %v4718
        %v7215 = vunpack.c.l.b16 %v4719
        %v7216 = vunpack.c.l.b16 %v4720
        %v7217 = vunpack.c.l.b16 %v4721
        %v7218 = vunpack.c.l.b16 %v4722
        %v7219 = vunpack.c.l.b16 %v4723
        %v7220 = vunpack.c.l.b16 %v4724
        %v7221 = vunpack.c.l.b16 %v4725
        %v7222 = vunpack.c.l.b16 %v4726
        %v7223 = vunpack.c.l.b16 %v4727
        %v7224 = vunpack.c.l.b16 %v4728
        %v7225 = vunpack.c.l.b16 %v4729
        %v7226 = vunpack.c.l.b16 %v4730
        %v7227 = vunpack.c.l.b16 %v4731
        %v7228 = vunpack.c.l.b16 %v4732
        %v7229 = vunpack.c.l.b16 %v4733
        %v7230 = vunpack.c.l.b16 %v4734
        %v7231 = vunpack.c.l.b16 %v4735
        %v7232 = vunpack.c.l.b16 %v4736
        %v7233 = vunpack.c.l.b16 %v4737
        %v7234 = vunpack.c.l.b16 %v4738
        %v7235 = vunpack.c.l.b16 %v4739
        %v7236 = vunpack.c.l.b16 %v4740
        %v7237 = vunpack.c.l.b16 %v4741
        %v7238 = vunpack.c.l.b16 %v4742
        %v7239 = vunpack.c.l.b16 %v4743
        %v7240 = vunpack.c.l.b16 %v4744
        %v7241 = vunpack.c.l.b16 %v4745
        %v7242 = vunpack.c.l.b16 %v4746
        %v7243 = vunpack.c.l.b16 %v4747
        %v7244 = vunpack.c.l.b16 %v4748
        %v7245 = vunpack.c.l.b16 %v4749
        %v7246 = vunpack.c.l.b16 %v4750
        %v7247 = vunpack.c.l.b16 %v4751
        %v7248 = vunpack.c.l.b16 %v4752
        %v7249 = vunpack.c.l.b16 %v4753
        %v7250 = vunpack.c.l.b16 %v4754
        %v7251 = vunpack.c.l.b16 %v4755
        %v7252 = vunpack.c.l.b16 %v4756
        %v7253 = vunpack.c.l.b16 %v4757
        %v7254 = vunpack.c.l.b16 %v4758
        %v7255 = vunpack.c.l.b16 %v4759
        %v7256 = vunpack.c.l.b16 %v4760
        %v7257 = vunpack.c.l.b16 %v4761
        %v7258 = vunpack.c.l.b16 %v4762
        %v7259 = vunpack.c.l.b16 %v4763
        %v7260 = vunpack.c.l.b16 %v4764
        %v7261 = vunpack.c.l.b16 %v4765
        %v7262 = vunpack.c.l.b16 %v4766
        %v7263 = vunpack.c.l.b16 %v4767
        %v7264 = vunpack.c.l.b16 %v4768
        %v7265 = vunpack.c.l.b16 %v4769
        %v7266 = vunpack.c.l.b16 %v4770
        %v7267 = vunpack.c.l.b16 %v4771
        %v7268 = vunpack.c.l.b16 %v4772
        %v7269 = vunpack.c.l.b16 %v4773
        %v7270 = vunpack.c.l.b16 %v4774
        %v7271 = vunpack.c.l.b16 %v4775
        %v7272 = vunpack.c.l.b16 %v4776
        %v7273 = vpack.c.b16 %v7130, %v7129
        %v7274 = vpack.c.b16 %v7132, %v7131
        %v7275 = vpack.c.b16 %v7134, %v7133
        %v7276 = vpack.c.b16 %v7136, %v7135
        %v7277 = vpack.c.b16 %v7138, %v7137
        %v7278 = vpack.c.b16 %v7140, %v7139
        %v7279 = vpack.c.b16 %v7142, %v7141
        %v7280 = vpack.c.b16 %v7144, %v7143
        %v7281 = vpack.c.b16 %v7146, %v7145
        %v7282 = vpack.c.b16 %v7148, %v7147
        %v7283 = vpack.c.b16 %v7150, %v7149
        %v7284 = vpack.c.b16 %v7152, %v7151
        %v7285 = vpack.c.b16 %v7154, %v7153
        %v7286 = vpack.c.b16 %v7156, %v7155
        %v7287 = vpack.c.b16 %v7158, %v7157
        %v7288 = vpack.c.b16 %v7160, %v7159
        %v7289 = vpack.c.b16 %v7162, %v7161
        %v7290 = vpack.c.b16 %v7164, %v7163
        %v7291 = vpack.c.b16 %v7166, %v7165
        %v7292 = vpack.c.b16 %v7168, %v7167
        %v7293 = vpack.c.b16 %v7170, %v7169
        %v7294 = vpack.c.b16 %v7172, %v7171
        %v7295 = vpack.c.b16 %v7174, %v7173
        %v7296 = vpack.c.b16 %v7176, %v7175
        %v7297 = vpack.c.b16 %v7178, %v7177
        %v7298 = vpack.c.b16 %v7180, %v7179
        %v7299 = vpack.c.b16 %v7182, %v7181
        %v7300 = vpack.c.b16 %v7184, %v7183
        %v7301 = vpack.c.b16 %v7186, %v7185
        %v7302 = vpack.c.b16 %v7188, %v7187
        %v7303 = vpack.c.b16 %v7190, %v7189
        %v7304 = vpack.c.b16 %v7192, %v7191
        %v7305 = vpack.c.b16 %v7194, %v7193
        %v7306 = vpack.c.b16 %v7196, %v7195
        %v7307 = vpack.c.b16 %v7198, %v7197
        %v7308 = vpack.c.b16 %v7200, %v7199
        %v7309 = vpack.c.b16 %v7202, %v7201
        %v7310 = vpack.c.b16 %v7204, %v7203
        %v7311 = vpack.c.b16 %v7206, %v7205
        %v7312 = vpack.c.b16 %v7208, %v7207
        %v7313 = vpack.c.b16 %v7210, %v7209
        %v7314 = vpack.c.b16 %v7212, %v7211
        %v7315 = vpack.c.b16 %v7214, %v7213
        %v7316 = vpack.c.b16 %v7216, %v7215
        %v7317 = vpack.c.b16 %v7218, %v7217
        %v7318 = vpack.c.b16 %v7220, %v7219
        %v7319 = vpack.c.b16 %v7222, %v7221
        %v7320 = vpack.c.b16 %v7224, %v7223
        %v7321 = vpack.c.b16 %v7226, %v7225
        %v7322 = vpack.c.b16 %v7228, %v7227
        %v7323 = vpack.c.b16 %v7230, %v7229
        %v7324 = vpack.c.b16 %v7232, %v7231
        %v7325 = vpack.c.b16 %v7234, %v7233
        %v7326 = vpack.c.b16 %v7236, %v7235
        %v7327 = vpack.c.b16 %v7238, %v7237
        %v7328 = vpack.c.b16 %v7240, %v7239
        %v7329 = vpack.c.b16 %v7242, %v7241
        %v7330 = vpack.c.b16 %v7244, %v7243
        %v7331 = vpack.c.b16 %v7246, %v7245
        %v7332 = vpack.c.b16 %v7248, %v7247
        %v7333 = vpack.c.b16 %v7250, %v7249
        %v7334 = vpack.c.b16 %v7252, %v7251
        %v7335 = vpack.c.b16 %v7254, %v7253
        %v7336 = vpack.c.b16 %v7256, %v7255
        %v7337 = vpack.c.b16 %v7258, %v7257
        %v7338 = vpack.c.b16 %v7260, %v7259
        %v7339 = vpack.c.b16 %v7262, %v7261
        %v7340 = vpack.c.b16 %v7264, %v7263
        %v7341 = vpack.c.b16 %v7266, %v7265
        %v7342 = vpack.c.b16 %v7268, %v7267
        %v7343 = vpack.c.b16 %v7270, %v7269
        %v7344 = vpack.c.b16 %v7272, %v7271
        %7417 = vmatprep.subr.bf16.mxu0 0
        %7418 = vmatpush1.bf16.msra.mxu0 %v7280
        %7419 = vmatprep.subr.bf16.mxu0 0
        %7420 = vmatpush1.bf16.msra.mxu0 %v7279
        %7421 = vmatprep.subr.bf16.mxu0 0
        %7422 = vmatpush1.bf16.msra.mxu0 %v7278
        %7423 = vmatprep.subr.bf16.mxu0 0
        %7424 = vmatpush1.bf16.msra.mxu0 %v7277
        %7425 = vmatprep.subr.bf16.mxu0 0
        %7426 = vmatpush1.bf16.msra.mxu0 %v7276
        %7427 = vmatprep.subr.bf16.mxu0 0
        %7428 = vmatpush1.bf16.msra.mxu0 %v7275
        %7429 = vmatprep.subr.bf16.mxu0 0
        %7430 = vmatpush1.bf16.msra.mxu0 %v7274
        %7431 = vmatprep.subr.bf16.mxu0 0
        %7432 = vmatpush1.bf16.msra.mxu0 %v7273
        %7433 = vmatprep.subr.bf16.mxu0 0
        %7434 = vmatpush2.bf16.msra.mxu0 %v7288
        %7435 = vmatprep.subr.bf16.mxu0 0
        %7436 = vmatpush2.bf16.msra.mxu0 %v7287
        %7437 = vmatprep.subr.bf16.mxu0 0
        %7438 = vmatpush2.bf16.msra.mxu0 %v7286
        %7439 = vmatprep.subr.bf16.mxu0 0
        %7440 = vmatpush2.bf16.msra.mxu0 %v7285
        %7441 = vmatprep.subr.bf16.mxu0 0
        %7442 = vmatpush2.bf16.msra.mxu0 %v7284
        %7443 = vmatprep.subr.bf16.mxu0 0
        %7444 = vmatpush2.bf16.msra.mxu0 %v7283
        %7445 = vmatprep.subr.bf16.mxu0 0
        %7446 = vmatpush2.bf16.msra.mxu0 %v7282
        %7447 = vmatprep.subr.bf16.mxu0 0
        %7448 = vmatpush2.bf16.msra.mxu0 %v7281
        %7449 = vmatprep.mubr.bf16.mxu0 %v4909
        %7450 = vmatmul.mubr.bf16.gmra.mxu0 %v4905
        %v7451 = vpop.f32.mrf.mxu0
        %v7452 = vadd.f32 0.0, %v7451
        %v7453 = vpop.f32.mrf.mxu0
        %v7454 = vpop.f32.mrf.mxu0
        %v7455 = vadd.f32 0.0, %v7454
        %v7456 = vpop.f32.mrf.mxu0
        %7457 = vmatprep.mubr.bf16.mxu0 %v5094
        %7458 = vmatmul.mubr.bf16.gmra.mxu0 %v5090
        %v7459 = vpop.f32.mrf.mxu0
        %v7460 = vadd.f32 0.0, %v7459
        %v7461 = vpop.f32.mrf.mxu0
        %v7462 = vpop.f32.mrf.mxu0
        %v7463 = vadd.f32 0.0, %v7462
        %v7464 = vpop.f32.mrf.mxu0
        %7465 = vmatprep.mubr.bf16.mxu0 %v5279
        %7466 = vmatmul.mubr.bf16.gmra.mxu0 %v5275
        %v7467 = vpop.f32.mrf.mxu0
        %v7468 = vadd.f32 0.0, %v7467
        %v7469 = vpop.f32.mrf.mxu0
        %v7470 = vpop.f32.mrf.mxu0
        %v7471 = vadd.f32 0.0, %v7470
        %v7472 = vpop.f32.mrf.mxu0
        %7473 = vmatprep.mubr.bf16.mxu0 %v5464
        %7474 = vmatmul.mubr.bf16.gmra.mxu0 %v5460
        %v7475 = vpop.f32.mrf.mxu0
        %v7476 = vadd.f32 0.0, %v7475
        %v7477 = vpop.f32.mrf.mxu0
        %v7478 = vpop.f32.mrf.mxu0
        %v7479 = vadd.f32 0.0, %v7478
        %v7480 = vpop.f32.mrf.mxu0
        %7481 = vmatprep.mubr.bf16.mxu0 %v5649
        %7482 = vmatmul.mubr.bf16.gmra.mxu0 %v5645
        %v7483 = vpop.f32.mrf.mxu0
        %v7484 = vadd.f32 0.0, %v7483
        %v7485 = vpop.f32.mrf.mxu0
        %v7486 = vpop.f32.mrf.mxu0
        %v7487 = vadd.f32 0.0, %v7486
        %v7488 = vpop.f32.mrf.mxu0
        %7489 = vmatprep.mubr.bf16.mxu0 %v5834
        %7490 = vmatmul.mubr.bf16.gmra.mxu0 %v5830
        %v7491 = vpop.f32.mrf.mxu0
        %v7492 = vadd.f32 0.0, %v7491
        %v7493 = vpop.f32.mrf.mxu0
        %v7494 = vpop.f32.mrf.mxu0
        %v7495 = vadd.f32 0.0, %v7494
        %v7496 = vpop.f32.mrf.mxu0
        %7497 = vmatprep.mubr.bf16.mxu0 %v6019
        %7498 = vmatmul.mubr.bf16.gmra.mxu0 %v6015
        %v7499 = vpop.f32.mrf.mxu0
        %v7500 = vadd.f32 0.0, %v7499
        %v7501 = vpop.f32.mrf.mxu0
        %v7502 = vpop.f32.mrf.mxu0
        %v7503 = vadd.f32 0.0, %v7502
        %v7504 = vpop.f32.mrf.mxu0
        %7505 = vmatprep.mubr.bf16.mxu0 %v6204
        %7506 = vmatmul.mubr.bf16.gmra.mxu0 %v6200
        %v7507 = vpop.f32.mrf.mxu0
        %v7508 = vadd.f32 0.0, %v7507
        %v7509 = vpop.f32.mrf.mxu0
        %v7510 = vpop.f32.mrf.mxu0
        %v7511 = vadd.f32 0.0, %v7510
        %v7512 = vpop.f32.mrf.mxu0
        %7513 = vmatprep.mubr.bf16.mxu0 %v6389
        %7514 = vmatmul.mubr.bf16.gmra.mxu0 %v6385
        %v7515 = vpop.f32.mrf.mxu0
        %v7516 = vadd.f32 0.0, %v7515
        %v7517 = vpop.f32.mrf.mxu0
        %v7518 = vpop.f32.mrf.mxu0
        %v7519 = vadd.f32 0.0, %v7518
        %v7520 = vpop.f32.mrf.mxu0
        %7521 = vmatprep.mubr.bf16.mxu0 %v6574
        %7522 = vmatmul.mubr.bf16.gmra.mxu0 %v6570
        %v7523 = vpop.f32.mrf.mxu0
        %v7524 = vadd.f32 0.0, %v7523
        %v7525 = vpop.f32.mrf.mxu0
        %v7526 = vpop.f32.mrf.mxu0
        %v7527 = vadd.f32 0.0, %v7526
        %v7528 = vpop.f32.mrf.mxu0
        %7529 = vmatprep.mubr.bf16.mxu0 %v6759
        %7530 = vmatmul.mubr.bf16.gmra.mxu0 %v6755
        %v7531 = vpop.f32.mrf.mxu0
        %v7532 = vadd.f32 0.0, %v7531
        %v7533 = vpop.f32.mrf.mxu0
        %v7534 = vpop.f32.mrf.mxu0
        %v7535 = vadd.f32 0.0, %v7534
        %v7536 = vpop.f32.mrf.mxu0
        %7537 = vmatprep.mubr.bf16.mxu0 %v6850
        %7538 = vmatmul.mubr.bf16.gmra.mxu0 %v6836
        %v7539 = vpop.f32.mrf.mxu0
        %v7540 = vadd.f32 0.0, %v7539
        %v7541 = vpop.f32.mrf.mxu0
        %v7542 = vpop.f32.mrf.mxu0
        %v7543 = vpop.f32.mrf.mxu0
        %7544 = vdwg.mxu0
        %7545 = vmatprep.subr.bf16.mxu0 0
        %7546 = vmatpush1.bf16.msra.mxu0 %v7296
        %7547 = vmatprep.subr.bf16.mxu0 0
        %7548 = vmatpush1.bf16.msra.mxu0 %v7295
        %7549 = vmatprep.subr.bf16.mxu0 0
        %7550 = vmatpush1.bf16.msra.mxu0 %v7294
        %7551 = vmatprep.subr.bf16.mxu0 0
        %7552 = vmatpush1.bf16.msra.mxu0 %v7293
        %7553 = vmatprep.subr.bf16.mxu0 0
        %7554 = vmatpush1.bf16.msra.mxu0 %v7292
        %7555 = vmatprep.subr.bf16.mxu0 0
        %7556 = vmatpush1.bf16.msra.mxu0 %v7291
        %7557 = vmatprep.subr.bf16.mxu0 0
        %7558 = vmatpush1.bf16.msra.mxu0 %v7290
        %7559 = vmatprep.subr.bf16.mxu0 0
        %7560 = vmatpush1.bf16.msra.mxu0 %v7289
        %7561 = vmatprep.subr.bf16.mxu0 0
        %7562 = vmatpush2.bf16.msra.mxu0 %v7304
        %7563 = vmatprep.subr.bf16.mxu0 0
        %7564 = vmatpush2.bf16.msra.mxu0 %v7303
        %7565 = vmatprep.subr.bf16.mxu0 0
        %7566 = vmatpush2.bf16.msra.mxu0 %v7302
        %7567 = vmatprep.subr.bf16.mxu0 0
        %7568 = vmatpush2.bf16.msra.mxu0 %v7301
        %7569 = vmatprep.subr.bf16.mxu0 0
        %7570 = vmatpush2.bf16.msra.mxu0 %v7300
        %7571 = vmatprep.subr.bf16.mxu0 0
        %7572 = vmatpush2.bf16.msra.mxu0 %v7299
        %7573 = vmatprep.subr.bf16.mxu0 0
        %7574 = vmatpush2.bf16.msra.mxu0 %v7298
        %7575 = vmatprep.subr.bf16.mxu0 0
        %7576 = vmatpush2.bf16.msra.mxu0 %v7297
        %7577 = vmatprep.mubr.bf16.mxu0 %v4910
        %7578 = vmatmul.mubr.bf16.gmra.mxu0 %v4906
        %v7579 = vpop.f32.mrf.mxu0
        %v7580 = vadd.f32 %v7452, %v7579
        %v7581 = vpop.f32.mrf.mxu0
        %v7582 = vpop.f32.mrf.mxu0
        %v7583 = vadd.f32 %v7455, %v7582
        %v7584 = vpop.f32.mrf.mxu0
        %7585 = vmatprep.mubr.bf16.mxu0 %v5095
        %7586 = vmatmul.mubr.bf16.gmra.mxu0 %v5091
        %v7587 = vpop.f32.mrf.mxu0
        %v7588 = vadd.f32 %v7460, %v7587
        %v7589 = vpop.f32.mrf.mxu0
        %v7590 = vpop.f32.mrf.mxu0
        %v7591 = vadd.f32 %v7463, %v7590
        %v7592 = vpop.f32.mrf.mxu0
        %7593 = vmatprep.mubr.bf16.mxu0 %v5280
        %7594 = vmatmul.mubr.bf16.gmra.mxu0 %v5276
        %v7595 = vpop.f32.mrf.mxu0
        %v7596 = vadd.f32 %v7468, %v7595
        %v7597 = vpop.f32.mrf.mxu0
        %v7598 = vpop.f32.mrf.mxu0
        %v7599 = vadd.f32 %v7471, %v7598
        %v7600 = vpop.f32.mrf.mxu0
        %7601 = vmatprep.mubr.bf16.mxu0 %v5465
        %7602 = vmatmul.mubr.bf16.gmra.mxu0 %v5461
        %v7603 = vpop.f32.mrf.mxu0
        %v7604 = vadd.f32 %v7476, %v7603
        %v7605 = vpop.f32.mrf.mxu0
        %v7606 = vpop.f32.mrf.mxu0
        %v7607 = vadd.f32 %v7479, %v7606
        %v7608 = vpop.f32.mrf.mxu0
        %7609 = vmatprep.mubr.bf16.mxu0 %v5650
        %7610 = vmatmul.mubr.bf16.gmra.mxu0 %v5646
        %v7611 = vpop.f32.mrf.mxu0
        %v7612 = vadd.f32 %v7484, %v7611
        %v7613 = vpop.f32.mrf.mxu0
        %v7614 = vpop.f32.mrf.mxu0
        %v7615 = vadd.f32 %v7487, %v7614
        %v7616 = vpop.f32.mrf.mxu0
        %7617 = vmatprep.mubr.bf16.mxu0 %v5835
        %7618 = vmatmul.mubr.bf16.gmra.mxu0 %v5831
        %v7619 = vpop.f32.mrf.mxu0
        %v7620 = vadd.f32 %v7492, %v7619
        %v7621 = vpop.f32.mrf.mxu0
        %v7622 = vpop.f32.mrf.mxu0
        %v7623 = vadd.f32 %v7495, %v7622
        %v7624 = vpop.f32.mrf.mxu0
        %7625 = vmatprep.mubr.bf16.mxu0 %v6020
        %7626 = vmatmul.mubr.bf16.gmra.mxu0 %v6016
        %v7627 = vpop.f32.mrf.mxu0
        %v7628 = vadd.f32 %v7500, %v7627
        %v7629 = vpop.f32.mrf.mxu0
        %v7630 = vpop.f32.mrf.mxu0
        %v7631 = vadd.f32 %v7503, %v7630
        %v7632 = vpop.f32.mrf.mxu0
        %7633 = vmatprep.mubr.bf16.mxu0 %v6205
        %7634 = vmatmul.mubr.bf16.gmra.mxu0 %v6201
        %v7635 = vpop.f32.mrf.mxu0
        %v7636 = vadd.f32 %v7508, %v7635
        %v7637 = vpop.f32.mrf.mxu0
        %v7638 = vpop.f32.mrf.mxu0
        %v7639 = vadd.f32 %v7511, %v7638
        %v7640 = vpop.f32.mrf.mxu0
        %7641 = vmatprep.mubr.bf16.mxu0 %v6390
        %7642 = vmatmul.mubr.bf16.gmra.mxu0 %v6386
        %v7643 = vpop.f32.mrf.mxu0
        %v7644 = vadd.f32 %v7516, %v7643
        %v7645 = vpop.f32.mrf.mxu0
        %v7646 = vpop.f32.mrf.mxu0
        %v7647 = vadd.f32 %v7519, %v7646
        %v7648 = vpop.f32.mrf.mxu0
        %7649 = vmatprep.mubr.bf16.mxu0 %v6575
        %7650 = vmatmul.mubr.bf16.gmra.mxu0 %v6571
        %v7651 = vpop.f32.mrf.mxu0
        %v7652 = vadd.f32 %v7524, %v7651
        %v7653 = vpop.f32.mrf.mxu0
        %v7654 = vpop.f32.mrf.mxu0
        %v7655 = vadd.f32 %v7527, %v7654
        %v7656 = vpop.f32.mrf.mxu0
        %7657 = vmatprep.mubr.bf16.mxu0 %v6760
        %7658 = vmatmul.mubr.bf16.gmra.mxu0 %v6756
        %v7659 = vpop.f32.mrf.mxu0
        %v7660 = vadd.f32 %v7532, %v7659
        %v7661 = vpop.f32.mrf.mxu0
        %v7662 = vpop.f32.mrf.mxu0
        %v7663 = vadd.f32 %v7535, %v7662
        %v7664 = vpop.f32.mrf.mxu0
        %7665 = vmatprep.mubr.bf16.mxu0 %v6860
        %7666 = vmatmul.mubr.bf16.gmra.mxu0 %v6858
        %v7667 = vpop.f32.mrf.mxu0
        %v7668 = vadd.f32 %v7540, %v7667
        %v7669 = vpop.f32.mrf.mxu0
        %v7670 = vpop.f32.mrf.mxu0
        %v7671 = vpop.f32.mrf.mxu0
        %7672 = vdwg.mxu0
        %7673 = vmatprep.subr.bf16.mxu0 0
        %7674 = vmatpush1.bf16.msra.mxu0 %v7312
        %7675 = vmatprep.subr.bf16.mxu0 0
        %7676 = vmatpush1.bf16.msra.mxu0 %v7311
        %7677 = vmatprep.subr.bf16.mxu0 0
        %7678 = vmatpush1.bf16.msra.mxu0 %v7310
        %7679 = vmatprep.subr.bf16.mxu0 0
        %7680 = vmatpush1.bf16.msra.mxu0 %v7309
        %7681 = vmatprep.subr.bf16.mxu0 0
        %7682 = vmatpush1.bf16.msra.mxu0 %v7308
        %7683 = vmatprep.subr.bf16.mxu0 0
        %7684 = vmatpush1.bf16.msra.mxu0 %v7307
        %7685 = vmatprep.subr.bf16.mxu0 0
        %7686 = vmatpush1.bf16.msra.mxu0 %v7306
        %7687 = vmatprep.subr.bf16.mxu0 0
        %7688 = vmatpush1.bf16.msra.mxu0 %v7305
        %7689 = vmatprep.subr.bf16.mxu0 0
        %7690 = vmatpush2.bf16.msra.mxu0 %v7320
        %7691 = vmatprep.subr.bf16.mxu0 0
        %7692 = vmatpush2.bf16.msra.mxu0 %v7319
        %7693 = vmatprep.subr.bf16.mxu0 0
        %7694 = vmatpush2.bf16.msra.mxu0 %v7318
        %7695 = vmatprep.subr.bf16.mxu0 0
        %7696 = vmatpush2.bf16.msra.mxu0 %v7317
        %7697 = vmatprep.subr.bf16.mxu0 0
        %7698 = vmatpush2.bf16.msra.mxu0 %v7316
        %7699 = vmatprep.subr.bf16.mxu0 0
        %7700 = vmatpush2.bf16.msra.mxu0 %v7315
        %7701 = vmatprep.subr.bf16.mxu0 0
        %7702 = vmatpush2.bf16.msra.mxu0 %v7314
        %7703 = vmatprep.subr.bf16.mxu0 0
        %7704 = vmatpush2.bf16.msra.mxu0 %v7313
        %7705 = vmatprep.mubr.bf16.mxu0 %v4911
        %7706 = vmatmul.mubr.bf16.gmra.mxu0 %v4907
        %v7707 = vpop.f32.mrf.mxu0
        %v7708 = vadd.f32 %v7580, %v7707
        %v7709 = vpop.f32.mrf.mxu0
        %v7710 = vpop.f32.mrf.mxu0
        %v7711 = vadd.f32 %v7583, %v7710
        %v7712 = vpop.f32.mrf.mxu0
        %7713 = vmatprep.mubr.bf16.mxu0 %v5096
        %7714 = vmatmul.mubr.bf16.gmra.mxu0 %v5092
        %v7715 = vpop.f32.mrf.mxu0
        %v7716 = vadd.f32 %v7588, %v7715
        %v7717 = vpop.f32.mrf.mxu0
        %v7718 = vpop.f32.mrf.mxu0
        %v7719 = vadd.f32 %v7591, %v7718
        %v7720 = vpop.f32.mrf.mxu0
        %7721 = vmatprep.mubr.bf16.mxu0 %v5281
        %7722 = vmatmul.mubr.bf16.gmra.mxu0 %v5277
        %v7723 = vpop.f32.mrf.mxu0
        %v7724 = vadd.f32 %v7596, %v7723
        %v7725 = vpop.f32.mrf.mxu0
        %v7726 = vpop.f32.mrf.mxu0
        %v7727 = vadd.f32 %v7599, %v7726
        %v7728 = vpop.f32.mrf.mxu0
        %7729 = vmatprep.mubr.bf16.mxu0 %v5466
        %7730 = vmatmul.mubr.bf16.gmra.mxu0 %v5462
        %v7731 = vpop.f32.mrf.mxu0
        %v7732 = vadd.f32 %v7604, %v7731
        %v7733 = vpop.f32.mrf.mxu0
        %v7734 = vpop.f32.mrf.mxu0
        %v7735 = vadd.f32 %v7607, %v7734
        %v7736 = vpop.f32.mrf.mxu0
        %7737 = vmatprep.mubr.bf16.mxu0 %v5651
        %7738 = vmatmul.mubr.bf16.gmra.mxu0 %v5647
        %v7739 = vpop.f32.mrf.mxu0
        %v7740 = vadd.f32 %v7612, %v7739
        %v7741 = vpop.f32.mrf.mxu0
        %v7742 = vpop.f32.mrf.mxu0
        %v7743 = vadd.f32 %v7615, %v7742
        %v7744 = vpop.f32.mrf.mxu0
        %7745 = vmatprep.mubr.bf16.mxu0 %v5836
        %7746 = vmatmul.mubr.bf16.gmra.mxu0 %v5832
        %v7747 = vpop.f32.mrf.mxu0
        %v7748 = vadd.f32 %v7620, %v7747
        %v7749 = vpop.f32.mrf.mxu0
        %v7750 = vpop.f32.mrf.mxu0
        %v7751 = vadd.f32 %v7623, %v7750
        %v7752 = vpop.f32.mrf.mxu0
        %7753 = vmatprep.mubr.bf16.mxu0 %v6021
        %7754 = vmatmul.mubr.bf16.gmra.mxu0 %v6017
        %v7755 = vpop.f32.mrf.mxu0
        %v7756 = vadd.f32 %v7628, %v7755
        %v7757 = vpop.f32.mrf.mxu0
        %v7758 = vpop.f32.mrf.mxu0
        %v7759 = vadd.f32 %v7631, %v7758
        %v7760 = vpop.f32.mrf.mxu0
        %7761 = vmatprep.mubr.bf16.mxu0 %v6206
        %7762 = vmatmul.mubr.bf16.gmra.mxu0 %v6202
        %v7763 = vpop.f32.mrf.mxu0
        %v7764 = vadd.f32 %v7636, %v7763
        %v7765 = vpop.f32.mrf.mxu0
        %v7766 = vpop.f32.mrf.mxu0
        %v7767 = vadd.f32 %v7639, %v7766
        %v7768 = vpop.f32.mrf.mxu0
        %7769 = vmatprep.mubr.bf16.mxu0 %v6391
        %7770 = vmatmul.mubr.bf16.gmra.mxu0 %v6387
        %v7771 = vpop.f32.mrf.mxu0
        %v7772 = vadd.f32 %v7644, %v7771
        %v7773 = vpop.f32.mrf.mxu0
        %v7774 = vpop.f32.mrf.mxu0
        %v7775 = vadd.f32 %v7647, %v7774
        %v7776 = vpop.f32.mrf.mxu0
        %7777 = vmatprep.mubr.bf16.mxu0 %v6576
        %7778 = vmatmul.mubr.bf16.gmra.mxu0 %v6572
        %v7779 = vpop.f32.mrf.mxu0
        %v7780 = vadd.f32 %v7652, %v7779
        %v7781 = vpop.f32.mrf.mxu0
        %v7782 = vpop.f32.mrf.mxu0
        %v7783 = vadd.f32 %v7655, %v7782
        %v7784 = vpop.f32.mrf.mxu0
        %7785 = vmatprep.mubr.bf16.mxu0 %v6761
        %7786 = vmatmul.mubr.bf16.gmra.mxu0 %v6757
        %v7787 = vpop.f32.mrf.mxu0
        %v7788 = vadd.f32 %v7660, %v7787
        %v7789 = vpop.f32.mrf.mxu0
        %v7790 = vpop.f32.mrf.mxu0
        %v7791 = vadd.f32 %v7663, %v7790
        %v7792 = vpop.f32.mrf.mxu0
        %7793 = vmatprep.mubr.bf16.mxu0 %v6857
        %7794 = vmatmul.mubr.bf16.gmra.mxu0 %v6843
        %v7795 = vpop.f32.mrf.mxu0
        %v7796 = vadd.f32 %v7668, %v7795
        %v7797 = vpop.f32.mrf.mxu0
        %v7798 = vpop.f32.mrf.mxu0
        %v7799 = vpop.f32.mrf.mxu0
        %7800 = vdwg.mxu0
        %7801 = vmatprep.subr.bf16.mxu0 0
        %7802 = vmatpush1.bf16.msra.mxu0 %v7328
        %7803 = vmatprep.subr.bf16.mxu0 0
        %7804 = vmatpush1.bf16.msra.mxu0 %v7327
        %7805 = vmatprep.subr.bf16.mxu0 0
        %7806 = vmatpush1.bf16.msra.mxu0 %v7326
        %7807 = vmatprep.subr.bf16.mxu0 0
        %7808 = vmatpush1.bf16.msra.mxu0 %v7325
        %7809 = vmatprep.subr.bf16.mxu0 0
        %7810 = vmatpush1.bf16.msra.mxu0 %v7324
        %7811 = vmatprep.subr.bf16.mxu0 0
        %7812 = vmatpush1.bf16.msra.mxu0 %v7323
        %7813 = vmatprep.subr.bf16.mxu0 0
        %7814 = vmatpush1.bf16.msra.mxu0 %v7322
        %7815 = vmatprep.subr.bf16.mxu0 0
        %7816 = vmatpush1.bf16.msra.mxu0 %v7321
        %7817 = vmatprep.subr.bf16.mxu0 0
        %7818 = vmatpush2.bf16.msra.mxu0 %v7336
        %7819 = vmatprep.subr.bf16.mxu0 0
        %7820 = vmatpush2.bf16.msra.mxu0 %v7335
        %7821 = vmatprep.subr.bf16.mxu0 0
        %7822 = vmatpush2.bf16.msra.mxu0 %v7334
        %7823 = vmatprep.subr.bf16.mxu0 0
        %7824 = vmatpush2.bf16.msra.mxu0 %v7333
        %7825 = vmatprep.subr.bf16.mxu0 0
        %7826 = vmatpush2.bf16.msra.mxu0 %v7332
        %7827 = vmatprep.subr.bf16.mxu0 0
        %7828 = vmatpush2.bf16.msra.mxu0 %v7331
        %7829 = vmatprep.subr.bf16.mxu0 0
        %7830 = vmatpush2.bf16.msra.mxu0 %v7330
        %7831 = vmatprep.subr.bf16.mxu0 0
        %7832 = vmatpush2.bf16.msra.mxu0 %v7329
        %7833 = vmatprep.mubr.bf16.mxu0 %v4912
        %7834 = vmatmul.mubr.bf16.gmra.mxu0 %v4908
        %v7835 = vpop.f32.mrf.mxu0
        %v7836 = vadd.f32 %v7708, %v7835
        %v7837 = vpop.f32.mrf.mxu0
        %v7838 = vpop.f32.mrf.mxu0
        %v7839 = vadd.f32 %v7711, %v7838
        %v7840 = vpop.f32.mrf.mxu0
        %7841 = vmatprep.mubr.bf16.mxu0 %v5097
        %7842 = vmatmul.mubr.bf16.gmra.mxu0 %v5093
        %v7843 = vpop.f32.mrf.mxu0
        %v7844 = vadd.f32 %v7716, %v7843
        %v7845 = vpop.f32.mrf.mxu0
        %v7846 = vpop.f32.mrf.mxu0
        %v7847 = vadd.f32 %v7719, %v7846
        %v7848 = vpop.f32.mrf.mxu0
        %7849 = vmatprep.mubr.bf16.mxu0 %v5282
        %7850 = vmatmul.mubr.bf16.gmra.mxu0 %v5278
        %v7851 = vpop.f32.mrf.mxu0
        %v7852 = vadd.f32 %v7724, %v7851
        %v7853 = vpop.f32.mrf.mxu0
        %v7854 = vpop.f32.mrf.mxu0
        %v7855 = vadd.f32 %v7727, %v7854
        %v7856 = vpop.f32.mrf.mxu0
        %7857 = vmatprep.mubr.bf16.mxu0 %v5467
        %7858 = vmatmul.mubr.bf16.gmra.mxu0 %v5463
        %v7859 = vpop.f32.mrf.mxu0
        %v7860 = vadd.f32 %v7732, %v7859
        %v7861 = vpop.f32.mrf.mxu0
        %v7862 = vpop.f32.mrf.mxu0
        %v7863 = vadd.f32 %v7735, %v7862
        %v7864 = vpop.f32.mrf.mxu0
        %7865 = vmatprep.mubr.bf16.mxu0 %v5652
        %7866 = vmatmul.mubr.bf16.gmra.mxu0 %v5648
        %v7867 = vpop.f32.mrf.mxu0
        %v7868 = vadd.f32 %v7740, %v7867
        %v7869 = vpop.f32.mrf.mxu0
        %v7870 = vpop.f32.mrf.mxu0
        %v7871 = vadd.f32 %v7743, %v7870
        %v7872 = vpop.f32.mrf.mxu0
        %7873 = vmatprep.mubr.bf16.mxu0 %v5837
        %7874 = vmatmul.mubr.bf16.gmra.mxu0 %v5833
        %v7875 = vpop.f32.mrf.mxu0
        %v7876 = vadd.f32 %v7748, %v7875
        %v7877 = vpop.f32.mrf.mxu0
        %v7878 = vpop.f32.mrf.mxu0
        %v7879 = vadd.f32 %v7751, %v7878
        %v7880 = vpop.f32.mrf.mxu0
        %7881 = vmatprep.mubr.bf16.mxu0 %v6022
        %7882 = vmatmul.mubr.bf16.gmra.mxu0 %v6018
        %v7883 = vpop.f32.mrf.mxu0
        %v7884 = vadd.f32 %v7756, %v7883
        %v7885 = vpop.f32.mrf.mxu0
        %v7886 = vpop.f32.mrf.mxu0
        %v7887 = vadd.f32 %v7759, %v7886
        %v7888 = vpop.f32.mrf.mxu0
        %7889 = vmatprep.mubr.bf16.mxu0 %v6207
        %7890 = vmatmul.mubr.bf16.gmra.mxu0 %v6203
        %v7891 = vpop.f32.mrf.mxu0
        %v7892 = vadd.f32 %v7764, %v7891
        %v7893 = vpop.f32.mrf.mxu0
        %v7894 = vpop.f32.mrf.mxu0
        %v7895 = vadd.f32 %v7767, %v7894
        %v7896 = vpop.f32.mrf.mxu0
        %7897 = vmatprep.mubr.bf16.mxu0 %v6392
        %7898 = vmatmul.mubr.bf16.gmra.mxu0 %v6388
        %v7899 = vpop.f32.mrf.mxu0
        %v7900 = vadd.f32 %v7772, %v7899
        %v7901 = vpop.f32.mrf.mxu0
        %v7902 = vpop.f32.mrf.mxu0
        %v7903 = vadd.f32 %v7775, %v7902
        %v7904 = vpop.f32.mrf.mxu0
        %7905 = vmatprep.mubr.bf16.mxu0 %v6577
        %7906 = vmatmul.mubr.bf16.gmra.mxu0 %v6573
        %v7907 = vpop.f32.mrf.mxu0
        %v7908 = vadd.f32 %v7780, %v7907
        %v7909 = vpop.f32.mrf.mxu0
        %v7910 = vpop.f32.mrf.mxu0
        %v7911 = vadd.f32 %v7783, %v7910
        %v7912 = vpop.f32.mrf.mxu0
        %7913 = vmatprep.mubr.bf16.mxu0 %v6762
        %7914 = vmatmul.mubr.bf16.gmra.mxu0 %v6758
        %v7915 = vpop.f32.mrf.mxu0
        %v7916 = vadd.f32 %v7788, %v7915
        %v7917 = vpop.f32.mrf.mxu0
        %v7918 = vpop.f32.mrf.mxu0
        %v7919 = vadd.f32 %v7791, %v7918
        %v7920 = vpop.f32.mrf.mxu0
        %7921 = vmatprep.mubr.bf16.mxu0 %v6861
        %7922 = vmatmul.mubr.bf16.gmra.mxu0 %v6859
        %v7923 = vpop.f32.mrf.mxu0
        %v7924 = vadd.f32 %v7796, %v7923
        %v7925 = vpop.f32.mrf.mxu0
        %v7926 = vpop.f32.mrf.mxu0
        %v7927 = vpop.f32.mrf.mxu0
        %7928 = vdwg.mxu0
        %7929 = vmatprep.subr.bf16.mxu0 0
        %7930 = vmatpush1.bf16.msra.mxu0 %v7344
        %7931 = vmatprep.subr.bf16.mxu0 0
        %7932 = vmatpush1.bf16.msra.mxu0 %v7343
        %7933 = vmatprep.subr.bf16.mxu0 0
        %7934 = vmatpush1.bf16.msra.mxu0 %v7342
        %7935 = vmatprep.subr.bf16.mxu0 0
        %7936 = vmatpush1.bf16.msra.mxu0 %v7341
        %7937 = vmatprep.subr.bf16.mxu0 0
        %7938 = vmatpush1.bf16.msra.mxu0 %v7340
        %7939 = vmatprep.subr.bf16.mxu0 0
        %7940 = vmatpush1.bf16.msra.mxu0 %v7339
        %7941 = vmatprep.subr.bf16.mxu0 0
        %7942 = vmatpush1.bf16.msra.mxu0 %v7338
        %7943 = vmatprep.subr.bf16.mxu0 0
        %7944 = vmatpush1.bf16.msra.mxu0 %v7337
        %7945 = vmatprep.subr.bf16.mxu0 0
        %7946 = vmatpush2.bf16.msra.mxu0 0
        %7947 = vmatprep.subr.bf16.mxu0 0
        %7948 = vmatpush2.bf16.msra.mxu0 0
        %7949 = vmatprep.subr.bf16.mxu0 0
        %7950 = vmatpush2.bf16.msra.mxu0 0
        %7951 = vmatprep.subr.bf16.mxu0 0
        %7952 = vmatpush2.bf16.msra.mxu0 0
        %7953 = vmatprep.subr.bf16.mxu0 0
        %7954 = vmatpush2.bf16.msra.mxu0 0
        %7955 = vmatprep.subr.bf16.mxu0 0
        %7956 = vmatpush2.bf16.msra.mxu0 0
        %7957 = vmatprep.subr.bf16.mxu0 0
        %7958 = vmatpush2.bf16.msra.mxu0 0
        %7959 = vmatprep.subr.bf16.mxu0 0
        %7960 = vmatpush2.bf16.msra.mxu0 0
        %7961 = vmatprep.mubr.bf16.mxu0 0
        %7962 = vmatmul.mubr.bf16.gmra.mxu0 %v4961
        %v7963 = vpop.f32.mrf.mxu0
        %v7964 = vadd.f32 %v7836, %v7963
        %v7965 = vpop.f32.mrf.mxu0
        %v7966 = vpop.f32.mrf.mxu0
        %v7967 = vadd.f32 %v7839, %v7966
        %v7968 = vpop.f32.mrf.mxu0
        %7969 = vmatprep.mubr.bf16.mxu0 0
        %7970 = vmatmul.mubr.bf16.gmra.mxu0 %v5146
        %v7971 = vpop.f32.mrf.mxu0
        %v7972 = vadd.f32 %v7844, %v7971
        %v7973 = vpop.f32.mrf.mxu0
        %v7974 = vpop.f32.mrf.mxu0
        %v7975 = vadd.f32 %v7847, %v7974
        %v7976 = vpop.f32.mrf.mxu0
        %7977 = vmatprep.mubr.bf16.mxu0 0
        %7978 = vmatmul.mubr.bf16.gmra.mxu0 %v5331
        %v7979 = vpop.f32.mrf.mxu0
        %v7980 = vadd.f32 %v7852, %v7979
        %v7981 = vpop.f32.mrf.mxu0
        %v7982 = vpop.f32.mrf.mxu0
        %v7983 = vadd.f32 %v7855, %v7982
        %v7984 = vpop.f32.mrf.mxu0
        %7985 = vmatprep.mubr.bf16.mxu0 0
        %7986 = vmatmul.mubr.bf16.gmra.mxu0 %v5516
        %v7987 = vpop.f32.mrf.mxu0
        %v7988 = vadd.f32 %v7860, %v7987
        %v7989 = vpop.f32.mrf.mxu0
        %v7990 = vpop.f32.mrf.mxu0
        %v7991 = vadd.f32 %v7863, %v7990
        %v7992 = vpop.f32.mrf.mxu0
        %7993 = vmatprep.mubr.bf16.mxu0 0
        %7994 = vmatmul.mubr.bf16.gmra.mxu0 %v5701
        %v7995 = vpop.f32.mrf.mxu0
        %v7996 = vadd.f32 %v7868, %v7995
        %v7997 = vpop.f32.mrf.mxu0
        %v7998 = vpop.f32.mrf.mxu0
        %v7999 = vadd.f32 %v7871, %v7998
        %v8000 = vpop.f32.mrf.mxu0
        %8001 = vmatprep.mubr.bf16.mxu0 0
        %8002 = vmatmul.mubr.bf16.gmra.mxu0 %v5886
        %v8003 = vpop.f32.mrf.mxu0
        %v8004 = vadd.f32 %v7876, %v8003
        %v8005 = vpop.f32.mrf.mxu0
        %v8006 = vpop.f32.mrf.mxu0
        %v8007 = vadd.f32 %v7879, %v8006
        %v8008 = vpop.f32.mrf.mxu0
        %8009 = vmatprep.mubr.bf16.mxu0 0
        %8010 = vmatmul.mubr.bf16.gmra.mxu0 %v6071
        %v8011 = vpop.f32.mrf.mxu0
        %v8012 = vadd.f32 %v7884, %v8011
        %v8013 = vpop.f32.mrf.mxu0
        %v8014 = vpop.f32.mrf.mxu0
        %v8015 = vadd.f32 %v7887, %v8014
        %v8016 = vpop.f32.mrf.mxu0
        %8017 = vmatprep.mubr.bf16.mxu0 0
        %8018 = vmatmul.mubr.bf16.gmra.mxu0 %v6256
        %v8019 = vpop.f32.mrf.mxu0
        %v8020 = vadd.f32 %v7892, %v8019
        %v8021 = vpop.f32.mrf.mxu0
        %v8022 = vpop.f32.mrf.mxu0
        %v8023 = vadd.f32 %v7895, %v8022
        %v8024 = vpop.f32.mrf.mxu0
        %8025 = vmatprep.mubr.bf16.mxu0 0
        %8026 = vmatmul.mubr.bf16.gmra.mxu0 %v6441
        %v8027 = vpop.f32.mrf.mxu0
        %v8028 = vadd.f32 %v7900, %v8027
        %v8029 = vpop.f32.mrf.mxu0
        %v8030 = vpop.f32.mrf.mxu0
        %v8031 = vadd.f32 %v7903, %v8030
        %v8032 = vpop.f32.mrf.mxu0
        %8033 = vmatprep.mubr.bf16.mxu0 0
        %8034 = vmatmul.mubr.bf16.gmra.mxu0 %v6626
        %v8035 = vpop.f32.mrf.mxu0
        %v8036 = vadd.f32 %v7908, %v8035
        %v8037 = vpop.f32.mrf.mxu0
        %v8038 = vpop.f32.mrf.mxu0
        %v8039 = vadd.f32 %v7911, %v8038
        %v8040 = vpop.f32.mrf.mxu0
        %8041 = vmatprep.mubr.bf16.mxu0 0
        %8042 = vmatmul.mubr.bf16.gmra.mxu0 %v6811
        %v8043 = vpop.f32.mrf.mxu0
        %v8044 = vadd.f32 %v7916, %v8043
        %v8045 = vpop.f32.mrf.mxu0
        %v8046 = vpop.f32.mrf.mxu0
        %v8047 = vadd.f32 %v7919, %v8046
        %v8048 = vpop.f32.mrf.mxu0
        %8049 = vmatprep.mubr.bf16.mxu0 0
        %8050 = vmatmul.mubr.bf16.gmra.mxu0 %v6876
        %v8051 = vpop.f32.mrf.mxu0
        %v8052 = vadd.f32 %v7924, %v8051
        %v8053 = vpop.f32.mrf.mxu0
        %v8054 = vpop.f32.mrf.mxu0
        %v8055 = vpop.f32.mrf.mxu0
        %8056 = vdwg.mxu0
        %v8057 = vld [vmem:[%s5] sm:$0x1]
        %v8059 = vlaneseq
        %v8060 = vshrl.u32 %v8059, 7
        %v8061 = vsub.s32 0, %v8060
        %v8062 = vrot.slane %v8057, %v8061
        %v8064 = vmul.f32 %v7964, %v8062
        %v8065 = vmul.f32 %v7967, %v8062
        %v8066 = vmul.f32 %v7972, %v8062
        %v8067 = vmul.f32 %v7975, %v8062
        %v8068 = vmul.f32 %v7980, %v8062
        %v8069 = vmul.f32 %v7983, %v8062
        %v8070 = vmul.f32 %v7988, %v8062
        %v8071 = vmul.f32 %v7991, %v8062
        %v8072 = vmul.f32 %v7996, %v8062
        %v8073 = vmul.f32 %v7999, %v8062
        %v8074 = vmul.f32 %v8004, %v8062
        %v8075 = vmul.f32 %v8007, %v8062
        %v8076 = vmul.f32 %v8012, %v8062
        %v8077 = vmul.f32 %v8015, %v8062
        %v8078 = vmul.f32 %v8020, %v8062
        %v8079 = vmul.f32 %v8023, %v8062
        %v8080 = vmul.f32 %v8028, %v8062
        %v8081 = vmul.f32 %v8031, %v8062
        %v8082 = vmul.f32 %v8036, %v8062
        %v8083 = vmul.f32 %v8039, %v8062
        %v8084 = vmul.f32 %v8044, %v8062
        %v8085 = vmul.f32 %v8047, %v8062
        %v8086 = vmul.f32 %v8052, %v8062
        %v8087 = vld [vmem:[%s6] sm:$0x1]
        %v8089 = vlaneseq
        %v8090 = vshrl.u32 %v8089, 7
        %v8091 = vsub.s32 0, %v8090
        %v8092 = vrot.slane %v8087, %v8091
        %v8094 = vadd.f32 %v8064, %v8092
        %v8095 = vadd.f32 %v8065, %v8092
        %v8096 = vadd.f32 %v8066, %v8092
        %v8097 = vadd.f32 %v8067, %v8092
        %v8098 = vadd.f32 %v8068, %v8092
        %v8099 = vadd.f32 %v8069, %v8092
        %v8100 = vadd.f32 %v8070, %v8092
        %v8101 = vadd.f32 %v8071, %v8092
        %v8102 = vadd.f32 %v8072, %v8092
        %v8103 = vadd.f32 %v8073, %v8092
        %v8104 = vadd.f32 %v8074, %v8092
        %v8105 = vadd.f32 %v8075, %v8092
        %v8106 = vadd.f32 %v8076, %v8092
        %v8107 = vadd.f32 %v8077, %v8092
        %v8108 = vadd.f32 %v8078, %v8092
        %v8109 = vadd.f32 %v8079, %v8092
        %v8110 = vadd.f32 %v8080, %v8092
        %v8111 = vadd.f32 %v8081, %v8092
        %v8112 = vadd.f32 %v8082, %v8092
        %v8113 = vadd.f32 %v8083, %v8092
        %v8114 = vadd.f32 %v8084, %v8092
        %v8115 = vadd.f32 %v8085, %v8092
        %v8116 = vadd.f32 %v8086, %v8092
        %vm8117 = vcmp.ge.f32.partialorder %v8094, 0.0
        %vm8118 = vcmp.ge.f32.partialorder %v8095, 0.0
        %vm8119 = vcmp.ge.f32.partialorder %v8096, 0.0
        %vm8120 = vcmp.ge.f32.partialorder %v8097, 0.0
        %vm8121 = vcmp.ge.f32.partialorder %v8098, 0.0
        %vm8122 = vcmp.ge.f32.partialorder %v8099, 0.0
        %vm8123 = vcmp.ge.f32.partialorder %v8100, 0.0
        %vm8124 = vcmp.ge.f32.partialorder %v8101, 0.0
        %vm8125 = vcmp.ge.f32.partialorder %v8102, 0.0
        %vm8126 = vcmp.ge.f32.partialorder %v8103, 0.0
        %vm8127 = vcmp.ge.f32.partialorder %v8104, 0.0
        %vm8128 = vcmp.ge.f32.partialorder %v8105, 0.0
        %vm8129 = vcmp.ge.f32.partialorder %v8106, 0.0
        %vm8130 = vcmp.ge.f32.partialorder %v8107, 0.0
        %vm8131 = vcmp.ge.f32.partialorder %v8108, 0.0
        %vm8132 = vcmp.ge.f32.partialorder %v8109, 0.0
        %vm8133 = vcmp.ge.f32.partialorder %v8110, 0.0
        %vm8134 = vcmp.ge.f32.partialorder %v8111, 0.0
        %vm8135 = vcmp.ge.f32.partialorder %v8112, 0.0
        %vm8136 = vcmp.ge.f32.partialorder %v8113, 0.0
        %vm8137 = vcmp.ge.f32.partialorder %v8114, 0.0
        %vm8138 = vcmp.ge.f32.partialorder %v8115, 0.0
        %vm8139 = vcmp.ge.f32.partialorder %v8116, 0.0
        %v8140 = vld [vmem:[%s9] sm:$0x1]
        %v8142 = vlaneseq
        %v8143 = vshrl.u32 %v8142, 7
        %v8144 = vsub.s32 0, %v8143
        %v8145 = vrot.slane %v8140, %v8144
        %v8147 = vmul.f32 %v8145, %v8094
        %v8148 = vmul.f32 %v8145, %v8095
        %v8149 = vmul.f32 %v8145, %v8096
        %v8150 = vmul.f32 %v8145, %v8097
        %v8151 = vmul.f32 %v8145, %v8098
        %v8152 = vmul.f32 %v8145, %v8099
        %v8153 = vmul.f32 %v8145, %v8100
        %v8154 = vmul.f32 %v8145, %v8101
        %v8155 = vmul.f32 %v8145, %v8102
        %v8156 = vmul.f32 %v8145, %v8103
        %v8157 = vmul.f32 %v8145, %v8104
        %v8158 = vmul.f32 %v8145, %v8105
        %v8159 = vmul.f32 %v8145, %v8106
        %v8160 = vmul.f32 %v8145, %v8107
        %v8161 = vmul.f32 %v8145, %v8108
        %v8162 = vmul.f32 %v8145, %v8109
        %v8163 = vmul.f32 %v8145, %v8110
        %v8164 = vmul.f32 %v8145, %v8111
        %v8165 = vmul.f32 %v8145, %v8112
        %v8166 = vmul.f32 %v8145, %v8113
        %v8167 = vmul.f32 %v8145, %v8114
        %v8168 = vmul.f32 %v8145, %v8115
        %v8169 = vmul.f32 %v8145, %v8116
        %v8170 = vsel %vm8117, %v8094, %v8147
        %v8171 = vsel %vm8118, %v8095, %v8148
        %v8172 = vsel %vm8119, %v8096, %v8149
        %v8173 = vsel %vm8120, %v8097, %v8150
        %v8174 = vsel %vm8121, %v8098, %v8151
        %v8175 = vsel %vm8122, %v8099, %v8152
        %v8176 = vsel %vm8123, %v8100, %v8153
        %v8177 = vsel %vm8124, %v8101, %v8154
        %v8178 = vsel %vm8125, %v8102, %v8155
        %v8179 = vsel %vm8126, %v8103, %v8156
        %v8180 = vsel %vm8127, %v8104, %v8157
        %v8181 = vsel %vm8128, %v8105, %v8158
        %v8182 = vsel %vm8129, %v8106, %v8159
        %v8183 = vsel %vm8130, %v8107, %v8160
        %v8184 = vsel %vm8131, %v8108, %v8161
        %v8185 = vsel %vm8132, %v8109, %v8162
        %v8186 = vsel %vm8133, %v8110, %v8163
        %v8187 = vsel %vm8134, %v8111, %v8164
        %v8188 = vsel %vm8135, %v8112, %v8165
        %v8189 = vsel %vm8136, %v8113, %v8166
        %v8190 = vsel %vm8137, %v8114, %v8167
        %v8191 = vsel %vm8138, %v8115, %v8168
        %v8192 = vsel %vm8139, %v8116, %v8169
        %v8216 = vcombine.high %v8170, %v8170
        %v8218 = vunpack.c.l.s4 1983009808
        %v8219 = vunpack.c.0.s8 %v8218
        %v8220 = vlaneseq
        %v8221 = vshrl.u32 %v8220, 7
        %v8222 = vsub.s32 %v8219, %v8221
        %v8223 = vrot.slane %v8170, %v8222
        %v8225 = vunpack.c.l.s4 1983009808
        %v8226 = vunpack.c.0.s8 %v8225
        %v8227 = vlaneseq
        %v8228 = vshrl.u32 %v8227, 7
        %v8229 = vsub.s32 %v8226, %v8228
        %v8230 = vrot.slane %v8216, %v8229
        %v8231 = vcombine.high %v8223, %v8223
        %v8232 = vcombine.high %v8230, %v8230
        %v8233 = vcombine.high %v8171, %v8171
        %v8235 = vunpack.c.l.s4 1983009808
        %v8236 = vunpack.c.0.s8 %v8235
        %v8237 = vlaneseq
        %v8238 = vshrl.u32 %v8237, 7
        %v8239 = vsub.s32 %v8236, %v8238
        %v8240 = vrot.slane %v8171, %v8239
        %v8242 = vunpack.c.l.s4 1983009808
        %v8243 = vunpack.c.0.s8 %v8242
        %v8244 = vlaneseq
        %v8245 = vshrl.u32 %v8244, 7
        %v8246 = vsub.s32 %v8243, %v8245
        %v8247 = vrot.slane %v8233, %v8246
        %v8248 = vcombine.high %v8240, %v8240
        %v8249 = vcombine.high %v8247, %v8247
        %v8250 = vcombine.high %v8172, %v8172
        %v8252 = vunpack.c.l.s4 1983009808
        %v8253 = vunpack.c.0.s8 %v8252
        %v8254 = vlaneseq
        %v8255 = vshrl.u32 %v8254, 7
        %v8256 = vsub.s32 %v8253, %v8255
        %v8257 = vrot.slane %v8172, %v8256
        %v8259 = vunpack.c.l.s4 1983009808
        %v8260 = vunpack.c.0.s8 %v8259
        %v8261 = vlaneseq
        %v8262 = vshrl.u32 %v8261, 7
        %v8263 = vsub.s32 %v8260, %v8262
        %v8264 = vrot.slane %v8250, %v8263
        %v8265 = vcombine.high %v8257, %v8257
        %v8266 = vcombine.high %v8264, %v8264
        %v8267 = vcombine.high %v8173, %v8173
        %v8269 = vunpack.c.l.s4 1983009808
        %v8270 = vunpack.c.0.s8 %v8269
        %v8271 = vlaneseq
        %v8272 = vshrl.u32 %v8271, 7
        %v8273 = vsub.s32 %v8270, %v8272
        %v8274 = vrot.slane %v8173, %v8273
        %v8276 = vunpack.c.l.s4 1983009808
        %v8277 = vunpack.c.0.s8 %v8276
        %v8278 = vlaneseq
        %v8279 = vshrl.u32 %v8278, 7
        %v8280 = vsub.s32 %v8277, %v8279
        %v8281 = vrot.slane %v8267, %v8280
        %v8282 = vcombine.high %v8274, %v8274
        %v8283 = vcombine.high %v8281, %v8281
        %v8284 = vcombine.high %v8174, %v8174
        %v8286 = vunpack.c.l.s4 1983009808
        %v8287 = vunpack.c.0.s8 %v8286
        %v8288 = vlaneseq
        %v8289 = vshrl.u32 %v8288, 7
        %v8290 = vsub.s32 %v8287, %v8289
        %v8291 = vrot.slane %v8174, %v8290
        %v8293 = vunpack.c.l.s4 1983009808
        %v8294 = vunpack.c.0.s8 %v8293
        %v8295 = vlaneseq
        %v8296 = vshrl.u32 %v8295, 7
        %v8297 = vsub.s32 %v8294, %v8296
        %v8298 = vrot.slane %v8284, %v8297
        %v8299 = vcombine.high %v8291, %v8291
        %v8300 = vcombine.high %v8298, %v8298
        %v8301 = vcombine.high %v8175, %v8175
        %v8303 = vunpack.c.l.s4 1983009808
        %v8304 = vunpack.c.0.s8 %v8303
        %v8305 = vlaneseq
        %v8306 = vshrl.u32 %v8305, 7
        %v8307 = vsub.s32 %v8304, %v8306
        %v8308 = vrot.slane %v8175, %v8307
        %v8310 = vunpack.c.l.s4 1983009808
        %v8311 = vunpack.c.0.s8 %v8310
        %v8312 = vlaneseq
        %v8313 = vshrl.u32 %v8312, 7
        %v8314 = vsub.s32 %v8311, %v8313
        %v8315 = vrot.slane %v8301, %v8314
        %v8316 = vcombine.high %v8308, %v8308
        %v8317 = vcombine.high %v8315, %v8315
        %v8318 = vcombine.high %v8176, %v8176
        %v8320 = vunpack.c.l.s4 1983009808
        %v8321 = vunpack.c.0.s8 %v8320
        %v8322 = vlaneseq
        %v8323 = vshrl.u32 %v8322, 7
        %v8324 = vsub.s32 %v8321, %v8323
        %v8325 = vrot.slane %v8176, %v8324
        %v8327 = vunpack.c.l.s4 1983009808
        %v8328 = vunpack.c.0.s8 %v8327
        %v8329 = vlaneseq
        %v8330 = vshrl.u32 %v8329, 7
        %v8331 = vsub.s32 %v8328, %v8330
        %v8332 = vrot.slane %v8318, %v8331
        %v8333 = vcombine.high %v8325, %v8325
        %v8334 = vcombine.high %v8332, %v8332
        %v8335 = vcombine.high %v8177, %v8177
        %v8337 = vunpack.c.l.s4 1983009808
        %v8338 = vunpack.c.0.s8 %v8337
        %v8339 = vlaneseq
        %v8340 = vshrl.u32 %v8339, 7
        %v8341 = vsub.s32 %v8338, %v8340
        %v8342 = vrot.slane %v8177, %v8341
        %v8344 = vunpack.c.l.s4 1983009808
        %v8345 = vunpack.c.0.s8 %v8344
        %v8346 = vlaneseq
        %v8347 = vshrl.u32 %v8346, 7
        %v8348 = vsub.s32 %v8345, %v8347
        %v8349 = vrot.slane %v8335, %v8348
        %v8350 = vcombine.high %v8342, %v8342
        %v8351 = vcombine.high %v8349, %v8349
        %v8352 = vcombine.high %v8178, %v8178
        %v8354 = vunpack.c.l.s4 1983009808
        %v8355 = vunpack.c.0.s8 %v8354
        %v8356 = vlaneseq
        %v8357 = vshrl.u32 %v8356, 7
        %v8358 = vsub.s32 %v8355, %v8357
        %v8359 = vrot.slane %v8178, %v8358
        %v8361 = vunpack.c.l.s4 1983009808
        %v8362 = vunpack.c.0.s8 %v8361
        %v8363 = vlaneseq
        %v8364 = vshrl.u32 %v8363, 7
        %v8365 = vsub.s32 %v8362, %v8364
        %v8366 = vrot.slane %v8352, %v8365
        %v8367 = vcombine.high %v8359, %v8359
        %v8368 = vcombine.high %v8366, %v8366
        %v8369 = vcombine.high %v8179, %v8179
        %v8371 = vunpack.c.l.s4 1983009808
        %v8372 = vunpack.c.0.s8 %v8371
        %v8373 = vlaneseq
        %v8374 = vshrl.u32 %v8373, 7
        %v8375 = vsub.s32 %v8372, %v8374
        %v8376 = vrot.slane %v8179, %v8375
        %v8378 = vunpack.c.l.s4 1983009808
        %v8379 = vunpack.c.0.s8 %v8378
        %v8380 = vlaneseq
        %v8381 = vshrl.u32 %v8380, 7
        %v8382 = vsub.s32 %v8379, %v8381
        %v8383 = vrot.slane %v8369, %v8382
        %v8384 = vcombine.high %v8376, %v8376
        %v8385 = vcombine.high %v8383, %v8383
        %v8386 = vcombine.high %v8180, %v8180
        %v8388 = vunpack.c.l.s4 1983009808
        %v8389 = vunpack.c.0.s8 %v8388
        %v8390 = vlaneseq
        %v8391 = vshrl.u32 %v8390, 7
        %v8392 = vsub.s32 %v8389, %v8391
        %v8393 = vrot.slane %v8180, %v8392
        %v8395 = vunpack.c.l.s4 1983009808
        %v8396 = vunpack.c.0.s8 %v8395
        %v8397 = vlaneseq
        %v8398 = vshrl.u32 %v8397, 7
        %v8399 = vsub.s32 %v8396, %v8398
        %v8400 = vrot.slane %v8386, %v8399
        %v8401 = vcombine.high %v8393, %v8393
        %v8402 = vcombine.high %v8400, %v8400
        %v8403 = vcombine.high %v8181, %v8181
        %v8405 = vunpack.c.l.s4 1983009808
        %v8406 = vunpack.c.0.s8 %v8405
        %v8407 = vlaneseq
        %v8408 = vshrl.u32 %v8407, 7
        %v8409 = vsub.s32 %v8406, %v8408
        %v8410 = vrot.slane %v8181, %v8409
        %v8412 = vunpack.c.l.s4 1983009808
        %v8413 = vunpack.c.0.s8 %v8412
        %v8414 = vlaneseq
        %v8415 = vshrl.u32 %v8414, 7
        %v8416 = vsub.s32 %v8413, %v8415
        %v8417 = vrot.slane %v8403, %v8416
        %v8418 = vcombine.high %v8410, %v8410
        %v8419 = vcombine.high %v8417, %v8417
        %v8420 = vcombine.high %v8182, %v8182
        %v8422 = vunpack.c.l.s4 1983009808
        %v8423 = vunpack.c.0.s8 %v8422
        %v8424 = vlaneseq
        %v8425 = vshrl.u32 %v8424, 7
        %v8426 = vsub.s32 %v8423, %v8425
        %v8427 = vrot.slane %v8182, %v8426
        %v8429 = vunpack.c.l.s4 1983009808
        %v8430 = vunpack.c.0.s8 %v8429
        %v8431 = vlaneseq
        %v8432 = vshrl.u32 %v8431, 7
        %v8433 = vsub.s32 %v8430, %v8432
        %v8434 = vrot.slane %v8420, %v8433
        %v8435 = vcombine.high %v8427, %v8427
        %v8436 = vcombine.high %v8434, %v8434
        %v8437 = vcombine.high %v8183, %v8183
        %v8439 = vunpack.c.l.s4 1983009808
        %v8440 = vunpack.c.0.s8 %v8439
        %v8441 = vlaneseq
        %v8442 = vshrl.u32 %v8441, 7
        %v8443 = vsub.s32 %v8440, %v8442
        %v8444 = vrot.slane %v8183, %v8443
        %v8446 = vunpack.c.l.s4 1983009808
        %v8447 = vunpack.c.0.s8 %v8446
        %v8448 = vlaneseq
        %v8449 = vshrl.u32 %v8448, 7
        %v8450 = vsub.s32 %v8447, %v8449
        %v8451 = vrot.slane %v8437, %v8450
        %v8452 = vcombine.high %v8444, %v8444
        %v8453 = vcombine.high %v8451, %v8451
        %v8454 = vcombine.high %v8184, %v8184
        %v8456 = vunpack.c.l.s4 1983009808
        %v8457 = vunpack.c.0.s8 %v8456
        %v8458 = vlaneseq
        %v8459 = vshrl.u32 %v8458, 7
        %v8460 = vsub.s32 %v8457, %v8459
        %v8461 = vrot.slane %v8184, %v8460
        %v8463 = vunpack.c.l.s4 1983009808
        %v8464 = vunpack.c.0.s8 %v8463
        %v8465 = vlaneseq
        %v8466 = vshrl.u32 %v8465, 7
        %v8467 = vsub.s32 %v8464, %v8466
        %v8468 = vrot.slane %v8454, %v8467
        %v8469 = vcombine.high %v8461, %v8461
        %v8470 = vcombine.high %v8468, %v8468
        %v8471 = vcombine.high %v8185, %v8185
        %v8473 = vunpack.c.l.s4 1983009808
        %v8474 = vunpack.c.0.s8 %v8473
        %v8475 = vlaneseq
        %v8476 = vshrl.u32 %v8475, 7
        %v8477 = vsub.s32 %v8474, %v8476
        %v8478 = vrot.slane %v8185, %v8477
        %v8480 = vunpack.c.l.s4 1983009808
        %v8481 = vunpack.c.0.s8 %v8480
        %v8482 = vlaneseq
        %v8483 = vshrl.u32 %v8482, 7
        %v8484 = vsub.s32 %v8481, %v8483
        %v8485 = vrot.slane %v8471, %v8484
        %v8486 = vcombine.high %v8478, %v8478
        %v8487 = vcombine.high %v8485, %v8485
        %v8488 = vcombine.high %v8186, %v8186
        %v8490 = vunpack.c.l.s4 1983009808
        %v8491 = vunpack.c.0.s8 %v8490
        %v8492 = vlaneseq
        %v8493 = vshrl.u32 %v8492, 7
        %v8494 = vsub.s32 %v8491, %v8493
        %v8495 = vrot.slane %v8186, %v8494
        %v8497 = vunpack.c.l.s4 1983009808
        %v8498 = vunpack.c.0.s8 %v8497
        %v8499 = vlaneseq
        %v8500 = vshrl.u32 %v8499, 7
        %v8501 = vsub.s32 %v8498, %v8500
        %v8502 = vrot.slane %v8488, %v8501
        %v8503 = vcombine.high %v8495, %v8495
        %v8504 = vcombine.high %v8502, %v8502
        %v8505 = vcombine.high %v8187, %v8187
        %v8507 = vunpack.c.l.s4 1983009808
        %v8508 = vunpack.c.0.s8 %v8507
        %v8509 = vlaneseq
        %v8510 = vshrl.u32 %v8509, 7
        %v8511 = vsub.s32 %v8508, %v8510
        %v8512 = vrot.slane %v8187, %v8511
        %v8514 = vunpack.c.l.s4 1983009808
        %v8515 = vunpack.c.0.s8 %v8514
        %v8516 = vlaneseq
        %v8517 = vshrl.u32 %v8516, 7
        %v8518 = vsub.s32 %v8515, %v8517
        %v8519 = vrot.slane %v8505, %v8518
        %v8520 = vcombine.high %v8512, %v8512
        %v8521 = vcombine.high %v8519, %v8519
        %v8522 = vcombine.high %v8188, %v8188
        %v8524 = vunpack.c.l.s4 1983009808
        %v8525 = vunpack.c.0.s8 %v8524
        %v8526 = vlaneseq
        %v8527 = vshrl.u32 %v8526, 7
        %v8528 = vsub.s32 %v8525, %v8527
        %v8529 = vrot.slane %v8188, %v8528
        %v8531 = vunpack.c.l.s4 1983009808
        %v8532 = vunpack.c.0.s8 %v8531
        %v8533 = vlaneseq
        %v8534 = vshrl.u32 %v8533, 7
        %v8535 = vsub.s32 %v8532, %v8534
        %v8536 = vrot.slane %v8522, %v8535
        %v8537 = vcombine.high %v8529, %v8529
        %v8538 = vcombine.high %v8536, %v8536
        %v8539 = vcombine.high %v8189, %v8189
        %v8541 = vunpack.c.l.s4 1983009808
        %v8542 = vunpack.c.0.s8 %v8541
        %v8543 = vlaneseq
        %v8544 = vshrl.u32 %v8543, 7
        %v8545 = vsub.s32 %v8542, %v8544
        %v8546 = vrot.slane %v8189, %v8545
        %v8548 = vunpack.c.l.s4 1983009808
        %v8549 = vunpack.c.0.s8 %v8548
        %v8550 = vlaneseq
        %v8551 = vshrl.u32 %v8550, 7
        %v8552 = vsub.s32 %v8549, %v8551
        %v8553 = vrot.slane %v8539, %v8552
        %v8554 = vcombine.high %v8546, %v8546
        %v8555 = vcombine.high %v8553, %v8553
        %v8556 = vcombine.high %v8190, %v8190
        %v8558 = vunpack.c.l.s4 1983009808
        %v8559 = vunpack.c.0.s8 %v8558
        %v8560 = vlaneseq
        %v8561 = vshrl.u32 %v8560, 7
        %v8562 = vsub.s32 %v8559, %v8561
        %v8563 = vrot.slane %v8190, %v8562
        %v8565 = vunpack.c.l.s4 1983009808
        %v8566 = vunpack.c.0.s8 %v8565
        %v8567 = vlaneseq
        %v8568 = vshrl.u32 %v8567, 7
        %v8569 = vsub.s32 %v8566, %v8568
        %v8570 = vrot.slane %v8556, %v8569
        %v8571 = vcombine.high %v8563, %v8563
        %v8572 = vcombine.high %v8570, %v8570
        %v8573 = vcombine.high %v8191, %v8191
        %v8575 = vunpack.c.l.s4 1983009808
        %v8576 = vunpack.c.0.s8 %v8575
        %v8577 = vlaneseq
        %v8578 = vshrl.u32 %v8577, 7
        %v8579 = vsub.s32 %v8576, %v8578
        %v8580 = vrot.slane %v8191, %v8579
        %v8582 = vunpack.c.l.s4 1983009808
        %v8583 = vunpack.c.0.s8 %v8582
        %v8584 = vlaneseq
        %v8585 = vshrl.u32 %v8584, 7
        %v8586 = vsub.s32 %v8583, %v8585
        %v8587 = vrot.slane %v8573, %v8586
        %v8588 = vcombine.high %v8580, %v8580
        %v8589 = vcombine.high %v8587, %v8587
        %v8591 = vunpack.c.l.s4 1983009808
        %v8592 = vunpack.c.0.s8 %v8591
        %v8593 = vlaneseq
        %v8594 = vshrl.u32 %v8593, 7
        %v8595 = vsub.s32 %v8592, %v8594
        %v8596 = vrot.slane %v8192, %v8595
        %v8597 = vcombine.high %v8596, %v8596
        %s8598 = ssub.s32 %s328, 1
        %v8599 = vstv %s8598
        %v8600 = vadd.s32 %v8599, 1
        %v8601 = vadd.s32 %v8599, 2
        %v8602 = vadd.s32 %v8599, 3
        %v8603 = vadd.s32 %v8599, 4
        %v8604 = vadd.s32 %v8599, 5
        %v8605 = vadd.s32 %v8599, 6
        %v8606 = vadd.s32 %v8599, 7
        %v8607 = vadd.s32 %v8599, 8
        %v8608 = vadd.s32 %v8599, 9
        %v8609 = vsub.s32 %v533, 1
        %v8610 = vsub.s32 %v534, 1
        %v8611 = vsub.s32 %v535, 1
        %vm8612 = vcmp.ge.s32.totalorder %v8599, 0
        %vm8613 = vcmp.ge.s32.totalorder %v8600, 0
        %vm8614 = vcmp.ge.s32.totalorder %v8601, 0
        %vm8615 = vcmp.ge.s32.totalorder %v8602, 0
        %vm8616 = vcmp.ge.s32.totalorder %v8603, 0
        %vm8617 = vcmp.ge.s32.totalorder %v8604, 0
        %vm8618 = vcmp.ge.s32.totalorder %v8605, 0
        %vm8619 = vcmp.ge.s32.totalorder %v8606, 0
        %vm8620 = vcmp.ge.s32.totalorder %v8607, 0
        %vm8621 = vcmp.ge.s32.totalorder %v8608, 0
        %vm8622 = vcmp.lt.s32.totalorder %v8599, 16
        %vm8623 = vcmp.lt.s32.totalorder %v8600, 16
        %vm8624 = vcmp.lt.s32.totalorder %v8601, 16
        %vm8625 = vcmp.lt.s32.totalorder %v8602, 16
        %vm8626 = vcmp.lt.s32.totalorder %v8603, 16
        %vm8627 = vcmp.lt.s32.totalorder %v8604, 16
        %vm8628 = vcmp.lt.s32.totalorder %v8605, 16
        %vm8629 = vcmp.lt.s32.totalorder %v8606, 16
        %vm8630 = vcmp.lt.s32.totalorder %v8607, 16
        %vm8631 = vcmp.lt.s32.totalorder %v8608, 16
        %vm8632 = vmand %vm8612, %vm8622
        %vm8633 = vmand %vm8613, %vm8623
        %vm8634 = vmand %vm8614, %vm8624
        %vm8635 = vmand %vm8615, %vm8625
        %vm8636 = vmand %vm8616, %vm8626
        %vm8637 = vmand %vm8617, %vm8627
        %vm8638 = vmand %vm8618, %vm8628
        %vm8639 = vmand %vm8619, %vm8629
        %vm8640 = vmand %vm8620, %vm8630
        %vm8641 = vmand %vm8621, %vm8631
        %vm8642 = vcmp.ge.s32.totalorder %v8609, 0
        %vm8643 = vcmp.ge.s32.totalorder %v8610, 0
        %vm8644 = vcmp.ge.s32.totalorder %v8611, 0
        %vm8645 = vmand %vm8632, %vm8642
        %vm8646 = vmand %vm8632, %vm8643
        %vm8647 = vmand %vm8632, %vm8644
        %vm8648 = vmand %vm8633, %vm8642
        %vm8649 = vmand %vm8633, %vm8643
        %vm8650 = vmand %vm8633, %vm8644
        %vm8651 = vmand %vm8634, %vm8642
        %vm8652 = vmand %vm8634, %vm8643
        %vm8653 = vmand %vm8634, %vm8644
        %vm8654 = vmand %vm8635, %vm8642
        %vm8655 = vmand %vm8635, %vm8643
        %vm8656 = vmand %vm8635, %vm8644
        %vm8657 = vmand %vm8636, %vm8642
        %vm8658 = vmand %vm8636, %vm8643
        %vm8659 = vmand %vm8636, %vm8644
        %vm8660 = vmand %vm8637, %vm8642
        %vm8661 = vmand %vm8637, %vm8643
        %vm8662 = vmand %vm8637, %vm8644
        %vm8663 = vmand %vm8638, %vm8642
        %vm8664 = vmand %vm8638, %vm8643
        %vm8665 = vmand %vm8638, %vm8644
        %vm8666 = vmand %vm8639, %vm8642
        %vm8667 = vmand %vm8639, %vm8643
        %vm8668 = vmand %vm8639, %vm8644
        %vm8669 = vmand %vm8640, %vm8642
        %vm8670 = vmand %vm8640, %vm8643
        %vm8671 = vmand %vm8640, %vm8644
        %vm8672 = vmand %vm8641, %vm8642
        %vm8673 = vmand %vm8641, %vm8643
        %vm8674 = vmand %vm8641, %vm8644
        %vm8675 = vcmp.lt.s32.totalorder %v8609, 16
        %vm8676 = vcmp.lt.s32.totalorder %v8610, 16
        %vm8677 = vcmp.lt.s32.totalorder %v8611, 16
        %vm8678 = vmand %vm8645, %vm8675
        %vm8679 = vmand %vm8646, %vm8676
        %vm8680 = vmand %vm8647, %vm8677
        %vm8681 = vmand %vm8648, %vm8675
        %vm8682 = vmand %vm8649, %vm8676
        %vm8683 = vmand %vm8650, %vm8677
        %vm8684 = vmand %vm8651, %vm8675
        %vm8685 = vmand %vm8652, %vm8676
        %vm8686 = vmand %vm8653, %vm8677
        %vm8687 = vmand %vm8654, %vm8675
        %vm8688 = vmand %vm8655, %vm8676
        %vm8689 = vmand %vm8656, %vm8677
        %vm8690 = vmand %vm8657, %vm8675
        %vm8691 = vmand %vm8658, %vm8676
        %vm8692 = vmand %vm8659, %vm8677
        %vm8693 = vmand %vm8660, %vm8675
        %vm8694 = vmand %vm8661, %vm8676
        %vm8695 = vmand %vm8662, %vm8677
        %vm8696 = vmand %vm8663, %vm8675
        %vm8697 = vmand %vm8664, %vm8676
        %vm8698 = vmand %vm8665, %vm8677
        %vm8699 = vmand %vm8666, %vm8675
        %vm8700 = vmand %vm8667, %vm8676
        %vm8701 = vmand %vm8668, %vm8677
        %vm8702 = vmand %vm8669, %vm8675
        %vm8703 = vmand %vm8670, %vm8676
        %vm8704 = vmand %vm8671, %vm8677
        %vm8705 = vmand %vm8672, %vm8675
        %vm8706 = vmand %vm8673, %vm8676
        %vm8707 = vmand %vm8674, %vm8677
        %v8708 = vsel %vm8678, 1, 0
        %v8709 = vsel %vm8679, 1, 0
        %v8710 = vsel %vm8680, 1, 0
        %v8711 = vsel %vm8681, 1, 0
        %v8712 = vsel %vm8682, 1, 0
        %v8713 = vsel %vm8683, 1, 0
        %v8714 = vsel %vm8684, 1, 0
        %v8715 = vsel %vm8685, 1, 0
        %v8716 = vsel %vm8686, 1, 0
        %v8717 = vsel %vm8687, 1, 0
        %v8718 = vsel %vm8688, 1, 0
        %v8719 = vsel %vm8689, 1, 0
        %v8720 = vsel %vm8690, 1, 0
        %v8721 = vsel %vm8691, 1, 0
        %v8722 = vsel %vm8692, 1, 0
        %v8723 = vsel %vm8693, 1, 0
        %v8724 = vsel %vm8694, 1, 0
        %v8725 = vsel %vm8695, 1, 0
        %v8726 = vsel %vm8696, 1, 0
        %v8727 = vsel %vm8697, 1, 0
        %v8728 = vsel %vm8698, 1, 0
        %v8729 = vsel %vm8699, 1, 0
        %v8730 = vsel %vm8700, 1, 0
        %v8731 = vsel %vm8701, 1, 0
        %v8732 = vsel %vm8702, 1, 0
        %v8733 = vsel %vm8703, 1, 0
        %v8734 = vsel %vm8704, 1, 0
        %v8735 = vsel %vm8705, 1, 0
        %v8736 = vsel %vm8706, 1, 0
        %v8737 = vsel %vm8707, 1, 0
        %vm8738 = vcmp.eq.s32.totalorder %v8708, 1
        %vm8739 = vcmp.eq.s32.totalorder %v8709, 1
        %vm8740 = vcmp.eq.s32.totalorder %v8710, 1
        %vm8741 = vcmp.eq.s32.totalorder %v8711, 1
        %vm8742 = vcmp.eq.s32.totalorder %v8712, 1
        %vm8743 = vcmp.eq.s32.totalorder %v8713, 1
        %vm8744 = vcmp.eq.s32.totalorder %v8714, 1
        %vm8745 = vcmp.eq.s32.totalorder %v8715, 1
        %vm8746 = vcmp.eq.s32.totalorder %v8716, 1
        %vm8747 = vcmp.eq.s32.totalorder %v8717, 1
        %vm8748 = vcmp.eq.s32.totalorder %v8718, 1
        %vm8749 = vcmp.eq.s32.totalorder %v8719, 1
        %vm8750 = vcmp.eq.s32.totalorder %v8720, 1
        %vm8751 = vcmp.eq.s32.totalorder %v8721, 1
        %vm8752 = vcmp.eq.s32.totalorder %v8722, 1
        %vm8753 = vcmp.eq.s32.totalorder %v8723, 1
        %vm8754 = vcmp.eq.s32.totalorder %v8724, 1
        %vm8755 = vcmp.eq.s32.totalorder %v8725, 1
        %vm8756 = vcmp.eq.s32.totalorder %v8726, 1
        %vm8757 = vcmp.eq.s32.totalorder %v8727, 1
        %vm8758 = vcmp.eq.s32.totalorder %v8728, 1
        %vm8759 = vcmp.eq.s32.totalorder %v8729, 1
        %vm8760 = vcmp.eq.s32.totalorder %v8730, 1
        %vm8761 = vcmp.eq.s32.totalorder %v8731, 1
        %vm8762 = vcmp.eq.s32.totalorder %v8732, 1
        %vm8763 = vcmp.eq.s32.totalorder %v8733, 1
        %vm8764 = vcmp.eq.s32.totalorder %v8734, 1
        %vm8765 = vcmp.eq.s32.totalorder %v8735, 1
        %vm8766 = vcmp.eq.s32.totalorder %v8736, 1
        %vm8767 = vcmp.eq.s32.totalorder %v8737, 1
        %v8768 = vcombine.low %v8223, %v8231
        %v8769 = vcombine.low %v8230, %v8232
        %v8771 = vunpack.c.l.s4 1983009808
        %v8772 = vunpack.c.0.s8 %v8771
        %v8773 = vlaneseq
        %v8774 = vshrl.u32 %v8773, 7
        %v8775 = vsub.s32 %v8772, %v8774
        %v8776 = vrot.slane %v8768, %v8775
        %v8778 = vunpack.c.l.s4 1983009808
        %v8779 = vunpack.c.0.s8 %v8778
        %v8780 = vlaneseq
        %v8781 = vshrl.u32 %v8780, 7
        %v8782 = vsub.s32 %v8779, %v8781
        %v8783 = vrot.slane %v8769, %v8782
        %v8784 = vcombine.low %v8776, %v8783
        %v8785 = vcombine.low %v8240, %v8248
        %v8786 = vcombine.low %v8247, %v8249
        %v8788 = vunpack.c.l.s4 1983009808
        %v8789 = vunpack.c.0.s8 %v8788
        %v8790 = vlaneseq
        %v8791 = vshrl.u32 %v8790, 7
        %v8792 = vsub.s32 %v8789, %v8791
        %v8793 = vrot.slane %v8785, %v8792
        %v8795 = vunpack.c.l.s4 1983009808
        %v8796 = vunpack.c.0.s8 %v8795
        %v8797 = vlaneseq
        %v8798 = vshrl.u32 %v8797, 7
        %v8799 = vsub.s32 %v8796, %v8798
        %v8800 = vrot.slane %v8786, %v8799
        %v8801 = vcombine.low %v8793, %v8800
        %v8803 = vunpack.c.l.s4 1983009808
        %v8804 = vunpack.c.0.s8 %v8803
        %v8805 = vlaneseq
        %v8806 = vshrl.u32 %v8805, 7
        %v8807 = vsub.s32 %v8804, %v8806
        %v8808 = vrot.slane %v8257, %v8807
        %v8809 = vcombine.low %v8265, %v8264
        %v8810 = vcombine.low %v8266, %v8274
        %v8812 = vunpack.c.l.s4 1983009808
        %v8813 = vunpack.c.0.s8 %v8812
        %v8814 = vlaneseq
        %v8815 = vshrl.u32 %v8814, 7
        %v8816 = vsub.s32 %v8813, %v8815
        %v8817 = vrot.slane %v8809, %v8816
        %v8819 = vunpack.c.l.s4 1983009808
        %v8820 = vunpack.c.0.s8 %v8819
        %v8821 = vlaneseq
        %v8822 = vshrl.u32 %v8821, 7
        %v8823 = vsub.s32 %v8820, %v8822
        %v8824 = vrot.slane %v8810, %v8823
        %v8825 = vcombine.low %v8817, %v8824
        %v8826 = vcombine.low %v8282, %v8281
        %v8827 = vcombine.low %v8283, %v8291
        %v8829 = vunpack.c.l.s4 1983009808
        %v8830 = vunpack.c.0.s8 %v8829
        %v8831 = vlaneseq
        %v8832 = vshrl.u32 %v8831, 7
        %v8833 = vsub.s32 %v8830, %v8832
        %v8834 = vrot.slane %v8826, %v8833
        %v8836 = vunpack.c.l.s4 1983009808
        %v8837 = vunpack.c.0.s8 %v8836
        %v8838 = vlaneseq
        %v8839 = vshrl.u32 %v8838, 7
        %v8840 = vsub.s32 %v8837, %v8839
        %v8841 = vrot.slane %v8827, %v8840
        %v8842 = vcombine.low %v8834, %v8841
        %v8844 = vunpack.c.l.s4 1983009808
        %v8845 = vunpack.c.0.s8 %v8844
        %v8846 = vlaneseq
        %v8847 = vshrl.u32 %v8846, 7
        %v8848 = vsub.s32 %v8845, %v8847
        %v8849 = vrot.slane %v8299, %v8848
        %v8850 = vcombine.low %v8298, %v8300
        %v8851 = vcombine.low %v8308, %v8316
        %v8853 = vunpack.c.l.s4 1983009808
        %v8854 = vunpack.c.0.s8 %v8853
        %v8855 = vlaneseq
        %v8856 = vshrl.u32 %v8855, 7
        %v8857 = vsub.s32 %v8854, %v8856
        %v8858 = vrot.slane %v8850, %v8857
        %v8860 = vunpack.c.l.s4 1983009808
        %v8861 = vunpack.c.0.s8 %v8860
        %v8862 = vlaneseq
        %v8863 = vshrl.u32 %v8862, 7
        %v8864 = vsub.s32 %v8861, %v8863
        %v8865 = vrot.slane %v8851, %v8864
        %v8866 = vcombine.low %v8858, %v8865
        %v8867 = vcombine.low %v8315, %v8317
        %v8868 = vcombine.low %v8325, %v8333
        %v8870 = vunpack.c.l.s4 1983009808
        %v8871 = vunpack.c.0.s8 %v8870
        %v8872 = vlaneseq
        %v8873 = vshrl.u32 %v8872, 7
        %v8874 = vsub.s32 %v8871, %v8873
        %v8875 = vrot.slane %v8867, %v8874
        %v8877 = vunpack.c.l.s4 1983009808
        %v8878 = vunpack.c.0.s8 %v8877
        %v8879 = vlaneseq
        %v8880 = vshrl.u32 %v8879, 7
        %v8881 = vsub.s32 %v8878, %v8880
        %v8882 = vrot.slane %v8868, %v8881
        %v8883 = vcombine.low %v8875, %v8882
        %v8885 = vunpack.c.l.s4 1983009808
        %v8886 = vunpack.c.0.s8 %v8885
        %v8887 = vlaneseq
        %v8888 = vshrl.u32 %v8887, 7
        %v8889 = vsub.s32 %v8886, %v8888
        %v8890 = vrot.slane %v8332, %v8889
        %v8891 = vcombine.low %v8334, %v8342
        %v8892 = vcombine.low %v8350, %v8349
        %v8894 = vunpack.c.l.s4 1983009808
        %v8895 = vunpack.c.0.s8 %v8894
        %v8896 = vlaneseq
        %v8897 = vshrl.u32 %v8896, 7
        %v8898 = vsub.s32 %v8895, %v8897
        %v8899 = vrot.slane %v8891, %v8898
        %v8901 = vunpack.c.l.s4 1983009808
        %v8902 = vunpack.c.0.s8 %v8901
        %v8903 = vlaneseq
        %v8904 = vshrl.u32 %v8903, 7
        %v8905 = vsub.s32 %v8902, %v8904
        %v8906 = vrot.slane %v8892, %v8905
        %v8907 = vcombine.low %v8899, %v8906
        %v8908 = vcombine.low %v8351, %v8359
        %v8909 = vcombine.low %v8367, %v8366
        %v8911 = vunpack.c.l.s4 1983009808
        %v8912 = vunpack.c.0.s8 %v8911
        %v8913 = vlaneseq
        %v8914 = vshrl.u32 %v8913, 7
        %v8915 = vsub.s32 %v8912, %v8914
        %v8916 = vrot.slane %v8908, %v8915
        %v8918 = vunpack.c.l.s4 1983009808
        %v8919 = vunpack.c.0.s8 %v8918
        %v8920 = vlaneseq
        %v8921 = vshrl.u32 %v8920, 7
        %v8922 = vsub.s32 %v8919, %v8921
        %v8923 = vrot.slane %v8909, %v8922
        %v8924 = vcombine.low %v8916, %v8923
        %v8926 = vunpack.c.l.s4 1983009808
        %v8927 = vunpack.c.0.s8 %v8926
        %v8928 = vlaneseq
        %v8929 = vshrl.u32 %v8928, 7
        %v8930 = vsub.s32 %v8927, %v8929
        %v8931 = vrot.slane %v8368, %v8930
        %v8932 = vcombine.low %v8376, %v8384
        %v8933 = vcombine.low %v8383, %v8385
        %v8935 = vunpack.c.l.s4 1983009808
        %v8936 = vunpack.c.0.s8 %v8935
        %v8937 = vlaneseq
        %v8938 = vshrl.u32 %v8937, 7
        %v8939 = vsub.s32 %v8936, %v8938
        %v8940 = vrot.slane %v8932, %v8939
        %v8942 = vunpack.c.l.s4 1983009808
        %v8943 = vunpack.c.0.s8 %v8942
        %v8944 = vlaneseq
        %v8945 = vshrl.u32 %v8944, 7
        %v8946 = vsub.s32 %v8943, %v8945
        %v8947 = vrot.slane %v8933, %v8946
        %v8948 = vcombine.low %v8940, %v8947
        %v8949 = vcombine.low %v8393, %v8401
        %v8950 = vcombine.low %v8400, %v8402
        %v8952 = vunpack.c.l.s4 1983009808
        %v8953 = vunpack.c.0.s8 %v8952
        %v8954 = vlaneseq
        %v8955 = vshrl.u32 %v8954, 7
        %v8956 = vsub.s32 %v8953, %v8955
        %v8957 = vrot.slane %v8949, %v8956
        %v8959 = vunpack.c.l.s4 1983009808
        %v8960 = vunpack.c.0.s8 %v8959
        %v8961 = vlaneseq
        %v8962 = vshrl.u32 %v8961, 7
        %v8963 = vsub.s32 %v8960, %v8962
        %v8964 = vrot.slane %v8950, %v8963
        %v8965 = vcombine.low %v8957, %v8964
        %v8967 = vunpack.c.l.s4 1983009808
        %v8968 = vunpack.c.0.s8 %v8967
        %v8969 = vlaneseq
        %v8970 = vshrl.u32 %v8969, 7
        %v8971 = vsub.s32 %v8968, %v8970
        %v8972 = vrot.slane %v8410, %v8971
        %v8973 = vcombine.low %v8418, %v8417
        %v8974 = vcombine.low %v8419, %v8427
        %v8976 = vunpack.c.l.s4 1983009808
        %v8977 = vunpack.c.0.s8 %v8976
        %v8978 = vlaneseq
        %v8979 = vshrl.u32 %v8978, 7
        %v8980 = vsub.s32 %v8977, %v8979
        %v8981 = vrot.slane %v8973, %v8980
        %v8983 = vunpack.c.l.s4 1983009808
        %v8984 = vunpack.c.0.s8 %v8983
        %v8985 = vlaneseq
        %v8986 = vshrl.u32 %v8985, 7
        %v8987 = vsub.s32 %v8984, %v8986
        %v8988 = vrot.slane %v8974, %v8987
        %v8989 = vcombine.low %v8981, %v8988
        %v8990 = vcombine.low %v8435, %v8434
        %v8991 = vcombine.low %v8436, %v8444
        %v8993 = vunpack.c.l.s4 1983009808
        %v8994 = vunpack.c.0.s8 %v8993
        %v8995 = vlaneseq
        %v8996 = vshrl.u32 %v8995, 7
        %v8997 = vsub.s32 %v8994, %v8996
        %v8998 = vrot.slane %v8990, %v8997
        %v9000 = vunpack.c.l.s4 1983009808
        %v9001 = vunpack.c.0.s8 %v9000
        %v9002 = vlaneseq
        %v9003 = vshrl.u32 %v9002, 7
        %v9004 = vsub.s32 %v9001, %v9003
        %v9005 = vrot.slane %v8991, %v9004
        %v9006 = vcombine.low %v8998, %v9005
        %v9008 = vunpack.c.l.s4 1983009808
        %v9009 = vunpack.c.0.s8 %v9008
        %v9010 = vlaneseq
        %v9011 = vshrl.u32 %v9010, 7
        %v9012 = vsub.s32 %v9009, %v9011
        %v9013 = vrot.slane %v8452, %v9012
        %v9014 = vcombine.low %v8451, %v8453
        %v9015 = vcombine.low %v8461, %v8469
        %v9017 = vunpack.c.l.s4 1983009808
        %v9018 = vunpack.c.0.s8 %v9017
        %v9019 = vlaneseq
        %v9020 = vshrl.u32 %v9019, 7
        %v9021 = vsub.s32 %v9018, %v9020
        %v9022 = vrot.slane %v9014, %v9021
        %v9024 = vunpack.c.l.s4 1983009808
        %v9025 = vunpack.c.0.s8 %v9024
        %v9026 = vlaneseq
        %v9027 = vshrl.u32 %v9026, 7
        %v9028 = vsub.s32 %v9025, %v9027
        %v9029 = vrot.slane %v9015, %v9028
        %v9030 = vcombine.low %v9022, %v9029
        %v9031 = vcombine.low %v8468, %v8470
        %v9032 = vcombine.low %v8478, %v8486
        %v9034 = vunpack.c.l.s4 1983009808
        %v9035 = vunpack.c.0.s8 %v9034
        %v9036 = vlaneseq
        %v9037 = vshrl.u32 %v9036, 7
        %v9038 = vsub.s32 %v9035, %v9037
        %v9039 = vrot.slane %v9031, %v9038
        %v9041 = vunpack.c.l.s4 1983009808
        %v9042 = vunpack.c.0.s8 %v9041
        %v9043 = vlaneseq
        %v9044 = vshrl.u32 %v9043, 7
        %v9045 = vsub.s32 %v9042, %v9044
        %v9046 = vrot.slane %v9032, %v9045
        %v9047 = vcombine.low %v9039, %v9046
        %v9049 = vunpack.c.l.s4 1983009808
        %v9050 = vunpack.c.0.s8 %v9049
        %v9051 = vlaneseq
        %v9052 = vshrl.u32 %v9051, 7
        %v9053 = vsub.s32 %v9050, %v9052
        %v9054 = vrot.slane %v8485, %v9053
        %v9055 = vcombine.low %v8487, %v8495
        %v9056 = vcombine.low %v8503, %v8502
        %v9058 = vunpack.c.l.s4 1983009808
        %v9059 = vunpack.c.0.s8 %v9058
        %v9060 = vlaneseq
        %v9061 = vshrl.u32 %v9060, 7
        %v9062 = vsub.s32 %v9059, %v9061
        %v9063 = vrot.slane %v9055, %v9062
        %v9065 = vunpack.c.l.s4 1983009808
        %v9066 = vunpack.c.0.s8 %v9065
        %v9067 = vlaneseq
        %v9068 = vshrl.u32 %v9067, 7
        %v9069 = vsub.s32 %v9066, %v9068
        %v9070 = vrot.slane %v9056, %v9069
        %v9071 = vcombine.low %v9063, %v9070
        %v9072 = vcombine.low %v8504, %v8512
        %v9073 = vcombine.low %v8520, %v8519
        %v9075 = vunpack.c.l.s4 1983009808
        %v9076 = vunpack.c.0.s8 %v9075
        %v9077 = vlaneseq
        %v9078 = vshrl.u32 %v9077, 7
        %v9079 = vsub.s32 %v9076, %v9078
        %v9080 = vrot.slane %v9072, %v9079
        %v9082 = vunpack.c.l.s4 1983009808
        %v9083 = vunpack.c.0.s8 %v9082
        %v9084 = vlaneseq
        %v9085 = vshrl.u32 %v9084, 7
        %v9086 = vsub.s32 %v9083, %v9085
        %v9087 = vrot.slane %v9073, %v9086
        %v9088 = vcombine.low %v9080, %v9087
        %v9090 = vunpack.c.l.s4 1983009808
        %v9091 = vunpack.c.0.s8 %v9090
        %v9092 = vlaneseq
        %v9093 = vshrl.u32 %v9092, 7
        %v9094 = vsub.s32 %v9091, %v9093
        %v9095 = vrot.slane %v8521, %v9094
        %v9096 = vcombine.low %v8529, %v8537
        %v9097 = vcombine.low %v8536, %v8538
        %v9099 = vunpack.c.l.s4 1983009808
        %v9100 = vunpack.c.0.s8 %v9099
        %v9101 = vlaneseq
        %v9102 = vshrl.u32 %v9101, 7
        %v9103 = vsub.s32 %v9100, %v9102
        %v9104 = vrot.slane %v9096, %v9103
        %v9106 = vunpack.c.l.s4 1983009808
        %v9107 = vunpack.c.0.s8 %v9106
        %v9108 = vlaneseq
        %v9109 = vshrl.u32 %v9108, 7
        %v9110 = vsub.s32 %v9107, %v9109
        %v9111 = vrot.slane %v9097, %v9110
        %v9112 = vcombine.low %v9104, %v9111
        %v9113 = vcombine.low %v8546, %v8554
        %v9114 = vcombine.low %v8553, %v8555
        %v9116 = vunpack.c.l.s4 1983009808
        %v9117 = vunpack.c.0.s8 %v9116
        %v9118 = vlaneseq
        %v9119 = vshrl.u32 %v9118, 7
        %v9120 = vsub.s32 %v9117, %v9119
        %v9121 = vrot.slane %v9113, %v9120
        %v9123 = vunpack.c.l.s4 1983009808
        %v9124 = vunpack.c.0.s8 %v9123
        %v9125 = vlaneseq
        %v9126 = vshrl.u32 %v9125, 7
        %v9127 = vsub.s32 %v9124, %v9126
        %v9128 = vrot.slane %v9114, %v9127
        %v9129 = vcombine.low %v9121, %v9128
        %v9131 = vunpack.c.l.s4 1983009808
        %v9132 = vunpack.c.0.s8 %v9131
        %v9133 = vlaneseq
        %v9134 = vshrl.u32 %v9133, 7
        %v9135 = vsub.s32 %v9132, %v9134
        %v9136 = vrot.slane %v8563, %v9135
        %v9137 = vcombine.low %v8571, %v8570
        %v9138 = vcombine.low %v8572, %v8580
        %v9140 = vunpack.c.l.s4 1983009808
        %v9141 = vunpack.c.0.s8 %v9140
        %v9142 = vlaneseq
        %v9143 = vshrl.u32 %v9142, 7
        %v9144 = vsub.s32 %v9141, %v9143
        %v9145 = vrot.slane %v9137, %v9144
        %v9147 = vunpack.c.l.s4 1983009808
        %v9148 = vunpack.c.0.s8 %v9147
        %v9149 = vlaneseq
        %v9150 = vshrl.u32 %v9149, 7
        %v9151 = vsub.s32 %v9148, %v9150
        %v9152 = vrot.slane %v9138, %v9151
        %v9153 = vcombine.low %v9145, %v9152
        %v9154 = vcombine.low %v8588, %v8587
        %v9155 = vcombine.low %v8589, %v8596
        %v9157 = vunpack.c.l.s4 1983009808
        %v9158 = vunpack.c.0.s8 %v9157
        %v9159 = vlaneseq
        %v9160 = vshrl.u32 %v9159, 7
        %v9161 = vsub.s32 %v9158, %v9160
        %v9162 = vrot.slane %v9154, %v9161
        %v9164 = vunpack.c.l.s4 1983009808
        %v9165 = vunpack.c.0.s8 %v9164
        %v9166 = vlaneseq
        %v9167 = vshrl.u32 %v9166, 7
        %v9168 = vsub.s32 %v9165, %v9167
        %v9169 = vrot.slane %v9155, %v9168
        %v9170 = vcombine.low %v9162, %v9169
        %v9172 = vunpack.c.l.s4 1983009808
        %v9173 = vunpack.c.0.s8 %v9172
        %v9174 = vlaneseq
        %v9175 = vshrl.u32 %v9174, 7
        %v9176 = vsub.s32 %v9173, %v9175
        %v9177 = vrot.slane %v8597, %v9176
        %v9208 = vsel %vm8738, %v8784, 0.0
        %v9209 = vsel %vm8739, %v8801, 0.0
        %v9210 = vsel %vm8740, %v8808, 0.0
        %v9211 = vsel %vm8741, %v8825, 0.0
        %v9212 = vsel %vm8742, %v8842, 0.0
        %v9213 = vsel %vm8743, %v8849, 0.0
        %v9214 = vsel %vm8744, %v8866, 0.0
        %v9215 = vsel %vm8745, %v8883, 0.0
        %v9216 = vsel %vm8746, %v8890, 0.0
        %v9217 = vsel %vm8747, %v8907, 0.0
        %v9218 = vsel %vm8748, %v8924, 0.0
        %v9219 = vsel %vm8749, %v8931, 0.0
        %v9220 = vsel %vm8750, %v8948, 0.0
        %v9221 = vsel %vm8751, %v8965, 0.0
        %v9222 = vsel %vm8752, %v8972, 0.0
        %v9223 = vsel %vm8753, %v8989, 0.0
        %v9224 = vsel %vm8754, %v9006, 0.0
        %v9225 = vsel %vm8755, %v9013, 0.0
        %v9226 = vsel %vm8756, %v9030, 0.0
        %v9227 = vsel %vm8757, %v9047, 0.0
        %v9228 = vsel %vm8758, %v9054, 0.0
        %v9229 = vsel %vm8759, %v9071, 0.0
        %v9230 = vsel %vm8760, %v9088, 0.0
        %v9231 = vsel %vm8761, %v9095, 0.0
        %v9232 = vsel %vm8762, %v9112, 0.0
        %v9233 = vsel %vm8763, %v9129, 0.0
        %v9234 = vsel %vm8764, %v9136, 0.0
        %v9235 = vsel %vm8765, %v9153, 0.0
        %v9236 = vsel %vm8766, %v9170, 0.0
        %v9237 = vsel %vm8767, %v9177, 0.0
        %v9238 = vpack.c.bf16 %v9209, %v9208
        %v9239 = vpack.c.bf16 %v9210, %v9210
        %v9240 = vpack.c.bf16 %v9212, %v9211
        %v9241 = vpack.c.bf16 %v9213, %v9213
        %v9242 = vpack.c.bf16 %v9215, %v9214
        %v9243 = vpack.c.bf16 %v9216, %v9216
        %v9244 = vpack.c.bf16 %v9218, %v9217
        %v9245 = vpack.c.bf16 %v9219, %v9219
        %v9246 = vpack.c.bf16 %v9221, %v9220
        %v9247 = vpack.c.bf16 %v9222, %v9222
        %v9248 = vpack.c.bf16 %v9224, %v9223
        %v9249 = vpack.c.bf16 %v9225, %v9225
        %v9250 = vpack.c.bf16 %v9227, %v9226
        %v9251 = vpack.c.bf16 %v9228, %v9228
        %v9252 = vpack.c.bf16 %v9230, %v9229
        %v9253 = vpack.c.bf16 %v9231, %v9231
        %v9254 = vpack.c.bf16 %v9233, %v9232
        %v9255 = vpack.c.bf16 %v9234, %v9234
        %v9256 = vpack.c.bf16 %v9236, %v9235
        %v9257 = vpack.c.bf16 %v9237, %v9237
        %v9278 = vunpack.c.l.b16 %v9238
        %v9279 = vunpack.c.h.b16 %v9238
        %v9280 = vunpack.c.l.b16 %v9239
        %v9281 = vunpack.c.l.b16 %v9240
        %v9282 = vunpack.c.h.b16 %v9240
        %v9283 = vunpack.c.l.b16 %v9241
        %v9284 = vunpack.c.l.b16 %v9242
        %v9285 = vunpack.c.h.b16 %v9242
        %v9286 = vunpack.c.l.b16 %v9243
        %v9287 = vunpack.c.l.b16 %v9244
        %v9288 = vunpack.c.h.b16 %v9244
        %v9289 = vunpack.c.l.b16 %v9245
        %v9290 = vunpack.c.l.b16 %v9246
        %v9291 = vunpack.c.h.b16 %v9246
        %v9292 = vunpack.c.l.b16 %v9247
        %v9293 = vunpack.c.l.b16 %v9248
        %v9294 = vunpack.c.h.b16 %v9248
        %v9295 = vunpack.c.l.b16 %v9249
        %v9296 = vunpack.c.l.b16 %v9250
        %v9297 = vunpack.c.h.b16 %v9250
        %v9298 = vunpack.c.l.b16 %v9251
        %v9299 = vunpack.c.l.b16 %v9252
        %v9300 = vunpack.c.h.b16 %v9252
        %v9301 = vunpack.c.l.b16 %v9253
        %v9302 = vunpack.c.l.b16 %v9254
        %v9303 = vunpack.c.h.b16 %v9254
        %v9304 = vunpack.c.l.b16 %v9255
        %v9305 = vunpack.c.l.b16 %v9256
        %v9306 = vunpack.c.h.b16 %v9256
        %v9307 = vunpack.c.l.b16 %v9257
        %v9308 = vpack.c.b16 %v9278, %v9278
        %v9309 = vpack.c.b16 %v9279, %v9279
        %v9310 = vpack.c.b16 %v9280, %v9280
        %v9311 = vpack.c.b16 %v9281, %v9281
        %v9312 = vpack.c.b16 %v9282, %v9282
        %v9313 = vpack.c.b16 %v9283, %v9283
        %v9314 = vpack.c.b16 %v9284, %v9284
        %v9315 = vpack.c.b16 %v9285, %v9285
        %v9316 = vpack.c.b16 %v9286, %v9286
        %v9317 = vpack.c.b16 %v9287, %v9287
        %v9318 = vpack.c.b16 %v9288, %v9288
        %v9319 = vpack.c.b16 %v9289, %v9289
        %v9320 = vpack.c.b16 %v9290, %v9290
        %v9321 = vpack.c.b16 %v9291, %v9291
        %v9322 = vpack.c.b16 %v9292, %v9292
        %v9323 = vpack.c.b16 %v9293, %v9293
        %v9324 = vpack.c.b16 %v9294, %v9294
        %v9325 = vpack.c.b16 %v9295, %v9295
        %v9326 = vpack.c.b16 %v9296, %v9296
        %v9327 = vpack.c.b16 %v9297, %v9297
        %v9328 = vpack.c.b16 %v9298, %v9298
        %v9329 = vpack.c.b16 %v9299, %v9299
        %v9330 = vpack.c.b16 %v9300, %v9300
        %v9331 = vpack.c.b16 %v9301, %v9301
        %v9332 = vpack.c.b16 %v9302, %v9302
        %v9333 = vpack.c.b16 %v9303, %v9303
        %v9334 = vpack.c.b16 %v9304, %v9304
        %v9335 = vpack.c.b16 %v9305, %v9305
        %v9336 = vpack.c.b16 %v9306, %v9306
        %v9337 = vpack.c.b16 %v9307, %v9307
        %9368 = vst [vmem:[#allocation4] sm:$0xf] %v9308
        %9369 = vst [vmem:[#allocation4 + $0x4] sm:$0xf] %v9309
        %9370 = vst [vmem:[#allocation4 + $0x8] sm:$0x1] %v9310
        %9371 = vst [vmem:[#allocation4 + $0xc] sm:$0xf] %v9311
        %9372 = vst [vmem:[#allocation4 + $0x10] sm:$0xf] %v9312
        %9373 = vst [vmem:[#allocation4 + $0x14] sm:$0x1] %v9313
        %9374 = vst [vmem:[#allocation4 + $0x18] sm:$0xf] %v9314
        %9375 = vst [vmem:[#allocation4 + $0x1c] sm:$0xf] %v9315
        %9376 = vst [vmem:[#allocation4 + $0x20] sm:$0x1] %v9316
        %9377 = vst [vmem:[#allocation4 + $0x24] sm:$0xf] %v9317
        %9378 = vst [vmem:[#allocation4 + $0x28] sm:$0xf] %v9318
        %9379 = vst [vmem:[#allocation4 + $0x2c] sm:$0x1] %v9319
        %9380 = vst [vmem:[#allocation4 + $0x30] sm:$0xf] %v9320
        %9381 = vst [vmem:[#allocation4 + $0x34] sm:$0xf] %v9321
        %9382 = vst [vmem:[#allocation4 + $0x38] sm:$0x1] %v9322
        %9383 = vst [vmem:[#allocation4 + $0x3c] sm:$0xf] %v9323
        %9384 = vst [vmem:[#allocation4 + $0x40] sm:$0xf] %v9324
        %9385 = vst [vmem:[#allocation4 + $0x44] sm:$0x1] %v9325
        %9386 = vst [vmem:[#allocation4 + $0x48] sm:$0xf] %v9326
        %9387 = vst [vmem:[#allocation4 + $0x4c] sm:$0xf] %v9327
        %9388 = vst [vmem:[#allocation4 + $0x50] sm:$0x1] %v9328
        %9389 = vst [vmem:[#allocation4 + $0x54] sm:$0xf] %v9329
        %9390 = vst [vmem:[#allocation4 + $0x58] sm:$0xf] %v9330
        %9391 = vst [vmem:[#allocation4 + $0x5c] sm:$0x1] %v9331
        %9392 = vst [vmem:[#allocation4 + $0x60] sm:$0xf] %v9332
        %9393 = vst [vmem:[#allocation4 + $0x64] sm:$0xf] %v9333
        %9394 = vst [vmem:[#allocation4 + $0x68] sm:$0x1] %v9334
        %9395 = vst [vmem:[#allocation4 + $0x6c] sm:$0xf] %v9335
        %9396 = vst [vmem:[#allocation4 + $0x70] sm:$0xf] %v9336
        %9397 = vst [vmem:[#allocation4 + $0x74] sm:$0x1] %v9337
        %v9398 = vld [vmem:[#allocation4] sm:$0xf]
        %v9399 = vld [vmem:[#allocation4 + $0x4] sm:$0xf]
        %v9400 = vld [vmem:[#allocation4 + $0xc] sm:$0xf]
        %v9401 = vld [vmem:[#allocation4 + $0x10] sm:$0xf]
        %v9402 = vld [vmem:[#allocation4 + $0x18] sm:$0xf]
        %v9403 = vld [vmem:[#allocation4 + $0x1c] sm:$0xf]
        %v9404 = vld [vmem:[#allocation4 + $0x24] sm:$0xf]
        %v9405 = vld [vmem:[#allocation4 + $0x28] sm:$0xf]
        %v9406 = vld [vmem:[#allocation4 + $0x30] sm:$0xf]
        %v9407 = vld [vmem:[#allocation4 + $0x34] sm:$0xf]
        %v9408 = vld [vmem:[#allocation4 + $0x3c] sm:$0xf]
        %v9409 = vld [vmem:[#allocation4 + $0x40] sm:$0xf]
        %v9410 = vld [vmem:[#allocation4 + $0x48] sm:$0xf]
        %v9411 = vld [vmem:[#allocation4 + $0x4c] sm:$0xf]
        %v9412 = vld [vmem:[#allocation4 + $0x54] sm:$0xf]
        %v9413 = vld [vmem:[#allocation4 + $0x58] sm:$0xf]
        %v9414 = vld [vmem:[#allocation4 + $0x8] sm:$0x1]
        %v9415 = vld [vmem:[#allocation4 + $0x14] sm:$0x1]
        %v9416 = vld [vmem:[#allocation4 + $0x20] sm:$0x1]
        %v9417 = vld [vmem:[#allocation4 + $0x2c] sm:$0x1]
        %v9418 = vld [vmem:[#allocation4 + $0x38] sm:$0x1]
        %v9419 = vld [vmem:[#allocation4 + $0x44] sm:$0x1]
        %v9420 = vld [vmem:[#allocation4 + $0x50] sm:$0x1]
        %v9421 = vld [vmem:[#allocation4 + $0x5c] sm:$0x1]
        %v9422 = vld [vmem:[#allocation4] sm:$0xe]
        %v9423 = vld [vmem:[#allocation4 + $0xc] sm:$0xe]
        %v9424 = vld [vmem:[#allocation4 + $0x18] sm:$0xe]
        %v9425 = vld [vmem:[#allocation4 + $0x24] sm:$0xe]
        %v9426 = vld [vmem:[#allocation4 + $0x30] sm:$0xe]
        %v9427 = vld [vmem:[#allocation4 + $0x3c] sm:$0xe]
        %v9428 = vld [vmem:[#allocation4 + $0x48] sm:$0xe]
        %v9429 = vld [vmem:[#allocation4 + $0x54] sm:$0xe]
        %s9430 = scalar_lea.vmem [#allocation4], 12
        %v9431 = vld [vmem:[%s9430] sm:$0xf]
        %v9432 = vld [vmem:[%s9430 + $0x4] sm:$0xf]
        %v9433 = vld [vmem:[%s9430 + $0xc] sm:$0xf]
        %v9434 = vld [vmem:[%s9430 + $0x10] sm:$0xf]
        %v9435 = vld [vmem:[%s9430 + $0x18] sm:$0xf]
        %v9436 = vld [vmem:[%s9430 + $0x1c] sm:$0xf]
        %v9437 = vld [vmem:[%s9430 + $0x24] sm:$0xf]
        %v9438 = vld [vmem:[%s9430 + $0x28] sm:$0xf]
        %v9439 = vld [vmem:[%s9430 + $0x30] sm:$0xf]
        %v9440 = vld [vmem:[%s9430 + $0x34] sm:$0xf]
        %v9441 = vld [vmem:[%s9430 + $0x3c] sm:$0xf]
        %v9442 = vld [vmem:[%s9430 + $0x40] sm:$0xf]
        %v9443 = vld [vmem:[%s9430 + $0x48] sm:$0xf]
        %v9444 = vld [vmem:[%s9430 + $0x4c] sm:$0xf]
        %v9445 = vld [vmem:[%s9430 + $0x54] sm:$0xf]
        %v9446 = vld [vmem:[%s9430 + $0x58] sm:$0xf]
        %v9447 = vld [vmem:[%s9430 + $0x8] sm:$0x1]
        %v9448 = vld [vmem:[%s9430 + $0x14] sm:$0x1]
        %v9449 = vld [vmem:[%s9430 + $0x20] sm:$0x1]
        %v9450 = vld [vmem:[%s9430 + $0x2c] sm:$0x1]
        %v9451 = vld [vmem:[%s9430 + $0x38] sm:$0x1]
        %v9452 = vld [vmem:[%s9430 + $0x44] sm:$0x1]
        %v9453 = vld [vmem:[%s9430 + $0x50] sm:$0x1]
        %v9454 = vld [vmem:[%s9430 + $0x5c] sm:$0x1]
        %v9455 = vld [vmem:[%s9430] sm:$0xe]
        %v9456 = vld [vmem:[%s9430 + $0xc] sm:$0xe]
        %v9457 = vld [vmem:[%s9430 + $0x18] sm:$0xe]
        %v9458 = vld [vmem:[%s9430 + $0x24] sm:$0xe]
        %v9459 = vld [vmem:[%s9430 + $0x30] sm:$0xe]
        %v9460 = vld [vmem:[%s9430 + $0x3c] sm:$0xe]
        %v9461 = vld [vmem:[%s9430 + $0x48] sm:$0xe]
        %v9462 = vld [vmem:[%s9430 + $0x54] sm:$0xe]
        %s9463 = scalar_lea.vmem [#allocation4], 24
        %v9464 = vld [vmem:[%s9463] sm:$0xf]
        %v9465 = vld [vmem:[%s9463 + $0x4] sm:$0xf]
        %v9466 = vld [vmem:[%s9463 + $0xc] sm:$0xf]
        %v9467 = vld [vmem:[%s9463 + $0x10] sm:$0xf]
        %v9468 = vld [vmem:[%s9463 + $0x18] sm:$0xf]
        %v9469 = vld [vmem:[%s9463 + $0x1c] sm:$0xf]
        %v9470 = vld [vmem:[%s9463 + $0x24] sm:$0xf]
        %v9471 = vld [vmem:[%s9463 + $0x28] sm:$0xf]
        %v9472 = vld [vmem:[%s9463 + $0x30] sm:$0xf]
        %v9473 = vld [vmem:[%s9463 + $0x34] sm:$0xf]
        %v9474 = vld [vmem:[%s9463 + $0x3c] sm:$0xf]
        %v9475 = vld [vmem:[%s9463 + $0x40] sm:$0xf]
        %v9476 = vld [vmem:[%s9463 + $0x48] sm:$0xf]
        %v9477 = vld [vmem:[%s9463 + $0x4c] sm:$0xf]
        %v9478 = vld [vmem:[%s9463 + $0x54] sm:$0xf]
        %v9479 = vld [vmem:[%s9463 + $0x58] sm:$0xf]
        %v9480 = vld [vmem:[%s9463 + $0x8] sm:$0x1]
        %v9481 = vld [vmem:[%s9463 + $0x14] sm:$0x1]
        %v9482 = vld [vmem:[%s9463 + $0x20] sm:$0x1]
        %v9483 = vld [vmem:[%s9463 + $0x2c] sm:$0x1]
        %v9484 = vld [vmem:[%s9463 + $0x38] sm:$0x1]
        %v9485 = vld [vmem:[%s9463 + $0x44] sm:$0x1]
        %v9486 = vld [vmem:[%s9463 + $0x50] sm:$0x1]
        %v9487 = vld [vmem:[%s9463 + $0x5c] sm:$0x1]
        %v9488 = vld [vmem:[%s9463] sm:$0xe]
        %v9489 = vld [vmem:[%s9463 + $0xc] sm:$0xe]
        %v9490 = vld [vmem:[%s9463 + $0x18] sm:$0xe]
        %v9491 = vld [vmem:[%s9463 + $0x24] sm:$0xe]
        %v9492 = vld [vmem:[%s9463 + $0x30] sm:$0xe]
        %v9493 = vld [vmem:[%s9463 + $0x3c] sm:$0xe]
        %v9494 = vld [vmem:[%s9463 + $0x48] sm:$0xe]
        %v9495 = vld [vmem:[%s9463 + $0x54] sm:$0xe]
        %v9512 = vunpack.c.l.b16 %v9398
        %v9513 = vunpack.c.l.b16 %v9399
        %v9514 = vunpack.c.l.b16 %v9400
        %v9515 = vunpack.c.l.b16 %v9401
        %v9516 = vunpack.c.l.b16 %v9402
        %v9517 = vunpack.c.l.b16 %v9403
        %v9518 = vunpack.c.l.b16 %v9404
        %v9519 = vunpack.c.l.b16 %v9405
        %v9520 = vunpack.c.l.b16 %v9406
        %v9521 = vunpack.c.l.b16 %v9407
        %v9522 = vunpack.c.l.b16 %v9408
        %v9523 = vunpack.c.l.b16 %v9409
        %v9524 = vunpack.c.l.b16 %v9410
        %v9525 = vunpack.c.l.b16 %v9411
        %v9526 = vunpack.c.l.b16 %v9412
        %v9527 = vunpack.c.l.b16 %v9413
        %v9528 = vpack.c.b16 %v9513, %v9512
        %v9529 = vpack.c.b16 %v9515, %v9514
        %v9530 = vpack.c.b16 %v9517, %v9516
        %v9531 = vpack.c.b16 %v9519, %v9518
        %v9532 = vpack.c.b16 %v9521, %v9520
        %v9533 = vpack.c.b16 %v9523, %v9522
        %v9534 = vpack.c.b16 %v9525, %v9524
        %v9535 = vpack.c.b16 %v9527, %v9526
        %v9552 = vunpack.c.l.b16 %v9414
        %v9553 = vunpack.c.l.b16 %v9415
        %v9554 = vunpack.c.l.b16 %v9416
        %v9555 = vunpack.c.l.b16 %v9417
        %v9556 = vunpack.c.l.b16 %v9418
        %v9557 = vunpack.c.l.b16 %v9419
        %v9558 = vunpack.c.l.b16 %v9420
        %v9559 = vunpack.c.l.b16 %v9421
        %v9560 = vpack.c.b16 %v9552, %v9552
        %v9561 = vpack.c.b16 %v9553, %v9553
        %v9562 = vpack.c.b16 %v9554, %v9554
        %v9563 = vpack.c.b16 %v9555, %v9555
        %v9564 = vpack.c.b16 %v9556, %v9556
        %v9565 = vpack.c.b16 %v9557, %v9557
        %v9566 = vpack.c.b16 %v9558, %v9558
        %v9567 = vpack.c.b16 %v9559, %v9559
        %v9569 = vshrl.u32 %v9528, 16
        %v9571 = vshll.u32 %v9528, 16
        %v9573 = vrot.slane %v9571, 1
        %v9574 = vor.u32 %v9569, %v9573
        %v9576 = vshll.u32 %v9560, 16
        %v9578 = vrot.slane %v9576, 1
        %v9579 = vsel %vm1301, %v9574, %v9578
        %v9581 = vshrl.u32 %v9529, 16
        %v9583 = vshll.u32 %v9529, 16
        %v9585 = vrot.slane %v9583, 1
        %v9586 = vor.u32 %v9581, %v9585
        %v9588 = vshll.u32 %v9561, 16
        %v9590 = vrot.slane %v9588, 1
        %v9591 = vsel %vm1301, %v9586, %v9590
        %v9593 = vshrl.u32 %v9530, 16
        %v9595 = vshll.u32 %v9530, 16
        %v9597 = vrot.slane %v9595, 1
        %v9598 = vor.u32 %v9593, %v9597
        %v9600 = vshll.u32 %v9562, 16
        %v9602 = vrot.slane %v9600, 1
        %v9603 = vsel %vm1301, %v9598, %v9602
        %v9605 = vshrl.u32 %v9531, 16
        %v9607 = vshll.u32 %v9531, 16
        %v9609 = vrot.slane %v9607, 1
        %v9610 = vor.u32 %v9605, %v9609
        %v9612 = vshll.u32 %v9563, 16
        %v9614 = vrot.slane %v9612, 1
        %v9615 = vsel %vm1301, %v9610, %v9614
        %v9617 = vshrl.u32 %v9532, 16
        %v9619 = vshll.u32 %v9532, 16
        %v9621 = vrot.slane %v9619, 1
        %v9622 = vor.u32 %v9617, %v9621
        %v9624 = vshll.u32 %v9564, 16
        %v9626 = vrot.slane %v9624, 1
        %v9627 = vsel %vm1301, %v9622, %v9626
        %v9629 = vshrl.u32 %v9533, 16
        %v9631 = vshll.u32 %v9533, 16
        %v9633 = vrot.slane %v9631, 1
        %v9634 = vor.u32 %v9629, %v9633
        %v9636 = vshll.u32 %v9565, 16
        %v9638 = vrot.slane %v9636, 1
        %v9639 = vsel %vm1301, %v9634, %v9638
        %v9641 = vshrl.u32 %v9534, 16
        %v9643 = vshll.u32 %v9534, 16
        %v9645 = vrot.slane %v9643, 1
        %v9646 = vor.u32 %v9641, %v9645
        %v9648 = vshll.u32 %v9566, 16
        %v9650 = vrot.slane %v9648, 1
        %v9651 = vsel %vm1301, %v9646, %v9650
        %v9653 = vshrl.u32 %v9535, 16
        %v9655 = vshll.u32 %v9535, 16
        %v9657 = vrot.slane %v9655, 1
        %v9658 = vor.u32 %v9653, %v9657
        %v9660 = vshll.u32 %v9567, 16
        %v9662 = vrot.slane %v9660, 1
        %v9663 = vsel %vm1301, %v9658, %v9662
        %v9680 = vunpack.c.l.b16 %v9422
        %v9681 = vunpack.c.l.b16 %v9423
        %v9682 = vunpack.c.l.b16 %v9424
        %v9683 = vunpack.c.l.b16 %v9425
        %v9684 = vunpack.c.l.b16 %v9426
        %v9685 = vunpack.c.l.b16 %v9427
        %v9686 = vunpack.c.l.b16 %v9428
        %v9687 = vunpack.c.l.b16 %v9429
        %v9688 = vpack.c.b16 %v9513, %v9680
        %v9689 = vpack.c.b16 %v9515, %v9681
        %v9690 = vpack.c.b16 %v9517, %v9682
        %v9691 = vpack.c.b16 %v9519, %v9683
        %v9692 = vpack.c.b16 %v9521, %v9684
        %v9693 = vpack.c.b16 %v9523, %v9685
        %v9694 = vpack.c.b16 %v9525, %v9686
        %v9695 = vpack.c.b16 %v9527, %v9687
        %v9696 = vrot.slane %v9688, 1
        %v9697 = vrot.slane %v9560, 1
        %v9698 = vsel %vm1482, %v9696, %v9697
        %v9699 = vrot.slane %v9689, 1
        %v9700 = vrot.slane %v9561, 1
        %v9701 = vsel %vm1482, %v9699, %v9700
        %v9702 = vrot.slane %v9690, 1
        %v9703 = vrot.slane %v9562, 1
        %v9704 = vsel %vm1482, %v9702, %v9703
        %v9705 = vrot.slane %v9691, 1
        %v9706 = vrot.slane %v9563, 1
        %v9707 = vsel %vm1482, %v9705, %v9706
        %v9708 = vrot.slane %v9692, 1
        %v9709 = vrot.slane %v9564, 1
        %v9710 = vsel %vm1482, %v9708, %v9709
        %v9711 = vrot.slane %v9693, 1
        %v9712 = vrot.slane %v9565, 1
        %v9713 = vsel %vm1482, %v9711, %v9712
        %v9714 = vrot.slane %v9694, 1
        %v9715 = vrot.slane %v9566, 1
        %v9716 = vsel %vm1482, %v9714, %v9715
        %v9717 = vrot.slane %v9695, 1
        %v9718 = vrot.slane %v9567, 1
        %v9719 = vsel %vm1482, %v9717, %v9718
        %v9744 = vunpack.c.l.b16 %v9431
        %v9745 = vunpack.c.l.b16 %v9432
        %v9746 = vunpack.c.l.b16 %v9433
        %v9747 = vunpack.c.l.b16 %v9434
        %v9748 = vunpack.c.l.b16 %v9435
        %v9749 = vunpack.c.l.b16 %v9436
        %v9750 = vunpack.c.l.b16 %v9437
        %v9751 = vunpack.c.l.b16 %v9438
        %v9752 = vunpack.c.l.b16 %v9439
        %v9753 = vunpack.c.l.b16 %v9440
        %v9754 = vunpack.c.l.b16 %v9441
        %v9755 = vunpack.c.l.b16 %v9442
        %v9756 = vunpack.c.l.b16 %v9443
        %v9757 = vunpack.c.l.b16 %v9444
        %v9758 = vunpack.c.l.b16 %v9445
        %v9759 = vunpack.c.l.b16 %v9446
        %v9760 = vpack.c.b16 %v9745, %v9744
        %v9761 = vpack.c.b16 %v9747, %v9746
        %v9762 = vpack.c.b16 %v9749, %v9748
        %v9763 = vpack.c.b16 %v9751, %v9750
        %v9764 = vpack.c.b16 %v9753, %v9752
        %v9765 = vpack.c.b16 %v9755, %v9754
        %v9766 = vpack.c.b16 %v9757, %v9756
        %v9767 = vpack.c.b16 %v9759, %v9758
        %v9784 = vunpack.c.l.b16 %v9447
        %v9785 = vunpack.c.l.b16 %v9448
        %v9786 = vunpack.c.l.b16 %v9449
        %v9787 = vunpack.c.l.b16 %v9450
        %v9788 = vunpack.c.l.b16 %v9451
        %v9789 = vunpack.c.l.b16 %v9452
        %v9790 = vunpack.c.l.b16 %v9453
        %v9791 = vunpack.c.l.b16 %v9454
        %v9792 = vpack.c.b16 %v9784, %v9784
        %v9793 = vpack.c.b16 %v9785, %v9785
        %v9794 = vpack.c.b16 %v9786, %v9786
        %v9795 = vpack.c.b16 %v9787, %v9787
        %v9796 = vpack.c.b16 %v9788, %v9788
        %v9797 = vpack.c.b16 %v9789, %v9789
        %v9798 = vpack.c.b16 %v9790, %v9790
        %v9799 = vpack.c.b16 %v9791, %v9791
        %v9801 = vshrl.u32 %v9760, 16
        %v9803 = vshll.u32 %v9760, 16
        %v9805 = vrot.slane %v9803, 1
        %v9806 = vor.u32 %v9801, %v9805
        %v9808 = vshll.u32 %v9792, 16
        %v9810 = vrot.slane %v9808, 1
        %v9811 = vsel %vm1301, %v9806, %v9810
        %v9813 = vshrl.u32 %v9761, 16
        %v9815 = vshll.u32 %v9761, 16
        %v9817 = vrot.slane %v9815, 1
        %v9818 = vor.u32 %v9813, %v9817
        %v9820 = vshll.u32 %v9793, 16
        %v9822 = vrot.slane %v9820, 1
        %v9823 = vsel %vm1301, %v9818, %v9822
        %v9825 = vshrl.u32 %v9762, 16
        %v9827 = vshll.u32 %v9762, 16
        %v9829 = vrot.slane %v9827, 1
        %v9830 = vor.u32 %v9825, %v9829
        %v9832 = vshll.u32 %v9794, 16
        %v9834 = vrot.slane %v9832, 1
        %v9835 = vsel %vm1301, %v9830, %v9834
        %v9837 = vshrl.u32 %v9763, 16
        %v9839 = vshll.u32 %v9763, 16
        %v9841 = vrot.slane %v9839, 1
        %v9842 = vor.u32 %v9837, %v9841
        %v9844 = vshll.u32 %v9795, 16
        %v9846 = vrot.slane %v9844, 1
        %v9847 = vsel %vm1301, %v9842, %v9846
        %v9849 = vshrl.u32 %v9764, 16
        %v9851 = vshll.u32 %v9764, 16
        %v9853 = vrot.slane %v9851, 1
        %v9854 = vor.u32 %v9849, %v9853
        %v9856 = vshll.u32 %v9796, 16
        %v9858 = vrot.slane %v9856, 1
        %v9859 = vsel %vm1301, %v9854, %v9858
        %v9861 = vshrl.u32 %v9765, 16
        %v9863 = vshll.u32 %v9765, 16
        %v9865 = vrot.slane %v9863, 1
        %v9866 = vor.u32 %v9861, %v9865
        %v9868 = vshll.u32 %v9797, 16
        %v9870 = vrot.slane %v9868, 1
        %v9871 = vsel %vm1301, %v9866, %v9870
        %v9873 = vshrl.u32 %v9766, 16
        %v9875 = vshll.u32 %v9766, 16
        %v9877 = vrot.slane %v9875, 1
        %v9878 = vor.u32 %v9873, %v9877
        %v9880 = vshll.u32 %v9798, 16
        %v9882 = vrot.slane %v9880, 1
        %v9883 = vsel %vm1301, %v9878, %v9882
        %v9885 = vshrl.u32 %v9767, 16
        %v9887 = vshll.u32 %v9767, 16
        %v9889 = vrot.slane %v9887, 1
        %v9890 = vor.u32 %v9885, %v9889
        %v9892 = vshll.u32 %v9799, 16
        %v9894 = vrot.slane %v9892, 1
        %v9895 = vsel %vm1301, %v9890, %v9894
        %v9912 = vunpack.c.l.b16 %v9455
        %v9913 = vunpack.c.l.b16 %v9456
        %v9914 = vunpack.c.l.b16 %v9457
        %v9915 = vunpack.c.l.b16 %v9458
        %v9916 = vunpack.c.l.b16 %v9459
        %v9917 = vunpack.c.l.b16 %v9460
        %v9918 = vunpack.c.l.b16 %v9461
        %v9919 = vunpack.c.l.b16 %v9462
        %v9920 = vpack.c.b16 %v9745, %v9912
        %v9921 = vpack.c.b16 %v9747, %v9913
        %v9922 = vpack.c.b16 %v9749, %v9914
        %v9923 = vpack.c.b16 %v9751, %v9915
        %v9924 = vpack.c.b16 %v9753, %v9916
        %v9925 = vpack.c.b16 %v9755, %v9917
        %v9926 = vpack.c.b16 %v9757, %v9918
        %v9927 = vpack.c.b16 %v9759, %v9919
        %v9928 = vrot.slane %v9920, 1
        %v9929 = vrot.slane %v9792, 1
        %v9930 = vsel %vm1482, %v9928, %v9929
        %v9931 = vrot.slane %v9921, 1
        %v9932 = vrot.slane %v9793, 1
        %v9933 = vsel %vm1482, %v9931, %v9932
        %v9934 = vrot.slane %v9922, 1
        %v9935 = vrot.slane %v9794, 1
        %v9936 = vsel %vm1482, %v9934, %v9935
        %v9937 = vrot.slane %v9923, 1
        %v9938 = vrot.slane %v9795, 1
        %v9939 = vsel %vm1482, %v9937, %v9938
        %v9940 = vrot.slane %v9924, 1
        %v9941 = vrot.slane %v9796, 1
        %v9942 = vsel %vm1482, %v9940, %v9941
        %v9943 = vrot.slane %v9925, 1
        %v9944 = vrot.slane %v9797, 1
        %v9945 = vsel %vm1482, %v9943, %v9944
        %v9946 = vrot.slane %v9926, 1
        %v9947 = vrot.slane %v9798, 1
        %v9948 = vsel %vm1482, %v9946, %v9947
        %v9949 = vrot.slane %v9927, 1
        %v9950 = vrot.slane %v9799, 1
        %v9951 = vsel %vm1482, %v9949, %v9950
        %v9976 = vunpack.c.l.b16 %v9464
        %v9977 = vunpack.c.l.b16 %v9465
        %v9978 = vunpack.c.l.b16 %v9466
        %v9979 = vunpack.c.l.b16 %v9467
        %v9980 = vunpack.c.l.b16 %v9468
        %v9981 = vunpack.c.l.b16 %v9469
        %v9982 = vunpack.c.l.b16 %v9470
        %v9983 = vunpack.c.l.b16 %v9471
        %v9984 = vunpack.c.l.b16 %v9472
        %v9985 = vunpack.c.l.b16 %v9473
        %v9986 = vunpack.c.l.b16 %v9474
        %v9987 = vunpack.c.l.b16 %v9475
        %v9988 = vunpack.c.l.b16 %v9476
        %v9989 = vunpack.c.l.b16 %v9477
        %v9990 = vunpack.c.l.b16 %v9478
        %v9991 = vunpack.c.l.b16 %v9479
        %v9992 = vpack.c.b16 %v9977, %v9976
        %v9993 = vpack.c.b16 %v9979, %v9978
        %v9994 = vpack.c.b16 %v9981, %v9980
        %v9995 = vpack.c.b16 %v9983, %v9982
        %v9996 = vpack.c.b16 %v9985, %v9984
        %v9997 = vpack.c.b16 %v9987, %v9986
        %v9998 = vpack.c.b16 %v9989, %v9988
        %v9999 = vpack.c.b16 %v9991, %v9990
        %v10016 = vunpack.c.l.b16 %v9480
        %v10017 = vunpack.c.l.b16 %v9481
        %v10018 = vunpack.c.l.b16 %v9482
        %v10019 = vunpack.c.l.b16 %v9483
        %v10020 = vunpack.c.l.b16 %v9484
        %v10021 = vunpack.c.l.b16 %v9485
        %v10022 = vunpack.c.l.b16 %v9486
        %v10023 = vunpack.c.l.b16 %v9487
        %v10024 = vpack.c.b16 %v10016, %v10016
        %v10025 = vpack.c.b16 %v10017, %v10017
        %v10026 = vpack.c.b16 %v10018, %v10018
        %v10027 = vpack.c.b16 %v10019, %v10019
        %v10028 = vpack.c.b16 %v10020, %v10020
        %v10029 = vpack.c.b16 %v10021, %v10021
        %v10030 = vpack.c.b16 %v10022, %v10022
        %v10031 = vpack.c.b16 %v10023, %v10023
        %v10033 = vshrl.u32 %v9992, 16
        %v10035 = vshll.u32 %v9992, 16
        %v10037 = vrot.slane %v10035, 1
        %v10038 = vor.u32 %v10033, %v10037
        %v10040 = vshll.u32 %v10024, 16
        %v10042 = vrot.slane %v10040, 1
        %v10043 = vsel %vm1301, %v10038, %v10042
        %v10045 = vshrl.u32 %v9993, 16
        %v10047 = vshll.u32 %v9993, 16
        %v10049 = vrot.slane %v10047, 1
        %v10050 = vor.u32 %v10045, %v10049
        %v10052 = vshll.u32 %v10025, 16
        %v10054 = vrot.slane %v10052, 1
        %v10055 = vsel %vm1301, %v10050, %v10054
        %v10057 = vshrl.u32 %v9994, 16
        %v10059 = vshll.u32 %v9994, 16
        %v10061 = vrot.slane %v10059, 1
        %v10062 = vor.u32 %v10057, %v10061
        %v10064 = vshll.u32 %v10026, 16
        %v10066 = vrot.slane %v10064, 1
        %v10067 = vsel %vm1301, %v10062, %v10066
        %v10069 = vshrl.u32 %v9995, 16
        %v10071 = vshll.u32 %v9995, 16
        %v10073 = vrot.slane %v10071, 1
        %v10074 = vor.u32 %v10069, %v10073
        %v10076 = vshll.u32 %v10027, 16
        %v10078 = vrot.slane %v10076, 1
        %v10079 = vsel %vm1301, %v10074, %v10078
        %v10081 = vshrl.u32 %v9996, 16
        %v10083 = vshll.u32 %v9996, 16
        %v10085 = vrot.slane %v10083, 1
        %v10086 = vor.u32 %v10081, %v10085
        %v10088 = vshll.u32 %v10028, 16
        %v10090 = vrot.slane %v10088, 1
        %v10091 = vsel %vm1301, %v10086, %v10090
        %v10093 = vshrl.u32 %v9997, 16
        %v10095 = vshll.u32 %v9997, 16
        %v10097 = vrot.slane %v10095, 1
        %v10098 = vor.u32 %v10093, %v10097
        %v10100 = vshll.u32 %v10029, 16
        %v10102 = vrot.slane %v10100, 1
        %v10103 = vsel %vm1301, %v10098, %v10102
        %v10105 = vshrl.u32 %v9998, 16
        %v10107 = vshll.u32 %v9998, 16
        %v10109 = vrot.slane %v10107, 1
        %v10110 = vor.u32 %v10105, %v10109
        %v10112 = vshll.u32 %v10030, 16
        %v10114 = vrot.slane %v10112, 1
        %v10115 = vsel %vm1301, %v10110, %v10114
        %v10117 = vshrl.u32 %v9999, 16
        %v10119 = vshll.u32 %v9999, 16
        %v10121 = vrot.slane %v10119, 1
        %v10122 = vor.u32 %v10117, %v10121
        %v10124 = vshll.u32 %v10031, 16
        %v10126 = vrot.slane %v10124, 1
        %v10127 = vsel %vm1301, %v10122, %v10126
        %v10144 = vunpack.c.l.b16 %v9488
        %v10145 = vunpack.c.l.b16 %v9489
        %v10146 = vunpack.c.l.b16 %v9490
        %v10147 = vunpack.c.l.b16 %v9491
        %v10148 = vunpack.c.l.b16 %v9492
        %v10149 = vunpack.c.l.b16 %v9493
        %v10150 = vunpack.c.l.b16 %v9494
        %v10151 = vunpack.c.l.b16 %v9495
        %v10152 = vpack.c.b16 %v9977, %v10144
        %v10153 = vpack.c.b16 %v9979, %v10145
        %v10154 = vpack.c.b16 %v9981, %v10146
        %v10155 = vpack.c.b16 %v9983, %v10147
        %v10156 = vpack.c.b16 %v9985, %v10148
        %v10157 = vpack.c.b16 %v9987, %v10149
        %v10158 = vpack.c.b16 %v9989, %v10150
        %v10159 = vpack.c.b16 %v9991, %v10151
        %v10160 = vrot.slane %v10152, 1
        %v10161 = vrot.slane %v10024, 1
        %v10162 = vsel %vm1482, %v10160, %v10161
        %v10163 = vrot.slane %v10153, 1
        %v10164 = vrot.slane %v10025, 1
        %v10165 = vsel %vm1482, %v10163, %v10164
        %v10166 = vrot.slane %v10154, 1
        %v10167 = vrot.slane %v10026, 1
        %v10168 = vsel %vm1482, %v10166, %v10167
        %v10169 = vrot.slane %v10155, 1
        %v10170 = vrot.slane %v10027, 1
        %v10171 = vsel %vm1482, %v10169, %v10170
        %v10172 = vrot.slane %v10156, 1
        %v10173 = vrot.slane %v10028, 1
        %v10174 = vsel %vm1482, %v10172, %v10173
        %v10175 = vrot.slane %v10157, 1
        %v10176 = vrot.slane %v10029, 1
        %v10177 = vsel %vm1482, %v10175, %v10176
        %v10178 = vrot.slane %v10158, 1
        %v10179 = vrot.slane %v10030, 1
        %v10180 = vsel %vm1482, %v10178, %v10179
        %v10181 = vrot.slane %v10159, 1
        %v10182 = vrot.slane %v10031, 1
        %v10183 = vsel %vm1482, %v10181, %v10182
        %v10192 = vld [vmem:[%s2] sm:$0xf]
        %v10193 = vld [vmem:[%s2 + $0x4] sm:$0xf]
        %v10194 = vld [vmem:[%s2 + $0x8] sm:$0xf]
        %v10195 = vld [vmem:[%s2 + $0xc] sm:$0xf]
        %v10196 = vld [vmem:[%s2 + $0x10] sm:$0xf]
        %v10197 = vld [vmem:[%s2 + $0x14] sm:$0xf]
        %v10198 = vld [vmem:[%s2 + $0x18] sm:$0xf]
        %v10199 = vld [vmem:[%s2 + $0x1c] sm:$0xf]
        %v10200 = vld [vmem:[%s2 + $0x20] sm:$0xf]
        %v10201 = vld [vmem:[%s2 + $0x24] sm:$0xf]
        %v10202 = vld [vmem:[%s2 + $0x28] sm:$0xf]
        %v10203 = vld [vmem:[%s2 + $0x2c] sm:$0xf]
        %v10204 = vld [vmem:[%s2 + $0x30] sm:$0xf]
        %v10205 = vld [vmem:[%s2 + $0x34] sm:$0xf]
        %v10206 = vld [vmem:[%s2 + $0x38] sm:$0xf]
        %v10207 = vld [vmem:[%s2 + $0x3c] sm:$0xf]
        %v10208 = vld [vmem:[%s2 + $0x40] sm:$0xf]
        %v10209 = vld [vmem:[%s2 + $0x44] sm:$0xf]
        %v10210 = vld [vmem:[%s2 + $0x48] sm:$0xf]
        %v10211 = vld [vmem:[%s2 + $0x4c] sm:$0xf]
        %v10212 = vld [vmem:[%s2 + $0x50] sm:$0xf]
        %v10213 = vld [vmem:[%s2 + $0x54] sm:$0xf]
        %v10214 = vld [vmem:[%s2 + $0x58] sm:$0xf]
        %v10215 = vld [vmem:[%s2 + $0x5c] sm:$0xf]
        %v10216 = vld [vmem:[%s2 + $0x60] sm:$0xf]
        %v10217 = vld [vmem:[%s2 + $0x64] sm:$0xf]
        %v10218 = vld [vmem:[%s2 + $0x68] sm:$0xf]
        %v10219 = vld [vmem:[%s2 + $0x6c] sm:$0xf]
        %v10220 = vld [vmem:[%s2 + $0x70] sm:$0xf]
        %v10221 = vld [vmem:[%s2 + $0x74] sm:$0xf]
        %v10222 = vld [vmem:[%s2 + $0x78] sm:$0xf]
        %v10223 = vld [vmem:[%s2 + $0x7c] sm:$0xf]
        %v10224 = vld [vmem:[%s2 + $0x80] sm:$0xf]
        %v10225 = vld [vmem:[%s2 + $0x84] sm:$0xf]
        %v10226 = vld [vmem:[%s2 + $0x88] sm:$0xf]
        %v10227 = vld [vmem:[%s2 + $0x8c] sm:$0xf]
        %v10228 = vld [vmem:[%s2 + $0x90] sm:$0xf]
        %v10229 = vld [vmem:[%s2 + $0x94] sm:$0xf]
        %v10230 = vld [vmem:[%s2 + $0x98] sm:$0xf]
        %v10231 = vld [vmem:[%s2 + $0x9c] sm:$0xf]
        %v10232 = vld [vmem:[%s2 + $0xa0] sm:$0xf]
        %v10233 = vld [vmem:[%s2 + $0xa4] sm:$0xf]
        %v10234 = vld [vmem:[%s2 + $0xa8] sm:$0xf]
        %v10235 = vld [vmem:[%s2 + $0xac] sm:$0xf]
        %v10236 = vld [vmem:[%s2 + $0xb0] sm:$0xf]
        %v10237 = vld [vmem:[%s2 + $0xb4] sm:$0xf]
        %v10238 = vld [vmem:[%s2 + $0xb8] sm:$0xf]
        %v10239 = vld [vmem:[%s2 + $0xbc] sm:$0xf]
        %v10240 = vld [vmem:[%s2 + $0xc0] sm:$0xf]
        %v10241 = vld [vmem:[%s2 + $0xc4] sm:$0xf]
        %v10242 = vld [vmem:[%s2 + $0xc8] sm:$0xf]
        %v10243 = vld [vmem:[%s2 + $0xcc] sm:$0xf]
        %v10244 = vld [vmem:[%s2 + $0xd0] sm:$0xf]
        %v10245 = vld [vmem:[%s2 + $0xd4] sm:$0xf]
        %v10246 = vld [vmem:[%s2 + $0xd8] sm:$0xf]
        %v10247 = vld [vmem:[%s2 + $0xdc] sm:$0xf]
        %v10248 = vld [vmem:[%s2 + $0xe0] sm:$0xf]
        %v10249 = vld [vmem:[%s2 + $0xe4] sm:$0xf]
        %v10250 = vld [vmem:[%s2 + $0xe8] sm:$0xf]
        %v10251 = vld [vmem:[%s2 + $0xec] sm:$0xf]
        %v10252 = vld [vmem:[%s2 + $0xf0] sm:$0xf]
        %v10253 = vld [vmem:[%s2 + $0xf4] sm:$0xf]
        %v10254 = vld [vmem:[%s2 + $0xf8] sm:$0xf]
        %v10255 = vld [vmem:[%s2 + $0xfc] sm:$0xf]
        %v10256 = vld [vmem:[%s2 + $0x100] sm:$0xf]
        %v10257 = vld [vmem:[%s2 + $0x104] sm:$0xf]
        %v10258 = vld [vmem:[%s2 + $0x108] sm:$0xf]
        %v10259 = vld [vmem:[%s2 + $0x10c] sm:$0xf]
        %v10260 = vld [vmem:[%s2 + $0x110] sm:$0xf]
        %v10261 = vld [vmem:[%s2 + $0x114] sm:$0xf]
        %v10262 = vld [vmem:[%s2 + $0x118] sm:$0xf]
        %v10263 = vld [vmem:[%s2 + $0x11c] sm:$0xf]
        %v10264 = vld [vmem:[%s2 + $0x120] sm:$0xf]
        %v10265 = vld [vmem:[%s2 + $0x124] sm:$0xf]
        %v10266 = vld [vmem:[%s2 + $0x128] sm:$0xf]
        %v10267 = vld [vmem:[%s2 + $0x12c] sm:$0xf]
        %v10268 = vld [vmem:[%s2 + $0x130] sm:$0xf]
        %v10269 = vld [vmem:[%s2 + $0x134] sm:$0xf]
        %v10270 = vld [vmem:[%s2 + $0x138] sm:$0xf]
        %v10271 = vld [vmem:[%s2 + $0x13c] sm:$0xf]
        %v10272 = vld [vmem:[%s2 + $0x140] sm:$0xf]
        %v10273 = vld [vmem:[%s2 + $0x144] sm:$0xf]
        %v10274 = vld [vmem:[%s2 + $0x148] sm:$0xf]
        %v10275 = vld [vmem:[%s2 + $0x14c] sm:$0xf]
        %v10276 = vld [vmem:[%s2 + $0x150] sm:$0xf]
        %v10277 = vld [vmem:[%s2 + $0x154] sm:$0xf]
        %v10278 = vld [vmem:[%s2 + $0x158] sm:$0xf]
        %v10279 = vld [vmem:[%s2 + $0x15c] sm:$0xf]
        %v10280 = vld [vmem:[%s2 + $0x160] sm:$0xf]
        %v10281 = vld [vmem:[%s2 + $0x164] sm:$0xf]
        %v10282 = vld [vmem:[%s2 + $0x168] sm:$0xf]
        %v10283 = vld [vmem:[%s2 + $0x16c] sm:$0xf]
        %v10284 = vld [vmem:[%s2 + $0x170] sm:$0xf]
        %v10285 = vld [vmem:[%s2 + $0x174] sm:$0xf]
        %v10286 = vld [vmem:[%s2 + $0x178] sm:$0xf]
        %v10287 = vld [vmem:[%s2 + $0x17c] sm:$0xf]
        %v10288 = vld [vmem:[%s2 + $0x180] sm:$0xf]
        %v10289 = vld [vmem:[%s2 + $0x184] sm:$0xf]
        %v10290 = vld [vmem:[%s2 + $0x188] sm:$0xf]
        %v10291 = vld [vmem:[%s2 + $0x18c] sm:$0xf]
        %v10292 = vld [vmem:[%s2 + $0x190] sm:$0xf]
        %v10293 = vld [vmem:[%s2 + $0x194] sm:$0xf]
        %v10294 = vld [vmem:[%s2 + $0x198] sm:$0xf]
        %v10295 = vld [vmem:[%s2 + $0x19c] sm:$0xf]
        %v10296 = vld [vmem:[%s2 + $0x1a0] sm:$0xf]
        %v10297 = vld [vmem:[%s2 + $0x1a4] sm:$0xf]
        %v10298 = vld [vmem:[%s2 + $0x1a8] sm:$0xf]
        %v10299 = vld [vmem:[%s2 + $0x1ac] sm:$0xf]
        %v10300 = vld [vmem:[%s2 + $0x1b0] sm:$0xf]
        %v10301 = vld [vmem:[%s2 + $0x1b4] sm:$0xf]
        %v10302 = vld [vmem:[%s2 + $0x1b8] sm:$0xf]
        %v10303 = vld [vmem:[%s2 + $0x1bc] sm:$0xf]
        %v10304 = vld [vmem:[%s2 + $0x1c0] sm:$0xf]
        %v10305 = vld [vmem:[%s2 + $0x1c4] sm:$0xf]
        %v10306 = vld [vmem:[%s2 + $0x1c8] sm:$0xf]
        %v10307 = vld [vmem:[%s2 + $0x1cc] sm:$0xf]
        %v10308 = vld [vmem:[%s2 + $0x1d0] sm:$0xf]
        %v10309 = vld [vmem:[%s2 + $0x1d4] sm:$0xf]
        %v10310 = vld [vmem:[%s2 + $0x1d8] sm:$0xf]
        %v10311 = vld [vmem:[%s2 + $0x1dc] sm:$0xf]
        %v10312 = vld [vmem:[%s2 + $0x1e0] sm:$0xf]
        %v10313 = vld [vmem:[%s2 + $0x1e4] sm:$0xf]
        %v10314 = vld [vmem:[%s2 + $0x1e8] sm:$0xf]
        %v10315 = vld [vmem:[%s2 + $0x1ec] sm:$0xf]
        %v10316 = vld [vmem:[%s2 + $0x1f0] sm:$0xf]
        %v10317 = vld [vmem:[%s2 + $0x1f4] sm:$0xf]
        %v10318 = vld [vmem:[%s2 + $0x1f8] sm:$0xf]
        %v10319 = vld [vmem:[%s2 + $0x1fc] sm:$0xf]
        %v10320 = vld [vmem:[%s2 + $0x200] sm:$0xf]
        %v10321 = vld [vmem:[%s2 + $0x204] sm:$0xf]
        %v10322 = vld [vmem:[%s2 + $0x208] sm:$0xf]
        %v10323 = vld [vmem:[%s2 + $0x20c] sm:$0xf]
        %v10324 = vld [vmem:[%s2 + $0x210] sm:$0xf]
        %v10325 = vld [vmem:[%s2 + $0x214] sm:$0xf]
        %v10326 = vld [vmem:[%s2 + $0x218] sm:$0xf]
        %v10327 = vld [vmem:[%s2 + $0x21c] sm:$0xf]
        %v10328 = vld [vmem:[%s2 + $0x220] sm:$0xf]
        %v10329 = vld [vmem:[%s2 + $0x224] sm:$0xf]
        %v10330 = vld [vmem:[%s2 + $0x228] sm:$0xf]
        %v10331 = vld [vmem:[%s2 + $0x22c] sm:$0xf]
        %v10332 = vld [vmem:[%s2 + $0x230] sm:$0xf]
        %v10333 = vld [vmem:[%s2 + $0x234] sm:$0xf]
        %v10334 = vld [vmem:[%s2 + $0x238] sm:$0xf]
        %v10335 = vld [vmem:[%s2 + $0x23c] sm:$0xf]
        %v10480 = vunpack.c.l.b16 %v10192
        %v10481 = vunpack.c.l.b16 %v10193
        %v10482 = vunpack.c.l.b16 %v10194
        %v10483 = vunpack.c.l.b16 %v10195
        %v10484 = vunpack.c.l.b16 %v10196
        %v10485 = vunpack.c.l.b16 %v10197
        %v10486 = vunpack.c.l.b16 %v10198
        %v10487 = vunpack.c.l.b16 %v10199
        %v10488 = vunpack.c.l.b16 %v10200
        %v10489 = vunpack.c.l.b16 %v10201
        %v10490 = vunpack.c.l.b16 %v10202
        %v10491 = vunpack.c.l.b16 %v10203
        %v10492 = vunpack.c.l.b16 %v10204
        %v10493 = vunpack.c.l.b16 %v10205
        %v10494 = vunpack.c.l.b16 %v10206
        %v10495 = vunpack.c.l.b16 %v10207
        %v10496 = vunpack.c.l.b16 %v10208
        %v10497 = vunpack.c.l.b16 %v10209
        %v10498 = vunpack.c.l.b16 %v10210
        %v10499 = vunpack.c.l.b16 %v10211
        %v10500 = vunpack.c.l.b16 %v10212
        %v10501 = vunpack.c.l.b16 %v10213
        %v10502 = vunpack.c.l.b16 %v10214
        %v10503 = vunpack.c.l.b16 %v10215
        %v10504 = vunpack.c.l.b16 %v10216
        %v10505 = vunpack.c.l.b16 %v10217
        %v10506 = vunpack.c.l.b16 %v10218
        %v10507 = vunpack.c.l.b16 %v10219
        %v10508 = vunpack.c.l.b16 %v10220
        %v10509 = vunpack.c.l.b16 %v10221
        %v10510 = vunpack.c.l.b16 %v10222
        %v10511 = vunpack.c.l.b16 %v10223
        %v10512 = vunpack.c.l.b16 %v10224
        %v10513 = vunpack.c.l.b16 %v10225
        %v10514 = vunpack.c.l.b16 %v10226
        %v10515 = vunpack.c.l.b16 %v10227
        %v10516 = vunpack.c.l.b16 %v10228
        %v10517 = vunpack.c.l.b16 %v10229
        %v10518 = vunpack.c.l.b16 %v10230
        %v10519 = vunpack.c.l.b16 %v10231
        %v10520 = vunpack.c.l.b16 %v10232
        %v10521 = vunpack.c.l.b16 %v10233
        %v10522 = vunpack.c.l.b16 %v10234
        %v10523 = vunpack.c.l.b16 %v10235
        %v10524 = vunpack.c.l.b16 %v10236
        %v10525 = vunpack.c.l.b16 %v10237
        %v10526 = vunpack.c.l.b16 %v10238
        %v10527 = vunpack.c.l.b16 %v10239
        %v10528 = vunpack.c.l.b16 %v10240
        %v10529 = vunpack.c.l.b16 %v10241
        %v10530 = vunpack.c.l.b16 %v10242
        %v10531 = vunpack.c.l.b16 %v10243
        %v10532 = vunpack.c.l.b16 %v10244
        %v10533 = vunpack.c.l.b16 %v10245
        %v10534 = vunpack.c.l.b16 %v10246
        %v10535 = vunpack.c.l.b16 %v10247
        %v10536 = vunpack.c.l.b16 %v10248
        %v10537 = vunpack.c.l.b16 %v10249
        %v10538 = vunpack.c.l.b16 %v10250
        %v10539 = vunpack.c.l.b16 %v10251
        %v10540 = vunpack.c.l.b16 %v10252
        %v10541 = vunpack.c.l.b16 %v10253
        %v10542 = vunpack.c.l.b16 %v10254
        %v10543 = vunpack.c.l.b16 %v10255
        %v10544 = vunpack.c.l.b16 %v10256
        %v10545 = vunpack.c.l.b16 %v10257
        %v10546 = vunpack.c.l.b16 %v10258
        %v10547 = vunpack.c.l.b16 %v10259
        %v10548 = vunpack.c.l.b16 %v10260
        %v10549 = vunpack.c.l.b16 %v10261
        %v10550 = vunpack.c.l.b16 %v10262
        %v10551 = vunpack.c.l.b16 %v10263
        %v10552 = vunpack.c.l.b16 %v10264
        %v10553 = vunpack.c.l.b16 %v10265
        %v10554 = vunpack.c.l.b16 %v10266
        %v10555 = vunpack.c.l.b16 %v10267
        %v10556 = vunpack.c.l.b16 %v10268
        %v10557 = vunpack.c.l.b16 %v10269
        %v10558 = vunpack.c.l.b16 %v10270
        %v10559 = vunpack.c.l.b16 %v10271
        %v10560 = vunpack.c.l.b16 %v10272
        %v10561 = vunpack.c.l.b16 %v10273
        %v10562 = vunpack.c.l.b16 %v10274
        %v10563 = vunpack.c.l.b16 %v10275
        %v10564 = vunpack.c.l.b16 %v10276
        %v10565 = vunpack.c.l.b16 %v10277
        %v10566 = vunpack.c.l.b16 %v10278
        %v10567 = vunpack.c.l.b16 %v10279
        %v10568 = vunpack.c.l.b16 %v10280
        %v10569 = vunpack.c.l.b16 %v10281
        %v10570 = vunpack.c.l.b16 %v10282
        %v10571 = vunpack.c.l.b16 %v10283
        %v10572 = vunpack.c.l.b16 %v10284
        %v10573 = vunpack.c.l.b16 %v10285
        %v10574 = vunpack.c.l.b16 %v10286
        %v10575 = vunpack.c.l.b16 %v10287
        %v10576 = vunpack.c.l.b16 %v10288
        %v10577 = vunpack.c.l.b16 %v10289
        %v10578 = vunpack.c.l.b16 %v10290
        %v10579 = vunpack.c.l.b16 %v10291
        %v10580 = vunpack.c.l.b16 %v10292
        %v10581 = vunpack.c.l.b16 %v10293
        %v10582 = vunpack.c.l.b16 %v10294
        %v10583 = vunpack.c.l.b16 %v10295
        %v10584 = vunpack.c.l.b16 %v10296
        %v10585 = vunpack.c.l.b16 %v10297
        %v10586 = vunpack.c.l.b16 %v10298
        %v10587 = vunpack.c.l.b16 %v10299
        %v10588 = vunpack.c.l.b16 %v10300
        %v10589 = vunpack.c.l.b16 %v10301
        %v10590 = vunpack.c.l.b16 %v10302
        %v10591 = vunpack.c.l.b16 %v10303
        %v10592 = vunpack.c.l.b16 %v10304
        %v10593 = vunpack.c.l.b16 %v10305
        %v10594 = vunpack.c.l.b16 %v10306
        %v10595 = vunpack.c.l.b16 %v10307
        %v10596 = vunpack.c.l.b16 %v10308
        %v10597 = vunpack.c.l.b16 %v10309
        %v10598 = vunpack.c.l.b16 %v10310
        %v10599 = vunpack.c.l.b16 %v10311
        %v10600 = vunpack.c.l.b16 %v10312
        %v10601 = vunpack.c.l.b16 %v10313
        %v10602 = vunpack.c.l.b16 %v10314
        %v10603 = vunpack.c.l.b16 %v10315
        %v10604 = vunpack.c.l.b16 %v10316
        %v10605 = vunpack.c.l.b16 %v10317
        %v10606 = vunpack.c.l.b16 %v10318
        %v10607 = vunpack.c.l.b16 %v10319
        %v10608 = vunpack.c.l.b16 %v10320
        %v10609 = vunpack.c.l.b16 %v10321
        %v10610 = vunpack.c.l.b16 %v10322
        %v10611 = vunpack.c.l.b16 %v10323
        %v10612 = vunpack.c.l.b16 %v10324
        %v10613 = vunpack.c.l.b16 %v10325
        %v10614 = vunpack.c.l.b16 %v10326
        %v10615 = vunpack.c.l.b16 %v10327
        %v10616 = vunpack.c.l.b16 %v10328
        %v10617 = vunpack.c.l.b16 %v10329
        %v10618 = vunpack.c.l.b16 %v10330
        %v10619 = vunpack.c.l.b16 %v10331
        %v10620 = vunpack.c.l.b16 %v10332
        %v10621 = vunpack.c.l.b16 %v10333
        %v10622 = vunpack.c.l.b16 %v10334
        %v10623 = vunpack.c.l.b16 %v10335
        %v10624 = vpack.c.b16 %v10481, %v10480
        %v10625 = vpack.c.b16 %v10483, %v10482
        %v10626 = vpack.c.b16 %v10485, %v10484
        %v10627 = vpack.c.b16 %v10487, %v10486
        %v10628 = vpack.c.b16 %v10489, %v10488
        %v10629 = vpack.c.b16 %v10491, %v10490
        %v10630 = vpack.c.b16 %v10493, %v10492
        %v10631 = vpack.c.b16 %v10495, %v10494
        %v10632 = vpack.c.b16 %v10497, %v10496
        %v10633 = vpack.c.b16 %v10499, %v10498
        %v10634 = vpack.c.b16 %v10501, %v10500
        %v10635 = vpack.c.b16 %v10503, %v10502
        %v10636 = vpack.c.b16 %v10505, %v10504
        %v10637 = vpack.c.b16 %v10507, %v10506
        %v10638 = vpack.c.b16 %v10509, %v10508
        %v10639 = vpack.c.b16 %v10511, %v10510
        %v10640 = vpack.c.b16 %v10513, %v10512
        %v10641 = vpack.c.b16 %v10515, %v10514
        %v10642 = vpack.c.b16 %v10517, %v10516
        %v10643 = vpack.c.b16 %v10519, %v10518
        %v10644 = vpack.c.b16 %v10521, %v10520
        %v10645 = vpack.c.b16 %v10523, %v10522
        %v10646 = vpack.c.b16 %v10525, %v10524
        %v10647 = vpack.c.b16 %v10527, %v10526
        %v10648 = vpack.c.b16 %v10529, %v10528
        %v10649 = vpack.c.b16 %v10531, %v10530
        %v10650 = vpack.c.b16 %v10533, %v10532
        %v10651 = vpack.c.b16 %v10535, %v10534
        %v10652 = vpack.c.b16 %v10537, %v10536
        %v10653 = vpack.c.b16 %v10539, %v10538
        %v10654 = vpack.c.b16 %v10541, %v10540
        %v10655 = vpack.c.b16 %v10543, %v10542
        %v10656 = vpack.c.b16 %v10545, %v10544
        %v10657 = vpack.c.b16 %v10547, %v10546
        %v10658 = vpack.c.b16 %v10549, %v10548
        %v10659 = vpack.c.b16 %v10551, %v10550
        %v10660 = vpack.c.b16 %v10553, %v10552
        %v10661 = vpack.c.b16 %v10555, %v10554
        %v10662 = vpack.c.b16 %v10557, %v10556
        %v10663 = vpack.c.b16 %v10559, %v10558
        %v10664 = vpack.c.b16 %v10561, %v10560
        %v10665 = vpack.c.b16 %v10563, %v10562
        %v10666 = vpack.c.b16 %v10565, %v10564
        %v10667 = vpack.c.b16 %v10567, %v10566
        %v10668 = vpack.c.b16 %v10569, %v10568
        %v10669 = vpack.c.b16 %v10571, %v10570
        %v10670 = vpack.c.b16 %v10573, %v10572
        %v10671 = vpack.c.b16 %v10575, %v10574
        %v10672 = vpack.c.b16 %v10577, %v10576
        %v10673 = vpack.c.b16 %v10579, %v10578
        %v10674 = vpack.c.b16 %v10581, %v10580
        %v10675 = vpack.c.b16 %v10583, %v10582
        %v10676 = vpack.c.b16 %v10585, %v10584
        %v10677 = vpack.c.b16 %v10587, %v10586
        %v10678 = vpack.c.b16 %v10589, %v10588
        %v10679 = vpack.c.b16 %v10591, %v10590
        %v10680 = vpack.c.b16 %v10593, %v10592
        %v10681 = vpack.c.b16 %v10595, %v10594
        %v10682 = vpack.c.b16 %v10597, %v10596
        %v10683 = vpack.c.b16 %v10599, %v10598
        %v10684 = vpack.c.b16 %v10601, %v10600
        %v10685 = vpack.c.b16 %v10603, %v10602
        %v10686 = vpack.c.b16 %v10605, %v10604
        %v10687 = vpack.c.b16 %v10607, %v10606
        %v10688 = vpack.c.b16 %v10609, %v10608
        %v10689 = vpack.c.b16 %v10611, %v10610
        %v10690 = vpack.c.b16 %v10613, %v10612
        %v10691 = vpack.c.b16 %v10615, %v10614
        %v10692 = vpack.c.b16 %v10617, %v10616
        %v10693 = vpack.c.b16 %v10619, %v10618
        %v10694 = vpack.c.b16 %v10621, %v10620
        %v10695 = vpack.c.b16 %v10623, %v10622
        %10768 = vmatprep.subr.bf16.mxu0 0
        %10769 = vmatpush1.bf16.msra.mxu0 %v10631
        %10770 = vmatprep.subr.bf16.mxu0 0
        %10771 = vmatpush1.bf16.msra.mxu0 %v10630
        %10772 = vmatprep.subr.bf16.mxu0 0
        %10773 = vmatpush1.bf16.msra.mxu0 %v10629
        %10774 = vmatprep.subr.bf16.mxu0 0
        %10775 = vmatpush1.bf16.msra.mxu0 %v10628
        %10776 = vmatprep.subr.bf16.mxu0 0
        %10777 = vmatpush1.bf16.msra.mxu0 %v10627
        %10778 = vmatprep.subr.bf16.mxu0 0
        %10779 = vmatpush1.bf16.msra.mxu0 %v10626
        %10780 = vmatprep.subr.bf16.mxu0 0
        %10781 = vmatpush1.bf16.msra.mxu0 %v10625
        %10782 = vmatprep.subr.bf16.mxu0 0
        %10783 = vmatpush1.bf16.msra.mxu0 %v10624
        %10784 = vmatprep.subr.bf16.mxu0 0
        %10785 = vmatpush2.bf16.msra.mxu0 %v10639
        %10786 = vmatprep.subr.bf16.mxu0 0
        %10787 = vmatpush2.bf16.msra.mxu0 %v10638
        %10788 = vmatprep.subr.bf16.mxu0 0
        %10789 = vmatpush2.bf16.msra.mxu0 %v10637
        %10790 = vmatprep.subr.bf16.mxu0 0
        %10791 = vmatpush2.bf16.msra.mxu0 %v10636
        %10792 = vmatprep.subr.bf16.mxu0 0
        %10793 = vmatpush2.bf16.msra.mxu0 %v10635
        %10794 = vmatprep.subr.bf16.mxu0 0
        %10795 = vmatpush2.bf16.msra.mxu0 %v10634
        %10796 = vmatprep.subr.bf16.mxu0 0
        %10797 = vmatpush2.bf16.msra.mxu0 %v10633
        %10798 = vmatprep.subr.bf16.mxu0 0
        %10799 = vmatpush2.bf16.msra.mxu0 %v10632
        %10800 = vmatprep.mubr.bf16.mxu0 %v9579
        %10801 = vmatmul.mubr.bf16.gmra.mxu0 %v9528
        %v10802 = vpop.f32.mrf.mxu0
        %v10803 = vadd.f32 0.0, %v10802
        %v10804 = vpop.f32.mrf.mxu0
        %v10805 = vpop.f32.mrf.mxu0
        %v10806 = vadd.f32 0.0, %v10805
        %v10807 = vpop.f32.mrf.mxu0
        %10808 = vmatprep.mubr.bf16.mxu0 %v9591
        %10809 = vmatmul.mubr.bf16.gmra.mxu0 %v9529
        %v10810 = vpop.f32.mrf.mxu0
        %v10811 = vadd.f32 0.0, %v10810
        %v10812 = vpop.f32.mrf.mxu0
        %v10813 = vpop.f32.mrf.mxu0
        %v10814 = vadd.f32 0.0, %v10813
        %v10815 = vpop.f32.mrf.mxu0
        %10816 = vmatprep.mubr.bf16.mxu0 %v9603
        %10817 = vmatmul.mubr.bf16.gmra.mxu0 %v9530
        %v10818 = vpop.f32.mrf.mxu0
        %v10819 = vadd.f32 0.0, %v10818
        %v10820 = vpop.f32.mrf.mxu0
        %v10821 = vpop.f32.mrf.mxu0
        %v10822 = vadd.f32 0.0, %v10821
        %v10823 = vpop.f32.mrf.mxu0
        %10824 = vmatprep.mubr.bf16.mxu0 %v9615
        %10825 = vmatmul.mubr.bf16.gmra.mxu0 %v9531
        %v10826 = vpop.f32.mrf.mxu0
        %v10827 = vadd.f32 0.0, %v10826
        %v10828 = vpop.f32.mrf.mxu0
        %v10829 = vpop.f32.mrf.mxu0
        %v10830 = vadd.f32 0.0, %v10829
        %v10831 = vpop.f32.mrf.mxu0
        %10832 = vmatprep.mubr.bf16.mxu0 %v9627
        %10833 = vmatmul.mubr.bf16.gmra.mxu0 %v9532
        %v10834 = vpop.f32.mrf.mxu0
        %v10835 = vadd.f32 0.0, %v10834
        %v10836 = vpop.f32.mrf.mxu0
        %v10837 = vpop.f32.mrf.mxu0
        %v10838 = vadd.f32 0.0, %v10837
        %v10839 = vpop.f32.mrf.mxu0
        %10840 = vmatprep.mubr.bf16.mxu0 %v9639
        %10841 = vmatmul.mubr.bf16.gmra.mxu0 %v9533
        %v10842 = vpop.f32.mrf.mxu0
        %v10843 = vadd.f32 0.0, %v10842
        %v10844 = vpop.f32.mrf.mxu0
        %v10845 = vpop.f32.mrf.mxu0
        %v10846 = vadd.f32 0.0, %v10845
        %v10847 = vpop.f32.mrf.mxu0
        %10848 = vmatprep.mubr.bf16.mxu0 %v9651
        %10849 = vmatmul.mubr.bf16.gmra.mxu0 %v9534
        %v10850 = vpop.f32.mrf.mxu0
        %v10851 = vadd.f32 0.0, %v10850
        %v10852 = vpop.f32.mrf.mxu0
        %v10853 = vpop.f32.mrf.mxu0
        %v10854 = vadd.f32 0.0, %v10853
        %v10855 = vpop.f32.mrf.mxu0
        %10856 = vmatprep.mubr.bf16.mxu0 %v9663
        %10857 = vmatmul.mubr.bf16.gmra.mxu0 %v9535
        %v10858 = vpop.f32.mrf.mxu0
        %v10859 = vadd.f32 0.0, %v10858
        %v10860 = vpop.f32.mrf.mxu0
        %v10861 = vpop.f32.mrf.mxu0
        %v10862 = vadd.f32 0.0, %v10861
        %v10863 = vpop.f32.mrf.mxu0
        %10864 = vdwg.mxu0
        %10865 = vmatprep.subr.bf16.mxu0 0
        %10866 = vmatpush1.bf16.msra.mxu0 %v10647
        %10867 = vmatprep.subr.bf16.mxu0 0
        %10868 = vmatpush1.bf16.msra.mxu0 %v10646
        %10869 = vmatprep.subr.bf16.mxu0 0
        %10870 = vmatpush1.bf16.msra.mxu0 %v10645
        %10871 = vmatprep.subr.bf16.mxu0 0
        %10872 = vmatpush1.bf16.msra.mxu0 %v10644
        %10873 = vmatprep.subr.bf16.mxu0 0
        %10874 = vmatpush1.bf16.msra.mxu0 %v10643
        %10875 = vmatprep.subr.bf16.mxu0 0
        %10876 = vmatpush1.bf16.msra.mxu0 %v10642
        %10877 = vmatprep.subr.bf16.mxu0 0
        %10878 = vmatpush1.bf16.msra.mxu0 %v10641
        %10879 = vmatprep.subr.bf16.mxu0 0
        %10880 = vmatpush1.bf16.msra.mxu0 %v10640
        %10881 = vmatprep.subr.bf16.mxu0 0
        %10882 = vmatpush2.bf16.msra.mxu0 %v10655
        %10883 = vmatprep.subr.bf16.mxu0 0
        %10884 = vmatpush2.bf16.msra.mxu0 %v10654
        %10885 = vmatprep.subr.bf16.mxu0 0
        %10886 = vmatpush2.bf16.msra.mxu0 %v10653
        %10887 = vmatprep.subr.bf16.mxu0 0
        %10888 = vmatpush2.bf16.msra.mxu0 %v10652
        %10889 = vmatprep.subr.bf16.mxu0 0
        %10890 = vmatpush2.bf16.msra.mxu0 %v10651
        %10891 = vmatprep.subr.bf16.mxu0 0
        %10892 = vmatpush2.bf16.msra.mxu0 %v10650
        %10893 = vmatprep.subr.bf16.mxu0 0
        %10894 = vmatpush2.bf16.msra.mxu0 %v10649
        %10895 = vmatprep.subr.bf16.mxu0 0
        %10896 = vmatpush2.bf16.msra.mxu0 %v10648
        %10897 = vmatprep.mubr.bf16.mxu0 %v9760
        %10898 = vmatmul.mubr.bf16.gmra.mxu0 %v9698
        %v10899 = vpop.f32.mrf.mxu0
        %v10900 = vadd.f32 %v10803, %v10899
        %v10901 = vpop.f32.mrf.mxu0
        %v10902 = vpop.f32.mrf.mxu0
        %v10903 = vadd.f32 %v10806, %v10902
        %v10904 = vpop.f32.mrf.mxu0
        %10905 = vmatprep.mubr.bf16.mxu0 %v9761
        %10906 = vmatmul.mubr.bf16.gmra.mxu0 %v9701
        %v10907 = vpop.f32.mrf.mxu0
        %v10908 = vadd.f32 %v10811, %v10907
        %v10909 = vpop.f32.mrf.mxu0
        %v10910 = vpop.f32.mrf.mxu0
        %v10911 = vadd.f32 %v10814, %v10910
        %v10912 = vpop.f32.mrf.mxu0
        %10913 = vmatprep.mubr.bf16.mxu0 %v9762
        %10914 = vmatmul.mubr.bf16.gmra.mxu0 %v9704
        %v10915 = vpop.f32.mrf.mxu0
        %v10916 = vadd.f32 %v10819, %v10915
        %v10917 = vpop.f32.mrf.mxu0
        %v10918 = vpop.f32.mrf.mxu0
        %v10919 = vadd.f32 %v10822, %v10918
        %v10920 = vpop.f32.mrf.mxu0
        %10921 = vmatprep.mubr.bf16.mxu0 %v9763
        %10922 = vmatmul.mubr.bf16.gmra.mxu0 %v9707
        %v10923 = vpop.f32.mrf.mxu0
        %v10924 = vadd.f32 %v10827, %v10923
        %v10925 = vpop.f32.mrf.mxu0
        %v10926 = vpop.f32.mrf.mxu0
        %v10927 = vadd.f32 %v10830, %v10926
        %v10928 = vpop.f32.mrf.mxu0
        %10929 = vmatprep.mubr.bf16.mxu0 %v9764
        %10930 = vmatmul.mubr.bf16.gmra.mxu0 %v9710
        %v10931 = vpop.f32.mrf.mxu0
        %v10932 = vadd.f32 %v10835, %v10931
        %v10933 = vpop.f32.mrf.mxu0
        %v10934 = vpop.f32.mrf.mxu0
        %v10935 = vadd.f32 %v10838, %v10934
        %v10936 = vpop.f32.mrf.mxu0
        %10937 = vmatprep.mubr.bf16.mxu0 %v9765
        %10938 = vmatmul.mubr.bf16.gmra.mxu0 %v9713
        %v10939 = vpop.f32.mrf.mxu0
        %v10940 = vadd.f32 %v10843, %v10939
        %v10941 = vpop.f32.mrf.mxu0
        %v10942 = vpop.f32.mrf.mxu0
        %v10943 = vadd.f32 %v10846, %v10942
        %v10944 = vpop.f32.mrf.mxu0
        %10945 = vmatprep.mubr.bf16.mxu0 %v9766
        %10946 = vmatmul.mubr.bf16.gmra.mxu0 %v9716
        %v10947 = vpop.f32.mrf.mxu0
        %v10948 = vadd.f32 %v10851, %v10947
        %v10949 = vpop.f32.mrf.mxu0
        %v10950 = vpop.f32.mrf.mxu0
        %v10951 = vadd.f32 %v10854, %v10950
        %v10952 = vpop.f32.mrf.mxu0
        %10953 = vmatprep.mubr.bf16.mxu0 %v9767
        %10954 = vmatmul.mubr.bf16.gmra.mxu0 %v9719
        %v10955 = vpop.f32.mrf.mxu0
        %v10956 = vadd.f32 %v10859, %v10955
        %v10957 = vpop.f32.mrf.mxu0
        %v10958 = vpop.f32.mrf.mxu0
        %v10959 = vadd.f32 %v10862, %v10958
        %v10960 = vpop.f32.mrf.mxu0
        %10961 = vdwg.mxu0
        %10962 = vmatprep.subr.bf16.mxu0 0
        %10963 = vmatpush1.bf16.msra.mxu0 %v10663
        %10964 = vmatprep.subr.bf16.mxu0 0
        %10965 = vmatpush1.bf16.msra.mxu0 %v10662
        %10966 = vmatprep.subr.bf16.mxu0 0
        %10967 = vmatpush1.bf16.msra.mxu0 %v10661
        %10968 = vmatprep.subr.bf16.mxu0 0
        %10969 = vmatpush1.bf16.msra.mxu0 %v10660
        %10970 = vmatprep.subr.bf16.mxu0 0
        %10971 = vmatpush1.bf16.msra.mxu0 %v10659
        %10972 = vmatprep.subr.bf16.mxu0 0
        %10973 = vmatpush1.bf16.msra.mxu0 %v10658
        %10974 = vmatprep.subr.bf16.mxu0 0
        %10975 = vmatpush1.bf16.msra.mxu0 %v10657
        %10976 = vmatprep.subr.bf16.mxu0 0
        %10977 = vmatpush1.bf16.msra.mxu0 %v10656
        %10978 = vmatprep.subr.bf16.mxu0 0
        %10979 = vmatpush2.bf16.msra.mxu0 %v10671
        %10980 = vmatprep.subr.bf16.mxu0 0
        %10981 = vmatpush2.bf16.msra.mxu0 %v10670
        %10982 = vmatprep.subr.bf16.mxu0 0
        %10983 = vmatpush2.bf16.msra.mxu0 %v10669
        %10984 = vmatprep.subr.bf16.mxu0 0
        %10985 = vmatpush2.bf16.msra.mxu0 %v10668
        %10986 = vmatprep.subr.bf16.mxu0 0
        %10987 = vmatpush2.bf16.msra.mxu0 %v10667
        %10988 = vmatprep.subr.bf16.mxu0 0
        %10989 = vmatpush2.bf16.msra.mxu0 %v10666
        %10990 = vmatprep.subr.bf16.mxu0 0
        %10991 = vmatpush2.bf16.msra.mxu0 %v10665
        %10992 = vmatprep.subr.bf16.mxu0 0
        %10993 = vmatpush2.bf16.msra.mxu0 %v10664
        %10994 = vmatprep.mubr.bf16.mxu0 %v9930
        %10995 = vmatmul.mubr.bf16.gmra.mxu0 %v9811
        %v10996 = vpop.f32.mrf.mxu0
        %v10997 = vadd.f32 %v10900, %v10996
        %v10998 = vpop.f32.mrf.mxu0
        %v10999 = vpop.f32.mrf.mxu0
        %v11000 = vadd.f32 %v10903, %v10999
        %v11001 = vpop.f32.mrf.mxu0
        %11002 = vmatprep.mubr.bf16.mxu0 %v9933
        %11003 = vmatmul.mubr.bf16.gmra.mxu0 %v9823
        %v11004 = vpop.f32.mrf.mxu0
        %v11005 = vadd.f32 %v10908, %v11004
        %v11006 = vpop.f32.mrf.mxu0
        %v11007 = vpop.f32.mrf.mxu0
        %v11008 = vadd.f32 %v10911, %v11007
        %v11009 = vpop.f32.mrf.mxu0
        %11010 = vmatprep.mubr.bf16.mxu0 %v9936
        %11011 = vmatmul.mubr.bf16.gmra.mxu0 %v9835
        %v11012 = vpop.f32.mrf.mxu0
        %v11013 = vadd.f32 %v10916, %v11012
        %v11014 = vpop.f32.mrf.mxu0
        %v11015 = vpop.f32.mrf.mxu0
        %v11016 = vadd.f32 %v10919, %v11015
        %v11017 = vpop.f32.mrf.mxu0
        %11018 = vmatprep.mubr.bf16.mxu0 %v9939
        %11019 = vmatmul.mubr.bf16.gmra.mxu0 %v9847
        %v11020 = vpop.f32.mrf.mxu0
        %v11021 = vadd.f32 %v10924, %v11020
        %v11022 = vpop.f32.mrf.mxu0
        %v11023 = vpop.f32.mrf.mxu0
        %v11024 = vadd.f32 %v10927, %v11023
        %v11025 = vpop.f32.mrf.mxu0
        %11026 = vmatprep.mubr.bf16.mxu0 %v9942
        %11027 = vmatmul.mubr.bf16.gmra.mxu0 %v9859
        %v11028 = vpop.f32.mrf.mxu0
        %v11029 = vadd.f32 %v10932, %v11028
        %v11030 = vpop.f32.mrf.mxu0
        %v11031 = vpop.f32.mrf.mxu0
        %v11032 = vadd.f32 %v10935, %v11031
        %v11033 = vpop.f32.mrf.mxu0
        %11034 = vmatprep.mubr.bf16.mxu0 %v9945
        %11035 = vmatmul.mubr.bf16.gmra.mxu0 %v9871
        %v11036 = vpop.f32.mrf.mxu0
        %v11037 = vadd.f32 %v10940, %v11036
        %v11038 = vpop.f32.mrf.mxu0
        %v11039 = vpop.f32.mrf.mxu0
        %v11040 = vadd.f32 %v10943, %v11039
        %v11041 = vpop.f32.mrf.mxu0
        %11042 = vmatprep.mubr.bf16.mxu0 %v9948
        %11043 = vmatmul.mubr.bf16.gmra.mxu0 %v9883
        %v11044 = vpop.f32.mrf.mxu0
        %v11045 = vadd.f32 %v10948, %v11044
        %v11046 = vpop.f32.mrf.mxu0
        %v11047 = vpop.f32.mrf.mxu0
        %v11048 = vadd.f32 %v10951, %v11047
        %v11049 = vpop.f32.mrf.mxu0
        %11050 = vmatprep.mubr.bf16.mxu0 %v9951
        %11051 = vmatmul.mubr.bf16.gmra.mxu0 %v9895
        %v11052 = vpop.f32.mrf.mxu0
        %v11053 = vadd.f32 %v10956, %v11052
        %v11054 = vpop.f32.mrf.mxu0
        %v11055 = vpop.f32.mrf.mxu0
        %v11056 = vadd.f32 %v10959, %v11055
        %v11057 = vpop.f32.mrf.mxu0
        %11058 = vdwg.mxu0
        %11059 = vmatprep.subr.bf16.mxu0 0
        %11060 = vmatpush1.bf16.msra.mxu0 %v10679
        %11061 = vmatprep.subr.bf16.mxu0 0
        %11062 = vmatpush1.bf16.msra.mxu0 %v10678
        %11063 = vmatprep.subr.bf16.mxu0 0
        %11064 = vmatpush1.bf16.msra.mxu0 %v10677
        %11065 = vmatprep.subr.bf16.mxu0 0
        %11066 = vmatpush1.bf16.msra.mxu0 %v10676
        %11067 = vmatprep.subr.bf16.mxu0 0
        %11068 = vmatpush1.bf16.msra.mxu0 %v10675
        %11069 = vmatprep.subr.bf16.mxu0 0
        %11070 = vmatpush1.bf16.msra.mxu0 %v10674
        %11071 = vmatprep.subr.bf16.mxu0 0
        %11072 = vmatpush1.bf16.msra.mxu0 %v10673
        %11073 = vmatprep.subr.bf16.mxu0 0
        %11074 = vmatpush1.bf16.msra.mxu0 %v10672
        %11075 = vmatprep.subr.bf16.mxu0 0
        %11076 = vmatpush2.bf16.msra.mxu0 %v10687
        %11077 = vmatprep.subr.bf16.mxu0 0
        %11078 = vmatpush2.bf16.msra.mxu0 %v10686
        %11079 = vmatprep.subr.bf16.mxu0 0
        %11080 = vmatpush2.bf16.msra.mxu0 %v10685
        %11081 = vmatprep.subr.bf16.mxu0 0
        %11082 = vmatpush2.bf16.msra.mxu0 %v10684
        %11083 = vmatprep.subr.bf16.mxu0 0
        %11084 = vmatpush2.bf16.msra.mxu0 %v10683
        %11085 = vmatprep.subr.bf16.mxu0 0
        %11086 = vmatpush2.bf16.msra.mxu0 %v10682
        %11087 = vmatprep.subr.bf16.mxu0 0
        %11088 = vmatpush2.bf16.msra.mxu0 %v10681
        %11089 = vmatprep.subr.bf16.mxu0 0
        %11090 = vmatpush2.bf16.msra.mxu0 %v10680
        %11091 = vmatprep.mubr.bf16.mxu0 %v10043
        %11092 = vmatmul.mubr.bf16.gmra.mxu0 %v9992
        %v11093 = vpop.f32.mrf.mxu0
        %v11094 = vadd.f32 %v10997, %v11093
        %v11095 = vpop.f32.mrf.mxu0
        %v11096 = vpop.f32.mrf.mxu0
        %v11097 = vadd.f32 %v11000, %v11096
        %v11098 = vpop.f32.mrf.mxu0
        %11099 = vmatprep.mubr.bf16.mxu0 %v10055
        %11100 = vmatmul.mubr.bf16.gmra.mxu0 %v9993
        %v11101 = vpop.f32.mrf.mxu0
        %v11102 = vadd.f32 %v11005, %v11101
        %v11103 = vpop.f32.mrf.mxu0
        %v11104 = vpop.f32.mrf.mxu0
        %v11105 = vadd.f32 %v11008, %v11104
        %v11106 = vpop.f32.mrf.mxu0
        %11107 = vmatprep.mubr.bf16.mxu0 %v10067
        %11108 = vmatmul.mubr.bf16.gmra.mxu0 %v9994
        %v11109 = vpop.f32.mrf.mxu0
        %v11110 = vadd.f32 %v11013, %v11109
        %v11111 = vpop.f32.mrf.mxu0
        %v11112 = vpop.f32.mrf.mxu0
        %v11113 = vadd.f32 %v11016, %v11112
        %v11114 = vpop.f32.mrf.mxu0
        %11115 = vmatprep.mubr.bf16.mxu0 %v10079
        %11116 = vmatmul.mubr.bf16.gmra.mxu0 %v9995
        %v11117 = vpop.f32.mrf.mxu0
        %v11118 = vadd.f32 %v11021, %v11117
        %v11119 = vpop.f32.mrf.mxu0
        %v11120 = vpop.f32.mrf.mxu0
        %v11121 = vadd.f32 %v11024, %v11120
        %v11122 = vpop.f32.mrf.mxu0
        %11123 = vmatprep.mubr.bf16.mxu0 %v10091
        %11124 = vmatmul.mubr.bf16.gmra.mxu0 %v9996
        %v11125 = vpop.f32.mrf.mxu0
        %v11126 = vadd.f32 %v11029, %v11125
        %v11127 = vpop.f32.mrf.mxu0
        %v11128 = vpop.f32.mrf.mxu0
        %v11129 = vadd.f32 %v11032, %v11128
        %v11130 = vpop.f32.mrf.mxu0
        %11131 = vmatprep.mubr.bf16.mxu0 %v10103
        %11132 = vmatmul.mubr.bf16.gmra.mxu0 %v9997
        %v11133 = vpop.f32.mrf.mxu0
        %v11134 = vadd.f32 %v11037, %v11133
        %v11135 = vpop.f32.mrf.mxu0
        %v11136 = vpop.f32.mrf.mxu0
        %v11137 = vadd.f32 %v11040, %v11136
        %v11138 = vpop.f32.mrf.mxu0
        %11139 = vmatprep.mubr.bf16.mxu0 %v10115
        %11140 = vmatmul.mubr.bf16.gmra.mxu0 %v9998
        %v11141 = vpop.f32.mrf.mxu0
        %v11142 = vadd.f32 %v11045, %v11141
        %v11143 = vpop.f32.mrf.mxu0
        %v11144 = vpop.f32.mrf.mxu0
        %v11145 = vadd.f32 %v11048, %v11144
        %v11146 = vpop.f32.mrf.mxu0
        %11147 = vmatprep.mubr.bf16.mxu0 %v10127
        %11148 = vmatmul.mubr.bf16.gmra.mxu0 %v9999
        %v11149 = vpop.f32.mrf.mxu0
        %v11150 = vadd.f32 %v11053, %v11149
        %v11151 = vpop.f32.mrf.mxu0
        %v11152 = vpop.f32.mrf.mxu0
        %v11153 = vadd.f32 %v11056, %v11152
        %v11154 = vpop.f32.mrf.mxu0
        %11155 = vdwg.mxu0
        %11156 = vmatprep.subr.bf16.mxu0 0
        %11157 = vmatpush1.bf16.msra.mxu0 %v10695
        %11158 = vmatprep.subr.bf16.mxu0 0
        %11159 = vmatpush1.bf16.msra.mxu0 %v10694
        %11160 = vmatprep.subr.bf16.mxu0 0
        %11161 = vmatpush1.bf16.msra.mxu0 %v10693
        %11162 = vmatprep.subr.bf16.mxu0 0
        %11163 = vmatpush1.bf16.msra.mxu0 %v10692
        %11164 = vmatprep.subr.bf16.mxu0 0
        %11165 = vmatpush1.bf16.msra.mxu0 %v10691
        %11166 = vmatprep.subr.bf16.mxu0 0
        %11167 = vmatpush1.bf16.msra.mxu0 %v10690
        %11168 = vmatprep.subr.bf16.mxu0 0
        %11169 = vmatpush1.bf16.msra.mxu0 %v10689
        %11170 = vmatprep.subr.bf16.mxu0 0
        %11171 = vmatpush1.bf16.msra.mxu0 %v10688
        %11172 = vmatprep.subr.bf16.mxu0 0
        %11173 = vmatpush2.bf16.msra.mxu0 0
        %11174 = vmatprep.subr.bf16.mxu0 0
        %11175 = vmatpush2.bf16.msra.mxu0 0
        %11176 = vmatprep.subr.bf16.mxu0 0
        %11177 = vmatpush2.bf16.msra.mxu0 0
        %11178 = vmatprep.subr.bf16.mxu0 0
        %11179 = vmatpush2.bf16.msra.mxu0 0
        %11180 = vmatprep.subr.bf16.mxu0 0
        %11181 = vmatpush2.bf16.msra.mxu0 0
        %11182 = vmatprep.subr.bf16.mxu0 0
        %11183 = vmatpush2.bf16.msra.mxu0 0
        %11184 = vmatprep.subr.bf16.mxu0 0
        %11185 = vmatpush2.bf16.msra.mxu0 0
        %11186 = vmatprep.subr.bf16.mxu0 0
        %11187 = vmatpush2.bf16.msra.mxu0 0
        %11188 = vmatprep.mubr.bf16.mxu0 0
        %11189 = vmatmul.mubr.bf16.gmra.mxu0 %v10162
        %v11190 = vpop.f32.mrf.mxu0
        %v11191 = vadd.f32 %v11094, %v11190
        %v11192 = vpop.f32.mrf.mxu0
        %v11193 = vpop.f32.mrf.mxu0
        %v11194 = vadd.f32 %v11097, %v11193
        %v11195 = vpop.f32.mrf.mxu0
        %11196 = vmatprep.mubr.bf16.mxu0 0
        %11197 = vmatmul.mubr.bf16.gmra.mxu0 %v10165
        %v11198 = vpop.f32.mrf.mxu0
        %v11199 = vadd.f32 %v11102, %v11198
        %v11200 = vpop.f32.mrf.mxu0
        %v11201 = vpop.f32.mrf.mxu0
        %v11202 = vadd.f32 %v11105, %v11201
        %v11203 = vpop.f32.mrf.mxu0
        %11204 = vmatprep.mubr.bf16.mxu0 0
        %11205 = vmatmul.mubr.bf16.gmra.mxu0 %v10168
        %v11206 = vpop.f32.mrf.mxu0
        %v11207 = vadd.f32 %v11110, %v11206
        %v11208 = vpop.f32.mrf.mxu0
        %v11209 = vpop.f32.mrf.mxu0
        %v11210 = vadd.f32 %v11113, %v11209
        %v11211 = vpop.f32.mrf.mxu0
        %11212 = vmatprep.mubr.bf16.mxu0 0
        %11213 = vmatmul.mubr.bf16.gmra.mxu0 %v10171
        %v11214 = vpop.f32.mrf.mxu0
        %v11215 = vadd.f32 %v11118, %v11214
        %v11216 = vpop.f32.mrf.mxu0
        %v11217 = vpop.f32.mrf.mxu0
        %v11218 = vadd.f32 %v11121, %v11217
        %v11219 = vpop.f32.mrf.mxu0
        %11220 = vmatprep.mubr.bf16.mxu0 0
        %11221 = vmatmul.mubr.bf16.gmra.mxu0 %v10174
        %v11222 = vpop.f32.mrf.mxu0
        %v11223 = vadd.f32 %v11126, %v11222
        %v11224 = vpop.f32.mrf.mxu0
        %v11225 = vpop.f32.mrf.mxu0
        %v11226 = vadd.f32 %v11129, %v11225
        %v11227 = vpop.f32.mrf.mxu0
        %11228 = vmatprep.mubr.bf16.mxu0 0
        %11229 = vmatmul.mubr.bf16.gmra.mxu0 %v10177
        %v11230 = vpop.f32.mrf.mxu0
        %v11231 = vadd.f32 %v11134, %v11230
        %v11232 = vpop.f32.mrf.mxu0
        %v11233 = vpop.f32.mrf.mxu0
        %v11234 = vadd.f32 %v11137, %v11233
        %v11235 = vpop.f32.mrf.mxu0
        %11236 = vmatprep.mubr.bf16.mxu0 0
        %11237 = vmatmul.mubr.bf16.gmra.mxu0 %v10180
        %v11238 = vpop.f32.mrf.mxu0
        %v11239 = vadd.f32 %v11142, %v11238
        %v11240 = vpop.f32.mrf.mxu0
        %v11241 = vpop.f32.mrf.mxu0
        %v11242 = vadd.f32 %v11145, %v11241
        %v11243 = vpop.f32.mrf.mxu0
        %11244 = vmatprep.mubr.bf16.mxu0 0
        %11245 = vmatmul.mubr.bf16.gmra.mxu0 %v10183
        %v11246 = vpop.f32.mrf.mxu0
        %v11247 = vadd.f32 %v11150, %v11246
        %v11248 = vpop.f32.mrf.mxu0
        %v11249 = vpop.f32.mrf.mxu0
        %v11250 = vadd.f32 %v11153, %v11249
        %v11251 = vpop.f32.mrf.mxu0
        %11252 = vdwg.mxu0
        %v11253 = vld [vmem:[%s7] sm:$0x1]
        %v11255 = vlaneseq
        %v11256 = vshrl.u32 %v11255, 7
        %v11257 = vsub.s32 0, %v11256
        %v11258 = vrot.slane %v11253, %v11257
        %v11260 = vmul.f32 %v11191, %v11258
        %v11261 = vmul.f32 %v11194, %v11258
        %v11262 = vmul.f32 %v11199, %v11258
        %v11263 = vmul.f32 %v11202, %v11258
        %v11264 = vmul.f32 %v11207, %v11258
        %v11265 = vmul.f32 %v11210, %v11258
        %v11266 = vmul.f32 %v11215, %v11258
        %v11267 = vmul.f32 %v11218, %v11258
        %v11268 = vmul.f32 %v11223, %v11258
        %v11269 = vmul.f32 %v11226, %v11258
        %v11270 = vmul.f32 %v11231, %v11258
        %v11271 = vmul.f32 %v11234, %v11258
        %v11272 = vmul.f32 %v11239, %v11258
        %v11273 = vmul.f32 %v11242, %v11258
        %v11274 = vmul.f32 %v11247, %v11258
        %v11275 = vmul.f32 %v11250, %v11258
        %v11276 = vld [vmem:[%s8] sm:$0x1]
        %v11278 = vlaneseq
        %v11279 = vshrl.u32 %v11278, 7
        %v11280 = vsub.s32 0, %v11279
        %v11281 = vrot.slane %v11276, %v11280
        %v11283 = vadd.f32 %v11260, %v11281
        %v11284 = vadd.f32 %v11261, %v11281
        %v11285 = vadd.f32 %v11262, %v11281
        %v11286 = vadd.f32 %v11263, %v11281
        %v11287 = vadd.f32 %v11264, %v11281
        %v11288 = vadd.f32 %v11265, %v11281
        %v11289 = vadd.f32 %v11266, %v11281
        %v11290 = vadd.f32 %v11267, %v11281
        %v11291 = vadd.f32 %v11268, %v11281
        %v11292 = vadd.f32 %v11269, %v11281
        %v11293 = vadd.f32 %v11270, %v11281
        %v11294 = vadd.f32 %v11271, %v11281
        %v11295 = vadd.f32 %v11272, %v11281
        %v11296 = vadd.f32 %v11273, %v11281
        %v11297 = vadd.f32 %v11274, %v11281
        %v11298 = vadd.f32 %v11275, %v11281
        %s11299 = scalar_lea.vmem [#allocation2], 48
        %v11300 = vld [vmem:[%s11299 + $0x2] sm:$0xff]
        %v11301 = vld [vmem:[%s11299 + $0xa] sm:$0xff]
        %v11302 = vld [vmem:[%s11299 + $0x1a] sm:$0xff]
        %v11303 = vld [vmem:[%s11299 + $0x22] sm:$0xff]
        %v11304 = vld [vmem:[%s11299 + $0x32] sm:$0xff]
        %v11305 = vld [vmem:[%s11299 + $0x3a] sm:$0xff]
        %v11306 = vld [vmem:[%s11299 + $0x4a] sm:$0xff]
        %v11307 = vld [vmem:[%s11299 + $0x52] sm:$0xff]
        %v11308 = vld [vmem:[%s11299 + $0x62] sm:$0xff]
        %v11309 = vld [vmem:[%s11299 + $0x6a] sm:$0xff]
        %v11310 = vld [vmem:[%s11299 + $0x7a] sm:$0xff]
        %v11311 = vld [vmem:[%s11299 + $0x82] sm:$0xff]
        %v11312 = vld [vmem:[%s11299 + $0x92] sm:$0xff]
        %v11313 = vld [vmem:[%s11299 + $0x9a] sm:$0xff]
        %v11314 = vld [vmem:[%s11299 + $0xaa] sm:$0xff]
        %v11315 = vld [vmem:[%s11299 + $0xb2] sm:$0xff]
        %v11316 = vadd.f32 %v11283, %v11300
        %v11317 = vadd.f32 %v11284, %v11301
        %v11318 = vadd.f32 %v11285, %v11302
        %v11319 = vadd.f32 %v11286, %v11303
        %v11320 = vadd.f32 %v11287, %v11304
        %v11321 = vadd.f32 %v11288, %v11305
        %v11322 = vadd.f32 %v11289, %v11306
        %v11323 = vadd.f32 %v11290, %v11307
        %v11324 = vadd.f32 %v11291, %v11308
        %v11325 = vadd.f32 %v11292, %v11309
        %v11326 = vadd.f32 %v11293, %v11310
        %v11327 = vadd.f32 %v11294, %v11311
        %v11328 = vadd.f32 %v11295, %v11312
        %v11329 = vadd.f32 %v11296, %v11313
        %v11330 = vadd.f32 %v11297, %v11314
        %v11331 = vadd.f32 %v11298, %v11315
        %11332 = vst [vmem:[%s325] sm:$0xff] %v11316
        %11333 = vst [vmem:[%s325 + $0x8] sm:$0xff] %v11317
        %11334 = vst [vmem:[%s325 + $0x10] sm:$0xff] %v11318
        %11335 = vst [vmem:[%s325 + $0x18] sm:$0xff] %v11319
        %11336 = vst [vmem:[%s325 + $0x20] sm:$0xff] %v11320
        %11337 = vst [vmem:[%s325 + $0x28] sm:$0xff] %v11321
        %11338 = vst [vmem:[%s325 + $0x30] sm:$0xff] %v11322
        %11339 = vst [vmem:[%s325 + $0x38] sm:$0xff] %v11323
        %11340 = vst [vmem:[%s325 + $0x40] sm:$0xff] %v11324
        %11341 = vst [vmem:[%s325 + $0x48] sm:$0xff] %v11325
        %11342 = vst [vmem:[%s325 + $0x50] sm:$0xff] %v11326
        %11343 = vst [vmem:[%s325 + $0x58] sm:$0xff] %v11327
        %11344 = vst [vmem:[%s325 + $0x60] sm:$0xff] %v11328
        %11345 = vst [vmem:[%s325 + $0x68] sm:$0xff] %v11329
        %11346 = vst [vmem:[%s325 + $0x70] sm:$0xff] %v11330
        %11347 = vst [vmem:[%s325 + $0x78] sm:$0xff] %v11331
        %s11348 = sand.u32 %s235, 1
        %s11349 = scalar_lea.sflag [#allocation7], %s11348
        %s11350 = sand.u32 %s235, 1
        %s11351 = smul.addr %s11350, 128
        %s11352 = scalar_lea.vmem [#allocation6], %s11351
        // Predicated region
        $region94: #{tpu_custom_call.1} parent=55 // pred_check
          %p11353 = pneg %p245
        $region95: #{tpu_custom_call.1} parent=55 // pred_check_branch
          %11355 = sbr.rel (%p11353) target = $region97
        $region96: #{tpu_custom_call.1} parent=55 // pred_region
          %s11356 = smul.u32 8, %s29
          %s11358 = ssub.s32 2048, 2048
          %11359 = vsyncadd %s11349, %s11358
          %s11360 = smul.addr %s11356, 2
          %s11361 = smul.addr %s28, 32
          %s11362 = sadd.s32 %s11360, %s11361
          %s11363 = smul.addr %s11362, 128
          %s11364 = scalar_lea.hbm %s10, %s11363
          %s11365 = sshll.u32 %s11352, 4
          %s11366 = int_to_ptr.vmem [resolvable:$true] %s11365
          %11371 = dma.vmem_to_hbm [thread:$0]  %s11366, 2048, %s11364, %s11349, 128, 128, 8
        $region97: #{tpu_custom_call.1} parent=55 // pred_fallthru
          _
      $region56: #{tpu_custom_call.1} parent=5 // pred_fallthru
        _
      %p11372 = scmp.le.s32.totalorder 2, %s19
      // Predicated region
      $region98: #{tpu_custom_call.1} parent=5 // pred_check
        %p11373 = pneg %p11372
      $region99: #{tpu_custom_call.1} parent=5 // pred_check_branch
        %11375 = sbr.rel (%p11373) target = $region101
      $region100: #{tpu_custom_call.1} parent=5 // pred_region
        %s11376 = ssub.s32 %s19, 2
        // Predicated region
        $region102: #{tpu_custom_call.1} parent=100 // pred_check
          %p11377 = pneg %p251
        $region103: #{tpu_custom_call.1} parent=100 // pred_check_branch
          %11379 = sbr.rel (%p11377) target = $region105
        $region104: #{tpu_custom_call.1} parent=100 // pred_region
          %s11380 = sand.u32 %s236, 1
          %s11381 = scalar_lea.sflag [#allocation7], %s11380
          %s11382 = sand.u32 %s236, 1
          %s11383 = smul.addr %s11382, 128
          %s11384 = scalar_lea.vmem [#allocation6], %s11383
          %11385 = dma.done %s11381, 2048
        $region105: #{tpu_custom_call.1} parent=100 // pred_fallthru
          _
      $region101: #{tpu_custom_call.1} parent=5 // pred_fallthru
        _
    $region6: #{tpu_custom_call.1} parent=1 // loop_footer
      %s23 = sadd.s32 1, %s19
    $region7: #{tpu_custom_call.1} parent=1 // loop_footer_branch
      %18 = sbr.rel target = $region3
    $region8: #{tpu_custom_call.1} parent=1 // loop_exit
      _
    %11386 = vsyncpa [#allocation7], 1
    %s11387 = scalar_lea.sflag [#allocation7], 1
    %11388 = vsyncpa %s11387, 1
  %11389 = vsyncmov [#allocation5]
  %s11390 = vpop.sfrf %11389
  %p11391 = scmp.eq.s32.totalorder %s11390, 0
  %p11392 = pneg %p11391
  %11394 = shalt.err (%p11392)

</llo_original>
